<compile_context>
chip_gen: v7x
topology: tpu7x:2x2x1
jax: 0.10.0
libtpu: 0.0.40
codegen_flags: <defaults>
</compile_context>

<pallas_src>
import functools

import jax
import jax.numpy as jnp
from jax import lax
from jax.experimental import pallas as pl
from jax.experimental.pallas import tpu as pltpu


def _round_up(x, m):
    return ((x + m - 1) // m) * m


def _pick_row_tile(H, W, target_rows=128):
    """Largest divisor of H with TR*W <= target_rows (keeps the per-tile f32
    accumulator comfortably in vregs)."""
    best = 1
    for d in range(1, H + 1):
        if H % d == 0 and d * W <= target_rows:
            best = d
    return best


# ----------------------------------------------------------------------------
# Fused Pallas kernel: conv1+BN1+ReLU -> conv2+BN2 -> +residual -> ReLU
# ----------------------------------------------------------------------------
def _basic_block_kernel(x_ref, w1_ref, w2_ref, b1_ref, b2_ref, o_ref,
                        pad_ref, shift_ref, *, H, W, Cp, LPAD, Wp, TR):
    """One batch image per grid step.

    x_ref   : (1, H, W, Cp)        bf16 input (channels zero-padded to Cp)
    w1_ref  : (9, Cp, Cp)          bf16 conv1 weights, BN1 scale folded in
    w2_ref  : (9, Cp, Cp)          bf16 conv2 weights, BN2 scale folded in
    b1_ref  : (1, Cp)              f32 folded BN1 bias
    b2_ref  : (1, Cp)              f32 folded BN2 bias
    o_ref   : (1, H, W, Cp)        bf16 output
    pad_ref : (H+2, Wp, Cp)        bf16 haloed scratch (interior at col LPAD)
    shift_ref : (3, (H+2)*W, Cp)   bf16 kw-shifted, row-flattened buffers
    """
    # --- border-only zeroing of the haloed scratch (interior is overwritten) --
    zero_row = jnp.zeros((1, Wp, Cp), jnp.bfloat16)
    zero_col = jnp.zeros((H, 1, Cp), jnp.bfloat16)
    pad_ref[0:1, :, :] = zero_row                       # top halo row
    pad_ref[H + 1:H + 2, :, :] = zero_row               # bottom halo row
    pad_ref[1:H + 1, LPAD - 1:LPAD, :] = zero_col       # left halo column
    pad_ref[1:H + 1, LPAD + W:LPAD + W + 1, :] = zero_col  # right halo column

    # Stage the bf16 input into the sublane-aligned interior (no casts).
    pad_ref[1:H + 1, LPAD:LPAD + W, :] = x_ref[0]

    def build_shift_buffers():
        # 3 kw-shifted copies, flattened to ((H+2)*W, Cp): every tap read below
        # becomes a contiguous, 16-row-aligned leading-row slice (no per-tap
        # slice+reshape materialization).
        for kw in range(3):
            c0 = LPAD - 1 + kw
            shift_ref[kw] = pad_ref[:, c0:c0 + W, :].reshape((H + 2) * W, Cp)

    def conv_tile(w_ref, r0):
        # Row-tile outer, 9 taps inner; accumulate as a value chain so the MXU
        # result accumulates in MRB/vregs and is materialized once per tile.
        acc = None
        for k in range(9):
            kh, kw = k // 3, k % 3
            s = (r0 + kh) * W
            patch = shift_ref[kw, s:s + TR * W, :]          # bf16, aligned
            c = jnp.dot(patch, w_ref[k], preferred_element_type=jnp.float32)
            acc = c if acc is None else acc + c
        return acc                                          # (TR*W, Cp) f32

    # ---- conv1 (BN1 scale folded) + bias + ReLU -> back into pad_ref (bf16) --
    build_shift_buffers()
    for r0 in range(0, H, TR):
        y1 = jnp.maximum(conv_tile(w1_ref, r0) + b1_ref[...], 0.0)
        pad_ref[1 + r0:1 + r0 + TR, LPAD:LPAD + W, :] = (
            y1.reshape(TR, W, Cp).astype(jnp.bfloat16))

    # ---- conv2 (BN2 scale folded) + bias + residual + ReLU -> bf16 output ----
    build_shift_buffers()
    for r0 in range(0, H, TR):
        out = conv_tile(w2_ref, r0) + b2_ref[...]
        out = out.reshape(TR, W, Cp)
        # Residual from the bf16 input (matches the numerics-matched reference;
        # small skip-path quantization vs the pure-f32 spec).
        out = out + x_ref[0, r0:r0 + TR, :, :].astype(jnp.float32)
        out = jnp.maximum(out, 0.0)
        o_ref[0, r0:r0 + TR, :, :] = out.astype(o_ref.dtype)


# ----------------------------------------------------------------------------
# Host-side wrapper
# ----------------------------------------------------------------------------
def _fold_bn(gamma, beta, mean, var, eps=1e-5):
    scale = gamma / jnp.sqrt(var + eps)
    bias = beta - mean * scale
    return scale, bias                      # (C,), (C,)


def basic_block_forward(x_nchw, params, eps=1e-5):
    """Pallas implementation of BasicBlock.forward (stride=1, downsample=None)."""
    N, C, H, W = x_nchw.shape
    Cp = _round_up(C, 128)                  # lane-dense channel padding
    pad_c = Cp - C
    LPAD = 16                               # bf16 sublane tile -> aligned interior
    Wp = _round_up(LPAD + W + 1, 16)        # haloed scratch width
    TR = _pick_row_tile(H, W)               # output rows per MXU tile

    s1, b1 = _fold_bn(params["bn1_gamma"], params["bn1_beta"],
                      params["bn1_mean"], params["bn1_var"], eps)
    s2, b2 = _fold_bn(params["bn2_gamma"], params["bn2_beta"],
                      params["bn2_mean"], params["bn2_var"], eps)

    def prep_w(w, scale):
        # Fold BN scale into the conv weight (output channel of HWIO), pad
        # channels to Cp, flatten the 3x3 taps -> (9, Cp, Cp) bf16.
        wf = w * scale[None, None, None, :]
        wf = jnp.pad(wf, ((0, 0), (0, 0), (0, pad_c), (0, pad_c)))
        return wf.reshape(9, Cp, Cp).astype(jnp.bfloat16)

    w1p = prep_w(params["w1"], s1)
    w2p = prep_w(params["w2"], s2)
    b1p = jnp.pad(b1, (0, pad_c)).reshape(1, Cp).astype(jnp.float32)
    b2p = jnp.pad(b2, (0, pad_c)).reshape(1, Cp).astype(jnp.float32)

    # NCHW -> NHWC, channel-pad to Cp, cast to bf16 (layout plumbing only).
    x = jnp.transpose(x_nchw, (0, 2, 3, 1))
    xp = jnp.pad(x, ((0, 0), (0, 0), (0, 0), (0, pad_c))).astype(jnp.bfloat16)

    kernel = functools.partial(_basic_block_kernel,
                               H=H, W=W, Cp=Cp, LPAD=LPAD, Wp=Wp, TR=TR)

    flops = 2 * 2 * 9 * N * H * W * Cp * Cp         # 2 convs, 2 flops/MAC
    bytes_accessed = (2 * N * H * W * Cp * 2        # bf16 in + out
                      + 2 * 9 * Cp * Cp * 2         # bf16 weights
                      + 2 * Cp * 4)                 # f32 biases

    out = pl.pallas_call(
        kernel,
        out_shape=jax.ShapeDtypeStruct((N, H, W, Cp), jnp.bfloat16),
        grid_spec=pltpu.PrefetchScalarGridSpec(
            num_scalar_prefetch=0,
            grid=(N,),
            in_specs=[
                pl.BlockSpec((1, H, W, Cp), lambda n: (n, 0, 0, 0)),   # x
                pl.BlockSpec((9, Cp, Cp), lambda n: (0, 0, 0)),        # w1 folded
                pl.BlockSpec((9, Cp, Cp), lambda n: (0, 0, 0)),        # w2 folded
                pl.BlockSpec((1, Cp), lambda n: (0, 0)),               # b1
                pl.BlockSpec((1, Cp), lambda n: (0, 0)),               # b2
            ],
            out_specs=pl.BlockSpec((1, H, W, Cp), lambda n: (n, 0, 0, 0)),
            scratch_shapes=[
                pltpu.VMEM((H + 2, Wp, Cp), jnp.bfloat16),        # haloed x / y1
                pltpu.VMEM((3, (H + 2) * W, Cp), jnp.bfloat16),   # kw-shift bufs
            ],
        ),
        compiler_params=pltpu.CompilerParams(
            dimension_semantics=("parallel",)),
        cost_estimate=pl.CostEstimate(flops=flops, transcendentals=0,
                                      bytes_accessed=bytes_accessed),
    )(xp, w1p, w2p, b1p, b2p)

    # Network-boundary plumbing only: in a full ResNet the padded-NHWC bf16
    # activation would be fed directly to the next block.
    return jnp.transpose(out[..., :C], (0, 3, 1, 2)).astype(jnp.float32)


# ----------------------------------------------------------------------------
# References for correctness checks
# ----------------------------------------------------------------------------
def _ref_forward_f32(x_nchw, params, eps=1e-5):
    """Spec reference: pure-f32 conv/BN(eval)/ReLU exactly as the PyTorch module."""
    x = jnp.transpose(x_nchw, (0, 2, 3, 1))
    dn = ("NHWC", "HWIO", "NHWC")

    def conv(inp, w):
        return lax.conv_general_dilated(inp, w, (1, 1), "SAME",
                                        dimension_numbers=dn)

    def bn(inp, g, b, m, v):
        return (inp - m) / jnp.sqrt(v + eps) * g + b

    out = conv(x, params["w1"])
    out = bn(out, params["bn1_gamma"], params["bn1_beta"],
             params["bn1_mean"], params["bn1_var"])
    out = jnp.maximum(out, 0.0)
    out = conv(out, params["w2"])
    out = bn(out, params["bn2_gamma"], params["bn2_beta"],
             params["bn2_mean"], params["bn2_var"])
    out = jnp.maximum(out + x, 0.0)
    return jnp.transpose(out, (0, 3, 1, 2))


def _ref_forward_matched(x_nchw, params, eps=1e-5):
    """Numerics-matched reference: bf16 conv inputs + folded BN scale, f32 accum,
    bf16 intermediate activation (same arithmetic as the Pallas kernel)."""
    x32 = jnp.transpose(x_nchw, (0, 2, 3, 1))
    x = x32.astype(jnp.bfloat16)
    s1, b1 = _fold_bn(params["bn1_gamma"], params["bn1_beta"],
                      params["bn1_mean"], params["bn1_var"], eps)
    s2, b2 = _fold_bn(params["bn2_gamma"], params["bn2_beta"],
                      params["bn2_mean"], params["bn2_var"], eps)
    w1 = (params["w1"] * s1[None, None, None, :]).astype(jnp.bfloat16)
    w2 = (params["w2"] * s2[None, None, None, :]).astype(jnp.bfloat16)
    dn = ("NHWC", "HWIO", "NHWC")

    def conv(inp, w):
        return lax.conv_general_dilated(inp, w, (1, 1), "SAME",
                                        dimension_numbers=dn,
                                        preferred_element_type=jnp.float32)

    y1 = jnp.maximum(conv(x, w1) + b1, 0.0)
    out = conv(y1.astype(jnp.bfloat16), w2) + b2 + x.astype(jnp.float32)
    out = jnp.maximum(out, 0.0)
    return jnp.transpose(out, (0, 3, 1, 2))


# ----------------------------------------------------------------------------
# Main
# ----------------------------------------------------------------------------
if __name__ == "__main__":
    key = jax.random.PRNGKey(0)
    N, C, H, W = 2, 8, 16, 16                      # inplanes = planes = 8
    ks = jax.random.split(key, 11)

    x = jax.random.normal(ks[0], (N, C, H, W), jnp.float32)

    params = {
        # conv weights in HWIO (kh, kw, Cin, Cout)
        "w1": jax.random.normal(ks[1], (3, 3, C, C), jnp.float32) * 0.1,
        "w2": jax.random.normal(ks[2], (3, 3, C, C), jnp.float32) * 0.1,
        "bn1_gamma": jax.random.normal(ks[3], (C,), jnp.float32) * 0.1 + 1.0,
        "bn1_beta": jax.random.normal(ks[4], (C,), jnp.float32) * 0.1,
        "bn1_mean": jax.random.normal(ks[5], (C,), jnp.float32) * 0.1,
        "bn1_var": jax.random.uniform(ks[6], (C,), jnp.float32, 0.5, 1.5),
        "bn2_gamma": jax.random.normal(ks[7], (C,), jnp.float32) * 0.1 + 1.0,
        "bn2_beta": jax.random.normal(ks[8], (C,), jnp.float32) * 0.1,
        "bn2_mean": jax.random.normal(ks[9], (C,), jnp.float32) * 0.1,
        "bn2_var": jax.random.uniform(ks[10], (C,), jnp.float32, 0.5, 1.5),
    }

    fwd = jax.jit(basic_block_forward)
    out = jax.block_until_ready(fwd(x, params))

    ref_match = jax.block_until_ready(_ref_forward_matched(x, params))
    # Quantize the matched reference the same way the kernel writes its output.
    ref_match_q = ref_match.astype(jnp.bfloat16).astype(jnp.float32)
    ref_f32 = jax.block_until_ready(_ref_forward_f32(x, params))

    assert out.shape == (N, C, H, W), out.shape
    err_match = float(jnp.max(jnp.abs(out - ref_match_q)))
    err_f32 = float(jnp.max(jnp.abs(out - ref_f32)))
    # Check vs the numerics-matched reference (same bf16/f32 math, bf16 output).
    assert err_match < 5e-2, ("mismatch vs matched reference", err_match)
    # Looser structural check vs the pure-f32 spec (bf16 quantization only).
    assert err_f32 < 3e-1, ("mismatch vs f32 spec reference", err_f32)
    print("KERNEL_OK")
</pallas_src>

<mosaic_0001>
module attributes {stable_mosaic.version = 11 : i64} {
  func.func @_basic_block_kernel(%arg0: i32, %arg1: memref<1x16x16x128xbf16, #tpu.memory_space<vmem>>, %arg2: memref<9x128x128xbf16, #tpu.memory_space<vmem>>, %arg3: memref<9x128x128xbf16, #tpu.memory_space<vmem>>, %arg4: memref<1x128xf32, #tpu.memory_space<vmem>>, %arg5: memref<1x128xf32, #tpu.memory_space<vmem>>, %arg6: memref<1x16x16x128xbf16, #tpu.memory_space<vmem>>, %arg7: memref<18x48x128xbf16, #tpu.memory_space<vmem>>, %arg8: memref<3x288x128xbf16, #tpu.memory_space<vmem>>) attributes {dimension_semantics = [#tpu.dimension_semantics<parallel>], iteration_bounds = array<i64: 2>, scalar_prefetch = 0 : i64, scratch_operands = 2 : i64, tpu.core_type = #tpu.core_type<tc>, window_params = [{transform_indices = @transform_0, window_bounds = array<i64: 1, 16, 16, 128>}, {pipeline_mode = #tpu.pipeline_mode<synchronous>, transform_indices = @transform_1, window_bounds = array<i64: 9, 128, 128>}, {pipeline_mode = #tpu.pipeline_mode<synchronous>, transform_indices = @transform_2, window_bounds = array<i64: 9, 128, 128>}, {pipeline_mode = #tpu.pipeline_mode<synchronous>, transform_indices = @transform_3, window_bounds = array<i64: 1, 128>}, {pipeline_mode = #tpu.pipeline_mode<synchronous>, transform_indices = @transform_4, window_bounds = array<i64: 1, 128>}, {transform_indices = @transform_5, window_bounds = array<i64: 1, 16, 16, 128>}]} {
    %cst = arith.constant 0.000000e+00 : bf16
    %0 = vector.broadcast %cst : bf16 to vector<1x48x128xbf16>
    %cst_0 = arith.constant 0.000000e+00 : bf16
    %1 = vector.broadcast %cst_0 : bf16 to vector<16x1x128xbf16>
    %c0 = arith.constant 0 : index
    %c0_1 = arith.constant 0 : index
    %c0_2 = arith.constant 0 : index
    %2 = vector.load %arg7[%c0, %c0_1, %c0_2] : memref<18x48x128xbf16, #tpu.memory_space<vmem>>, vector<1x48x128xbf16>
    tpu.vector_store %arg7[%c0, %c0_1, %c0_2], %0 {strides = array<i32>} : memref<18x48x128xbf16, #tpu.memory_space<vmem>>, vector<1x48x128xbf16>,
    %c17 = arith.constant 17 : index
    %c0_3 = arith.constant 0 : index
    %c0_4 = arith.constant 0 : index
    %3 = vector.load %arg7[%c17, %c0_3, %c0_4] : memref<18x48x128xbf16, #tpu.memory_space<vmem>>, vector<1x48x128xbf16>
    tpu.vector_store %arg7[%c17, %c0_3, %c0_4], %0 {strides = array<i32>} : memref<18x48x128xbf16, #tpu.memory_space<vmem>>, vector<1x48x128xbf16>,
    %c1 = arith.constant 1 : index
    %c15 = arith.constant 15 : index
    %c0_5 = arith.constant 0 : index
    %4 = vector.load %arg7[%c1, %c15, %c0_5] : memref<18x48x128xbf16, #tpu.memory_space<vmem>>, vector<16x1x128xbf16>
    tpu.vector_store %arg7[%c1, %c15, %c0_5], %1 {strides = array<i32>} : memref<18x48x128xbf16, #tpu.memory_space<vmem>>, vector<16x1x128xbf16>,
    %c1_6 = arith.constant 1 : index
    %c32 = arith.constant 32 : index
    %c0_7 = arith.constant 0 : index
    %5 = vector.load %arg7[%c1_6, %c32, %c0_7] : memref<18x48x128xbf16, #tpu.memory_space<vmem>>, vector<16x1x128xbf16>
    tpu.vector_store %arg7[%c1_6, %c32, %c0_7], %1 {strides = array<i32>} : memref<18x48x128xbf16, #tpu.memory_space<vmem>>, vector<16x1x128xbf16>,
    %c0_8 = arith.constant 0 : index
    %c0_9 = arith.constant 0 : index
    %c0_10 = arith.constant 0 : index
    %c0_11 = arith.constant 0 : index
    %6 = vector.load %arg1[%c0_8, %c0_9, %c0_10, %c0_11] : memref<1x16x16x128xbf16, #tpu.memory_space<vmem>>, vector<1x16x16x128xbf16>
    %7 = vector.shape_cast %6 : vector<1x16x16x128xbf16> to vector<16x16x128xbf16>
    %c1_12 = arith.constant 1 : index
    %c16 = arith.constant 16 : index
    %c0_13 = arith.constant 0 : index
    %8 = vector.load %arg7[%c1_12, %c16, %c0_13] : memref<18x48x128xbf16, #tpu.memory_space<vmem>>, vector<16x16x128xbf16>
    tpu.vector_store %arg7[%c1_12, %c16, %c0_13], %7 {strides = array<i32>} : memref<18x48x128xbf16, #tpu.memory_space<vmem>>, vector<16x16x128xbf16>,
    %c0_14 = arith.constant 0 : index
    %c15_15 = arith.constant 15 : index
    %c0_16 = arith.constant 0 : index
    %9 = vector.load %arg7[%c0_14, %c15_15, %c0_16] : memref<18x48x128xbf16, #tpu.memory_space<vmem>>, vector<18x16x128xbf16>
    %10 = vector.shape_cast %9 : vector<18x16x128xbf16> to vector<288x128xbf16>
    %c0_17 = arith.constant 0 : index
    %c0_18 = arith.constant 0 : index
    %c0_19 = arith.constant 0 : index
    %11 = vector.load %arg8[%c0_17, %c0_18, %c0_19] : memref<3x288x128xbf16, #tpu.memory_space<vmem>>, vector<1x288x128xbf16>
    %12 = vector.shape_cast %11 : vector<1x288x128xbf16> to vector<288x128xbf16>
    %13 = vector.shape_cast %10 : vector<288x128xbf16> to vector<1x288x128xbf16>
    tpu.vector_store %arg8[%c0_17, %c0_18, %c0_19], %13 {strides = array<i32>} : memref<3x288x128xbf16, #tpu.memory_space<vmem>>, vector<1x288x128xbf16>,
    %c0_20 = arith.constant 0 : index
    %c16_21 = arith.constant 16 : index
    %c0_22 = arith.constant 0 : index
    %14 = vector.load %arg7[%c0_20, %c16_21, %c0_22] : memref<18x48x128xbf16, #tpu.memory_space<vmem>>, vector<18x16x128xbf16>
    %15 = vector.shape_cast %14 : vector<18x16x128xbf16> to vector<288x128xbf16>
    %c1_23 = arith.constant 1 : index
    %c0_24 = arith.constant 0 : index
    %c0_25 = arith.constant 0 : index
    %16 = vector.load %arg8[%c1_23, %c0_24, %c0_25] : memref<3x288x128xbf16, #tpu.memory_space<vmem>>, vector<1x288x128xbf16>
    %17 = vector.shape_cast %16 : vector<1x288x128xbf16> to vector<288x128xbf16>
    %18 = vector.shape_cast %15 : vector<288x128xbf16> to vector<1x288x128xbf16>
    tpu.vector_store %arg8[%c1_23, %c0_24, %c0_25], %18 {strides = array<i32>} : memref<3x288x128xbf16, #tpu.memory_space<vmem>>, vector<1x288x128xbf16>,
    %c0_26 = arith.constant 0 : index
    %c17_27 = arith.constant 17 : index
    %c0_28 = arith.constant 0 : index
    %19 = vector.load %arg7[%c0_26, %c17_27, %c0_28] : memref<18x48x128xbf16, #tpu.memory_space<vmem>>, vector<18x16x128xbf16>
    %20 = vector.shape_cast %19 : vector<18x16x128xbf16> to vector<288x128xbf16>
    %c2 = arith.constant 2 : index
    %c0_29 = arith.constant 0 : index
    %c0_30 = arith.constant 0 : index
    %21 = vector.load %arg8[%c2, %c0_29, %c0_30] : memref<3x288x128xbf16, #tpu.memory_space<vmem>>, vector<1x288x128xbf16>
    %22 = vector.shape_cast %21 : vector<1x288x128xbf16> to vector<288x128xbf16>
    %23 = vector.shape_cast %20 : vector<288x128xbf16> to vector<1x288x128xbf16>
    tpu.vector_store %arg8[%c2, %c0_29, %c0_30], %23 {strides = array<i32>} : memref<3x288x128xbf16, #tpu.memory_space<vmem>>, vector<1x288x128xbf16>,
    %c0_31 = arith.constant 0 : index
    %c0_32 = arith.constant 0 : index
    %c0_33 = arith.constant 0 : index
    %24 = vector.load %arg8[%c0_31, %c0_32, %c0_33] : memref<3x288x128xbf16, #tpu.memory_space<vmem>>, vector<1x128x128xbf16>
    %25 = vector.shape_cast %24 : vector<1x128x128xbf16> to vector<128x128xbf16>
    %c0_34 = arith.constant 0 : index
    %c0_35 = arith.constant 0 : index
    %c0_36 = arith.constant 0 : index
    %26 = vector.load %arg2[%c0_34, %c0_35, %c0_36] : memref<9x128x128xbf16, #tpu.memory_space<vmem>>, vector<1x128x128xbf16>
    %27 = vector.shape_cast %26 : vector<1x128x128xbf16> to vector<128x128xbf16>
    %cst_37 = arith.constant dense<0.000000e+00> : vector<128x128xf32>
    %28 = tpu.matmul %25, %27, %cst_37 {dimension_numbers = #tpu.dot_dimension_numbers<[1], [0], [0], [1], [0, 0, 1, 1], [], []>} : vector<128x128xbf16>, vector<128x128xbf16>, vector<128x128xf32> -> vector<128x128xf32>
    %c1_38 = arith.constant 1 : index
    %c0_39 = arith.constant 0 : index
    %c0_40 = arith.constant 0 : index
    %29 = vector.load %arg8[%c1_38, %c0_39, %c0_40] : memref<3x288x128xbf16, #tpu.memory_space<vmem>>, vector<1x128x128xbf16>
    %30 = vector.shape_cast %29 : vector<1x128x128xbf16> to vector<128x128xbf16>
    %c1_41 = arith.constant 1 : index
    %c0_42 = arith.constant 0 : index
    %c0_43 = arith.constant 0 : index
    %31 = vector.load %arg2[%c1_41, %c0_42, %c0_43] : memref<9x128x128xbf16, #tpu.memory_space<vmem>>, vector<1x128x128xbf16>
    %32 = vector.shape_cast %31 : vector<1x128x128xbf16> to vector<128x128xbf16>
    %cst_44 = arith.constant dense<0.000000e+00> : vector<128x128xf32>
    %33 = tpu.matmul %30, %32, %cst_44 {dimension_numbers = #tpu.dot_dimension_numbers<[1], [0], [0], [1], [0, 0, 1, 1], [], []>} : vector<128x128xbf16>, vector<128x128xbf16>, vector<128x128xf32> -> vector<128x128xf32>
    %34 = arith.addf %28, %33 : vector<128x128xf32>
    %c2_45 = arith.constant 2 : index
    %c0_46 = arith.constant 0 : index
    %c0_47 = arith.constant 0 : index
    %35 = vector.load %arg8[%c2_45, %c0_46, %c0_47] : memref<3x288x128xbf16, #tpu.memory_space<vmem>>, vector<1x128x128xbf16>
    %36 = vector.shape_cast %35 : vector<1x128x128xbf16> to vector<128x128xbf16>
    %c2_48 = arith.constant 2 : index
    %c0_49 = arith.constant 0 : index
    %c0_50 = arith.constant 0 : index
    %37 = vector.load %arg2[%c2_48, %c0_49, %c0_50] : memref<9x128x128xbf16, #tpu.memory_space<vmem>>, vector<1x128x128xbf16>
    %38 = vector.shape_cast %37 : vector<1x128x128xbf16> to vector<128x128xbf16>
    %cst_51 = arith.constant dense<0.000000e+00> : vector<128x128xf32>
    %39 = tpu.matmul %36, %38, %cst_51 {dimension_numbers = #tpu.dot_dimension_numbers<[1], [0], [0], [1], [0, 0, 1, 1], [], []>} : vector<128x128xbf16>, vector<128x128xbf16>, vector<128x128xf32> -> vector<128x128xf32>
    %40 = arith.addf %34, %39 : vector<128x128xf32>
    %c0_52 = arith.constant 0 : index
    %c16_53 = arith.constant 16 : index
    %c0_54 = arith.constant 0 : index
    %41 = vector.load %arg8[%c0_52, %c16_53, %c0_54] : memref<3x288x128xbf16, #tpu.memory_space<vmem>>, vector<1x128x128xbf16>
    %42 = vector.shape_cast %41 : vector<1x128x128xbf16> to vector<128x128xbf16>
    %c3 = arith.constant 3 : index
    %c0_55 = arith.constant 0 : index
    %c0_56 = arith.constant 0 : index
    %43 = vector.load %arg2[%c3, %c0_55, %c0_56] : memref<9x128x128xbf16, #tpu.memory_space<vmem>>, vector<1x128x128xbf16>
    %44 = vector.shape_cast %43 : vector<1x128x128xbf16> to vector<128x128xbf16>
    %cst_57 = arith.constant dense<0.000000e+00> : vector<128x128xf32>
    %45 = tpu.matmul %42, %44, %cst_57 {dimension_numbers = #tpu.dot_dimension_numbers<[1], [0], [0], [1], [0, 0, 1, 1], [], []>} : vector<128x128xbf16>, vector<128x128xbf16>, vector<128x128xf32> -> vector<128x128xf32>
    %46 = arith.addf %40, %45 : vector<128x128xf32>
    %c1_58 = arith.constant 1 : index
    %c16_59 = arith.constant 16 : index
    %c0_60 = arith.constant 0 : index
    %47 = vector.load %arg8[%c1_58, %c16_59, %c0_60] : memref<3x288x128xbf16, #tpu.memory_space<vmem>>, vector<1x128x128xbf16>
    %48 = vector.shape_cast %47 : vector<1x128x128xbf16> to vector<128x128xbf16>
    %c4 = arith.constant 4 : index
    %c0_61 = arith.constant 0 : index
    %c0_62 = arith.constant 0 : index
    %49 = vector.load %arg2[%c4, %c0_61, %c0_62] : memref<9x128x128xbf16, #tpu.memory_space<vmem>>, vector<1x128x128xbf16>
    %50 = vector.shape_cast %49 : vector<1x128x128xbf16> to vector<128x128xbf16>
    %cst_63 = arith.constant dense<0.000000e+00> : vector<128x128xf32>
    %51 = tpu.matmul %48, %50, %cst_63 {dimension_numbers = #tpu.dot_dimension_numbers<[1], [0], [0], [1], [0, 0, 1, 1], [], []>} : vector<128x128xbf16>, vector<128x128xbf16>, vector<128x128xf32> -> vector<128x128xf32>
    %52 = arith.addf %46, %51 : vector<128x128xf32>
    %c2_64 = arith.constant 2 : index
    %c16_65 = arith.constant 16 : index
    %c0_66 = arith.constant 0 : index
    %53 = vector.load %arg8[%c2_64, %c16_65, %c0_66] : memref<3x288x128xbf16, #tpu.memory_space<vmem>>, vector<1x128x128xbf16>
    %54 = vector.shape_cast %53 : vector<1x128x128xbf16> to vector<128x128xbf16>
    %c5 = arith.constant 5 : index
    %c0_67 = arith.constant 0 : index
    %c0_68 = arith.constant 0 : index
    %55 = vector.load %arg2[%c5, %c0_67, %c0_68] : memref<9x128x128xbf16, #tpu.memory_space<vmem>>, vector<1x128x128xbf16>
    %56 = vector.shape_cast %55 : vector<1x128x128xbf16> to vector<128x128xbf16>
    %cst_69 = arith.constant dense<0.000000e+00> : vector<128x128xf32>
    %57 = tpu.matmul %54, %56, %cst_69 {dimension_numbers = #tpu.dot_dimension_numbers<[1], [0], [0], [1], [0, 0, 1, 1], [], []>} : vector<128x128xbf16>, vector<128x128xbf16>, vector<128x128xf32> -> vector<128x128xf32>
    %58 = arith.addf %52, %57 : vector<128x128xf32>
    %c0_70 = arith.constant 0 : index
    %c32_71 = arith.constant 32 : index
    %c0_72 = arith.constant 0 : index
    %59 = vector.load %arg8[%c0_70, %c32_71, %c0_72] : memref<3x288x128xbf16, #tpu.memory_space<vmem>>, vector<1x128x128xbf16>
    %60 = vector.shape_cast %59 : vector<1x128x128xbf16> to vector<128x128xbf16>
    %c6 = arith.constant 6 : index
    %c0_73 = arith.constant 0 : index
    %c0_74 = arith.constant 0 : index
    %61 = vector.load %arg2[%c6, %c0_73, %c0_74] : memref<9x128x128xbf16, #tpu.memory_space<vmem>>, vector<1x128x128xbf16>
    %62 = vector.shape_cast %61 : vector<1x128x128xbf16> to vector<128x128xbf16>
    %cst_75 = arith.constant dense<0.000000e+00> : vector<128x128xf32>
    %63 = tpu.matmul %60, %62, %cst_75 {dimension_numbers = #tpu.dot_dimension_numbers<[1], [0], [0], [1], [0, 0, 1, 1], [], []>} : vector<128x128xbf16>, vector<128x128xbf16>, vector<128x128xf32> -> vector<128x128xf32>
    %64 = arith.addf %58, %63 : vector<128x128xf32>
    %c1_76 = arith.constant 1 : index
    %c32_77 = arith.constant 32 : index
    %c0_78 = arith.constant 0 : index
    %65 = vector.load %arg8[%c1_76, %c32_77, %c0_78] : memref<3x288x128xbf16, #tpu.memory_space<vmem>>, vector<1x128x128xbf16>
    %66 = vector.shape_cast %65 : vector<1x128x128xbf16> to vector<128x128xbf16>
    %c7 = arith.constant 7 : index
    %c0_79 = arith.constant 0 : index
    %c0_80 = arith.constant 0 : index
    %67 = vector.load %arg2[%c7, %c0_79, %c0_80] : memref<9x128x128xbf16, #tpu.memory_space<vmem>>, vector<1x128x128xbf16>
    %68 = vector.shape_cast %67 : vector<1x128x128xbf16> to vector<128x128xbf16>
    %cst_81 = arith.constant dense<0.000000e+00> : vector<128x128xf32>
    %69 = tpu.matmul %66, %68, %cst_81 {dimension_numbers = #tpu.dot_dimension_numbers<[1], [0], [0], [1], [0, 0, 1, 1], [], []>} : vector<128x128xbf16>, vector<128x128xbf16>, vector<128x128xf32> -> vector<128x128xf32>
    %70 = arith.addf %64, %69 : vector<128x128xf32>
    %c2_82 = arith.constant 2 : index
    %c32_83 = arith.constant 32 : index
    %c0_84 = arith.constant 0 : index
    %71 = vector.load %arg8[%c2_82, %c32_83, %c0_84] : memref<3x288x128xbf16, #tpu.memory_space<vmem>>, vector<1x128x128xbf16>
    %72 = vector.shape_cast %71 : vector<1x128x128xbf16> to vector<128x128xbf16>
    %c8 = arith.constant 8 : index
    %c0_85 = arith.constant 0 : index
    %c0_86 = arith.constant 0 : index
    %73 = vector.load %arg2[%c8, %c0_85, %c0_86] : memref<9x128x128xbf16, #tpu.memory_space<vmem>>, vector<1x128x128xbf16>
    %74 = vector.shape_cast %73 : vector<1x128x128xbf16> to vector<128x128xbf16>
    %cst_87 = arith.constant dense<0.000000e+00> : vector<128x128xf32>
    %75 = tpu.matmul %72, %74, %cst_87 {dimension_numbers = #tpu.dot_dimension_numbers<[1], [0], [0], [1], [0, 0, 1, 1], [], []>} : vector<128x128xbf16>, vector<128x128xbf16>, vector<128x128xf32> -> vector<128x128xf32>
    %76 = arith.addf %70, %75 : vector<128x128xf32>
    %c0_88 = arith.constant 0 : index
    %c0_89 = arith.constant 0 : index
    %77 = vector.load %arg4[%c0_88, %c0_89] : memref<1x128xf32, #tpu.memory_space<vmem>>, vector<1x128xf32>
    %78 = vector.broadcast %77 : vector<1x128xf32> to vector<128x128xf32>
    %79 = arith.addf %76, %78 : vector<128x128xf32>
    %cst_90 = arith.constant 0.000000e+00 : f32
    %80 = vector.broadcast %cst_90 : f32 to vector<128x128xf32>
    %81 = arith.maximumf %79, %80 : vector<128x128xf32>
    %82 = vector.shape_cast %81 : vector<128x128xf32> to vector<8x16x128xf32>
    %83 = arith.truncf %82 : vector<8x16x128xf32> to vector<8x16x128xbf16>
    %c1_91 = arith.constant 1 : index
    %c16_92 = arith.constant 16 : index
    %c0_93 = arith.constant 0 : index
    %84 = vector.load %arg7[%c1_91, %c16_92, %c0_93] : memref<18x48x128xbf16, #tpu.memory_space<vmem>>, vector<8x16x128xbf16>
    tpu.vector_store %arg7[%c1_91, %c16_92, %c0_93], %83 {strides = array<i32>} : memref<18x48x128xbf16, #tpu.memory_space<vmem>>, vector<8x16x128xbf16>,
    %c0_94 = arith.constant 0 : index
    %c128 = arith.constant 128 : index
    %c0_95 = arith.constant 0 : index
    %85 = vector.load %arg8[%c0_94, %c128, %c0_95] : memref<3x288x128xbf16, #tpu.memory_space<vmem>>, vector<1x128x128xbf16>
    %86 = vector.shape_cast %85 : vector<1x128x128xbf16> to vector<128x128xbf16>
    %c0_96 = arith.constant 0 : index
    %c0_97 = arith.constant 0 : index
    %c0_98 = arith.constant 0 : index
    %87 = vector.load %arg2[%c0_96, %c0_97, %c0_98] : memref<9x128x128xbf16, #tpu.memory_space<vmem>>, vector<1x128x128xbf16>
    %88 = vector.shape_cast %87 : vector<1x128x128xbf16> to vector<128x128xbf16>
    %cst_99 = arith.constant dense<0.000000e+00> : vector<128x128xf32>
    %89 = tpu.matmul %86, %88, %cst_99 {dimension_numbers = #tpu.dot_dimension_numbers<[1], [0], [0], [1], [0, 0, 1, 1], [], []>} : vector<128x128xbf16>, vector<128x128xbf16>, vector<128x128xf32> -> vector<128x128xf32>
    %c1_100 = arith.constant 1 : index
    %c128_101 = arith.constant 128 : index
    %c0_102 = arith.constant 0 : index
    %90 = vector.load %arg8[%c1_100, %c128_101, %c0_102] : memref<3x288x128xbf16, #tpu.memory_space<vmem>>, vector<1x128x128xbf16>
    %91 = vector.shape_cast %90 : vector<1x128x128xbf16> to vector<128x128xbf16>
    %c1_103 = arith.constant 1 : index
    %c0_104 = arith.constant 0 : index
    %c0_105 = arith.constant 0 : index
    %92 = vector.load %arg2[%c1_103, %c0_104, %c0_105] : memref<9x128x128xbf16, #tpu.memory_space<vmem>>, vector<1x128x128xbf16>
    %93 = vector.shape_cast %92 : vector<1x128x128xbf16> to vector<128x128xbf16>
    %cst_106 = arith.constant dense<0.000000e+00> : vector<128x128xf32>
    %94 = tpu.matmul %91, %93, %cst_106 {dimension_numbers = #tpu.dot_dimension_numbers<[1], [0], [0], [1], [0, 0, 1, 1], [], []>} : vector<128x128xbf16>, vector<128x128xbf16>, vector<128x128xf32> -> vector<128x128xf32>
    %95 = arith.addf %89, %94 : vector<128x128xf32>
    %c2_107 = arith.constant 2 : index
    %c128_108 = arith.constant 128 : index
    %c0_109 = arith.constant 0 : index
    %96 = vector.load %arg8[%c2_107, %c128_108, %c0_109] : memref<3x288x128xbf16, #tpu.memory_space<vmem>>, vector<1x128x128xbf16>
    %97 = vector.shape_cast %96 : vector<1x128x128xbf16> to vector<128x128xbf16>
    %c2_110 = arith.constant 2 : index
    %c0_111 = arith.constant 0 : index
    %c0_112 = arith.constant 0 : index
    %98 = vector.load %arg2[%c2_110, %c0_111, %c0_112] : memref<9x128x128xbf16, #tpu.memory_space<vmem>>, vector<1x128x128xbf16>
    %99 = vector.shape_cast %98 : vector<1x128x128xbf16> to vector<128x128xbf16>
    %cst_113 = arith.constant dense<0.000000e+00> : vector<128x128xf32>
    %100 = tpu.matmul %97, %99, %cst_113 {dimension_numbers = #tpu.dot_dimension_numbers<[1], [0], [0], [1], [0, 0, 1, 1], [], []>} : vector<128x128xbf16>, vector<128x128xbf16>, vector<128x128xf32> -> vector<128x128xf32>
    %101 = arith.addf %95, %100 : vector<128x128xf32>
    %c0_114 = arith.constant 0 : index
    %c144 = arith.constant 144 : index
    %c0_115 = arith.constant 0 : index
    %102 = vector.load %arg8[%c0_114, %c144, %c0_115] : memref<3x288x128xbf16, #tpu.memory_space<vmem>>, vector<1x128x128xbf16>
    %103 = vector.shape_cast %102 : vector<1x128x128xbf16> to vector<128x128xbf16>
    %c3_116 = arith.constant 3 : index
    %c0_117 = arith.constant 0 : index
    %c0_118 = arith.constant 0 : index
    %104 = vector.load %arg2[%c3_116, %c0_117, %c0_118] : memref<9x128x128xbf16, #tpu.memory_space<vmem>>, vector<1x128x128xbf16>
    %105 = vector.shape_cast %104 : vector<1x128x128xbf16> to vector<128x128xbf16>
    %cst_119 = arith.constant dense<0.000000e+00> : vector<128x128xf32>
    %106 = tpu.matmul %103, %105, %cst_119 {dimension_numbers = #tpu.dot_dimension_numbers<[1], [0], [0], [1], [0, 0, 1, 1], [], []>} : vector<128x128xbf16>, vector<128x128xbf16>, vector<128x128xf32> -> vector<128x128xf32>
    %107 = arith.addf %101, %106 : vector<128x128xf32>
    %c1_120 = arith.constant 1 : index
    %c144_121 = arith.constant 144 : index
    %c0_122 = arith.constant 0 : index
    %108 = vector.load %arg8[%c1_120, %c144_121, %c0_122] : memref<3x288x128xbf16, #tpu.memory_space<vmem>>, vector<1x128x128xbf16>
    %109 = vector.shape_cast %108 : vector<1x128x128xbf16> to vector<128x128xbf16>
    %c4_123 = arith.constant 4 : index
    %c0_124 = arith.constant 0 : index
    %c0_125 = arith.constant 0 : index
    %110 = vector.load %arg2[%c4_123, %c0_124, %c0_125] : memref<9x128x128xbf16, #tpu.memory_space<vmem>>, vector<1x128x128xbf16>
    %111 = vector.shape_cast %110 : vector<1x128x128xbf16> to vector<128x128xbf16>
    %cst_126 = arith.constant dense<0.000000e+00> : vector<128x128xf32>
    %112 = tpu.matmul %109, %111, %cst_126 {dimension_numbers = #tpu.dot_dimension_numbers<[1], [0], [0], [1], [0, 0, 1, 1], [], []>} : vector<128x128xbf16>, vector<128x128xbf16>, vector<128x128xf32> -> vector<128x128xf32>
    %113 = arith.addf %107, %112 : vector<128x128xf32>
    %c2_127 = arith.constant 2 : index
    %c144_128 = arith.constant 144 : index
    %c0_129 = arith.constant 0 : index
    %114 = vector.load %arg8[%c2_127, %c144_128, %c0_129] : memref<3x288x128xbf16, #tpu.memory_space<vmem>>, vector<1x128x128xbf16>
    %115 = vector.shape_cast %114 : vector<1x128x128xbf16> to vector<128x128xbf16>
    %c5_130 = arith.constant 5 : index
    %c0_131 = arith.constant 0 : index
    %c0_132 = arith.constant 0 : index
    %116 = vector.load %arg2[%c5_130, %c0_131, %c0_132] : memref<9x128x128xbf16, #tpu.memory_space<vmem>>, vector<1x128x128xbf16>
    %117 = vector.shape_cast %116 : vector<1x128x128xbf16> to vector<128x128xbf16>
    %cst_133 = arith.constant dense<0.000000e+00> : vector<128x128xf32>
    %118 = tpu.matmul %115, %117, %cst_133 {dimension_numbers = #tpu.dot_dimension_numbers<[1], [0], [0], [1], [0, 0, 1, 1], [], []>} : vector<128x128xbf16>, vector<128x128xbf16>, vector<128x128xf32> -> vector<128x128xf32>
    %119 = arith.addf %113, %118 : vector<128x128xf32>
    %c0_134 = arith.constant 0 : index
    %c160 = arith.constant 160 : index
    %c0_135 = arith.constant 0 : index
    %120 = vector.load %arg8[%c0_134, %c160, %c0_135] : memref<3x288x128xbf16, #tpu.memory_space<vmem>>, vector<1x128x128xbf16>
    %121 = vector.shape_cast %120 : vector<1x128x128xbf16> to vector<128x128xbf16>
    %c6_136 = arith.constant 6 : index
    %c0_137 = arith.constant 0 : index
    %c0_138 = arith.constant 0 : index
    %122 = vector.load %arg2[%c6_136, %c0_137, %c0_138] : memref<9x128x128xbf16, #tpu.memory_space<vmem>>, vector<1x128x128xbf16>
    %123 = vector.shape_cast %122 : vector<1x128x128xbf16> to vector<128x128xbf16>
    %cst_139 = arith.constant dense<0.000000e+00> : vector<128x128xf32>
    %124 = tpu.matmul %121, %123, %cst_139 {dimension_numbers = #tpu.dot_dimension_numbers<[1], [0], [0], [1], [0, 0, 1, 1], [], []>} : vector<128x128xbf16>, vector<128x128xbf16>, vector<128x128xf32> -> vector<128x128xf32>
    %125 = arith.addf %119, %124 : vector<128x128xf32>
    %c1_140 = arith.constant 1 : index
    %c160_141 = arith.constant 160 : index
    %c0_142 = arith.constant 0 : index
    %126 = vector.load %arg8[%c1_140, %c160_141, %c0_142] : memref<3x288x128xbf16, #tpu.memory_space<vmem>>, vector<1x128x128xbf16>
    %127 = vector.shape_cast %126 : vector<1x128x128xbf16> to vector<128x128xbf16>
    %c7_143 = arith.constant 7 : index
    %c0_144 = arith.constant 0 : index
    %c0_145 = arith.constant 0 : index
    %128 = vector.load %arg2[%c7_143, %c0_144, %c0_145] : memref<9x128x128xbf16, #tpu.memory_space<vmem>>, vector<1x128x128xbf16>
    %129 = vector.shape_cast %128 : vector<1x128x128xbf16> to vector<128x128xbf16>
    %cst_146 = arith.constant dense<0.000000e+00> : vector<128x128xf32>
    %130 = tpu.matmul %127, %129, %cst_146 {dimension_numbers = #tpu.dot_dimension_numbers<[1], [0], [0], [1], [0, 0, 1, 1], [], []>} : vector<128x128xbf16>, vector<128x128xbf16>, vector<128x128xf32> -> vector<128x128xf32>
    %131 = arith.addf %125, %130 : vector<128x128xf32>
    %c2_147 = arith.constant 2 : index
    %c160_148 = arith.constant 160 : index
    %c0_149 = arith.constant 0 : index
    %132 = vector.load %arg8[%c2_147, %c160_148, %c0_149] : memref<3x288x128xbf16, #tpu.memory_space<vmem>>, vector<1x128x128xbf16>
    %133 = vector.shape_cast %132 : vector<1x128x128xbf16> to vector<128x128xbf16>
    %c8_150 = arith.constant 8 : index
    %c0_151 = arith.constant 0 : index
    %c0_152 = arith.constant 0 : index
    %134 = vector.load %arg2[%c8_150, %c0_151, %c0_152] : memref<9x128x128xbf16, #tpu.memory_space<vmem>>, vector<1x128x128xbf16>
    %135 = vector.shape_cast %134 : vector<1x128x128xbf16> to vector<128x128xbf16>
    %cst_153 = arith.constant dense<0.000000e+00> : vector<128x128xf32>
    %136 = tpu.matmul %133, %135, %cst_153 {dimension_numbers = #tpu.dot_dimension_numbers<[1], [0], [0], [1], [0, 0, 1, 1], [], []>} : vector<128x128xbf16>, vector<128x128xbf16>, vector<128x128xf32> -> vector<128x128xf32>
    %137 = arith.addf %131, %136 : vector<128x128xf32>
    %c0_154 = arith.constant 0 : index
    %c0_155 = arith.constant 0 : index
    %138 = vector.load %arg4[%c0_154, %c0_155] : memref<1x128xf32, #tpu.memory_space<vmem>>, vector<1x128xf32>
    %139 = vector.broadcast %138 : vector<1x128xf32> to vector<128x128xf32>
    %140 = arith.addf %137, %139 : vector<128x128xf32>
    %cst_156 = arith.constant 0.000000e+00 : f32
    %141 = vector.broadcast %cst_156 : f32 to vector<128x128xf32>
    %142 = arith.maximumf %140, %141 : vector<128x128xf32>
    %143 = vector.shape_cast %142 : vector<128x128xf32> to vector<8x16x128xf32>
    %144 = arith.truncf %143 : vector<8x16x128xf32> to vector<8x16x128xbf16>
    %c9 = arith.constant 9 : index
    %c16_157 = arith.constant 16 : index
    %c0_158 = arith.constant 0 : index
    %145 = vector.load %arg7[%c9, %c16_157, %c0_158] : memref<18x48x128xbf16, #tpu.memory_space<vmem>>, vector<8x16x128xbf16>
    tpu.vector_store %arg7[%c9, %c16_157, %c0_158], %144 {strides = array<i32>} : memref<18x48x128xbf16, #tpu.memory_space<vmem>>, vector<8x16x128xbf16>,
    %c0_159 = arith.constant 0 : index
    %c15_160 = arith.constant 15 : index
    %c0_161 = arith.constant 0 : index
    %146 = vector.load %arg7[%c0_159, %c15_160, %c0_161] : memref<18x48x128xbf16, #tpu.memory_space<vmem>>, vector<18x16x128xbf16>
    %147 = vector.shape_cast %146 : vector<18x16x128xbf16> to vector<288x128xbf16>
    %c0_162 = arith.constant 0 : index
    %c0_163 = arith.constant 0 : index
    %c0_164 = arith.constant 0 : index
    %148 = vector.load %arg8[%c0_162, %c0_163, %c0_164] : memref<3x288x128xbf16, #tpu.memory_space<vmem>>, vector<1x288x128xbf16>
    %149 = vector.shape_cast %148 : vector<1x288x128xbf16> to vector<288x128xbf16>
    %150 = vector.shape_cast %147 : vector<288x128xbf16> to vector<1x288x128xbf16>
    tpu.vector_store %arg8[%c0_162, %c0_163, %c0_164], %150 {strides = array<i32>} : memref<3x288x128xbf16, #tpu.memory_space<vmem>>, vector<1x288x128xbf16>,
    %c0_165 = arith.constant 0 : index
    %c16_166 = arith.constant 16 : index
    %c0_167 = arith.constant 0 : index
    %151 = vector.load %arg7[%c0_165, %c16_166, %c0_167] : memref<18x48x128xbf16, #tpu.memory_space<vmem>>, vector<18x16x128xbf16>
    %152 = vector.shape_cast %151 : vector<18x16x128xbf16> to vector<288x128xbf16>
    %c1_168 = arith.constant 1 : index
    %c0_169 = arith.constant 0 : index
    %c0_170 = arith.constant 0 : index
    %153 = vector.load %arg8[%c1_168, %c0_169, %c0_170] : memref<3x288x128xbf16, #tpu.memory_space<vmem>>, vector<1x288x128xbf16>
    %154 = vector.shape_cast %153 : vector<1x288x128xbf16> to vector<288x128xbf16>
    %155 = vector.shape_cast %152 : vector<288x128xbf16> to vector<1x288x128xbf16>
    tpu.vector_store %arg8[%c1_168, %c0_169, %c0_170], %155 {strides = array<i32>} : memref<3x288x128xbf16, #tpu.memory_space<vmem>>, vector<1x288x128xbf16>,
    %c0_171 = arith.constant 0 : index
    %c17_172 = arith.constant 17 : index
    %c0_173 = arith.constant 0 : index
    %156 = vector.load %arg7[%c0_171, %c17_172, %c0_173] : memref<18x48x128xbf16, #tpu.memory_space<vmem>>, vector<18x16x128xbf16>
    %157 = vector.shape_cast %156 : vector<18x16x128xbf16> to vector<288x128xbf16>
    %c2_174 = arith.constant 2 : index
    %c0_175 = arith.constant 0 : index
    %c0_176 = arith.constant 0 : index
    %158 = vector.load %arg8[%c2_174, %c0_175, %c0_176] : memref<3x288x128xbf16, #tpu.memory_space<vmem>>, vector<1x288x128xbf16>
    %159 = vector.shape_cast %158 : vector<1x288x128xbf16> to vector<288x128xbf16>
    %160 = vector.shape_cast %157 : vector<288x128xbf16> to vector<1x288x128xbf16>
    tpu.vector_store %arg8[%c2_174, %c0_175, %c0_176], %160 {strides = array<i32>} : memref<3x288x128xbf16, #tpu.memory_space<vmem>>, vector<1x288x128xbf16>,
    %c0_177 = arith.constant 0 : index
    %c0_178 = arith.constant 0 : index
    %c0_179 = arith.constant 0 : index
    %161 = vector.load %arg8[%c0_177, %c0_178, %c0_179] : memref<3x288x128xbf16, #tpu.memory_space<vmem>>, vector<1x128x128xbf16>
    %162 = vector.shape_cast %161 : vector<1x128x128xbf16> to vector<128x128xbf16>
    %c0_180 = arith.constant 0 : index
    %c0_181 = arith.constant 0 : index
    %c0_182 = arith.constant 0 : index
    %163 = vector.load %arg3[%c0_180, %c0_181, %c0_182] : memref<9x128x128xbf16, #tpu.memory_space<vmem>>, vector<1x128x128xbf16>
    %164 = vector.shape_cast %163 : vector<1x128x128xbf16> to vector<128x128xbf16>
    %cst_183 = arith.constant dense<0.000000e+00> : vector<128x128xf32>
    %165 = tpu.matmul %162, %164, %cst_183 {dimension_numbers = #tpu.dot_dimension_numbers<[1], [0], [0], [1], [0, 0, 1, 1], [], []>} : vector<128x128xbf16>, vector<128x128xbf16>, vector<128x128xf32> -> vector<128x128xf32>
    %c1_184 = arith.constant 1 : index
    %c0_185 = arith.constant 0 : index
    %c0_186 = arith.constant 0 : index
    %166 = vector.load %arg8[%c1_184, %c0_185, %c0_186] : memref<3x288x128xbf16, #tpu.memory_space<vmem>>, vector<1x128x128xbf16>
    %167 = vector.shape_cast %166 : vector<1x128x128xbf16> to vector<128x128xbf16>
    %c1_187 = arith.constant 1 : index
    %c0_188 = arith.constant 0 : index
    %c0_189 = arith.constant 0 : index
    %168 = vector.load %arg3[%c1_187, %c0_188, %c0_189] : memref<9x128x128xbf16, #tpu.memory_space<vmem>>, vector<1x128x128xbf16>
    %169 = vector.shape_cast %168 : vector<1x128x128xbf16> to vector<128x128xbf16>
    %cst_190 = arith.constant dense<0.000000e+00> : vector<128x128xf32>
    %170 = tpu.matmul %167, %169, %cst_190 {dimension_numbers = #tpu.dot_dimension_numbers<[1], [0], [0], [1], [0, 0, 1, 1], [], []>} : vector<128x128xbf16>, vector<128x128xbf16>, vector<128x128xf32> -> vector<128x128xf32>
    %171 = arith.addf %165, %170 : vector<128x128xf32>
    %c2_191 = arith.constant 2 : index
    %c0_192 = arith.constant 0 : index
    %c0_193 = arith.constant 0 : index
    %172 = vector.load %arg8[%c2_191, %c0_192, %c0_193] : memref<3x288x128xbf16, #tpu.memory_space<vmem>>, vector<1x128x128xbf16>
    %173 = vector.shape_cast %172 : vector<1x128x128xbf16> to vector<128x128xbf16>
    %c2_194 = arith.constant 2 : index
    %c0_195 = arith.constant 0 : index
    %c0_196 = arith.constant 0 : index
    %174 = vector.load %arg3[%c2_194, %c0_195, %c0_196] : memref<9x128x128xbf16, #tpu.memory_space<vmem>>, vector<1x128x128xbf16>
    %175 = vector.shape_cast %174 : vector<1x128x128xbf16> to vector<128x128xbf16>
    %cst_197 = arith.constant dense<0.000000e+00> : vector<128x128xf32>
    %176 = tpu.matmul %173, %175, %cst_197 {dimension_numbers = #tpu.dot_dimension_numbers<[1], [0], [0], [1], [0, 0, 1, 1], [], []>} : vector<128x128xbf16>, vector<128x128xbf16>, vector<128x128xf32> -> vector<128x128xf32>
    %177 = arith.addf %171, %176 : vector<128x128xf32>
    %c0_198 = arith.constant 0 : index
    %c16_199 = arith.constant 16 : index
    %c0_200 = arith.constant 0 : index
    %178 = vector.load %arg8[%c0_198, %c16_199, %c0_200] : memref<3x288x128xbf16, #tpu.memory_space<vmem>>, vector<1x128x128xbf16>
    %179 = vector.shape_cast %178 : vector<1x128x128xbf16> to vector<128x128xbf16>
    %c3_201 = arith.constant 3 : index
    %c0_202 = arith.constant 0 : index
    %c0_203 = arith.constant 0 : index
    %180 = vector.load %arg3[%c3_201, %c0_202, %c0_203] : memref<9x128x128xbf16, #tpu.memory_space<vmem>>, vector<1x128x128xbf16>
    %181 = vector.shape_cast %180 : vector<1x128x128xbf16> to vector<128x128xbf16>
    %cst_204 = arith.constant dense<0.000000e+00> : vector<128x128xf32>
    %182 = tpu.matmul %179, %181, %cst_204 {dimension_numbers = #tpu.dot_dimension_numbers<[1], [0], [0], [1], [0, 0, 1, 1], [], []>} : vector<128x128xbf16>, vector<128x128xbf16>, vector<128x128xf32> -> vector<128x128xf32>
    %183 = arith.addf %177, %182 : vector<128x128xf32>
    %c1_205 = arith.constant 1 : index
    %c16_206 = arith.constant 16 : index
    %c0_207 = arith.constant 0 : index
    %184 = vector.load %arg8[%c1_205, %c16_206, %c0_207] : memref<3x288x128xbf16, #tpu.memory_space<vmem>>, vector<1x128x128xbf16>
    %185 = vector.shape_cast %184 : vector<1x128x128xbf16> to vector<128x128xbf16>
    %c4_208 = arith.constant 4 : index
    %c0_209 = arith.constant 0 : index
    %c0_210 = arith.constant 0 : index
    %186 = vector.load %arg3[%c4_208, %c0_209, %c0_210] : memref<9x128x128xbf16, #tpu.memory_space<vmem>>, vector<1x128x128xbf16>
    %187 = vector.shape_cast %186 : vector<1x128x128xbf16> to vector<128x128xbf16>
    %cst_211 = arith.constant dense<0.000000e+00> : vector<128x128xf32>
    %188 = tpu.matmul %185, %187, %cst_211 {dimension_numbers = #tpu.dot_dimension_numbers<[1], [0], [0], [1], [0, 0, 1, 1], [], []>} : vector<128x128xbf16>, vector<128x128xbf16>, vector<128x128xf32> -> vector<128x128xf32>
    %189 = arith.addf %183, %188 : vector<128x128xf32>
    %c2_212 = arith.constant 2 : index
    %c16_213 = arith.constant 16 : index
    %c0_214 = arith.constant 0 : index
    %190 = vector.load %arg8[%c2_212, %c16_213, %c0_214] : memref<3x288x128xbf16, #tpu.memory_space<vmem>>, vector<1x128x128xbf16>
    %191 = vector.shape_cast %190 : vector<1x128x128xbf16> to vector<128x128xbf16>
    %c5_215 = arith.constant 5 : index
    %c0_216 = arith.constant 0 : index
    %c0_217 = arith.constant 0 : index
    %192 = vector.load %arg3[%c5_215, %c0_216, %c0_217] : memref<9x128x128xbf16, #tpu.memory_space<vmem>>, vector<1x128x128xbf16>
    %193 = vector.shape_cast %192 : vector<1x128x128xbf16> to vector<128x128xbf16>
    %cst_218 = arith.constant dense<0.000000e+00> : vector<128x128xf32>
    %194 = tpu.matmul %191, %193, %cst_218 {dimension_numbers = #tpu.dot_dimension_numbers<[1], [0], [0], [1], [0, 0, 1, 1], [], []>} : vector<128x128xbf16>, vector<128x128xbf16>, vector<128x128xf32> -> vector<128x128xf32>
    %195 = arith.addf %189, %194 : vector<128x128xf32>
    %c0_219 = arith.constant 0 : index
    %c32_220 = arith.constant 32 : index
    %c0_221 = arith.constant 0 : index
    %196 = vector.load %arg8[%c0_219, %c32_220, %c0_221] : memref<3x288x128xbf16, #tpu.memory_space<vmem>>, vector<1x128x128xbf16>
    %197 = vector.shape_cast %196 : vector<1x128x128xbf16> to vector<128x128xbf16>
    %c6_222 = arith.constant 6 : index
    %c0_223 = arith.constant 0 : index
    %c0_224 = arith.constant 0 : index
    %198 = vector.load %arg3[%c6_222, %c0_223, %c0_224] : memref<9x128x128xbf16, #tpu.memory_space<vmem>>, vector<1x128x128xbf16>
    %199 = vector.shape_cast %198 : vector<1x128x128xbf16> to vector<128x128xbf16>
    %cst_225 = arith.constant dense<0.000000e+00> : vector<128x128xf32>
    %200 = tpu.matmul %197, %199, %cst_225 {dimension_numbers = #tpu.dot_dimension_numbers<[1], [0], [0], [1], [0, 0, 1, 1], [], []>} : vector<128x128xbf16>, vector<128x128xbf16>, vector<128x128xf32> -> vector<128x128xf32>
    %201 = arith.addf %195, %200 : vector<128x128xf32>
    %c1_226 = arith.constant 1 : index
    %c32_227 = arith.constant 32 : index
    %c0_228 = arith.constant 0 : index
    %202 = vector.load %arg8[%c1_226, %c32_227, %c0_228] : memref<3x288x128xbf16, #tpu.memory_space<vmem>>, vector<1x128x128xbf16>
    %203 = vector.shape_cast %202 : vector<1x128x128xbf16> to vector<128x128xbf16>
    %c7_229 = arith.constant 7 : index
    %c0_230 = arith.constant 0 : index
    %c0_231 = arith.constant 0 : index
    %204 = vector.load %arg3[%c7_229, %c0_230, %c0_231] : memref<9x128x128xbf16, #tpu.memory_space<vmem>>, vector<1x128x128xbf16>
    %205 = vector.shape_cast %204 : vector<1x128x128xbf16> to vector<128x128xbf16>
    %cst_232 = arith.constant dense<0.000000e+00> : vector<128x128xf32>
    %206 = tpu.matmul %203, %205, %cst_232 {dimension_numbers = #tpu.dot_dimension_numbers<[1], [0], [0], [1], [0, 0, 1, 1], [], []>} : vector<128x128xbf16>, vector<128x128xbf16>, vector<128x128xf32> -> vector<128x128xf32>
    %207 = arith.addf %201, %206 : vector<128x128xf32>
    %c2_233 = arith.constant 2 : index
    %c32_234 = arith.constant 32 : index
    %c0_235 = arith.constant 0 : index
    %208 = vector.load %arg8[%c2_233, %c32_234, %c0_235] : memref<3x288x128xbf16, #tpu.memory_space<vmem>>, vector<1x128x128xbf16>
    %209 = vector.shape_cast %208 : vector<1x128x128xbf16> to vector<128x128xbf16>
    %c8_236 = arith.constant 8 : index
    %c0_237 = arith.constant 0 : index
    %c0_238 = arith.constant 0 : index
    %210 = vector.load %arg3[%c8_236, %c0_237, %c0_238] : memref<9x128x128xbf16, #tpu.memory_space<vmem>>, vector<1x128x128xbf16>
    %211 = vector.shape_cast %210 : vector<1x128x128xbf16> to vector<128x128xbf16>
    %cst_239 = arith.constant dense<0.000000e+00> : vector<128x128xf32>
    %212 = tpu.matmul %209, %211, %cst_239 {dimension_numbers = #tpu.dot_dimension_numbers<[1], [0], [0], [1], [0, 0, 1, 1], [], []>} : vector<128x128xbf16>, vector<128x128xbf16>, vector<128x128xf32> -> vector<128x128xf32>
    %213 = arith.addf %207, %212 : vector<128x128xf32>
    %c0_240 = arith.constant 0 : index
    %c0_241 = arith.constant 0 : index
    %214 = vector.load %arg5[%c0_240, %c0_241] : memref<1x128xf32, #tpu.memory_space<vmem>>, vector<1x128xf32>
    %215 = vector.broadcast %214 : vector<1x128xf32> to vector<128x128xf32>
    %216 = arith.addf %213, %215 : vector<128x128xf32>
    %217 = vector.shape_cast %216 : vector<128x128xf32> to vector<8x16x128xf32>
    %c0_242 = arith.constant 0 : index
    %c0_243 = arith.constant 0 : index
    %c0_244 = arith.constant 0 : index
    %c0_245 = arith.constant 0 : index
    %218 = vector.load %arg1[%c0_242, %c0_243, %c0_244, %c0_245] : memref<1x16x16x128xbf16, #tpu.memory_space<vmem>>, vector<1x8x16x128xbf16>
    %219 = vector.shape_cast %218 : vector<1x8x16x128xbf16> to vector<8x16x128xbf16>
    %220 = arith.extf %219 : vector<8x16x128xbf16> to vector<8x16x128xf32>
    %221 = arith.addf %217, %220 : vector<8x16x128xf32>
    %cst_246 = arith.constant 0.000000e+00 : f32
    %222 = vector.broadcast %cst_246 : f32 to vector<8x16x128xf32>
    %223 = arith.maximumf %221, %222 : vector<8x16x128xf32>
    %224 = arith.truncf %223 : vector<8x16x128xf32> to vector<8x16x128xbf16>
    %c0_247 = arith.constant 0 : index
    %c0_248 = arith.constant 0 : index
    %c0_249 = arith.constant 0 : index
    %c0_250 = arith.constant 0 : index
    %225 = vector.load %arg6[%c0_247, %c0_248, %c0_249, %c0_250] : memref<1x16x16x128xbf16, #tpu.memory_space<vmem>>, vector<1x8x16x128xbf16>
    %226 = vector.shape_cast %225 : vector<1x8x16x128xbf16> to vector<8x16x128xbf16>
    %227 = vector.shape_cast %224 : vector<8x16x128xbf16> to vector<1x8x16x128xbf16>
    tpu.vector_store %arg6[%c0_247, %c0_248, %c0_249, %c0_250], %227 {strides = array<i32>} : memref<1x16x16x128xbf16, #tpu.memory_space<vmem>>, vector<1x8x16x128xbf16>,
    %c0_251 = arith.constant 0 : index
    %c128_252 = arith.constant 128 : index
    %c0_253 = arith.constant 0 : index
    %228 = vector.load %arg8[%c0_251, %c128_252, %c0_253] : memref<3x288x128xbf16, #tpu.memory_space<vmem>>, vector<1x128x128xbf16>
    %229 = vector.shape_cast %228 : vector<1x128x128xbf16> to vector<128x128xbf16>
    %c0_254 = arith.constant 0 : index
    %c0_255 = arith.constant 0 : index
    %c0_256 = arith.constant 0 : index
    %230 = vector.load %arg3[%c0_254, %c0_255, %c0_256] : memref<9x128x128xbf16, #tpu.memory_space<vmem>>, vector<1x128x128xbf16>
    %231 = vector.shape_cast %230 : vector<1x128x128xbf16> to vector<128x128xbf16>
    %cst_257 = arith.constant dense<0.000000e+00> : vector<128x128xf32>
    %232 = tpu.matmul %229, %231, %cst_257 {dimension_numbers = #tpu.dot_dimension_numbers<[1], [0], [0], [1], [0, 0, 1, 1], [], []>} : vector<128x128xbf16>, vector<128x128xbf16>, vector<128x128xf32> -> vector<128x128xf32>
    %c1_258 = arith.constant 1 : index
    %c128_259 = arith.constant 128 : index
    %c0_260 = arith.constant 0 : index
    %233 = vector.load %arg8[%c1_258, %c128_259, %c0_260] : memref<3x288x128xbf16, #tpu.memory_space<vmem>>, vector<1x128x128xbf16>
    %234 = vector.shape_cast %233 : vector<1x128x128xbf16> to vector<128x128xbf16>
    %c1_261 = arith.constant 1 : index
    %c0_262 = arith.constant 0 : index
    %c0_263 = arith.constant 0 : index
    %235 = vector.load %arg3[%c1_261, %c0_262, %c0_263] : memref<9x128x128xbf16, #tpu.memory_space<vmem>>, vector<1x128x128xbf16>
    %236 = vector.shape_cast %235 : vector<1x128x128xbf16> to vector<128x128xbf16>
    %cst_264 = arith.constant dense<0.000000e+00> : vector<128x128xf32>
    %237 = tpu.matmul %234, %236, %cst_264 {dimension_numbers = #tpu.dot_dimension_numbers<[1], [0], [0], [1], [0, 0, 1, 1], [], []>} : vector<128x128xbf16>, vector<128x128xbf16>, vector<128x128xf32> -> vector<128x128xf32>
    %238 = arith.addf %232, %237 : vector<128x128xf32>
    %c2_265 = arith.constant 2 : index
    %c128_266 = arith.constant 128 : index
    %c0_267 = arith.constant 0 : index
    %239 = vector.load %arg8[%c2_265, %c128_266, %c0_267] : memref<3x288x128xbf16, #tpu.memory_space<vmem>>, vector<1x128x128xbf16>
    %240 = vector.shape_cast %239 : vector<1x128x128xbf16> to vector<128x128xbf16>
    %c2_268 = arith.constant 2 : index
    %c0_269 = arith.constant 0 : index
    %c0_270 = arith.constant 0 : index
    %241 = vector.load %arg3[%c2_268, %c0_269, %c0_270] : memref<9x128x128xbf16, #tpu.memory_space<vmem>>, vector<1x128x128xbf16>
    %242 = vector.shape_cast %241 : vector<1x128x128xbf16> to vector<128x128xbf16>
    %cst_271 = arith.constant dense<0.000000e+00> : vector<128x128xf32>
    %243 = tpu.matmul %240, %242, %cst_271 {dimension_numbers = #tpu.dot_dimension_numbers<[1], [0], [0], [1], [0, 0, 1, 1], [], []>} : vector<128x128xbf16>, vector<128x128xbf16>, vector<128x128xf32> -> vector<128x128xf32>
    %244 = arith.addf %238, %243 : vector<128x128xf32>
    %c0_272 = arith.constant 0 : index
    %c144_273 = arith.constant 144 : index
    %c0_274 = arith.constant 0 : index
    %245 = vector.load %arg8[%c0_272, %c144_273, %c0_274] : memref<3x288x128xbf16, #tpu.memory_space<vmem>>, vector<1x128x128xbf16>
    %246 = vector.shape_cast %245 : vector<1x128x128xbf16> to vector<128x128xbf16>
    %c3_275 = arith.constant 3 : index
    %c0_276 = arith.constant 0 : index
    %c0_277 = arith.constant 0 : index
    %247 = vector.load %arg3[%c3_275, %c0_276, %c0_277] : memref<9x128x128xbf16, #tpu.memory_space<vmem>>, vector<1x128x128xbf16>
    %248 = vector.shape_cast %247 : vector<1x128x128xbf16> to vector<128x128xbf16>
    %cst_278 = arith.constant dense<0.000000e+00> : vector<128x128xf32>
    %249 = tpu.matmul %246, %248, %cst_278 {dimension_numbers = #tpu.dot_dimension_numbers<[1], [0], [0], [1], [0, 0, 1, 1], [], []>} : vector<128x128xbf16>, vector<128x128xbf16>, vector<128x128xf32> -> vector<128x128xf32>
    %250 = arith.addf %244, %249 : vector<128x128xf32>
    %c1_279 = arith.constant 1 : index
    %c144_280 = arith.constant 144 : index
    %c0_281 = arith.constant 0 : index
    %251 = vector.load %arg8[%c1_279, %c144_280, %c0_281] : memref<3x288x128xbf16, #tpu.memory_space<vmem>>, vector<1x128x128xbf16>
    %252 = vector.shape_cast %251 : vector<1x128x128xbf16> to vector<128x128xbf16>
    %c4_282 = arith.constant 4 : index
    %c0_283 = arith.constant 0 : index
    %c0_284 = arith.constant 0 : index
    %253 = vector.load %arg3[%c4_282, %c0_283, %c0_284] : memref<9x128x128xbf16, #tpu.memory_space<vmem>>, vector<1x128x128xbf16>
    %254 = vector.shape_cast %253 : vector<1x128x128xbf16> to vector<128x128xbf16>
    %cst_285 = arith.constant dense<0.000000e+00> : vector<128x128xf32>
    %255 = tpu.matmul %252, %254, %cst_285 {dimension_numbers = #tpu.dot_dimension_numbers<[1], [0], [0], [1], [0, 0, 1, 1], [], []>} : vector<128x128xbf16>, vector<128x128xbf16>, vector<128x128xf32> -> vector<128x128xf32>
    %256 = arith.addf %250, %255 : vector<128x128xf32>
    %c2_286 = arith.constant 2 : index
    %c144_287 = arith.constant 144 : index
    %c0_288 = arith.constant 0 : index
    %257 = vector.load %arg8[%c2_286, %c144_287, %c0_288] : memref<3x288x128xbf16, #tpu.memory_space<vmem>>, vector<1x128x128xbf16>
    %258 = vector.shape_cast %257 : vector<1x128x128xbf16> to vector<128x128xbf16>
    %c5_289 = arith.constant 5 : index
    %c0_290 = arith.constant 0 : index
    %c0_291 = arith.constant 0 : index
    %259 = vector.load %arg3[%c5_289, %c0_290, %c0_291] : memref<9x128x128xbf16, #tpu.memory_space<vmem>>, vector<1x128x128xbf16>
    %260 = vector.shape_cast %259 : vector<1x128x128xbf16> to vector<128x128xbf16>
    %cst_292 = arith.constant dense<0.000000e+00> : vector<128x128xf32>
    %261 = tpu.matmul %258, %260, %cst_292 {dimension_numbers = #tpu.dot_dimension_numbers<[1], [0], [0], [1], [0, 0, 1, 1], [], []>} : vector<128x128xbf16>, vector<128x128xbf16>, vector<128x128xf32> -> vector<128x128xf32>
    %262 = arith.addf %256, %261 : vector<128x128xf32>
    %c0_293 = arith.constant 0 : index
    %c160_294 = arith.constant 160 : index
    %c0_295 = arith.constant 0 : index
    %263 = vector.load %arg8[%c0_293, %c160_294, %c0_295] : memref<3x288x128xbf16, #tpu.memory_space<vmem>>, vector<1x128x128xbf16>
    %264 = vector.shape_cast %263 : vector<1x128x128xbf16> to vector<128x128xbf16>
    %c6_296 = arith.constant 6 : index
    %c0_297 = arith.constant 0 : index
    %c0_298 = arith.constant 0 : index
    %265 = vector.load %arg3[%c6_296, %c0_297, %c0_298] : memref<9x128x128xbf16, #tpu.memory_space<vmem>>, vector<1x128x128xbf16>
    %266 = vector.shape_cast %265 : vector<1x128x128xbf16> to vector<128x128xbf16>
    %cst_299 = arith.constant dense<0.000000e+00> : vector<128x128xf32>
    %267 = tpu.matmul %264, %266, %cst_299 {dimension_numbers = #tpu.dot_dimension_numbers<[1], [0], [0], [1], [0, 0, 1, 1], [], []>} : vector<128x128xbf16>, vector<128x128xbf16>, vector<128x128xf32> -> vector<128x128xf32>
    %268 = arith.addf %262, %267 : vector<128x128xf32>
    %c1_300 = arith.constant 1 : index
    %c160_301 = arith.constant 160 : index
    %c0_302 = arith.constant 0 : index
    %269 = vector.load %arg8[%c1_300, %c160_301, %c0_302] : memref<3x288x128xbf16, #tpu.memory_space<vmem>>, vector<1x128x128xbf16>
    %270 = vector.shape_cast %269 : vector<1x128x128xbf16> to vector<128x128xbf16>
    %c7_303 = arith.constant 7 : index
    %c0_304 = arith.constant 0 : index
    %c0_305 = arith.constant 0 : index
    %271 = vector.load %arg3[%c7_303, %c0_304, %c0_305] : memref<9x128x128xbf16, #tpu.memory_space<vmem>>, vector<1x128x128xbf16>
    %272 = vector.shape_cast %271 : vector<1x128x128xbf16> to vector<128x128xbf16>
    %cst_306 = arith.constant dense<0.000000e+00> : vector<128x128xf32>
    %273 = tpu.matmul %270, %272, %cst_306 {dimension_numbers = #tpu.dot_dimension_numbers<[1], [0], [0], [1], [0, 0, 1, 1], [], []>} : vector<128x128xbf16>, vector<128x128xbf16>, vector<128x128xf32> -> vector<128x128xf32>
    %274 = arith.addf %268, %273 : vector<128x128xf32>
    %c2_307 = arith.constant 2 : index
    %c160_308 = arith.constant 160 : index
    %c0_309 = arith.constant 0 : index
    %275 = vector.load %arg8[%c2_307, %c160_308, %c0_309] : memref<3x288x128xbf16, #tpu.memory_space<vmem>>, vector<1x128x128xbf16>
    %276 = vector.shape_cast %275 : vector<1x128x128xbf16> to vector<128x128xbf16>
    %c8_310 = arith.constant 8 : index
    %c0_311 = arith.constant 0 : index
    %c0_312 = arith.constant 0 : index
    %277 = vector.load %arg3[%c8_310, %c0_311, %c0_312] : memref<9x128x128xbf16, #tpu.memory_space<vmem>>, vector<1x128x128xbf16>
    %278 = vector.shape_cast %277 : vector<1x128x128xbf16> to vector<128x128xbf16>
    %cst_313 = arith.constant dense<0.000000e+00> : vector<128x128xf32>
    %279 = tpu.matmul %276, %278, %cst_313 {dimension_numbers = #tpu.dot_dimension_numbers<[1], [0], [0], [1], [0, 0, 1, 1], [], []>} : vector<128x128xbf16>, vector<128x128xbf16>, vector<128x128xf32> -> vector<128x128xf32>
    %280 = arith.addf %274, %279 : vector<128x128xf32>
    %c0_314 = arith.constant 0 : index
    %c0_315 = arith.constant 0 : index
    %281 = vector.load %arg5[%c0_314, %c0_315] : memref<1x128xf32, #tpu.memory_space<vmem>>, vector<1x128xf32>
    %282 = vector.broadcast %281 : vector<1x128xf32> to vector<128x128xf32>
    %283 = arith.addf %280, %282 : vector<128x128xf32>
    %284 = vector.shape_cast %283 : vector<128x128xf32> to vector<8x16x128xf32>
    %c0_316 = arith.constant 0 : index
    %c8_317 = arith.constant 8 : index
    %c0_318 = arith.constant 0 : index
    %c0_319 = arith.constant 0 : index
    %285 = vector.load %arg1[%c0_316, %c8_317, %c0_318, %c0_319] : memref<1x16x16x128xbf16, #tpu.memory_space<vmem>>, vector<1x8x16x128xbf16>
    %286 = vector.shape_cast %285 : vector<1x8x16x128xbf16> to vector<8x16x128xbf16>
    %287 = arith.extf %286 : vector<8x16x128xbf16> to vector<8x16x128xf32>
    %288 = arith.addf %284, %287 : vector<8x16x128xf32>
    %cst_320 = arith.constant 0.000000e+00 : f32
    %289 = vector.broadcast %cst_320 : f32 to vector<8x16x128xf32>
    %290 = arith.maximumf %288, %289 : vector<8x16x128xf32>
    %291 = arith.truncf %290 : vector<8x16x128xf32> to vector<8x16x128xbf16>
    %c0_321 = arith.constant 0 : index
    %c8_322 = arith.constant 8 : index
    %c0_323 = arith.constant 0 : index
    %c0_324 = arith.constant 0 : index
    %292 = vector.load %arg6[%c0_321, %c8_322, %c0_323, %c0_324] : memref<1x16x16x128xbf16, #tpu.memory_space<vmem>>, vector<1x8x16x128xbf16>
    %293 = vector.shape_cast %292 : vector<1x8x16x128xbf16> to vector<8x16x128xbf16>
    %294 = vector.shape_cast %291 : vector<8x16x128xbf16> to vector<1x8x16x128xbf16>
    tpu.vector_store %arg6[%c0_321, %c8_322, %c0_323, %c0_324], %294 {strides = array<i32>} : memref<1x16x16x128xbf16, #tpu.memory_space<vmem>>, vector<1x8x16x128xbf16>,
    return
  }
  func.func @transform_0(%arg0: i32) -> (i32, i32, i32, i32) {
    %c0_i32 = arith.constant 0 : i32
    %c0_i32_0 = arith.constant 0 : i32
    %c0_i32_1 = arith.constant 0 : i32
    %c0_i32_2 = arith.constant 0 : i32
    return %arg0, %c0_i32, %c0_i32_0, %c0_i32_1 : i32, i32, i32, i32
  }
  func.func @transform_1(%arg0: i32) -> (i32, i32, i32) {
    %c0_i32 = arith.constant 0 : i32
    %c0_i32_0 = arith.constant 0 : i32
    %c0_i32_1 = arith.constant 0 : i32
    %c0_i32_2 = arith.constant 0 : i32
    return %c0_i32, %c0_i32_0, %c0_i32_1 : i32, i32, i32
  }
  func.func @transform_2(%arg0: i32) -> (i32, i32, i32) {
    %c0_i32 = arith.constant 0 : i32
    %c0_i32_0 = arith.constant 0 : i32
    %c0_i32_1 = arith.constant 0 : i32
    %c0_i32_2 = arith.constant 0 : i32
    return %c0_i32, %c0_i32_0, %c0_i32_1 : i32, i32, i32
  }
  func.func @transform_3(%arg0: i32) -> (i32, i32) {
    %c0_i32 = arith.constant 0 : i32
    %c0_i32_0 = arith.constant 0 : i32
    %c0_i32_1 = arith.constant 0 : i32
    return %c0_i32, %c0_i32_0 : i32, i32
  }
  func.func @transform_4(%arg0: i32) -> (i32, i32) {
    %c0_i32 = arith.constant 0 : i32
    %c0_i32_0 = arith.constant 0 : i32
    %c0_i32_1 = arith.constant 0 : i32
    return %c0_i32, %c0_i32_0 : i32, i32
  }
  func.func @transform_5(%arg0: i32) -> (i32, i32, i32, i32) {
    %c0_i32 = arith.constant 0 : i32
    %c0_i32_0 = arith.constant 0 : i32
    %c0_i32_1 = arith.constant 0 : i32
    %c0_i32_2 = arith.constant 0 : i32
    return %arg0, %c0_i32, %c0_i32_0, %c0_i32_1 : i32, i32, i32, i32
  }
}

</mosaic_0001>

<llo_original>
// kernel: basic_block_forward.1
$region0: #{basic_block_forward.1}
  #allocation0 [shape = 'u32[]', space=smem, size = 0x4, offset = 0x4, fixed_abs, tag = 'smem constant byte address 0x4 - core index']
  #allocation1 [shape = 'u32[144,128]{1,0:T(1,128)}', space=vmem, size = 0x12000, scoped, tag = 'internal scratch']
  #allocation2 [shape = 'bf16[18,48,128]{2,1,0:T(16,128)(2,1)}', space=vmem, size = 0x36000, scoped, tag = 'scratch operand']
  #allocation3 [shape = 'bf16[3,288,128]{2,1,0:T(16,128)(2,1)}', space=vmem, size = 0x36000, scoped, tag = 'scratch operand']
  %s0 = inlined_call_operand.vmem [shape: bf16[2,16,16,128], index: 0, kind: input, shape index: {}]
  %s1 = inlined_call_operand.vmem [shape: bf16[9,128,128], index: 1, kind: input, shape index: {}]
  %s2 = inlined_call_operand.vmem [shape: bf16[9,128,128], index: 2, kind: input, shape index: {}]
  %s3 = inlined_call_operand.vmem [shape: f32[1,128], index: 3, kind: input, shape index: {}]
  %s4 = inlined_call_operand.vmem [shape: f32[1,128], index: 4, kind: input, shape index: {}]
  %s5 = inlined_call_operand.vmem [shape: bf16[2,16,16,128], index: 5, kind: output, shape index: {}]
  %s6 = sld [smem:[#allocation0]]
  $region53: #{basic_block_forward.1} parent=0
    _
  %s8 = ssub.s32 1, %s6
  %s9 = scalar_select 0, %s8, %s6
  loop: start=0, step=1, limit=4
  $region2: #{basic_block_forward.1} parent=0 // loop_pre_header
    _
  $region3: #{basic_block_forward.1} parent=0 // loop_header
    %s11 = sphi 0, %s15
    %p12 = scmp.ge.s32.totalorder %s11, 4
    %s21 = sphi 0, %s23
    %s24 = sphi 0, %s21
    %s25 = sphi 0, %s24
    %s41 = sphi 0, %s25
    %s45 = sphi 0, %s45
    %s47 = sphi 0, %s45
    %s48 = sphi 0, %s47
    %s62 = sphi 0, %s48
    %s66 = sphi 0, %s66
    %s68 = sphi 0, %s66
    %s69 = sphi 0, %s68
    %s83 = sphi 0, %s69
    %s87 = sphi 0, %s87
    %s89 = sphi 0, %s87
    %s90 = sphi 0, %s89
    %s104 = sphi 0, %s90
    %s108 = sphi 0, %s108
    %s110 = sphi 0, %s108
    %s111 = sphi 0, %s110
    %s125 = sphi 0, %s111
    %s131 = sphi 0, %s133
    %s134 = sphi 0, %s131
    %s135 = sphi 0, %s134
    %s151 = sphi 0, %s135
  $region4: #{basic_block_forward.1} parent=0 // loop_header_branch
    %14 = sbr.rel (%p12) target = $region8
  $region5: #{basic_block_forward.1} parent=0 // loop_body
    %s16 = ssub.s32 %s11, 1
    %s17 = ssub.s32 %s11, 2
    %s18 = sadd.s32 %s11, 1
    %s19 = ssub.s32 %s11, %s18
    %p20 = scmp.eq.s32.totalorder %s19, 0
    %s22 = sadd.s32 %s21, 1
    %s23 = scalar_select %p20, %s21, %s22
    %p26 = pneg %p20
    %p27 = scmp.eq.s32.totalorder %s11, 1
    %p28 = por %p26, %p27
    %p29 = scmp.ne.s32.totalorder %s21, %s24
    %p30 = scmp.eq.s32.totalorder %s11, 0
    %p31 = por %p29, %p30
    %p32 = scmp.ne.s32.totalorder %s21, %s24
    %p33 = scmp.eq.s32.totalorder %s16, 1
    %p34 = por %p32, %p33
    %p35 = scmp.ne.s32.totalorder %s24, %s25
    %p36 = scmp.eq.s32.totalorder %s16, 0
    %p37 = por %p35, %p36
    %p38 = scmp.ne.s32.totalorder %s24, %s25
    %p39 = scmp.eq.s32.totalorder %s17, 1
    %p40 = por %p38, %p39
    %p42 = scmp.ne.s32.totalorder %s25, %s41
    %p43 = scmp.eq.s32.totalorder %s17, 0
    %p44 = por %p42, %p43
    %s46 = sadd.s32 %s45, 1
    %p49 = scmp.eq.s32.totalorder %s11, 1
    %p50 = scmp.ne.s32.totalorder %s45, %s47
    %p51 = scmp.eq.s32.totalorder %s11, 0
    %p52 = por %p50, %p51
    %p53 = scmp.ne.s32.totalorder %s45, %s47
    %p54 = scmp.eq.s32.totalorder %s16, 1
    %p55 = por %p53, %p54
    %p56 = scmp.ne.s32.totalorder %s47, %s48
    %p57 = scmp.eq.s32.totalorder %s16, 0
    %p58 = por %p56, %p57
    %p59 = scmp.ne.s32.totalorder %s47, %s48
    %p60 = scmp.eq.s32.totalorder %s17, 1
    %p61 = por %p59, %p60
    %p63 = scmp.ne.s32.totalorder %s48, %s62
    %p64 = scmp.eq.s32.totalorder %s17, 0
    %p65 = por %p63, %p64
    %s67 = sadd.s32 %s66, 1
    %p70 = scmp.eq.s32.totalorder %s11, 1
    %p71 = scmp.ne.s32.totalorder %s66, %s68
    %p72 = scmp.eq.s32.totalorder %s11, 0
    %p73 = por %p71, %p72
    %p74 = scmp.ne.s32.totalorder %s66, %s68
    %p75 = scmp.eq.s32.totalorder %s16, 1
    %p76 = por %p74, %p75
    %p77 = scmp.ne.s32.totalorder %s68, %s69
    %p78 = scmp.eq.s32.totalorder %s16, 0
    %p79 = por %p77, %p78
    %p80 = scmp.ne.s32.totalorder %s68, %s69
    %p81 = scmp.eq.s32.totalorder %s17, 1
    %p82 = por %p80, %p81
    %p84 = scmp.ne.s32.totalorder %s69, %s83
    %p85 = scmp.eq.s32.totalorder %s17, 0
    %p86 = por %p84, %p85
    %s88 = sadd.s32 %s87, 1
    %p91 = scmp.eq.s32.totalorder %s11, 1
    %p92 = scmp.ne.s32.totalorder %s87, %s89
    %p93 = scmp.eq.s32.totalorder %s11, 0
    %p94 = por %p92, %p93
    %p95 = scmp.ne.s32.totalorder %s87, %s89
    %p96 = scmp.eq.s32.totalorder %s16, 1
    %p97 = por %p95, %p96
    %p98 = scmp.ne.s32.totalorder %s89, %s90
    %p99 = scmp.eq.s32.totalorder %s16, 0
    %p100 = por %p98, %p99
    %p101 = scmp.ne.s32.totalorder %s89, %s90
    %p102 = scmp.eq.s32.totalorder %s17, 1
    %p103 = por %p101, %p102
    %p105 = scmp.ne.s32.totalorder %s90, %s104
    %p106 = scmp.eq.s32.totalorder %s17, 0
    %p107 = por %p105, %p106
    %s109 = sadd.s32 %s108, 1
    %p112 = scmp.eq.s32.totalorder %s11, 1
    %p113 = scmp.ne.s32.totalorder %s108, %s110
    %p114 = scmp.eq.s32.totalorder %s11, 0
    %p115 = por %p113, %p114
    %p116 = scmp.ne.s32.totalorder %s108, %s110
    %p117 = scmp.eq.s32.totalorder %s16, 1
    %p118 = por %p116, %p117
    %p119 = scmp.ne.s32.totalorder %s110, %s111
    %p120 = scmp.eq.s32.totalorder %s16, 0
    %p121 = por %p119, %p120
    %p122 = scmp.ne.s32.totalorder %s110, %s111
    %p123 = scmp.eq.s32.totalorder %s17, 1
    %p124 = por %p122, %p123
    %p126 = scmp.ne.s32.totalorder %s111, %s125
    %p127 = scmp.eq.s32.totalorder %s17, 0
    %p128 = por %p126, %p127
    %s129 = ssub.s32 %s11, %s18
    %p130 = scmp.eq.s32.totalorder %s129, 0
    %s132 = sadd.s32 %s131, 1
    %s133 = scalar_select %p130, %s131, %s132
    %p136 = pneg %p130
    %p137 = scmp.eq.s32.totalorder %s11, 1
    %p138 = por %p136, %p137
    %p139 = scmp.ne.s32.totalorder %s131, %s134
    %p140 = scmp.eq.s32.totalorder %s11, 0
    %p141 = por %p139, %p140
    %p142 = scmp.ne.s32.totalorder %s131, %s134
    %p143 = scmp.eq.s32.totalorder %s16, 1
    %p144 = por %p142, %p143
    %p145 = scmp.ne.s32.totalorder %s134, %s135
    %p146 = scmp.eq.s32.totalorder %s16, 0
    %p147 = por %p145, %p146
    %p148 = scmp.ne.s32.totalorder %s134, %s135
    %p149 = scmp.eq.s32.totalorder %s17, 1
    %p150 = por %p148, %p149
    %p152 = scmp.ne.s32.totalorder %s135, %s151
    %p153 = scmp.eq.s32.totalorder %s17, 0
    %p154 = por %p152, %p153
    %p155 = scmp.le.s32.totalorder 1, %s11
    %p156 = scmp.lt.s32.totalorder %s11, 3
    %p157 = pnand %p155, %p156
    %p158 = pneg %p157
    // Predicated region
    $region9: #{basic_block_forward.1} parent=5 // pred_check
      _
    $region10: #{basic_block_forward.1} parent=5 // pred_check_branch
      %160 = sbr.rel (%p157) target = $region12
    $region11: #{basic_block_forward.1} parent=5 // pred_region
      %s161 = ssub.s32 %s11, 1
      // Predicated region
      $region13: #{basic_block_forward.1} parent=11 // pred_check
        %p162 = pneg %p58
      $region14: #{basic_block_forward.1} parent=11 // pred_check_branch
        %164 = sbr.rel (%p162) target = $region16
      $region15: #{basic_block_forward.1} parent=11 // pred_region
        _
      $region16: #{basic_block_forward.1} parent=11 // pred_fallthru
        _
      // Predicated region
      $region17: #{basic_block_forward.1} parent=11 // pred_check
        %p165 = pneg %p79
      $region18: #{basic_block_forward.1} parent=11 // pred_check_branch
        %167 = sbr.rel (%p165) target = $region20
      $region19: #{basic_block_forward.1} parent=11 // pred_region
        _
      $region20: #{basic_block_forward.1} parent=11 // pred_fallthru
        _
      // Predicated region
      $region21: #{basic_block_forward.1} parent=11 // pred_check
        %p168 = pneg %p100
      $region22: #{basic_block_forward.1} parent=11 // pred_check_branch
        %170 = sbr.rel (%p168) target = $region24
      $region23: #{basic_block_forward.1} parent=11 // pred_region
        _
      $region24: #{basic_block_forward.1} parent=11 // pred_fallthru
        _
      // Predicated region
      $region25: #{basic_block_forward.1} parent=11 // pred_check
        %p171 = pneg %p121
      $region26: #{basic_block_forward.1} parent=11 // pred_check_branch
        %173 = sbr.rel (%p171) target = $region28
      $region27: #{basic_block_forward.1} parent=11 // pred_region
        _
      $region28: #{basic_block_forward.1} parent=11 // pred_fallthru
        _
    $region12: #{basic_block_forward.1} parent=5 // pred_fallthru
      _
    %p174 = scmp.lt.s32.totalorder %s11, 2
    // Predicated region
    $region29: #{basic_block_forward.1} parent=5 // pred_check
      %p175 = pneg %p174
    $region30: #{basic_block_forward.1} parent=5 // pred_check_branch
      %177 = sbr.rel (%p175) target = $region32
    $region31: #{basic_block_forward.1} parent=5 // pred_region
      // Predicated region
      $region33: #{basic_block_forward.1} parent=31 // pred_check
        %p178 = pneg %p31
      $region34: #{basic_block_forward.1} parent=31 // pred_check_branch
        %180 = sbr.rel (%p178) target = $region36
      $region35: #{basic_block_forward.1} parent=31 // pred_region
        %p181 = scmp.lt.s32.totalorder %s11, 1
        %s182 = scalar_select %p181, %s11, 1
        %s183 = smul.addr %s182, 32
        %s184 = smul.addr %s183, 4
        %s185 = scalar_lea.vmem %s0, %s184
      $region36: #{basic_block_forward.1} parent=31 // pred_fallthru
        _
    $region32: #{basic_block_forward.1} parent=5 // pred_fallthru
      _
    %p186 = scmp.le.s32.totalorder 1, %s11
    %p187 = scmp.lt.s32.totalorder %s11, 3
    %p188 = pnand %p186, %p187
    %p189 = pneg %p188
    // Predicated region
    $region37: #{basic_block_forward.1} parent=5 // pred_check
      _
    $region38: #{basic_block_forward.1} parent=5 // pred_check_branch
      %191 = sbr.rel (%p188) target = $region40
    $region39: #{basic_block_forward.1} parent=5 // pred_region
      %s192 = ssub.s32 %s11, 1
      %p193 = scmp.lt.s32.totalorder %s16, 1
      %s194 = scalar_select %p193, %s16, 1
      %s195 = smul.addr %s194, 32
      %s196 = smul.addr %s195, 4
      %s197 = scalar_lea.vmem %s0, %s196
      %p198 = pneg %p37
      %p199 = pneg %p34
      %p200 = pneg %p58
      %p201 = pneg %p55
      %p202 = pneg %p79
      %p203 = pneg %p76
      %p204 = pneg %p100
      %p205 = pneg %p97
      %p206 = pneg %p121
      %p207 = pneg %p118
      %p208 = pneg %p147
      %p209 = pneg %p144
      %p210 = scmp.lt.s32.totalorder %s16, 1
      %s211 = scalar_select %p210, %s16, 1
      %s212 = smul.addr %s211, 32
      %s213 = smul.addr %s212, 4
      %s214 = scalar_lea.vmem %s5, %s213
      %p215 = scmp.lt.s32.totalorder %s16, 1
      %s216 = scalar_select %p215, %s16, 1
      %s217 = smul.addr %s216, 32
      %s218 = smul.addr %s217, 4
      %s219 = scalar_lea.vmem %s0, %s218
      %p220 = scmp.lt.s32.totalorder %s16, 1
      %s221 = scalar_select %p220, %s16, 1
      %s222 = smul.addr %s221, 32
      %s223 = smul.addr %s222, 4
      %s224 = scalar_lea.vmem %s5, %s223
      %226 = vst [vmem:[#allocation2] sm:$0xff] 0
      %227 = vst [vmem:[#allocation2 + $0x8] sm:$0xff] 0
      %228 = vst [vmem:[#allocation2 + $0x10] sm:$0xff] 0
      %s229 = scalar_lea.vmem [#allocation2], 408
      %230 = vst [vmem:[%s229] sm:$0xff] 0
      %231 = vst [vmem:[%s229 + $0x8] sm:$0xff] 0
      %232 = vst [vmem:[%s229 + $0x10] sm:$0xff] 0
      %s233 = scalar_lea.vmem [#allocation2], 24
      %vm234 = vcmask 1047559
      %vm235 = vsmask.f32 7966
      %vm236 = vmand %vm234, %vm235
      %v237 = vld [vmem:[%s233] sm:$0x80]
      %v238 = vsel %vm236, 0, %v237
      %239 = vst [vmem:[%s233] sm:$0x80] %v238
      %v240 = vld [vmem:[%s233 + $0x18] sm:$0x80]
      %v241 = vsel %vm236, 0, %v240
      %242 = vst [vmem:[%s233 + $0x18] sm:$0x80] %v241
      %v243 = vld [vmem:[%s233 + $0x30] sm:$0x80]
      %v244 = vsel %vm236, 0, %v243
      %245 = vst [vmem:[%s233 + $0x30] sm:$0x80] %v244
      %v246 = vld [vmem:[%s233 + $0x48] sm:$0x80]
      %v247 = vsel %vm236, 0, %v246
      %248 = vst [vmem:[%s233 + $0x48] sm:$0x80] %v247
      %v249 = vld [vmem:[%s233 + $0x60] sm:$0x80]
      %v250 = vsel %vm236, 0, %v249
      %251 = vst [vmem:[%s233 + $0x60] sm:$0x80] %v250
      %v252 = vld [vmem:[%s233 + $0x78] sm:$0x80]
      %v253 = vsel %vm236, 0, %v252
      %254 = vst [vmem:[%s233 + $0x78] sm:$0x80] %v253
      %v255 = vld [vmem:[%s233 + $0x90] sm:$0x80]
      %v256 = vsel %vm236, 0, %v255
      %257 = vst [vmem:[%s233 + $0x90] sm:$0x80] %v256
      %v258 = vld [vmem:[%s233 + $0xa8] sm:$0x80]
      %v259 = vsel %vm236, 0, %v258
      %260 = vst [vmem:[%s233 + $0xa8] sm:$0x80] %v259
      %v261 = vld [vmem:[%s233 + $0xc0] sm:$0x80]
      %v262 = vsel %vm236, 0, %v261
      %263 = vst [vmem:[%s233 + $0xc0] sm:$0x80] %v262
      %v264 = vld [vmem:[%s233 + $0xd8] sm:$0x80]
      %v265 = vsel %vm236, 0, %v264
      %266 = vst [vmem:[%s233 + $0xd8] sm:$0x80] %v265
      %v267 = vld [vmem:[%s233 + $0xf0] sm:$0x80]
      %v268 = vsel %vm236, 0, %v267
      %269 = vst [vmem:[%s233 + $0xf0] sm:$0x80] %v268
      %v270 = vld [vmem:[%s233 + $0x108] sm:$0x80]
      %v271 = vsel %vm236, 0, %v270
      %272 = vst [vmem:[%s233 + $0x108] sm:$0x80] %v271
      %v273 = vld [vmem:[%s233 + $0x120] sm:$0x80]
      %v274 = vsel %vm236, 0, %v273
      %275 = vst [vmem:[%s233 + $0x120] sm:$0x80] %v274
      %v276 = vld [vmem:[%s233 + $0x138] sm:$0x80]
      %v277 = vsel %vm236, 0, %v276
      %278 = vst [vmem:[%s233 + $0x138] sm:$0x80] %v277
      %v279 = vld [vmem:[%s233 + $0x150] sm:$0x80]
      %v280 = vsel %vm236, 0, %v279
      %281 = vst [vmem:[%s233 + $0x150] sm:$0x80] %v280
      %v282 = vld [vmem:[%s233 + $0x168] sm:$0x80]
      %v283 = vsel %vm236, 0, %v282
      %284 = vst [vmem:[%s233 + $0x168] sm:$0x80] %v283
      %vm285 = vcmask 1040384
      %vm286 = vsmask.f32 256
      %vm287 = vmand %vm285, %vm286
      %v288 = vld [vmem:[%s233 + $0x10] sm:$0x1]
      %v289 = vsel %vm287, 0, %v288
      %290 = vst [vmem:[%s233 + $0x10] sm:$0x1] %v289
      %v291 = vld [vmem:[%s233 + $0x28] sm:$0x1]
      %v292 = vsel %vm287, 0, %v291
      %293 = vst [vmem:[%s233 + $0x28] sm:$0x1] %v292
      %v294 = vld [vmem:[%s233 + $0x40] sm:$0x1]
      %v295 = vsel %vm287, 0, %v294
      %296 = vst [vmem:[%s233 + $0x40] sm:$0x1] %v295
      %v297 = vld [vmem:[%s233 + $0x58] sm:$0x1]
      %v298 = vsel %vm287, 0, %v297
      %299 = vst [vmem:[%s233 + $0x58] sm:$0x1] %v298
      %v300 = vld [vmem:[%s233 + $0x70] sm:$0x1]
      %v301 = vsel %vm287, 0, %v300
      %302 = vst [vmem:[%s233 + $0x70] sm:$0x1] %v301
      %v303 = vld [vmem:[%s233 + $0x88] sm:$0x1]
      %v304 = vsel %vm287, 0, %v303
      %305 = vst [vmem:[%s233 + $0x88] sm:$0x1] %v304
      %v306 = vld [vmem:[%s233 + $0xa0] sm:$0x1]
      %v307 = vsel %vm287, 0, %v306
      %308 = vst [vmem:[%s233 + $0xa0] sm:$0x1] %v307
      %v309 = vld [vmem:[%s233 + $0xb8] sm:$0x1]
      %v310 = vsel %vm287, 0, %v309
      %311 = vst [vmem:[%s233 + $0xb8] sm:$0x1] %v310
      %v312 = vld [vmem:[%s233 + $0xd0] sm:$0x1]
      %v313 = vsel %vm287, 0, %v312
      %314 = vst [vmem:[%s233 + $0xd0] sm:$0x1] %v313
      %v315 = vld [vmem:[%s233 + $0xe8] sm:$0x1]
      %v316 = vsel %vm287, 0, %v315
      %317 = vst [vmem:[%s233 + $0xe8] sm:$0x1] %v316
      %v318 = vld [vmem:[%s233 + $0x100] sm:$0x1]
      %v319 = vsel %vm287, 0, %v318
      %320 = vst [vmem:[%s233 + $0x100] sm:$0x1] %v319
      %v321 = vld [vmem:[%s233 + $0x118] sm:$0x1]
      %v322 = vsel %vm287, 0, %v321
      %323 = vst [vmem:[%s233 + $0x118] sm:$0x1] %v322
      %v324 = vld [vmem:[%s233 + $0x130] sm:$0x1]
      %v325 = vsel %vm287, 0, %v324
      %326 = vst [vmem:[%s233 + $0x130] sm:$0x1] %v325
      %v327 = vld [vmem:[%s233 + $0x148] sm:$0x1]
      %v328 = vsel %vm287, 0, %v327
      %329 = vst [vmem:[%s233 + $0x148] sm:$0x1] %v328
      %v330 = vld [vmem:[%s233 + $0x160] sm:$0x1]
      %v331 = vsel %vm287, 0, %v330
      %332 = vst [vmem:[%s233 + $0x160] sm:$0x1] %v331
      %v333 = vld [vmem:[%s233 + $0x178] sm:$0x1]
      %v334 = vsel %vm287, 0, %v333
      %335 = vst [vmem:[%s233 + $0x178] sm:$0x1] %v334
      %v336 = vld [vmem:[%s219] sm:$0xf]
      %v337 = vld [vmem:[%s219 + $0x4] sm:$0xf]
      %v338 = vld [vmem:[%s219 + $0x8] sm:$0xf]
      %v339 = vld [vmem:[%s219 + $0xc] sm:$0xf]
      %v340 = vld [vmem:[%s219 + $0x10] sm:$0xf]
      %v341 = vld [vmem:[%s219 + $0x14] sm:$0xf]
      %v342 = vld [vmem:[%s219 + $0x18] sm:$0xf]
      %v343 = vld [vmem:[%s219 + $0x1c] sm:$0xf]
      %v344 = vld [vmem:[%s219 + $0x20] sm:$0xf]
      %v345 = vld [vmem:[%s219 + $0x24] sm:$0xf]
      %v346 = vld [vmem:[%s219 + $0x28] sm:$0xf]
      %v347 = vld [vmem:[%s219 + $0x2c] sm:$0xf]
      %v348 = vld [vmem:[%s219 + $0x30] sm:$0xf]
      %v349 = vld [vmem:[%s219 + $0x34] sm:$0xf]
      %v350 = vld [vmem:[%s219 + $0x38] sm:$0xf]
      %v351 = vld [vmem:[%s219 + $0x3c] sm:$0xf]
      %v352 = vld [vmem:[%s219 + $0x40] sm:$0xf]
      %v353 = vld [vmem:[%s219 + $0x44] sm:$0xf]
      %v354 = vld [vmem:[%s219 + $0x48] sm:$0xf]
      %v355 = vld [vmem:[%s219 + $0x4c] sm:$0xf]
      %v356 = vld [vmem:[%s219 + $0x50] sm:$0xf]
      %v357 = vld [vmem:[%s219 + $0x54] sm:$0xf]
      %v358 = vld [vmem:[%s219 + $0x58] sm:$0xf]
      %v359 = vld [vmem:[%s219 + $0x5c] sm:$0xf]
      %v360 = vld [vmem:[%s219 + $0x60] sm:$0xf]
      %v361 = vld [vmem:[%s219 + $0x64] sm:$0xf]
      %v362 = vld [vmem:[%s219 + $0x68] sm:$0xf]
      %v363 = vld [vmem:[%s219 + $0x6c] sm:$0xf]
      %v364 = vld [vmem:[%s219 + $0x70] sm:$0xf]
      %v365 = vld [vmem:[%s219 + $0x74] sm:$0xf]
      %v366 = vld [vmem:[%s219 + $0x78] sm:$0xf]
      %v367 = vld [vmem:[%s219 + $0x7c] sm:$0xf]
      %v400 = vunpack.c.l.b16 %v336
      %v401 = vunpack.c.l.b16 %v337
      %v402 = vunpack.c.l.b16 %v338
      %v403 = vunpack.c.l.b16 %v339
      %v404 = vunpack.c.l.b16 %v340
      %v405 = vunpack.c.l.b16 %v341
      %v406 = vunpack.c.l.b16 %v342
      %v407 = vunpack.c.l.b16 %v343
      %v408 = vunpack.c.l.b16 %v344
      %v409 = vunpack.c.l.b16 %v345
      %v410 = vunpack.c.l.b16 %v346
      %v411 = vunpack.c.l.b16 %v347
      %v412 = vunpack.c.l.b16 %v348
      %v413 = vunpack.c.l.b16 %v349
      %v414 = vunpack.c.l.b16 %v350
      %v415 = vunpack.c.l.b16 %v351
      %v416 = vunpack.c.l.b16 %v352
      %v417 = vunpack.c.l.b16 %v353
      %v418 = vunpack.c.l.b16 %v354
      %v419 = vunpack.c.l.b16 %v355
      %v420 = vunpack.c.l.b16 %v356
      %v421 = vunpack.c.l.b16 %v357
      %v422 = vunpack.c.l.b16 %v358
      %v423 = vunpack.c.l.b16 %v359
      %v424 = vunpack.c.l.b16 %v360
      %v425 = vunpack.c.l.b16 %v361
      %v426 = vunpack.c.l.b16 %v362
      %v427 = vunpack.c.l.b16 %v363
      %v428 = vunpack.c.l.b16 %v364
      %v429 = vunpack.c.l.b16 %v365
      %v430 = vunpack.c.l.b16 %v366
      %v431 = vunpack.c.l.b16 %v367
      %v432 = vpack.c.b16 %v401, %v400
      %v433 = vpack.c.b16 %v403, %v402
      %v434 = vpack.c.b16 %v405, %v404
      %v435 = vpack.c.b16 %v407, %v406
      %v436 = vpack.c.b16 %v409, %v408
      %v437 = vpack.c.b16 %v411, %v410
      %v438 = vpack.c.b16 %v413, %v412
      %v439 = vpack.c.b16 %v415, %v414
      %v440 = vpack.c.b16 %v417, %v416
      %v441 = vpack.c.b16 %v419, %v418
      %v442 = vpack.c.b16 %v421, %v420
      %v443 = vpack.c.b16 %v423, %v422
      %v444 = vpack.c.b16 %v425, %v424
      %v445 = vpack.c.b16 %v427, %v426
      %v446 = vpack.c.b16 %v429, %v428
      %v447 = vpack.c.b16 %v431, %v430
      %464 = vst [vmem:[%s233 + $0x8] sm:$0xff] %v432
      %465 = vst [vmem:[%s233 + $0x20] sm:$0xff] %v433
      %466 = vst [vmem:[%s233 + $0x38] sm:$0xff] %v434
      %467 = vst [vmem:[%s233 + $0x50] sm:$0xff] %v435
      %468 = vst [vmem:[%s233 + $0x68] sm:$0xff] %v436
      %469 = vst [vmem:[%s233 + $0x80] sm:$0xff] %v437
      %470 = vst [vmem:[%s233 + $0x98] sm:$0xff] %v438
      %471 = vst [vmem:[%s233 + $0xb0] sm:$0xff] %v439
      %472 = vst [vmem:[%s233 + $0xc8] sm:$0xff] %v440
      %473 = vst [vmem:[%s233 + $0xe0] sm:$0xff] %v441
      %474 = vst [vmem:[%s233 + $0xf8] sm:$0xff] %v442
      %475 = vst [vmem:[%s233 + $0x110] sm:$0xff] %v443
      %476 = vst [vmem:[%s233 + $0x128] sm:$0xff] %v444
      %477 = vst [vmem:[%s233 + $0x140] sm:$0xff] %v445
      %478 = vst [vmem:[%s233 + $0x158] sm:$0xff] %v446
      %479 = vst [vmem:[%s233 + $0x170] sm:$0xff] %v447
      %v480 = vld [vmem:[#allocation2] sm:$0x80]
      %v481 = vld [vmem:[#allocation2 + $0x8] sm:$0xff]
      %v482 = vld [vmem:[#allocation2 + $0x18] sm:$0x80]
      %v483 = vld [vmem:[#allocation2 + $0x20] sm:$0xff]
      %v484 = vld [vmem:[#allocation2 + $0x30] sm:$0x80]
      %v485 = vld [vmem:[#allocation2 + $0x38] sm:$0xff]
      %v486 = vld [vmem:[#allocation2 + $0x48] sm:$0x80]
      %v487 = vld [vmem:[#allocation2 + $0x50] sm:$0xff]
      %v488 = vld [vmem:[#allocation2 + $0x60] sm:$0x80]
      %v489 = vld [vmem:[#allocation2 + $0x68] sm:$0xff]
      %v490 = vld [vmem:[#allocation2 + $0x78] sm:$0x80]
      %v491 = vld [vmem:[#allocation2 + $0x80] sm:$0xff]
      %v492 = vld [vmem:[#allocation2 + $0x90] sm:$0x80]
      %v493 = vld [vmem:[#allocation2 + $0x98] sm:$0xff]
      %v494 = vld [vmem:[#allocation2 + $0xa8] sm:$0x80]
      %v495 = vld [vmem:[#allocation2 + $0xb0] sm:$0xff]
      %v496 = vld [vmem:[#allocation2 + $0xc0] sm:$0x80]
      %v497 = vld [vmem:[#allocation2 + $0xc8] sm:$0xff]
      %v498 = vld [vmem:[#allocation2 + $0xd8] sm:$0x80]
      %v499 = vld [vmem:[#allocation2 + $0xe0] sm:$0xff]
      %v500 = vld [vmem:[#allocation2 + $0xf0] sm:$0x80]
      %v501 = vld [vmem:[#allocation2 + $0xf8] sm:$0xff]
      %v502 = vld [vmem:[#allocation2 + $0x108] sm:$0x80]
      %v503 = vld [vmem:[#allocation2 + $0x110] sm:$0xff]
      %v504 = vld [vmem:[#allocation2 + $0x120] sm:$0x80]
      %v505 = vld [vmem:[#allocation2 + $0x128] sm:$0xff]
      %v506 = vld [vmem:[#allocation2 + $0x138] sm:$0x80]
      %v507 = vld [vmem:[#allocation2 + $0x140] sm:$0xff]
      %v508 = vld [vmem:[#allocation2 + $0x150] sm:$0x80]
      %v509 = vld [vmem:[#allocation2 + $0x158] sm:$0xff]
      %v510 = vld [vmem:[#allocation2 + $0x168] sm:$0x80]
      %v511 = vld [vmem:[#allocation2 + $0x170] sm:$0xff]
      %v512 = vld [vmem:[#allocation2 + $0x180] sm:$0x80]
      %v513 = vld [vmem:[#allocation2 + $0x188] sm:$0xff]
      %v514 = vld [vmem:[#allocation2 + $0x198] sm:$0x80]
      %v515 = vld [vmem:[#allocation2 + $0x1a0] sm:$0xff]
      %v517 = vshrl.u32 %v480, 16
      %v519 = vrot.slane %v517, 7
      %v521 = vshrl.u32 %v481, 16
      %v523 = vrot.slane %v521, 7
      %v524 = vshll.u32 %v481, 16
      %v526 = vor.u32 %v523, %v524
      %v527 = vsel %vm286, %v519, %v526
      %v529 = vshrl.u32 %v482, 16
      %v531 = vrot.slane %v529, 7
      %v533 = vshrl.u32 %v483, 16
      %v535 = vrot.slane %v533, 7
      %v536 = vshll.u32 %v483, 16
      %v538 = vor.u32 %v535, %v536
      %v539 = vsel %vm286, %v531, %v538
      %v541 = vshrl.u32 %v484, 16
      %v543 = vrot.slane %v541, 7
      %v545 = vshrl.u32 %v485, 16
      %v547 = vrot.slane %v545, 7
      %v548 = vshll.u32 %v485, 16
      %v550 = vor.u32 %v547, %v548
      %v551 = vsel %vm286, %v543, %v550
      %v553 = vshrl.u32 %v486, 16
      %v555 = vrot.slane %v553, 7
      %v557 = vshrl.u32 %v487, 16
      %v559 = vrot.slane %v557, 7
      %v560 = vshll.u32 %v487, 16
      %v562 = vor.u32 %v559, %v560
      %v563 = vsel %vm286, %v555, %v562
      %v565 = vshrl.u32 %v488, 16
      %v567 = vrot.slane %v565, 7
      %v569 = vshrl.u32 %v489, 16
      %v571 = vrot.slane %v569, 7
      %v572 = vshll.u32 %v489, 16
      %v574 = vor.u32 %v571, %v572
      %v575 = vsel %vm286, %v567, %v574
      %v577 = vshrl.u32 %v490, 16
      %v579 = vrot.slane %v577, 7
      %v581 = vshrl.u32 %v491, 16
      %v583 = vrot.slane %v581, 7
      %v584 = vshll.u32 %v491, 16
      %v586 = vor.u32 %v583, %v584
      %v587 = vsel %vm286, %v579, %v586
      %v589 = vshrl.u32 %v492, 16
      %v591 = vrot.slane %v589, 7
      %v593 = vshrl.u32 %v493, 16
      %v595 = vrot.slane %v593, 7
      %v596 = vshll.u32 %v493, 16
      %v598 = vor.u32 %v595, %v596
      %v599 = vsel %vm286, %v591, %v598
      %v601 = vshrl.u32 %v494, 16
      %v603 = vrot.slane %v601, 7
      %v605 = vshrl.u32 %v495, 16
      %v607 = vrot.slane %v605, 7
      %v608 = vshll.u32 %v495, 16
      %v610 = vor.u32 %v607, %v608
      %v611 = vsel %vm286, %v603, %v610
      %v613 = vshrl.u32 %v496, 16
      %v615 = vrot.slane %v613, 7
      %v617 = vshrl.u32 %v497, 16
      %v619 = vrot.slane %v617, 7
      %v620 = vshll.u32 %v497, 16
      %v622 = vor.u32 %v619, %v620
      %v623 = vsel %vm286, %v615, %v622
      %v625 = vshrl.u32 %v498, 16
      %v627 = vrot.slane %v625, 7
      %v629 = vshrl.u32 %v499, 16
      %v631 = vrot.slane %v629, 7
      %v632 = vshll.u32 %v499, 16
      %v634 = vor.u32 %v631, %v632
      %v635 = vsel %vm286, %v627, %v634
      %v637 = vshrl.u32 %v500, 16
      %v639 = vrot.slane %v637, 7
      %v641 = vshrl.u32 %v501, 16
      %v643 = vrot.slane %v641, 7
      %v644 = vshll.u32 %v501, 16
      %v646 = vor.u32 %v643, %v644
      %v647 = vsel %vm286, %v639, %v646
      %v649 = vshrl.u32 %v502, 16
      %v651 = vrot.slane %v649, 7
      %v653 = vshrl.u32 %v503, 16
      %v655 = vrot.slane %v653, 7
      %v656 = vshll.u32 %v503, 16
      %v658 = vor.u32 %v655, %v656
      %v659 = vsel %vm286, %v651, %v658
      %v661 = vshrl.u32 %v504, 16
      %v663 = vrot.slane %v661, 7
      %v665 = vshrl.u32 %v505, 16
      %v667 = vrot.slane %v665, 7
      %v668 = vshll.u32 %v505, 16
      %v670 = vor.u32 %v667, %v668
      %v671 = vsel %vm286, %v663, %v670
      %v673 = vshrl.u32 %v506, 16
      %v675 = vrot.slane %v673, 7
      %v677 = vshrl.u32 %v507, 16
      %v679 = vrot.slane %v677, 7
      %v680 = vshll.u32 %v507, 16
      %v682 = vor.u32 %v679, %v680
      %v683 = vsel %vm286, %v675, %v682
      %v685 = vshrl.u32 %v508, 16
      %v687 = vrot.slane %v685, 7
      %v689 = vshrl.u32 %v509, 16
      %v691 = vrot.slane %v689, 7
      %v692 = vshll.u32 %v509, 16
      %v694 = vor.u32 %v691, %v692
      %v695 = vsel %vm286, %v687, %v694
      %v697 = vshrl.u32 %v510, 16
      %v699 = vrot.slane %v697, 7
      %v701 = vshrl.u32 %v511, 16
      %v703 = vrot.slane %v701, 7
      %v704 = vshll.u32 %v511, 16
      %v706 = vor.u32 %v703, %v704
      %v707 = vsel %vm286, %v699, %v706
      %v709 = vshrl.u32 %v512, 16
      %v711 = vrot.slane %v709, 7
      %v713 = vshrl.u32 %v513, 16
      %v715 = vrot.slane %v713, 7
      %v716 = vshll.u32 %v513, 16
      %v718 = vor.u32 %v715, %v716
      %v719 = vsel %vm286, %v711, %v718
      %v721 = vshrl.u32 %v514, 16
      %v723 = vrot.slane %v721, 7
      %v725 = vshrl.u32 %v515, 16
      %v727 = vrot.slane %v725, 7
      %v728 = vshll.u32 %v515, 16
      %v730 = vor.u32 %v727, %v728
      %v731 = vsel %vm286, %v723, %v730
      %750 = vst [vmem:[#allocation3] sm:$0xff] %v527
      %751 = vst [vmem:[#allocation3 + $0x8] sm:$0xff] %v539
      %752 = vst [vmem:[#allocation3 + $0x10] sm:$0xff] %v551
      %753 = vst [vmem:[#allocation3 + $0x18] sm:$0xff] %v563
      %754 = vst [vmem:[#allocation3 + $0x20] sm:$0xff] %v575
      %755 = vst [vmem:[#allocation3 + $0x28] sm:$0xff] %v587
      %756 = vst [vmem:[#allocation3 + $0x30] sm:$0xff] %v599
      %757 = vst [vmem:[#allocation3 + $0x38] sm:$0xff] %v611
      %758 = vst [vmem:[#allocation3 + $0x40] sm:$0xff] %v623
      %759 = vst [vmem:[#allocation3 + $0x48] sm:$0xff] %v635
      %760 = vst [vmem:[#allocation3 + $0x50] sm:$0xff] %v647
      %761 = vst [vmem:[#allocation3 + $0x58] sm:$0xff] %v659
      %762 = vst [vmem:[#allocation3 + $0x60] sm:$0xff] %v671
      %763 = vst [vmem:[#allocation3 + $0x68] sm:$0xff] %v683
      %764 = vst [vmem:[#allocation3 + $0x70] sm:$0xff] %v695
      %765 = vst [vmem:[#allocation3 + $0x78] sm:$0xff] %v707
      %766 = vst [vmem:[#allocation3 + $0x80] sm:$0xff] %v719
      %767 = vst [vmem:[#allocation3 + $0x88] sm:$0xff] %v731
      %v768 = vld [vmem:[#allocation2 + $0x8] sm:$0xff]
      %v769 = vld [vmem:[#allocation2 + $0x20] sm:$0xff]
      %v770 = vld [vmem:[#allocation2 + $0x38] sm:$0xff]
      %v771 = vld [vmem:[#allocation2 + $0x50] sm:$0xff]
      %v772 = vld [vmem:[#allocation2 + $0x68] sm:$0xff]
      %v773 = vld [vmem:[#allocation2 + $0x80] sm:$0xff]
      %v774 = vld [vmem:[#allocation2 + $0x98] sm:$0xff]
      %v775 = vld [vmem:[#allocation2 + $0xb0] sm:$0xff]
      %v776 = vld [vmem:[#allocation2 + $0xc8] sm:$0xff]
      %v777 = vld [vmem:[#allocation2 + $0xe0] sm:$0xff]
      %v778 = vld [vmem:[#allocation2 + $0xf8] sm:$0xff]
      %v779 = vld [vmem:[#allocation2 + $0x110] sm:$0xff]
      %v780 = vld [vmem:[#allocation2 + $0x128] sm:$0xff]
      %v781 = vld [vmem:[#allocation2 + $0x140] sm:$0xff]
      %v782 = vld [vmem:[#allocation2 + $0x158] sm:$0xff]
      %v783 = vld [vmem:[#allocation2 + $0x170] sm:$0xff]
      %v784 = vld [vmem:[#allocation2 + $0x188] sm:$0xff]
      %v785 = vld [vmem:[#allocation2 + $0x1a0] sm:$0xff]
      %s786 = scalar_lea.vmem [#allocation3], 144
      %787 = vst [vmem:[%s786] sm:$0xff] %v768
      %788 = vst [vmem:[%s786 + $0x8] sm:$0xff] %v769
      %789 = vst [vmem:[%s786 + $0x10] sm:$0xff] %v770
      %790 = vst [vmem:[%s786 + $0x18] sm:$0xff] %v771
      %791 = vst [vmem:[%s786 + $0x20] sm:$0xff] %v772
      %792 = vst [vmem:[%s786 + $0x28] sm:$0xff] %v773
      %793 = vst [vmem:[%s786 + $0x30] sm:$0xff] %v774
      %794 = vst [vmem:[%s786 + $0x38] sm:$0xff] %v775
      %795 = vst [vmem:[%s786 + $0x40] sm:$0xff] %v776
      %796 = vst [vmem:[%s786 + $0x48] sm:$0xff] %v777
      %797 = vst [vmem:[%s786 + $0x50] sm:$0xff] %v778
      %798 = vst [vmem:[%s786 + $0x58] sm:$0xff] %v779
      %799 = vst [vmem:[%s786 + $0x60] sm:$0xff] %v780
      %800 = vst [vmem:[%s786 + $0x68] sm:$0xff] %v781
      %801 = vst [vmem:[%s786 + $0x70] sm:$0xff] %v782
      %802 = vst [vmem:[%s786 + $0x78] sm:$0xff] %v783
      %803 = vst [vmem:[%s786 + $0x80] sm:$0xff] %v784
      %804 = vst [vmem:[%s786 + $0x88] sm:$0xff] %v785
      %v805 = vld [vmem:[#allocation2 + $0x8] sm:$0xff]
      %v806 = vld [vmem:[#allocation2 + $0x10] sm:$0x1]
      %v807 = vld [vmem:[#allocation2 + $0x20] sm:$0xff]
      %v808 = vld [vmem:[#allocation2 + $0x28] sm:$0x1]
      %v809 = vld [vmem:[#allocation2 + $0x38] sm:$0xff]
      %v810 = vld [vmem:[#allocation2 + $0x40] sm:$0x1]
      %v811 = vld [vmem:[#allocation2 + $0x50] sm:$0xff]
      %v812 = vld [vmem:[#allocation2 + $0x58] sm:$0x1]
      %v813 = vld [vmem:[#allocation2 + $0x68] sm:$0xff]
      %v814 = vld [vmem:[#allocation2 + $0x70] sm:$0x1]
      %v815 = vld [vmem:[#allocation2 + $0x80] sm:$0xff]
      %v816 = vld [vmem:[#allocation2 + $0x88] sm:$0x1]
      %v817 = vld [vmem:[#allocation2 + $0x98] sm:$0xff]
      %v818 = vld [vmem:[#allocation2 + $0xa0] sm:$0x1]
      %v819 = vld [vmem:[#allocation2 + $0xb0] sm:$0xff]
      %v820 = vld [vmem:[#allocation2 + $0xb8] sm:$0x1]
      %v821 = vld [vmem:[#allocation2 + $0xc8] sm:$0xff]
      %v822 = vld [vmem:[#allocation2 + $0xd0] sm:$0x1]
      %v823 = vld [vmem:[#allocation2 + $0xe0] sm:$0xff]
      %v824 = vld [vmem:[#allocation2 + $0xe8] sm:$0x1]
      %v825 = vld [vmem:[#allocation2 + $0xf8] sm:$0xff]
      %v826 = vld [vmem:[#allocation2 + $0x100] sm:$0x1]
      %v827 = vld [vmem:[#allocation2 + $0x110] sm:$0xff]
      %v828 = vld [vmem:[#allocation2 + $0x118] sm:$0x1]
      %v829 = vld [vmem:[#allocation2 + $0x128] sm:$0xff]
      %v830 = vld [vmem:[#allocation2 + $0x130] sm:$0x1]
      %v831 = vld [vmem:[#allocation2 + $0x140] sm:$0xff]
      %v832 = vld [vmem:[#allocation2 + $0x148] sm:$0x1]
      %v833 = vld [vmem:[#allocation2 + $0x158] sm:$0xff]
      %v834 = vld [vmem:[#allocation2 + $0x160] sm:$0x1]
      %v835 = vld [vmem:[#allocation2 + $0x170] sm:$0xff]
      %v836 = vld [vmem:[#allocation2 + $0x178] sm:$0x1]
      %v837 = vld [vmem:[#allocation2 + $0x188] sm:$0xff]
      %v838 = vld [vmem:[#allocation2 + $0x190] sm:$0x1]
      %v839 = vld [vmem:[#allocation2 + $0x1a0] sm:$0xff]
      %v840 = vld [vmem:[#allocation2 + $0x1a8] sm:$0x1]
      %vm841 = vsmask.f32 7424
      %v843 = vshrl.u32 %v805, 16
      %v845 = vshll.u32 %v805, 16
      %v847 = vrot.slane %v845, 1
      %v848 = vor.u32 %v843, %v847
      %v850 = vshll.u32 %v806, 16
      %v852 = vrot.slane %v850, 1
      %v853 = vsel %vm841, %v848, %v852
      %v855 = vshrl.u32 %v807, 16
      %v857 = vshll.u32 %v807, 16
      %v859 = vrot.slane %v857, 1
      %v860 = vor.u32 %v855, %v859
      %v862 = vshll.u32 %v808, 16
      %v864 = vrot.slane %v862, 1
      %v865 = vsel %vm841, %v860, %v864
      %v867 = vshrl.u32 %v809, 16
      %v869 = vshll.u32 %v809, 16
      %v871 = vrot.slane %v869, 1
      %v872 = vor.u32 %v867, %v871
      %v874 = vshll.u32 %v810, 16
      %v876 = vrot.slane %v874, 1
      %v877 = vsel %vm841, %v872, %v876
      %v879 = vshrl.u32 %v811, 16
      %v881 = vshll.u32 %v811, 16
      %v883 = vrot.slane %v881, 1
      %v884 = vor.u32 %v879, %v883
      %v886 = vshll.u32 %v812, 16
      %v888 = vrot.slane %v886, 1
      %v889 = vsel %vm841, %v884, %v888
      %v891 = vshrl.u32 %v813, 16
      %v893 = vshll.u32 %v813, 16
      %v895 = vrot.slane %v893, 1
      %v896 = vor.u32 %v891, %v895
      %v898 = vshll.u32 %v814, 16
      %v900 = vrot.slane %v898, 1
      %v901 = vsel %vm841, %v896, %v900
      %v903 = vshrl.u32 %v815, 16
      %v905 = vshll.u32 %v815, 16
      %v907 = vrot.slane %v905, 1
      %v908 = vor.u32 %v903, %v907
      %v910 = vshll.u32 %v816, 16
      %v912 = vrot.slane %v910, 1
      %v913 = vsel %vm841, %v908, %v912
      %v915 = vshrl.u32 %v817, 16
      %v917 = vshll.u32 %v817, 16
      %v919 = vrot.slane %v917, 1
      %v920 = vor.u32 %v915, %v919
      %v922 = vshll.u32 %v818, 16
      %v924 = vrot.slane %v922, 1
      %v925 = vsel %vm841, %v920, %v924
      %v927 = vshrl.u32 %v819, 16
      %v929 = vshll.u32 %v819, 16
      %v931 = vrot.slane %v929, 1
      %v932 = vor.u32 %v927, %v931
      %v934 = vshll.u32 %v820, 16
      %v936 = vrot.slane %v934, 1
      %v937 = vsel %vm841, %v932, %v936
      %v939 = vshrl.u32 %v821, 16
      %v941 = vshll.u32 %v821, 16
      %v943 = vrot.slane %v941, 1
      %v944 = vor.u32 %v939, %v943
      %v946 = vshll.u32 %v822, 16
      %v948 = vrot.slane %v946, 1
      %v949 = vsel %vm841, %v944, %v948
      %v951 = vshrl.u32 %v823, 16
      %v953 = vshll.u32 %v823, 16
      %v955 = vrot.slane %v953, 1
      %v956 = vor.u32 %v951, %v955
      %v958 = vshll.u32 %v824, 16
      %v960 = vrot.slane %v958, 1
      %v961 = vsel %vm841, %v956, %v960
      %v963 = vshrl.u32 %v825, 16
      %v965 = vshll.u32 %v825, 16
      %v967 = vrot.slane %v965, 1
      %v968 = vor.u32 %v963, %v967
      %v970 = vshll.u32 %v826, 16
      %v972 = vrot.slane %v970, 1
      %v973 = vsel %vm841, %v968, %v972
      %v975 = vshrl.u32 %v827, 16
      %v977 = vshll.u32 %v827, 16
      %v979 = vrot.slane %v977, 1
      %v980 = vor.u32 %v975, %v979
      %v982 = vshll.u32 %v828, 16
      %v984 = vrot.slane %v982, 1
      %v985 = vsel %vm841, %v980, %v984
      %v987 = vshrl.u32 %v829, 16
      %v989 = vshll.u32 %v829, 16
      %v991 = vrot.slane %v989, 1
      %v992 = vor.u32 %v987, %v991
      %v994 = vshll.u32 %v830, 16
      %v996 = vrot.slane %v994, 1
      %v997 = vsel %vm841, %v992, %v996
      %v999 = vshrl.u32 %v831, 16
      %v1001 = vshll.u32 %v831, 16
      %v1003 = vrot.slane %v1001, 1
      %v1004 = vor.u32 %v999, %v1003
      %v1006 = vshll.u32 %v832, 16
      %v1008 = vrot.slane %v1006, 1
      %v1009 = vsel %vm841, %v1004, %v1008
      %v1011 = vshrl.u32 %v833, 16
      %v1013 = vshll.u32 %v833, 16
      %v1015 = vrot.slane %v1013, 1
      %v1016 = vor.u32 %v1011, %v1015
      %v1018 = vshll.u32 %v834, 16
      %v1020 = vrot.slane %v1018, 1
      %v1021 = vsel %vm841, %v1016, %v1020
      %v1023 = vshrl.u32 %v835, 16
      %v1025 = vshll.u32 %v835, 16
      %v1027 = vrot.slane %v1025, 1
      %v1028 = vor.u32 %v1023, %v1027
      %v1030 = vshll.u32 %v836, 16
      %v1032 = vrot.slane %v1030, 1
      %v1033 = vsel %vm841, %v1028, %v1032
      %v1035 = vshrl.u32 %v837, 16
      %v1037 = vshll.u32 %v837, 16
      %v1039 = vrot.slane %v1037, 1
      %v1040 = vor.u32 %v1035, %v1039
      %v1042 = vshll.u32 %v838, 16
      %v1044 = vrot.slane %v1042, 1
      %v1045 = vsel %vm841, %v1040, %v1044
      %v1047 = vshrl.u32 %v839, 16
      %v1049 = vshll.u32 %v839, 16
      %v1051 = vrot.slane %v1049, 1
      %v1052 = vor.u32 %v1047, %v1051
      %v1054 = vshll.u32 %v840, 16
      %v1056 = vrot.slane %v1054, 1
      %v1057 = vsel %vm841, %v1052, %v1056
      %s1076 = scalar_lea.vmem [#allocation3], 288
      %1077 = vst [vmem:[%s1076] sm:$0xff] %v853
      %1078 = vst [vmem:[%s1076 + $0x8] sm:$0xff] %v865
      %1079 = vst [vmem:[%s1076 + $0x10] sm:$0xff] %v877
      %1080 = vst [vmem:[%s1076 + $0x18] sm:$0xff] %v889
      %1081 = vst [vmem:[%s1076 + $0x20] sm:$0xff] %v901
      %1082 = vst [vmem:[%s1076 + $0x28] sm:$0xff] %v913
      %1083 = vst [vmem:[%s1076 + $0x30] sm:$0xff] %v925
      %1084 = vst [vmem:[%s1076 + $0x38] sm:$0xff] %v937
      %1085 = vst [vmem:[%s1076 + $0x40] sm:$0xff] %v949
      %1086 = vst [vmem:[%s1076 + $0x48] sm:$0xff] %v961
      %1087 = vst [vmem:[%s1076 + $0x50] sm:$0xff] %v973
      %1088 = vst [vmem:[%s1076 + $0x58] sm:$0xff] %v985
      %1089 = vst [vmem:[%s1076 + $0x60] sm:$0xff] %v997
      %1090 = vst [vmem:[%s1076 + $0x68] sm:$0xff] %v1009
      %1091 = vst [vmem:[%s1076 + $0x70] sm:$0xff] %v1021
      %1092 = vst [vmem:[%s1076 + $0x78] sm:$0xff] %v1033
      %1093 = vst [vmem:[%s1076 + $0x80] sm:$0xff] %v1045
      %1094 = vst [vmem:[%s1076 + $0x88] sm:$0xff] %v1057
      %v1095 = vld [vmem:[#allocation3] sm:$0xff]
      %v1096 = vld [vmem:[#allocation3 + $0x8] sm:$0xff]
      %v1097 = vld [vmem:[#allocation3 + $0x10] sm:$0xff]
      %v1098 = vld [vmem:[#allocation3 + $0x18] sm:$0xff]
      %v1099 = vld [vmem:[#allocation3 + $0x20] sm:$0xff]
      %v1100 = vld [vmem:[#allocation3 + $0x28] sm:$0xff]
      %v1101 = vld [vmem:[#allocation3 + $0x30] sm:$0xff]
      %v1102 = vld [vmem:[#allocation3 + $0x38] sm:$0xff]
      %v1103 = vld [vmem:[%s1] sm:$0xf]
      %v1104 = vld [vmem:[%s1 + $0x4] sm:$0xf]
      %v1105 = vld [vmem:[%s1 + $0x8] sm:$0xf]
      %v1106 = vld [vmem:[%s1 + $0xc] sm:$0xf]
      %v1107 = vld [vmem:[%s1 + $0x10] sm:$0xf]
      %v1108 = vld [vmem:[%s1 + $0x14] sm:$0xf]
      %v1109 = vld [vmem:[%s1 + $0x18] sm:$0xf]
      %v1110 = vld [vmem:[%s1 + $0x1c] sm:$0xf]
      %v1111 = vld [vmem:[%s1 + $0x20] sm:$0xf]
      %v1112 = vld [vmem:[%s1 + $0x24] sm:$0xf]
      %v1113 = vld [vmem:[%s1 + $0x28] sm:$0xf]
      %v1114 = vld [vmem:[%s1 + $0x2c] sm:$0xf]
      %v1115 = vld [vmem:[%s1 + $0x30] sm:$0xf]
      %v1116 = vld [vmem:[%s1 + $0x34] sm:$0xf]
      %v1117 = vld [vmem:[%s1 + $0x38] sm:$0xf]
      %v1118 = vld [vmem:[%s1 + $0x3c] sm:$0xf]
      %v1119 = vld [vmem:[%s786] sm:$0xff]
      %v1120 = vld [vmem:[%s786 + $0x8] sm:$0xff]
      %v1121 = vld [vmem:[%s786 + $0x10] sm:$0xff]
      %v1122 = vld [vmem:[%s786 + $0x18] sm:$0xff]
      %v1123 = vld [vmem:[%s786 + $0x20] sm:$0xff]
      %v1124 = vld [vmem:[%s786 + $0x28] sm:$0xff]
      %v1125 = vld [vmem:[%s786 + $0x30] sm:$0xff]
      %v1126 = vld [vmem:[%s786 + $0x38] sm:$0xff]
      %s1127 = scalar_lea.vmem %s1, 64
      %v1128 = vld [vmem:[%s1127] sm:$0xf]
      %v1129 = vld [vmem:[%s1127 + $0x4] sm:$0xf]
      %v1130 = vld [vmem:[%s1127 + $0x8] sm:$0xf]
      %v1131 = vld [vmem:[%s1127 + $0xc] sm:$0xf]
      %v1132 = vld [vmem:[%s1127 + $0x10] sm:$0xf]
      %v1133 = vld [vmem:[%s1127 + $0x14] sm:$0xf]
      %v1134 = vld [vmem:[%s1127 + $0x18] sm:$0xf]
      %v1135 = vld [vmem:[%s1127 + $0x1c] sm:$0xf]
      %v1136 = vld [vmem:[%s1127 + $0x20] sm:$0xf]
      %v1137 = vld [vmem:[%s1127 + $0x24] sm:$0xf]
      %v1138 = vld [vmem:[%s1127 + $0x28] sm:$0xf]
      %v1139 = vld [vmem:[%s1127 + $0x2c] sm:$0xf]
      %v1140 = vld [vmem:[%s1127 + $0x30] sm:$0xf]
      %v1141 = vld [vmem:[%s1127 + $0x34] sm:$0xf]
      %v1142 = vld [vmem:[%s1127 + $0x38] sm:$0xf]
      %v1143 = vld [vmem:[%s1127 + $0x3c] sm:$0xf]
      %v1160 = vunpack.c.l.b16 %v1128
      %v1161 = vunpack.c.l.b16 %v1129
      %v1162 = vunpack.c.l.b16 %v1130
      %v1163 = vunpack.c.l.b16 %v1131
      %v1164 = vunpack.c.l.b16 %v1132
      %v1165 = vunpack.c.l.b16 %v1133
      %v1166 = vunpack.c.l.b16 %v1134
      %v1167 = vunpack.c.l.b16 %v1135
      %v1168 = vunpack.c.l.b16 %v1136
      %v1169 = vunpack.c.l.b16 %v1137
      %v1170 = vunpack.c.l.b16 %v1138
      %v1171 = vunpack.c.l.b16 %v1139
      %v1172 = vunpack.c.l.b16 %v1140
      %v1173 = vunpack.c.l.b16 %v1141
      %v1174 = vunpack.c.l.b16 %v1142
      %v1175 = vunpack.c.l.b16 %v1143
      %v1176 = vpack.c.b16 %v1161, %v1160
      %v1177 = vpack.c.b16 %v1163, %v1162
      %v1178 = vpack.c.b16 %v1165, %v1164
      %v1179 = vpack.c.b16 %v1167, %v1166
      %v1180 = vpack.c.b16 %v1169, %v1168
      %v1181 = vpack.c.b16 %v1171, %v1170
      %v1182 = vpack.c.b16 %v1173, %v1172
      %v1183 = vpack.c.b16 %v1175, %v1174
      %1192 = vmatprep.subr.bf16.mxu0 0
      %1193 = vmatpush1.bf16.msra.mxu0 %v1176
      %1194 = vmatprep.subr.bf16.mxu0 0
      %1195 = vmatpush1.bf16.msra.mxu0 %v1177
      %1196 = vmatprep.subr.bf16.mxu0 0
      %1197 = vmatpush1.bf16.msra.mxu0 %v1178
      %1198 = vmatprep.subr.bf16.mxu0 0
      %1199 = vmatpush1.bf16.msra.mxu0 %v1179
      %1200 = vmatprep.subr.bf16.mxu0 0
      %1201 = vmatpush1.bf16.msra.mxu0 %v1180
      %1202 = vmatprep.subr.bf16.mxu0 0
      %1203 = vmatpush1.bf16.msra.mxu0 %v1181
      %1204 = vmatprep.subr.bf16.mxu0 0
      %1205 = vmatpush1.bf16.msra.mxu0 %v1182
      %1206 = vmatprep.subr.bf16.mxu0 0
      %1207 = vmatpush1.bf16.msra.mxu0 %v1183
      %1208 = vmatprep.subr.bf16.mxu0 0
      %1209 = vmatpush1.bf16.msra.mxu0 0
      %1210 = vmatprep.subr.bf16.mxu0 0
      %1211 = vmatpush1.bf16.msra.mxu0 0
      %1212 = vmatprep.subr.bf16.mxu0 0
      %1213 = vmatpush1.bf16.msra.mxu0 0
      %1214 = vmatprep.subr.bf16.mxu0 0
      %1215 = vmatpush1.bf16.msra.mxu0 0
      %1216 = vmatprep.subr.bf16.mxu0 0
      %1217 = vmatpush1.bf16.msra.mxu0 0
      %1218 = vmatprep.subr.bf16.mxu0 0
      %1219 = vmatpush1.bf16.msra.mxu0 0
      %1220 = vmatprep.subr.bf16.mxu0 0
      %1221 = vmatpush1.bf16.msra.mxu0 0
      %1222 = vmatprep.subr.bf16.mxu0 0
      %1223 = vmatpush1.bf16.msra.mxu0 0
      %1224 = vmatprep.mubr.bf16.mxu0 0
      %1225 = vmatmul.mubr.bf16.gmra.mrb[0].mxu0 %v1119
      %v1226 = vpop.f32.mrb[0].mxu0
      %v1227 = vadd.f32 0.0, %v1226
      %v1228 = vpop.f32.mrb[0].mxu0
      %v1229 = vpop.f32.mrb[0].mxu0
      %v1230 = vadd.f32 0.0, %v1229
      %v1231 = vpop.f32.mrb[0].mxu0
      %1232 = vmatprep.mubr.bf16.mxu0 0
      %1233 = vmatmul.mubr.bf16.gmra.mrb[0].mxu0 %v1120
      %v1234 = vpop.f32.mrb[0].mxu0
      %v1235 = vadd.f32 0.0, %v1234
      %v1236 = vpop.f32.mrb[0].mxu0
      %v1237 = vpop.f32.mrb[0].mxu0
      %v1238 = vadd.f32 0.0, %v1237
      %v1239 = vpop.f32.mrb[0].mxu0
      %1240 = vmatprep.mubr.bf16.mxu0 0
      %1241 = vmatmul.mubr.bf16.gmra.mrb[0].mxu0 %v1121
      %v1242 = vpop.f32.mrb[0].mxu0
      %v1243 = vadd.f32 0.0, %v1242
      %v1244 = vpop.f32.mrb[0].mxu0
      %v1245 = vpop.f32.mrb[0].mxu0
      %v1246 = vadd.f32 0.0, %v1245
      %v1247 = vpop.f32.mrb[0].mxu0
      %1248 = vmatprep.mubr.bf16.mxu0 0
      %1249 = vmatmul.mubr.bf16.gmra.mrb[0].mxu0 %v1122
      %v1250 = vpop.f32.mrb[0].mxu0
      %v1251 = vadd.f32 0.0, %v1250
      %v1252 = vpop.f32.mrb[0].mxu0
      %v1253 = vpop.f32.mrb[0].mxu0
      %v1254 = vadd.f32 0.0, %v1253
      %v1255 = vpop.f32.mrb[0].mxu0
      %1256 = vmatprep.mubr.bf16.mxu0 0
      %1257 = vmatmul.mubr.bf16.gmra.mrb[0].mxu0 %v1123
      %v1258 = vpop.f32.mrb[0].mxu0
      %v1259 = vadd.f32 0.0, %v1258
      %v1260 = vpop.f32.mrb[0].mxu0
      %v1261 = vpop.f32.mrb[0].mxu0
      %v1262 = vadd.f32 0.0, %v1261
      %v1263 = vpop.f32.mrb[0].mxu0
      %1264 = vmatprep.mubr.bf16.mxu0 0
      %1265 = vmatmul.mubr.bf16.gmra.mrb[0].mxu0 %v1124
      %v1266 = vpop.f32.mrb[0].mxu0
      %v1267 = vadd.f32 0.0, %v1266
      %v1268 = vpop.f32.mrb[0].mxu0
      %v1269 = vpop.f32.mrb[0].mxu0
      %v1270 = vadd.f32 0.0, %v1269
      %v1271 = vpop.f32.mrb[0].mxu0
      %1272 = vmatprep.mubr.bf16.mxu0 0
      %1273 = vmatmul.mubr.bf16.gmra.mrb[0].mxu0 %v1125
      %v1274 = vpop.f32.mrb[0].mxu0
      %v1275 = vadd.f32 0.0, %v1274
      %v1276 = vpop.f32.mrb[0].mxu0
      %v1277 = vpop.f32.mrb[0].mxu0
      %v1278 = vadd.f32 0.0, %v1277
      %v1279 = vpop.f32.mrb[0].mxu0
      %1280 = vmatprep.mubr.bf16.mxu0 0
      %1281 = vmatmul.mubr.bf16.gmra.mrb[0].mxu0 %v1126
      %v1282 = vpop.f32.mrb[0].mxu0
      %v1283 = vadd.f32 0.0, %v1282
      %v1284 = vpop.f32.mrb[0].mxu0
      %v1285 = vpop.f32.mrb[0].mxu0
      %v1286 = vadd.f32 0.0, %v1285
      %v1287 = vpop.f32.mrb[0].mxu0
      %1288 = vdwg.mxu0
      %v1305 = vunpack.c.l.b16 %v1103
      %v1306 = vunpack.c.l.b16 %v1104
      %v1307 = vunpack.c.l.b16 %v1105
      %v1308 = vunpack.c.l.b16 %v1106
      %v1309 = vunpack.c.l.b16 %v1107
      %v1310 = vunpack.c.l.b16 %v1108
      %v1311 = vunpack.c.l.b16 %v1109
      %v1312 = vunpack.c.l.b16 %v1110
      %v1313 = vunpack.c.l.b16 %v1111
      %v1314 = vunpack.c.l.b16 %v1112
      %v1315 = vunpack.c.l.b16 %v1113
      %v1316 = vunpack.c.l.b16 %v1114
      %v1317 = vunpack.c.l.b16 %v1115
      %v1318 = vunpack.c.l.b16 %v1116
      %v1319 = vunpack.c.l.b16 %v1117
      %v1320 = vunpack.c.l.b16 %v1118
      %v1321 = vpack.c.b16 %v1306, %v1305
      %v1322 = vpack.c.b16 %v1308, %v1307
      %v1323 = vpack.c.b16 %v1310, %v1309
      %v1324 = vpack.c.b16 %v1312, %v1311
      %v1325 = vpack.c.b16 %v1314, %v1313
      %v1326 = vpack.c.b16 %v1316, %v1315
      %v1327 = vpack.c.b16 %v1318, %v1317
      %v1328 = vpack.c.b16 %v1320, %v1319
      %1337 = vmatprep.subr.bf16.mxu0 0
      %1338 = vmatpush1.bf16.msra.mxu0 %v1321
      %1339 = vmatprep.subr.bf16.mxu0 0
      %1340 = vmatpush1.bf16.msra.mxu0 %v1322
      %1341 = vmatprep.subr.bf16.mxu0 0
      %1342 = vmatpush1.bf16.msra.mxu0 %v1323
      %1343 = vmatprep.subr.bf16.mxu0 0
      %1344 = vmatpush1.bf16.msra.mxu0 %v1324
      %1345 = vmatprep.subr.bf16.mxu0 0
      %1346 = vmatpush1.bf16.msra.mxu0 %v1325
      %1347 = vmatprep.subr.bf16.mxu0 0
      %1348 = vmatpush1.bf16.msra.mxu0 %v1326
      %1349 = vmatprep.subr.bf16.mxu0 0
      %1350 = vmatpush1.bf16.msra.mxu0 %v1327
      %1351 = vmatprep.subr.bf16.mxu0 0
      %1352 = vmatpush1.bf16.msra.mxu0 %v1328
      %1353 = vmatprep.subr.bf16.mxu0 0
      %1354 = vmatpush1.bf16.msra.mxu0 0
      %1355 = vmatprep.subr.bf16.mxu0 0
      %1356 = vmatpush1.bf16.msra.mxu0 0
      %1357 = vmatprep.subr.bf16.mxu0 0
      %1358 = vmatpush1.bf16.msra.mxu0 0
      %1359 = vmatprep.subr.bf16.mxu0 0
      %1360 = vmatpush1.bf16.msra.mxu0 0
      %1361 = vmatprep.subr.bf16.mxu0 0
      %1362 = vmatpush1.bf16.msra.mxu0 0
      %1363 = vmatprep.subr.bf16.mxu0 0
      %1364 = vmatpush1.bf16.msra.mxu0 0
      %1365 = vmatprep.subr.bf16.mxu0 0
      %1366 = vmatpush1.bf16.msra.mxu0 0
      %1367 = vmatprep.subr.bf16.mxu0 0
      %1368 = vmatpush1.bf16.msra.mxu0 0
      %1369 = vmatprep.mubr.bf16.mxu0 0
      %1370 = vmatmul.mubr.bf16.gmra.mrb[0].mxu0 %v1095
      %v1371 = vpop.f32.mrb[0].mxu0
      %v1372 = vadd.f32 %v1227, %v1371
      %v1373 = vpop.f32.mrb[0].mxu0
      %v1374 = vpop.f32.mrb[0].mxu0
      %v1375 = vadd.f32 %v1230, %v1374
      %v1376 = vpop.f32.mrb[0].mxu0
      %1377 = vmatprep.mubr.bf16.mxu0 0
      %1378 = vmatmul.mubr.bf16.gmra.mrb[0].mxu0 %v1096
      %v1379 = vpop.f32.mrb[0].mxu0
      %v1380 = vadd.f32 %v1235, %v1379
      %v1381 = vpop.f32.mrb[0].mxu0
      %v1382 = vpop.f32.mrb[0].mxu0
      %v1383 = vadd.f32 %v1238, %v1382
      %v1384 = vpop.f32.mrb[0].mxu0
      %1385 = vmatprep.mubr.bf16.mxu0 0
      %1386 = vmatmul.mubr.bf16.gmra.mrb[0].mxu0 %v1097
      %v1387 = vpop.f32.mrb[0].mxu0
      %v1388 = vadd.f32 %v1243, %v1387
      %v1389 = vpop.f32.mrb[0].mxu0
      %v1390 = vpop.f32.mrb[0].mxu0
      %v1391 = vadd.f32 %v1246, %v1390
      %v1392 = vpop.f32.mrb[0].mxu0
      %1393 = vmatprep.mubr.bf16.mxu0 0
      %1394 = vmatmul.mubr.bf16.gmra.mrb[0].mxu0 %v1098
      %v1395 = vpop.f32.mrb[0].mxu0
      %v1396 = vadd.f32 %v1251, %v1395
      %v1397 = vpop.f32.mrb[0].mxu0
      %v1398 = vpop.f32.mrb[0].mxu0
      %v1399 = vadd.f32 %v1254, %v1398
      %v1400 = vpop.f32.mrb[0].mxu0
      %1401 = vmatprep.mubr.bf16.mxu0 0
      %1402 = vmatmul.mubr.bf16.gmra.mrb[0].mxu0 %v1099
      %v1403 = vpop.f32.mrb[0].mxu0
      %v1404 = vadd.f32 %v1259, %v1403
      %v1405 = vpop.f32.mrb[0].mxu0
      %v1406 = vpop.f32.mrb[0].mxu0
      %v1407 = vadd.f32 %v1262, %v1406
      %v1408 = vpop.f32.mrb[0].mxu0
      %1409 = vmatprep.mubr.bf16.mxu0 0
      %1410 = vmatmul.mubr.bf16.gmra.mrb[0].mxu0 %v1100
      %v1411 = vpop.f32.mrb[0].mxu0
      %v1412 = vadd.f32 %v1267, %v1411
      %v1413 = vpop.f32.mrb[0].mxu0
      %v1414 = vpop.f32.mrb[0].mxu0
      %v1415 = vadd.f32 %v1270, %v1414
      %v1416 = vpop.f32.mrb[0].mxu0
      %1417 = vmatprep.mubr.bf16.mxu0 0
      %1418 = vmatmul.mubr.bf16.gmra.mrb[0].mxu0 %v1101
      %v1419 = vpop.f32.mrb[0].mxu0
      %v1420 = vadd.f32 %v1275, %v1419
      %v1421 = vpop.f32.mrb[0].mxu0
      %v1422 = vpop.f32.mrb[0].mxu0
      %v1423 = vadd.f32 %v1278, %v1422
      %v1424 = vpop.f32.mrb[0].mxu0
      %1425 = vmatprep.mubr.bf16.mxu0 0
      %1426 = vmatmul.mubr.bf16.gmra.mrb[0].mxu0 %v1102
      %v1427 = vpop.f32.mrb[0].mxu0
      %v1428 = vadd.f32 %v1283, %v1427
      %v1429 = vpop.f32.mrb[0].mxu0
      %v1430 = vpop.f32.mrb[0].mxu0
      %v1431 = vadd.f32 %v1286, %v1430
      %v1432 = vpop.f32.mrb[0].mxu0
      %1433 = vdwg.mxu0
      %v1434 = vld [vmem:[%s1076] sm:$0xff]
      %v1435 = vld [vmem:[%s1076 + $0x8] sm:$0xff]
      %v1436 = vld [vmem:[%s1076 + $0x10] sm:$0xff]
      %v1437 = vld [vmem:[%s1076 + $0x18] sm:$0xff]
      %v1438 = vld [vmem:[%s1076 + $0x20] sm:$0xff]
      %v1439 = vld [vmem:[%s1076 + $0x28] sm:$0xff]
      %v1440 = vld [vmem:[%s1076 + $0x30] sm:$0xff]
      %v1441 = vld [vmem:[%s1076 + $0x38] sm:$0xff]
      %s1442 = scalar_lea.vmem %s1, 128
      %v1443 = vld [vmem:[%s1442] sm:$0xf]
      %v1444 = vld [vmem:[%s1442 + $0x4] sm:$0xf]
      %v1445 = vld [vmem:[%s1442 + $0x8] sm:$0xf]
      %v1446 = vld [vmem:[%s1442 + $0xc] sm:$0xf]
      %v1447 = vld [vmem:[%s1442 + $0x10] sm:$0xf]
      %v1448 = vld [vmem:[%s1442 + $0x14] sm:$0xf]
      %v1449 = vld [vmem:[%s1442 + $0x18] sm:$0xf]
      %v1450 = vld [vmem:[%s1442 + $0x1c] sm:$0xf]
      %v1451 = vld [vmem:[%s1442 + $0x20] sm:$0xf]
      %v1452 = vld [vmem:[%s1442 + $0x24] sm:$0xf]
      %v1453 = vld [vmem:[%s1442 + $0x28] sm:$0xf]
      %v1454 = vld [vmem:[%s1442 + $0x2c] sm:$0xf]
      %v1455 = vld [vmem:[%s1442 + $0x30] sm:$0xf]
      %v1456 = vld [vmem:[%s1442 + $0x34] sm:$0xf]
      %v1457 = vld [vmem:[%s1442 + $0x38] sm:$0xf]
      %v1458 = vld [vmem:[%s1442 + $0x3c] sm:$0xf]
      %v1475 = vunpack.c.l.b16 %v1443
      %v1476 = vunpack.c.l.b16 %v1444
      %v1477 = vunpack.c.l.b16 %v1445
      %v1478 = vunpack.c.l.b16 %v1446
      %v1479 = vunpack.c.l.b16 %v1447
      %v1480 = vunpack.c.l.b16 %v1448
      %v1481 = vunpack.c.l.b16 %v1449
      %v1482 = vunpack.c.l.b16 %v1450
      %v1483 = vunpack.c.l.b16 %v1451
      %v1484 = vunpack.c.l.b16 %v1452
      %v1485 = vunpack.c.l.b16 %v1453
      %v1486 = vunpack.c.l.b16 %v1454
      %v1487 = vunpack.c.l.b16 %v1455
      %v1488 = vunpack.c.l.b16 %v1456
      %v1489 = vunpack.c.l.b16 %v1457
      %v1490 = vunpack.c.l.b16 %v1458
      %v1491 = vpack.c.b16 %v1476, %v1475
      %v1492 = vpack.c.b16 %v1478, %v1477
      %v1493 = vpack.c.b16 %v1480, %v1479
      %v1494 = vpack.c.b16 %v1482, %v1481
      %v1495 = vpack.c.b16 %v1484, %v1483
      %v1496 = vpack.c.b16 %v1486, %v1485
      %v1497 = vpack.c.b16 %v1488, %v1487
      %v1498 = vpack.c.b16 %v1490, %v1489
      %1507 = vmatprep.subr.bf16.mxu0 0
      %1508 = vmatpush1.bf16.msra.mxu0 %v1491
      %1509 = vmatprep.subr.bf16.mxu0 0
      %1510 = vmatpush1.bf16.msra.mxu0 %v1492
      %1511 = vmatprep.subr.bf16.mxu0 0
      %1512 = vmatpush1.bf16.msra.mxu0 %v1493
      %1513 = vmatprep.subr.bf16.mxu0 0
      %1514 = vmatpush1.bf16.msra.mxu0 %v1494
      %1515 = vmatprep.subr.bf16.mxu0 0
      %1516 = vmatpush1.bf16.msra.mxu0 %v1495
      %1517 = vmatprep.subr.bf16.mxu0 0
      %1518 = vmatpush1.bf16.msra.mxu0 %v1496
      %1519 = vmatprep.subr.bf16.mxu0 0
      %1520 = vmatpush1.bf16.msra.mxu0 %v1497
      %1521 = vmatprep.subr.bf16.mxu0 0
      %1522 = vmatpush1.bf16.msra.mxu0 %v1498
      %1523 = vmatprep.subr.bf16.mxu0 0
      %1524 = vmatpush1.bf16.msra.mxu0 0
      %1525 = vmatprep.subr.bf16.mxu0 0
      %1526 = vmatpush1.bf16.msra.mxu0 0
      %1527 = vmatprep.subr.bf16.mxu0 0
      %1528 = vmatpush1.bf16.msra.mxu0 0
      %1529 = vmatprep.subr.bf16.mxu0 0
      %1530 = vmatpush1.bf16.msra.mxu0 0
      %1531 = vmatprep.subr.bf16.mxu0 0
      %1532 = vmatpush1.bf16.msra.mxu0 0
      %1533 = vmatprep.subr.bf16.mxu0 0
      %1534 = vmatpush1.bf16.msra.mxu0 0
      %1535 = vmatprep.subr.bf16.mxu0 0
      %1536 = vmatpush1.bf16.msra.mxu0 0
      %1537 = vmatprep.subr.bf16.mxu0 0
      %1538 = vmatpush1.bf16.msra.mxu0 0
      %1539 = vmatprep.mubr.bf16.mxu0 0
      %1540 = vmatmul.mubr.bf16.gmra.mrb[0].mxu0 %v1434
      %v1541 = vpop.f32.mrb[0].mxu0
      %v1542 = vadd.f32 0.0, %v1541
      %v1543 = vpop.f32.mrb[0].mxu0
      %v1544 = vpop.f32.mrb[0].mxu0
      %v1545 = vadd.f32 0.0, %v1544
      %v1546 = vpop.f32.mrb[0].mxu0
      %1547 = vmatprep.mubr.bf16.mxu0 0
      %1548 = vmatmul.mubr.bf16.gmra.mrb[0].mxu0 %v1435
      %v1549 = vpop.f32.mrb[0].mxu0
      %v1550 = vadd.f32 0.0, %v1549
      %v1551 = vpop.f32.mrb[0].mxu0
      %v1552 = vpop.f32.mrb[0].mxu0
      %v1553 = vadd.f32 0.0, %v1552
      %v1554 = vpop.f32.mrb[0].mxu0
      %1555 = vmatprep.mubr.bf16.mxu0 0
      %1556 = vmatmul.mubr.bf16.gmra.mrb[0].mxu0 %v1436
      %v1557 = vpop.f32.mrb[0].mxu0
      %v1558 = vadd.f32 0.0, %v1557
      %v1559 = vpop.f32.mrb[0].mxu0
      %v1560 = vpop.f32.mrb[0].mxu0
      %v1561 = vadd.f32 0.0, %v1560
      %v1562 = vpop.f32.mrb[0].mxu0
      %1563 = vmatprep.mubr.bf16.mxu0 0
      %1564 = vmatmul.mubr.bf16.gmra.mrb[0].mxu0 %v1437
      %v1565 = vpop.f32.mrb[0].mxu0
      %v1566 = vadd.f32 0.0, %v1565
      %v1567 = vpop.f32.mrb[0].mxu0
      %v1568 = vpop.f32.mrb[0].mxu0
      %v1569 = vadd.f32 0.0, %v1568
      %v1570 = vpop.f32.mrb[0].mxu0
      %1571 = vmatprep.mubr.bf16.mxu0 0
      %1572 = vmatmul.mubr.bf16.gmra.mrb[0].mxu0 %v1438
      %v1573 = vpop.f32.mrb[0].mxu0
      %v1574 = vadd.f32 0.0, %v1573
      %v1575 = vpop.f32.mrb[0].mxu0
      %v1576 = vpop.f32.mrb[0].mxu0
      %v1577 = vadd.f32 0.0, %v1576
      %v1578 = vpop.f32.mrb[0].mxu0
      %1579 = vmatprep.mubr.bf16.mxu0 0
      %1580 = vmatmul.mubr.bf16.gmra.mrb[0].mxu0 %v1439
      %v1581 = vpop.f32.mrb[0].mxu0
      %v1582 = vadd.f32 0.0, %v1581
      %v1583 = vpop.f32.mrb[0].mxu0
      %v1584 = vpop.f32.mrb[0].mxu0
      %v1585 = vadd.f32 0.0, %v1584
      %v1586 = vpop.f32.mrb[0].mxu0
      %1587 = vmatprep.mubr.bf16.mxu0 0
      %1588 = vmatmul.mubr.bf16.gmra.mrb[0].mxu0 %v1440
      %v1589 = vpop.f32.mrb[0].mxu0
      %v1590 = vadd.f32 0.0, %v1589
      %v1591 = vpop.f32.mrb[0].mxu0
      %v1592 = vpop.f32.mrb[0].mxu0
      %v1593 = vadd.f32 0.0, %v1592
      %v1594 = vpop.f32.mrb[0].mxu0
      %1595 = vmatprep.mubr.bf16.mxu0 0
      %1596 = vmatmul.mubr.bf16.gmra.mrb[0].mxu0 %v1441
      %v1597 = vpop.f32.mrb[0].mxu0
      %v1598 = vadd.f32 0.0, %v1597
      %v1599 = vpop.f32.mrb[0].mxu0
      %v1600 = vpop.f32.mrb[0].mxu0
      %v1601 = vadd.f32 0.0, %v1600
      %v1602 = vpop.f32.mrb[0].mxu0
      %1603 = vdwg.mxu0
      %v1604 = vadd.f32 %v1372, %v1542
      %v1605 = vadd.f32 %v1375, %v1545
      %v1606 = vadd.f32 %v1380, %v1550
      %v1607 = vadd.f32 %v1383, %v1553
      %v1608 = vadd.f32 %v1388, %v1558
      %v1609 = vadd.f32 %v1391, %v1561
      %v1610 = vadd.f32 %v1396, %v1566
      %v1611 = vadd.f32 %v1399, %v1569
      %v1612 = vadd.f32 %v1404, %v1574
      %v1613 = vadd.f32 %v1407, %v1577
      %v1614 = vadd.f32 %v1412, %v1582
      %v1615 = vadd.f32 %v1415, %v1585
      %v1616 = vadd.f32 %v1420, %v1590
      %v1617 = vadd.f32 %v1423, %v1593
      %v1618 = vadd.f32 %v1428, %v1598
      %v1619 = vadd.f32 %v1431, %v1601
      %v1620 = vld [vmem:[#allocation3 + $0x8] sm:$0xff]
      %v1621 = vld [vmem:[#allocation3 + $0x10] sm:$0xff]
      %v1622 = vld [vmem:[#allocation3 + $0x18] sm:$0xff]
      %v1623 = vld [vmem:[#allocation3 + $0x20] sm:$0xff]
      %v1624 = vld [vmem:[#allocation3 + $0x28] sm:$0xff]
      %v1625 = vld [vmem:[#allocation3 + $0x30] sm:$0xff]
      %v1626 = vld [vmem:[#allocation3 + $0x38] sm:$0xff]
      %v1627 = vld [vmem:[#allocation3 + $0x40] sm:$0xff]
      %s1628 = scalar_lea.vmem %s1, 192
      %v1629 = vld [vmem:[%s1628] sm:$0xf]
      %v1630 = vld [vmem:[%s1628 + $0x4] sm:$0xf]
      %v1631 = vld [vmem:[%s1628 + $0x8] sm:$0xf]
      %v1632 = vld [vmem:[%s1628 + $0xc] sm:$0xf]
      %v1633 = vld [vmem:[%s1628 + $0x10] sm:$0xf]
      %v1634 = vld [vmem:[%s1628 + $0x14] sm:$0xf]
      %v1635 = vld [vmem:[%s1628 + $0x18] sm:$0xf]
      %v1636 = vld [vmem:[%s1628 + $0x1c] sm:$0xf]
      %v1637 = vld [vmem:[%s1628 + $0x20] sm:$0xf]
      %v1638 = vld [vmem:[%s1628 + $0x24] sm:$0xf]
      %v1639 = vld [vmem:[%s1628 + $0x28] sm:$0xf]
      %v1640 = vld [vmem:[%s1628 + $0x2c] sm:$0xf]
      %v1641 = vld [vmem:[%s1628 + $0x30] sm:$0xf]
      %v1642 = vld [vmem:[%s1628 + $0x34] sm:$0xf]
      %v1643 = vld [vmem:[%s1628 + $0x38] sm:$0xf]
      %v1644 = vld [vmem:[%s1628 + $0x3c] sm:$0xf]
      %v1661 = vunpack.c.l.b16 %v1629
      %v1662 = vunpack.c.l.b16 %v1630
      %v1663 = vunpack.c.l.b16 %v1631
      %v1664 = vunpack.c.l.b16 %v1632
      %v1665 = vunpack.c.l.b16 %v1633
      %v1666 = vunpack.c.l.b16 %v1634
      %v1667 = vunpack.c.l.b16 %v1635
      %v1668 = vunpack.c.l.b16 %v1636
      %v1669 = vunpack.c.l.b16 %v1637
      %v1670 = vunpack.c.l.b16 %v1638
      %v1671 = vunpack.c.l.b16 %v1639
      %v1672 = vunpack.c.l.b16 %v1640
      %v1673 = vunpack.c.l.b16 %v1641
      %v1674 = vunpack.c.l.b16 %v1642
      %v1675 = vunpack.c.l.b16 %v1643
      %v1676 = vunpack.c.l.b16 %v1644
      %v1677 = vpack.c.b16 %v1662, %v1661
      %v1678 = vpack.c.b16 %v1664, %v1663
      %v1679 = vpack.c.b16 %v1666, %v1665
      %v1680 = vpack.c.b16 %v1668, %v1667
      %v1681 = vpack.c.b16 %v1670, %v1669
      %v1682 = vpack.c.b16 %v1672, %v1671
      %v1683 = vpack.c.b16 %v1674, %v1673
      %v1684 = vpack.c.b16 %v1676, %v1675
      %1693 = vmatprep.subr.bf16.mxu0 0
      %1694 = vmatpush1.bf16.msra.mxu0 %v1677
      %1695 = vmatprep.subr.bf16.mxu0 0
      %1696 = vmatpush1.bf16.msra.mxu0 %v1678
      %1697 = vmatprep.subr.bf16.mxu0 0
      %1698 = vmatpush1.bf16.msra.mxu0 %v1679
      %1699 = vmatprep.subr.bf16.mxu0 0
      %1700 = vmatpush1.bf16.msra.mxu0 %v1680
      %1701 = vmatprep.subr.bf16.mxu0 0
      %1702 = vmatpush1.bf16.msra.mxu0 %v1681
      %1703 = vmatprep.subr.bf16.mxu0 0
      %1704 = vmatpush1.bf16.msra.mxu0 %v1682
      %1705 = vmatprep.subr.bf16.mxu0 0
      %1706 = vmatpush1.bf16.msra.mxu0 %v1683
      %1707 = vmatprep.subr.bf16.mxu0 0
      %1708 = vmatpush1.bf16.msra.mxu0 %v1684
      %1709 = vmatprep.subr.bf16.mxu0 0
      %1710 = vmatpush1.bf16.msra.mxu0 0
      %1711 = vmatprep.subr.bf16.mxu0 0
      %1712 = vmatpush1.bf16.msra.mxu0 0
      %1713 = vmatprep.subr.bf16.mxu0 0
      %1714 = vmatpush1.bf16.msra.mxu0 0
      %1715 = vmatprep.subr.bf16.mxu0 0
      %1716 = vmatpush1.bf16.msra.mxu0 0
      %1717 = vmatprep.subr.bf16.mxu0 0
      %1718 = vmatpush1.bf16.msra.mxu0 0
      %1719 = vmatprep.subr.bf16.mxu0 0
      %1720 = vmatpush1.bf16.msra.mxu0 0
      %1721 = vmatprep.subr.bf16.mxu0 0
      %1722 = vmatpush1.bf16.msra.mxu0 0
      %1723 = vmatprep.subr.bf16.mxu0 0
      %1724 = vmatpush1.bf16.msra.mxu0 0
      %1725 = vmatprep.mubr.bf16.mxu0 0
      %1726 = vmatmul.mubr.bf16.gmra.mrb[0].mxu0 %v1620
      %v1727 = vpop.f32.mrb[0].mxu0
      %v1728 = vadd.f32 0.0, %v1727
      %v1729 = vpop.f32.mrb[0].mxu0
      %v1730 = vpop.f32.mrb[0].mxu0
      %v1731 = vadd.f32 0.0, %v1730
      %v1732 = vpop.f32.mrb[0].mxu0
      %1733 = vmatprep.mubr.bf16.mxu0 0
      %1734 = vmatmul.mubr.bf16.gmra.mrb[0].mxu0 %v1621
      %v1735 = vpop.f32.mrb[0].mxu0
      %v1736 = vadd.f32 0.0, %v1735
      %v1737 = vpop.f32.mrb[0].mxu0
      %v1738 = vpop.f32.mrb[0].mxu0
      %v1739 = vadd.f32 0.0, %v1738
      %v1740 = vpop.f32.mrb[0].mxu0
      %1741 = vmatprep.mubr.bf16.mxu0 0
      %1742 = vmatmul.mubr.bf16.gmra.mrb[0].mxu0 %v1622
      %v1743 = vpop.f32.mrb[0].mxu0
      %v1744 = vadd.f32 0.0, %v1743
      %v1745 = vpop.f32.mrb[0].mxu0
      %v1746 = vpop.f32.mrb[0].mxu0
      %v1747 = vadd.f32 0.0, %v1746
      %v1748 = vpop.f32.mrb[0].mxu0
      %1749 = vmatprep.mubr.bf16.mxu0 0
      %1750 = vmatmul.mubr.bf16.gmra.mrb[0].mxu0 %v1623
      %v1751 = vpop.f32.mrb[0].mxu0
      %v1752 = vadd.f32 0.0, %v1751
      %v1753 = vpop.f32.mrb[0].mxu0
      %v1754 = vpop.f32.mrb[0].mxu0
      %v1755 = vadd.f32 0.0, %v1754
      %v1756 = vpop.f32.mrb[0].mxu0
      %1757 = vmatprep.mubr.bf16.mxu0 0
      %1758 = vmatmul.mubr.bf16.gmra.mrb[0].mxu0 %v1624
      %v1759 = vpop.f32.mrb[0].mxu0
      %v1760 = vadd.f32 0.0, %v1759
      %v1761 = vpop.f32.mrb[0].mxu0
      %v1762 = vpop.f32.mrb[0].mxu0
      %v1763 = vadd.f32 0.0, %v1762
      %v1764 = vpop.f32.mrb[0].mxu0
      %1765 = vmatprep.mubr.bf16.mxu0 0
      %1766 = vmatmul.mubr.bf16.gmra.mrb[0].mxu0 %v1625
      %v1767 = vpop.f32.mrb[0].mxu0
      %v1768 = vadd.f32 0.0, %v1767
      %v1769 = vpop.f32.mrb[0].mxu0
      %v1770 = vpop.f32.mrb[0].mxu0
      %v1771 = vadd.f32 0.0, %v1770
      %v1772 = vpop.f32.mrb[0].mxu0
      %1773 = vmatprep.mubr.bf16.mxu0 0
      %1774 = vmatmul.mubr.bf16.gmra.mrb[0].mxu0 %v1626
      %v1775 = vpop.f32.mrb[0].mxu0
      %v1776 = vadd.f32 0.0, %v1775
      %v1777 = vpop.f32.mrb[0].mxu0
      %v1778 = vpop.f32.mrb[0].mxu0
      %v1779 = vadd.f32 0.0, %v1778
      %v1780 = vpop.f32.mrb[0].mxu0
      %1781 = vmatprep.mubr.bf16.mxu0 0
      %1782 = vmatmul.mubr.bf16.gmra.mrb[0].mxu0 %v1627
      %v1783 = vpop.f32.mrb[0].mxu0
      %v1784 = vadd.f32 0.0, %v1783
      %v1785 = vpop.f32.mrb[0].mxu0
      %v1786 = vpop.f32.mrb[0].mxu0
      %v1787 = vadd.f32 0.0, %v1786
      %v1788 = vpop.f32.mrb[0].mxu0
      %1789 = vdwg.mxu0
      %v1790 = vadd.f32 %v1604, %v1728
      %v1791 = vadd.f32 %v1605, %v1731
      %v1792 = vadd.f32 %v1606, %v1736
      %v1793 = vadd.f32 %v1607, %v1739
      %v1794 = vadd.f32 %v1608, %v1744
      %v1795 = vadd.f32 %v1609, %v1747
      %v1796 = vadd.f32 %v1610, %v1752
      %v1797 = vadd.f32 %v1611, %v1755
      %v1798 = vadd.f32 %v1612, %v1760
      %v1799 = vadd.f32 %v1613, %v1763
      %v1800 = vadd.f32 %v1614, %v1768
      %v1801 = vadd.f32 %v1615, %v1771
      %v1802 = vadd.f32 %v1616, %v1776
      %v1803 = vadd.f32 %v1617, %v1779
      %v1804 = vadd.f32 %v1618, %v1784
      %v1805 = vadd.f32 %v1619, %v1787
      %v1806 = vld [vmem:[%s786 + $0x8] sm:$0xff]
      %v1807 = vld [vmem:[%s786 + $0x10] sm:$0xff]
      %v1808 = vld [vmem:[%s786 + $0x18] sm:$0xff]
      %v1809 = vld [vmem:[%s786 + $0x20] sm:$0xff]
      %v1810 = vld [vmem:[%s786 + $0x28] sm:$0xff]
      %v1811 = vld [vmem:[%s786 + $0x30] sm:$0xff]
      %v1812 = vld [vmem:[%s786 + $0x38] sm:$0xff]
      %v1813 = vld [vmem:[%s786 + $0x40] sm:$0xff]
      %s1814 = scalar_lea.vmem %s1, 256
      %v1815 = vld [vmem:[%s1814] sm:$0xf]
      %v1816 = vld [vmem:[%s1814 + $0x4] sm:$0xf]
      %v1817 = vld [vmem:[%s1814 + $0x8] sm:$0xf]
      %v1818 = vld [vmem:[%s1814 + $0xc] sm:$0xf]
      %v1819 = vld [vmem:[%s1814 + $0x10] sm:$0xf]
      %v1820 = vld [vmem:[%s1814 + $0x14] sm:$0xf]
      %v1821 = vld [vmem:[%s1814 + $0x18] sm:$0xf]
      %v1822 = vld [vmem:[%s1814 + $0x1c] sm:$0xf]
      %v1823 = vld [vmem:[%s1814 + $0x20] sm:$0xf]
      %v1824 = vld [vmem:[%s1814 + $0x24] sm:$0xf]
      %v1825 = vld [vmem:[%s1814 + $0x28] sm:$0xf]
      %v1826 = vld [vmem:[%s1814 + $0x2c] sm:$0xf]
      %v1827 = vld [vmem:[%s1814 + $0x30] sm:$0xf]
      %v1828 = vld [vmem:[%s1814 + $0x34] sm:$0xf]
      %v1829 = vld [vmem:[%s1814 + $0x38] sm:$0xf]
      %v1830 = vld [vmem:[%s1814 + $0x3c] sm:$0xf]
      %v1847 = vunpack.c.l.b16 %v1815
      %v1848 = vunpack.c.l.b16 %v1816
      %v1849 = vunpack.c.l.b16 %v1817
      %v1850 = vunpack.c.l.b16 %v1818
      %v1851 = vunpack.c.l.b16 %v1819
      %v1852 = vunpack.c.l.b16 %v1820
      %v1853 = vunpack.c.l.b16 %v1821
      %v1854 = vunpack.c.l.b16 %v1822
      %v1855 = vunpack.c.l.b16 %v1823
      %v1856 = vunpack.c.l.b16 %v1824
      %v1857 = vunpack.c.l.b16 %v1825
      %v1858 = vunpack.c.l.b16 %v1826
      %v1859 = vunpack.c.l.b16 %v1827
      %v1860 = vunpack.c.l.b16 %v1828
      %v1861 = vunpack.c.l.b16 %v1829
      %v1862 = vunpack.c.l.b16 %v1830
      %v1863 = vpack.c.b16 %v1848, %v1847
      %v1864 = vpack.c.b16 %v1850, %v1849
      %v1865 = vpack.c.b16 %v1852, %v1851
      %v1866 = vpack.c.b16 %v1854, %v1853
      %v1867 = vpack.c.b16 %v1856, %v1855
      %v1868 = vpack.c.b16 %v1858, %v1857
      %v1869 = vpack.c.b16 %v1860, %v1859
      %v1870 = vpack.c.b16 %v1862, %v1861
      %1879 = vmatprep.subr.bf16.mxu0 0
      %1880 = vmatpush1.bf16.msra.mxu0 %v1863
      %1881 = vmatprep.subr.bf16.mxu0 0
      %1882 = vmatpush1.bf16.msra.mxu0 %v1864
      %1883 = vmatprep.subr.bf16.mxu0 0
      %1884 = vmatpush1.bf16.msra.mxu0 %v1865
      %1885 = vmatprep.subr.bf16.mxu0 0
      %1886 = vmatpush1.bf16.msra.mxu0 %v1866
      %1887 = vmatprep.subr.bf16.mxu0 0
      %1888 = vmatpush1.bf16.msra.mxu0 %v1867
      %1889 = vmatprep.subr.bf16.mxu0 0
      %1890 = vmatpush1.bf16.msra.mxu0 %v1868
      %1891 = vmatprep.subr.bf16.mxu0 0
      %1892 = vmatpush1.bf16.msra.mxu0 %v1869
      %1893 = vmatprep.subr.bf16.mxu0 0
      %1894 = vmatpush1.bf16.msra.mxu0 %v1870
      %1895 = vmatprep.subr.bf16.mxu0 0
      %1896 = vmatpush1.bf16.msra.mxu0 0
      %1897 = vmatprep.subr.bf16.mxu0 0
      %1898 = vmatpush1.bf16.msra.mxu0 0
      %1899 = vmatprep.subr.bf16.mxu0 0
      %1900 = vmatpush1.bf16.msra.mxu0 0
      %1901 = vmatprep.subr.bf16.mxu0 0
      %1902 = vmatpush1.bf16.msra.mxu0 0
      %1903 = vmatprep.subr.bf16.mxu0 0
      %1904 = vmatpush1.bf16.msra.mxu0 0
      %1905 = vmatprep.subr.bf16.mxu0 0
      %1906 = vmatpush1.bf16.msra.mxu0 0
      %1907 = vmatprep.subr.bf16.mxu0 0
      %1908 = vmatpush1.bf16.msra.mxu0 0
      %1909 = vmatprep.subr.bf16.mxu0 0
      %1910 = vmatpush1.bf16.msra.mxu0 0
      %1911 = vmatprep.mubr.bf16.mxu0 0
      %1912 = vmatmul.mubr.bf16.gmra.mrb[0].mxu0 %v1806
      %v1913 = vpop.f32.mrb[0].mxu0
      %v1914 = vadd.f32 0.0, %v1913
      %v1915 = vpop.f32.mrb[0].mxu0
      %v1916 = vpop.f32.mrb[0].mxu0
      %v1917 = vadd.f32 0.0, %v1916
      %v1918 = vpop.f32.mrb[0].mxu0
      %1919 = vmatprep.mubr.bf16.mxu0 0
      %1920 = vmatmul.mubr.bf16.gmra.mrb[0].mxu0 %v1807
      %v1921 = vpop.f32.mrb[0].mxu0
      %v1922 = vadd.f32 0.0, %v1921
      %v1923 = vpop.f32.mrb[0].mxu0
      %v1924 = vpop.f32.mrb[0].mxu0
      %v1925 = vadd.f32 0.0, %v1924
      %v1926 = vpop.f32.mrb[0].mxu0
      %1927 = vmatprep.mubr.bf16.mxu0 0
      %1928 = vmatmul.mubr.bf16.gmra.mrb[0].mxu0 %v1808
      %v1929 = vpop.f32.mrb[0].mxu0
      %v1930 = vadd.f32 0.0, %v1929
      %v1931 = vpop.f32.mrb[0].mxu0
      %v1932 = vpop.f32.mrb[0].mxu0
      %v1933 = vadd.f32 0.0, %v1932
      %v1934 = vpop.f32.mrb[0].mxu0
      %1935 = vmatprep.mubr.bf16.mxu0 0
      %1936 = vmatmul.mubr.bf16.gmra.mrb[0].mxu0 %v1809
      %v1937 = vpop.f32.mrb[0].mxu0
      %v1938 = vadd.f32 0.0, %v1937
      %v1939 = vpop.f32.mrb[0].mxu0
      %v1940 = vpop.f32.mrb[0].mxu0
      %v1941 = vadd.f32 0.0, %v1940
      %v1942 = vpop.f32.mrb[0].mxu0
      %1943 = vmatprep.mubr.bf16.mxu0 0
      %1944 = vmatmul.mubr.bf16.gmra.mrb[0].mxu0 %v1810
      %v1945 = vpop.f32.mrb[0].mxu0
      %v1946 = vadd.f32 0.0, %v1945
      %v1947 = vpop.f32.mrb[0].mxu0
      %v1948 = vpop.f32.mrb[0].mxu0
      %v1949 = vadd.f32 0.0, %v1948
      %v1950 = vpop.f32.mrb[0].mxu0
      %1951 = vmatprep.mubr.bf16.mxu0 0
      %1952 = vmatmul.mubr.bf16.gmra.mrb[0].mxu0 %v1811
      %v1953 = vpop.f32.mrb[0].mxu0
      %v1954 = vadd.f32 0.0, %v1953
      %v1955 = vpop.f32.mrb[0].mxu0
      %v1956 = vpop.f32.mrb[0].mxu0
      %v1957 = vadd.f32 0.0, %v1956
      %v1958 = vpop.f32.mrb[0].mxu0
      %1959 = vmatprep.mubr.bf16.mxu0 0
      %1960 = vmatmul.mubr.bf16.gmra.mrb[0].mxu0 %v1812
      %v1961 = vpop.f32.mrb[0].mxu0
      %v1962 = vadd.f32 0.0, %v1961
      %v1963 = vpop.f32.mrb[0].mxu0
      %v1964 = vpop.f32.mrb[0].mxu0
      %v1965 = vadd.f32 0.0, %v1964
      %v1966 = vpop.f32.mrb[0].mxu0
      %1967 = vmatprep.mubr.bf16.mxu0 0
      %1968 = vmatmul.mubr.bf16.gmra.mrb[0].mxu0 %v1813
      %v1969 = vpop.f32.mrb[0].mxu0
      %v1970 = vadd.f32 0.0, %v1969
      %v1971 = vpop.f32.mrb[0].mxu0
      %v1972 = vpop.f32.mrb[0].mxu0
      %v1973 = vadd.f32 0.0, %v1972
      %v1974 = vpop.f32.mrb[0].mxu0
      %1975 = vdwg.mxu0
      %v1976 = vadd.f32 %v1790, %v1914
      %v1977 = vadd.f32 %v1791, %v1917
      %v1978 = vadd.f32 %v1792, %v1922
      %v1979 = vadd.f32 %v1793, %v1925
      %v1980 = vadd.f32 %v1794, %v1930
      %v1981 = vadd.f32 %v1795, %v1933
      %v1982 = vadd.f32 %v1796, %v1938
      %v1983 = vadd.f32 %v1797, %v1941
      %v1984 = vadd.f32 %v1798, %v1946
      %v1985 = vadd.f32 %v1799, %v1949
      %v1986 = vadd.f32 %v1800, %v1954
      %v1987 = vadd.f32 %v1801, %v1957
      %v1988 = vadd.f32 %v1802, %v1962
      %v1989 = vadd.f32 %v1803, %v1965
      %v1990 = vadd.f32 %v1804, %v1970
      %v1991 = vadd.f32 %v1805, %v1973
      %v1992 = vld [vmem:[%s1076 + $0x8] sm:$0xff]
      %v1993 = vld [vmem:[%s1076 + $0x10] sm:$0xff]
      %v1994 = vld [vmem:[%s1076 + $0x18] sm:$0xff]
      %v1995 = vld [vmem:[%s1076 + $0x20] sm:$0xff]
      %v1996 = vld [vmem:[%s1076 + $0x28] sm:$0xff]
      %v1997 = vld [vmem:[%s1076 + $0x30] sm:$0xff]
      %v1998 = vld [vmem:[%s1076 + $0x38] sm:$0xff]
      %v1999 = vld [vmem:[%s1076 + $0x40] sm:$0xff]
      %s2000 = scalar_lea.vmem %s1, 320
      %v2001 = vld [vmem:[%s2000] sm:$0xf]
      %v2002 = vld [vmem:[%s2000 + $0x4] sm:$0xf]
      %v2003 = vld [vmem:[%s2000 + $0x8] sm:$0xf]
      %v2004 = vld [vmem:[%s2000 + $0xc] sm:$0xf]
      %v2005 = vld [vmem:[%s2000 + $0x10] sm:$0xf]
      %v2006 = vld [vmem:[%s2000 + $0x14] sm:$0xf]
      %v2007 = vld [vmem:[%s2000 + $0x18] sm:$0xf]
      %v2008 = vld [vmem:[%s2000 + $0x1c] sm:$0xf]
      %v2009 = vld [vmem:[%s2000 + $0x20] sm:$0xf]
      %v2010 = vld [vmem:[%s2000 + $0x24] sm:$0xf]
      %v2011 = vld [vmem:[%s2000 + $0x28] sm:$0xf]
      %v2012 = vld [vmem:[%s2000 + $0x2c] sm:$0xf]
      %v2013 = vld [vmem:[%s2000 + $0x30] sm:$0xf]
      %v2014 = vld [vmem:[%s2000 + $0x34] sm:$0xf]
      %v2015 = vld [vmem:[%s2000 + $0x38] sm:$0xf]
      %v2016 = vld [vmem:[%s2000 + $0x3c] sm:$0xf]
      %v2033 = vunpack.c.l.b16 %v2001
      %v2034 = vunpack.c.l.b16 %v2002
      %v2035 = vunpack.c.l.b16 %v2003
      %v2036 = vunpack.c.l.b16 %v2004
      %v2037 = vunpack.c.l.b16 %v2005
      %v2038 = vunpack.c.l.b16 %v2006
      %v2039 = vunpack.c.l.b16 %v2007
      %v2040 = vunpack.c.l.b16 %v2008
      %v2041 = vunpack.c.l.b16 %v2009
      %v2042 = vunpack.c.l.b16 %v2010
      %v2043 = vunpack.c.l.b16 %v2011
      %v2044 = vunpack.c.l.b16 %v2012
      %v2045 = vunpack.c.l.b16 %v2013
      %v2046 = vunpack.c.l.b16 %v2014
      %v2047 = vunpack.c.l.b16 %v2015
      %v2048 = vunpack.c.l.b16 %v2016
      %v2049 = vpack.c.b16 %v2034, %v2033
      %v2050 = vpack.c.b16 %v2036, %v2035
      %v2051 = vpack.c.b16 %v2038, %v2037
      %v2052 = vpack.c.b16 %v2040, %v2039
      %v2053 = vpack.c.b16 %v2042, %v2041
      %v2054 = vpack.c.b16 %v2044, %v2043
      %v2055 = vpack.c.b16 %v2046, %v2045
      %v2056 = vpack.c.b16 %v2048, %v2047
      %2065 = vmatprep.subr.bf16.mxu0 0
      %2066 = vmatpush1.bf16.msra.mxu0 %v2049
      %2067 = vmatprep.subr.bf16.mxu0 0
      %2068 = vmatpush1.bf16.msra.mxu0 %v2050
      %2069 = vmatprep.subr.bf16.mxu0 0
      %2070 = vmatpush1.bf16.msra.mxu0 %v2051
      %2071 = vmatprep.subr.bf16.mxu0 0
      %2072 = vmatpush1.bf16.msra.mxu0 %v2052
      %2073 = vmatprep.subr.bf16.mxu0 0
      %2074 = vmatpush1.bf16.msra.mxu0 %v2053
      %2075 = vmatprep.subr.bf16.mxu0 0
      %2076 = vmatpush1.bf16.msra.mxu0 %v2054
      %2077 = vmatprep.subr.bf16.mxu0 0
      %2078 = vmatpush1.bf16.msra.mxu0 %v2055
      %2079 = vmatprep.subr.bf16.mxu0 0
      %2080 = vmatpush1.bf16.msra.mxu0 %v2056
      %2081 = vmatprep.subr.bf16.mxu0 0
      %2082 = vmatpush1.bf16.msra.mxu0 0
      %2083 = vmatprep.subr.bf16.mxu0 0
      %2084 = vmatpush1.bf16.msra.mxu0 0
      %2085 = vmatprep.subr.bf16.mxu0 0
      %2086 = vmatpush1.bf16.msra.mxu0 0
      %2087 = vmatprep.subr.bf16.mxu0 0
      %2088 = vmatpush1.bf16.msra.mxu0 0
      %2089 = vmatprep.subr.bf16.mxu0 0
      %2090 = vmatpush1.bf16.msra.mxu0 0
      %2091 = vmatprep.subr.bf16.mxu0 0
      %2092 = vmatpush1.bf16.msra.mxu0 0
      %2093 = vmatprep.subr.bf16.mxu0 0
      %2094 = vmatpush1.bf16.msra.mxu0 0
      %2095 = vmatprep.subr.bf16.mxu0 0
      %2096 = vmatpush1.bf16.msra.mxu0 0
      %2097 = vmatprep.mubr.bf16.mxu0 0
      %2098 = vmatmul.mubr.bf16.gmra.mrb[0].mxu0 %v1992
      %v2099 = vpop.f32.mrb[0].mxu0
      %v2100 = vadd.f32 0.0, %v2099
      %v2101 = vpop.f32.mrb[0].mxu0
      %v2102 = vpop.f32.mrb[0].mxu0
      %v2103 = vadd.f32 0.0, %v2102
      %v2104 = vpop.f32.mrb[0].mxu0
      %2105 = vmatprep.mubr.bf16.mxu0 0
      %2106 = vmatmul.mubr.bf16.gmra.mrb[0].mxu0 %v1993
      %v2107 = vpop.f32.mrb[0].mxu0
      %v2108 = vadd.f32 0.0, %v2107
      %v2109 = vpop.f32.mrb[0].mxu0
      %v2110 = vpop.f32.mrb[0].mxu0
      %v2111 = vadd.f32 0.0, %v2110
      %v2112 = vpop.f32.mrb[0].mxu0
      %2113 = vmatprep.mubr.bf16.mxu0 0
      %2114 = vmatmul.mubr.bf16.gmra.mrb[0].mxu0 %v1994
      %v2115 = vpop.f32.mrb[0].mxu0
      %v2116 = vadd.f32 0.0, %v2115
      %v2117 = vpop.f32.mrb[0].mxu0
      %v2118 = vpop.f32.mrb[0].mxu0
      %v2119 = vadd.f32 0.0, %v2118
      %v2120 = vpop.f32.mrb[0].mxu0
      %2121 = vmatprep.mubr.bf16.mxu0 0
      %2122 = vmatmul.mubr.bf16.gmra.mrb[0].mxu0 %v1995
      %v2123 = vpop.f32.mrb[0].mxu0
      %v2124 = vadd.f32 0.0, %v2123
      %v2125 = vpop.f32.mrb[0].mxu0
      %v2126 = vpop.f32.mrb[0].mxu0
      %v2127 = vadd.f32 0.0, %v2126
      %v2128 = vpop.f32.mrb[0].mxu0
      %2129 = vmatprep.mubr.bf16.mxu0 0
      %2130 = vmatmul.mubr.bf16.gmra.mrb[0].mxu0 %v1996
      %v2131 = vpop.f32.mrb[0].mxu0
      %v2132 = vadd.f32 0.0, %v2131
      %v2133 = vpop.f32.mrb[0].mxu0
      %v2134 = vpop.f32.mrb[0].mxu0
      %v2135 = vadd.f32 0.0, %v2134
      %v2136 = vpop.f32.mrb[0].mxu0
      %2137 = vmatprep.mubr.bf16.mxu0 0
      %2138 = vmatmul.mubr.bf16.gmra.mrb[0].mxu0 %v1997
      %v2139 = vpop.f32.mrb[0].mxu0
      %v2140 = vadd.f32 0.0, %v2139
      %v2141 = vpop.f32.mrb[0].mxu0
      %v2142 = vpop.f32.mrb[0].mxu0
      %v2143 = vadd.f32 0.0, %v2142
      %v2144 = vpop.f32.mrb[0].mxu0
      %2145 = vmatprep.mubr.bf16.mxu0 0
      %2146 = vmatmul.mubr.bf16.gmra.mrb[0].mxu0 %v1998
      %v2147 = vpop.f32.mrb[0].mxu0
      %v2148 = vadd.f32 0.0, %v2147
      %v2149 = vpop.f32.mrb[0].mxu0
      %v2150 = vpop.f32.mrb[0].mxu0
      %v2151 = vadd.f32 0.0, %v2150
      %v2152 = vpop.f32.mrb[0].mxu0
      %2153 = vmatprep.mubr.bf16.mxu0 0
      %2154 = vmatmul.mubr.bf16.gmra.mrb[0].mxu0 %v1999
      %v2155 = vpop.f32.mrb[0].mxu0
      %v2156 = vadd.f32 0.0, %v2155
      %v2157 = vpop.f32.mrb[0].mxu0
      %v2158 = vpop.f32.mrb[0].mxu0
      %v2159 = vadd.f32 0.0, %v2158
      %v2160 = vpop.f32.mrb[0].mxu0
      %2161 = vdwg.mxu0
      %v2162 = vadd.f32 %v1976, %v2100
      %v2163 = vadd.f32 %v1977, %v2103
      %v2164 = vadd.f32 %v1978, %v2108
      %v2165 = vadd.f32 %v1979, %v2111
      %v2166 = vadd.f32 %v1980, %v2116
      %v2167 = vadd.f32 %v1981, %v2119
      %v2168 = vadd.f32 %v1982, %v2124
      %v2169 = vadd.f32 %v1983, %v2127
      %v2170 = vadd.f32 %v1984, %v2132
      %v2171 = vadd.f32 %v1985, %v2135
      %v2172 = vadd.f32 %v1986, %v2140
      %v2173 = vadd.f32 %v1987, %v2143
      %v2174 = vadd.f32 %v1988, %v2148
      %v2175 = vadd.f32 %v1989, %v2151
      %v2176 = vadd.f32 %v1990, %v2156
      %v2177 = vadd.f32 %v1991, %v2159
      %v2178 = vld [vmem:[#allocation3 + $0x10] sm:$0xff]
      %v2179 = vld [vmem:[#allocation3 + $0x18] sm:$0xff]
      %v2180 = vld [vmem:[#allocation3 + $0x20] sm:$0xff]
      %v2181 = vld [vmem:[#allocation3 + $0x28] sm:$0xff]
      %v2182 = vld [vmem:[#allocation3 + $0x30] sm:$0xff]
      %v2183 = vld [vmem:[#allocation3 + $0x38] sm:$0xff]
      %v2184 = vld [vmem:[#allocation3 + $0x40] sm:$0xff]
      %v2185 = vld [vmem:[#allocation3 + $0x48] sm:$0xff]
      %s2186 = scalar_lea.vmem %s1, 384
      %v2187 = vld [vmem:[%s2186] sm:$0xf]
      %v2188 = vld [vmem:[%s2186 + $0x4] sm:$0xf]
      %v2189 = vld [vmem:[%s2186 + $0x8] sm:$0xf]
      %v2190 = vld [vmem:[%s2186 + $0xc] sm:$0xf]
      %v2191 = vld [vmem:[%s2186 + $0x10] sm:$0xf]
      %v2192 = vld [vmem:[%s2186 + $0x14] sm:$0xf]
      %v2193 = vld [vmem:[%s2186 + $0x18] sm:$0xf]
      %v2194 = vld [vmem:[%s2186 + $0x1c] sm:$0xf]
      %v2195 = vld [vmem:[%s2186 + $0x20] sm:$0xf]
      %v2196 = vld [vmem:[%s2186 + $0x24] sm:$0xf]
      %v2197 = vld [vmem:[%s2186 + $0x28] sm:$0xf]
      %v2198 = vld [vmem:[%s2186 + $0x2c] sm:$0xf]
      %v2199 = vld [vmem:[%s2186 + $0x30] sm:$0xf]
      %v2200 = vld [vmem:[%s2186 + $0x34] sm:$0xf]
      %v2201 = vld [vmem:[%s2186 + $0x38] sm:$0xf]
      %v2202 = vld [vmem:[%s2186 + $0x3c] sm:$0xf]
      %v2219 = vunpack.c.l.b16 %v2187
      %v2220 = vunpack.c.l.b16 %v2188
      %v2221 = vunpack.c.l.b16 %v2189
      %v2222 = vunpack.c.l.b16 %v2190
      %v2223 = vunpack.c.l.b16 %v2191
      %v2224 = vunpack.c.l.b16 %v2192
      %v2225 = vunpack.c.l.b16 %v2193
      %v2226 = vunpack.c.l.b16 %v2194
      %v2227 = vunpack.c.l.b16 %v2195
      %v2228 = vunpack.c.l.b16 %v2196
      %v2229 = vunpack.c.l.b16 %v2197
      %v2230 = vunpack.c.l.b16 %v2198
      %v2231 = vunpack.c.l.b16 %v2199
      %v2232 = vunpack.c.l.b16 %v2200
      %v2233 = vunpack.c.l.b16 %v2201
      %v2234 = vunpack.c.l.b16 %v2202
      %v2235 = vpack.c.b16 %v2220, %v2219
      %v2236 = vpack.c.b16 %v2222, %v2221
      %v2237 = vpack.c.b16 %v2224, %v2223
      %v2238 = vpack.c.b16 %v2226, %v2225
      %v2239 = vpack.c.b16 %v2228, %v2227
      %v2240 = vpack.c.b16 %v2230, %v2229
      %v2241 = vpack.c.b16 %v2232, %v2231
      %v2242 = vpack.c.b16 %v2234, %v2233
      %2251 = vmatprep.subr.bf16.mxu0 0
      %2252 = vmatpush1.bf16.msra.mxu0 %v2235
      %2253 = vmatprep.subr.bf16.mxu0 0
      %2254 = vmatpush1.bf16.msra.mxu0 %v2236
      %2255 = vmatprep.subr.bf16.mxu0 0
      %2256 = vmatpush1.bf16.msra.mxu0 %v2237
      %2257 = vmatprep.subr.bf16.mxu0 0
      %2258 = vmatpush1.bf16.msra.mxu0 %v2238
      %2259 = vmatprep.subr.bf16.mxu0 0
      %2260 = vmatpush1.bf16.msra.mxu0 %v2239
      %2261 = vmatprep.subr.bf16.mxu0 0
      %2262 = vmatpush1.bf16.msra.mxu0 %v2240
      %2263 = vmatprep.subr.bf16.mxu0 0
      %2264 = vmatpush1.bf16.msra.mxu0 %v2241
      %2265 = vmatprep.subr.bf16.mxu0 0
      %2266 = vmatpush1.bf16.msra.mxu0 %v2242
      %2267 = vmatprep.subr.bf16.mxu0 0
      %2268 = vmatpush1.bf16.msra.mxu0 0
      %2269 = vmatprep.subr.bf16.mxu0 0
      %2270 = vmatpush1.bf16.msra.mxu0 0
      %2271 = vmatprep.subr.bf16.mxu0 0
      %2272 = vmatpush1.bf16.msra.mxu0 0
      %2273 = vmatprep.subr.bf16.mxu0 0
      %2274 = vmatpush1.bf16.msra.mxu0 0
      %2275 = vmatprep.subr.bf16.mxu0 0
      %2276 = vmatpush1.bf16.msra.mxu0 0
      %2277 = vmatprep.subr.bf16.mxu0 0
      %2278 = vmatpush1.bf16.msra.mxu0 0
      %2279 = vmatprep.subr.bf16.mxu0 0
      %2280 = vmatpush1.bf16.msra.mxu0 0
      %2281 = vmatprep.subr.bf16.mxu0 0
      %2282 = vmatpush1.bf16.msra.mxu0 0
      %2283 = vmatprep.mubr.bf16.mxu0 0
      %2284 = vmatmul.mubr.bf16.gmra.mrb[0].mxu0 %v2178
      %v2285 = vpop.f32.mrb[0].mxu0
      %v2286 = vadd.f32 0.0, %v2285
      %v2287 = vpop.f32.mrb[0].mxu0
      %v2288 = vpop.f32.mrb[0].mxu0
      %v2289 = vadd.f32 0.0, %v2288
      %v2290 = vpop.f32.mrb[0].mxu0
      %2291 = vmatprep.mubr.bf16.mxu0 0
      %2292 = vmatmul.mubr.bf16.gmra.mrb[0].mxu0 %v2179
      %v2293 = vpop.f32.mrb[0].mxu0
      %v2294 = vadd.f32 0.0, %v2293
      %v2295 = vpop.f32.mrb[0].mxu0
      %v2296 = vpop.f32.mrb[0].mxu0
      %v2297 = vadd.f32 0.0, %v2296
      %v2298 = vpop.f32.mrb[0].mxu0
      %2299 = vmatprep.mubr.bf16.mxu0 0
      %2300 = vmatmul.mubr.bf16.gmra.mrb[0].mxu0 %v2180
      %v2301 = vpop.f32.mrb[0].mxu0
      %v2302 = vadd.f32 0.0, %v2301
      %v2303 = vpop.f32.mrb[0].mxu0
      %v2304 = vpop.f32.mrb[0].mxu0
      %v2305 = vadd.f32 0.0, %v2304
      %v2306 = vpop.f32.mrb[0].mxu0
      %2307 = vmatprep.mubr.bf16.mxu0 0
      %2308 = vmatmul.mubr.bf16.gmra.mrb[0].mxu0 %v2181
      %v2309 = vpop.f32.mrb[0].mxu0
      %v2310 = vadd.f32 0.0, %v2309
      %v2311 = vpop.f32.mrb[0].mxu0
      %v2312 = vpop.f32.mrb[0].mxu0
      %v2313 = vadd.f32 0.0, %v2312
      %v2314 = vpop.f32.mrb[0].mxu0
      %2315 = vmatprep.mubr.bf16.mxu0 0
      %2316 = vmatmul.mubr.bf16.gmra.mrb[0].mxu0 %v2182
      %v2317 = vpop.f32.mrb[0].mxu0
      %v2318 = vadd.f32 0.0, %v2317
      %v2319 = vpop.f32.mrb[0].mxu0
      %v2320 = vpop.f32.mrb[0].mxu0
      %v2321 = vadd.f32 0.0, %v2320
      %v2322 = vpop.f32.mrb[0].mxu0
      %2323 = vmatprep.mubr.bf16.mxu0 0
      %2324 = vmatmul.mubr.bf16.gmra.mrb[0].mxu0 %v2183
      %v2325 = vpop.f32.mrb[0].mxu0
      %v2326 = vadd.f32 0.0, %v2325
      %v2327 = vpop.f32.mrb[0].mxu0
      %v2328 = vpop.f32.mrb[0].mxu0
      %v2329 = vadd.f32 0.0, %v2328
      %v2330 = vpop.f32.mrb[0].mxu0
      %2331 = vmatprep.mubr.bf16.mxu0 0
      %2332 = vmatmul.mubr.bf16.gmra.mrb[0].mxu0 %v2184
      %v2333 = vpop.f32.mrb[0].mxu0
      %v2334 = vadd.f32 0.0, %v2333
      %v2335 = vpop.f32.mrb[0].mxu0
      %v2336 = vpop.f32.mrb[0].mxu0
      %v2337 = vadd.f32 0.0, %v2336
      %v2338 = vpop.f32.mrb[0].mxu0
      %2339 = vmatprep.mubr.bf16.mxu0 0
      %2340 = vmatmul.mubr.bf16.gmra.mrb[0].mxu0 %v2185
      %v2341 = vpop.f32.mrb[0].mxu0
      %v2342 = vadd.f32 0.0, %v2341
      %v2343 = vpop.f32.mrb[0].mxu0
      %v2344 = vpop.f32.mrb[0].mxu0
      %v2345 = vadd.f32 0.0, %v2344
      %v2346 = vpop.f32.mrb[0].mxu0
      %2347 = vdwg.mxu0
      %v2348 = vadd.f32 %v2162, %v2286
      %v2349 = vadd.f32 %v2163, %v2289
      %v2350 = vadd.f32 %v2164, %v2294
      %v2351 = vadd.f32 %v2165, %v2297
      %v2352 = vadd.f32 %v2166, %v2302
      %v2353 = vadd.f32 %v2167, %v2305
      %v2354 = vadd.f32 %v2168, %v2310
      %v2355 = vadd.f32 %v2169, %v2313
      %v2356 = vadd.f32 %v2170, %v2318
      %v2357 = vadd.f32 %v2171, %v2321
      %v2358 = vadd.f32 %v2172, %v2326
      %v2359 = vadd.f32 %v2173, %v2329
      %v2360 = vadd.f32 %v2174, %v2334
      %v2361 = vadd.f32 %v2175, %v2337
      %v2362 = vadd.f32 %v2176, %v2342
      %v2363 = vadd.f32 %v2177, %v2345
      %v2364 = vld [vmem:[%s786 + $0x10] sm:$0xff]
      %v2365 = vld [vmem:[%s786 + $0x18] sm:$0xff]
      %v2366 = vld [vmem:[%s786 + $0x20] sm:$0xff]
      %v2367 = vld [vmem:[%s786 + $0x28] sm:$0xff]
      %v2368 = vld [vmem:[%s786 + $0x30] sm:$0xff]
      %v2369 = vld [vmem:[%s786 + $0x38] sm:$0xff]
      %v2370 = vld [vmem:[%s786 + $0x40] sm:$0xff]
      %v2371 = vld [vmem:[%s786 + $0x48] sm:$0xff]
      %s2372 = scalar_lea.vmem %s1, 448
      %v2373 = vld [vmem:[%s2372] sm:$0xf]
      %v2374 = vld [vmem:[%s2372 + $0x4] sm:$0xf]
      %v2375 = vld [vmem:[%s2372 + $0x8] sm:$0xf]
      %v2376 = vld [vmem:[%s2372 + $0xc] sm:$0xf]
      %v2377 = vld [vmem:[%s2372 + $0x10] sm:$0xf]
      %v2378 = vld [vmem:[%s2372 + $0x14] sm:$0xf]
      %v2379 = vld [vmem:[%s2372 + $0x18] sm:$0xf]
      %v2380 = vld [vmem:[%s2372 + $0x1c] sm:$0xf]
      %v2381 = vld [vmem:[%s2372 + $0x20] sm:$0xf]
      %v2382 = vld [vmem:[%s2372 + $0x24] sm:$0xf]
      %v2383 = vld [vmem:[%s2372 + $0x28] sm:$0xf]
      %v2384 = vld [vmem:[%s2372 + $0x2c] sm:$0xf]
      %v2385 = vld [vmem:[%s2372 + $0x30] sm:$0xf]
      %v2386 = vld [vmem:[%s2372 + $0x34] sm:$0xf]
      %v2387 = vld [vmem:[%s2372 + $0x38] sm:$0xf]
      %v2388 = vld [vmem:[%s2372 + $0x3c] sm:$0xf]
      %v2405 = vunpack.c.l.b16 %v2373
      %v2406 = vunpack.c.l.b16 %v2374
      %v2407 = vunpack.c.l.b16 %v2375
      %v2408 = vunpack.c.l.b16 %v2376
      %v2409 = vunpack.c.l.b16 %v2377
      %v2410 = vunpack.c.l.b16 %v2378
      %v2411 = vunpack.c.l.b16 %v2379
      %v2412 = vunpack.c.l.b16 %v2380
      %v2413 = vunpack.c.l.b16 %v2381
      %v2414 = vunpack.c.l.b16 %v2382
      %v2415 = vunpack.c.l.b16 %v2383
      %v2416 = vunpack.c.l.b16 %v2384
      %v2417 = vunpack.c.l.b16 %v2385
      %v2418 = vunpack.c.l.b16 %v2386
      %v2419 = vunpack.c.l.b16 %v2387
      %v2420 = vunpack.c.l.b16 %v2388
      %v2421 = vpack.c.b16 %v2406, %v2405
      %v2422 = vpack.c.b16 %v2408, %v2407
      %v2423 = vpack.c.b16 %v2410, %v2409
      %v2424 = vpack.c.b16 %v2412, %v2411
      %v2425 = vpack.c.b16 %v2414, %v2413
      %v2426 = vpack.c.b16 %v2416, %v2415
      %v2427 = vpack.c.b16 %v2418, %v2417
      %v2428 = vpack.c.b16 %v2420, %v2419
      %2437 = vmatprep.subr.bf16.mxu0 0
      %2438 = vmatpush1.bf16.msra.mxu0 %v2421
      %2439 = vmatprep.subr.bf16.mxu0 0
      %2440 = vmatpush1.bf16.msra.mxu0 %v2422
      %2441 = vmatprep.subr.bf16.mxu0 0
      %2442 = vmatpush1.bf16.msra.mxu0 %v2423
      %2443 = vmatprep.subr.bf16.mxu0 0
      %2444 = vmatpush1.bf16.msra.mxu0 %v2424
      %2445 = vmatprep.subr.bf16.mxu0 0
      %2446 = vmatpush1.bf16.msra.mxu0 %v2425
      %2447 = vmatprep.subr.bf16.mxu0 0
      %2448 = vmatpush1.bf16.msra.mxu0 %v2426
      %2449 = vmatprep.subr.bf16.mxu0 0
      %2450 = vmatpush1.bf16.msra.mxu0 %v2427
      %2451 = vmatprep.subr.bf16.mxu0 0
      %2452 = vmatpush1.bf16.msra.mxu0 %v2428
      %2453 = vmatprep.subr.bf16.mxu0 0
      %2454 = vmatpush1.bf16.msra.mxu0 0
      %2455 = vmatprep.subr.bf16.mxu0 0
      %2456 = vmatpush1.bf16.msra.mxu0 0
      %2457 = vmatprep.subr.bf16.mxu0 0
      %2458 = vmatpush1.bf16.msra.mxu0 0
      %2459 = vmatprep.subr.bf16.mxu0 0
      %2460 = vmatpush1.bf16.msra.mxu0 0
      %2461 = vmatprep.subr.bf16.mxu0 0
      %2462 = vmatpush1.bf16.msra.mxu0 0
      %2463 = vmatprep.subr.bf16.mxu0 0
      %2464 = vmatpush1.bf16.msra.mxu0 0
      %2465 = vmatprep.subr.bf16.mxu0 0
      %2466 = vmatpush1.bf16.msra.mxu0 0
      %2467 = vmatprep.subr.bf16.mxu0 0
      %2468 = vmatpush1.bf16.msra.mxu0 0
      %2469 = vmatprep.mubr.bf16.mxu0 0
      %2470 = vmatmul.mubr.bf16.gmra.mrb[0].mxu0 %v2364
      %v2471 = vpop.f32.mrb[0].mxu0
      %v2472 = vadd.f32 0.0, %v2471
      %v2473 = vpop.f32.mrb[0].mxu0
      %v2474 = vpop.f32.mrb[0].mxu0
      %v2475 = vadd.f32 0.0, %v2474
      %v2476 = vpop.f32.mrb[0].mxu0
      %2477 = vmatprep.mubr.bf16.mxu0 0
      %2478 = vmatmul.mubr.bf16.gmra.mrb[0].mxu0 %v2365
      %v2479 = vpop.f32.mrb[0].mxu0
      %v2480 = vadd.f32 0.0, %v2479
      %v2481 = vpop.f32.mrb[0].mxu0
      %v2482 = vpop.f32.mrb[0].mxu0
      %v2483 = vadd.f32 0.0, %v2482
      %v2484 = vpop.f32.mrb[0].mxu0
      %2485 = vmatprep.mubr.bf16.mxu0 0
      %2486 = vmatmul.mubr.bf16.gmra.mrb[0].mxu0 %v2366
      %v2487 = vpop.f32.mrb[0].mxu0
      %v2488 = vadd.f32 0.0, %v2487
      %v2489 = vpop.f32.mrb[0].mxu0
      %v2490 = vpop.f32.mrb[0].mxu0
      %v2491 = vadd.f32 0.0, %v2490
      %v2492 = vpop.f32.mrb[0].mxu0
      %2493 = vmatprep.mubr.bf16.mxu0 0
      %2494 = vmatmul.mubr.bf16.gmra.mrb[0].mxu0 %v2367
      %v2495 = vpop.f32.mrb[0].mxu0
      %v2496 = vadd.f32 0.0, %v2495
      %v2497 = vpop.f32.mrb[0].mxu0
      %v2498 = vpop.f32.mrb[0].mxu0
      %v2499 = vadd.f32 0.0, %v2498
      %v2500 = vpop.f32.mrb[0].mxu0
      %2501 = vmatprep.mubr.bf16.mxu0 0
      %2502 = vmatmul.mubr.bf16.gmra.mrb[0].mxu0 %v2368
      %v2503 = vpop.f32.mrb[0].mxu0
      %v2504 = vadd.f32 0.0, %v2503
      %v2505 = vpop.f32.mrb[0].mxu0
      %v2506 = vpop.f32.mrb[0].mxu0
      %v2507 = vadd.f32 0.0, %v2506
      %v2508 = vpop.f32.mrb[0].mxu0
      %2509 = vmatprep.mubr.bf16.mxu0 0
      %2510 = vmatmul.mubr.bf16.gmra.mrb[0].mxu0 %v2369
      %v2511 = vpop.f32.mrb[0].mxu0
      %v2512 = vadd.f32 0.0, %v2511
      %v2513 = vpop.f32.mrb[0].mxu0
      %v2514 = vpop.f32.mrb[0].mxu0
      %v2515 = vadd.f32 0.0, %v2514
      %v2516 = vpop.f32.mrb[0].mxu0
      %2517 = vmatprep.mubr.bf16.mxu0 0
      %2518 = vmatmul.mubr.bf16.gmra.mrb[0].mxu0 %v2370
      %v2519 = vpop.f32.mrb[0].mxu0
      %v2520 = vadd.f32 0.0, %v2519
      %v2521 = vpop.f32.mrb[0].mxu0
      %v2522 = vpop.f32.mrb[0].mxu0
      %v2523 = vadd.f32 0.0, %v2522
      %v2524 = vpop.f32.mrb[0].mxu0
      %2525 = vmatprep.mubr.bf16.mxu0 0
      %2526 = vmatmul.mubr.bf16.gmra.mrb[0].mxu0 %v2371
      %v2527 = vpop.f32.mrb[0].mxu0
      %v2528 = vadd.f32 0.0, %v2527
      %v2529 = vpop.f32.mrb[0].mxu0
      %v2530 = vpop.f32.mrb[0].mxu0
      %v2531 = vadd.f32 0.0, %v2530
      %v2532 = vpop.f32.mrb[0].mxu0
      %2533 = vdwg.mxu0
      %v2534 = vadd.f32 %v2348, %v2472
      %v2535 = vadd.f32 %v2349, %v2475
      %v2536 = vadd.f32 %v2350, %v2480
      %v2537 = vadd.f32 %v2351, %v2483
      %v2538 = vadd.f32 %v2352, %v2488
      %v2539 = vadd.f32 %v2353, %v2491
      %v2540 = vadd.f32 %v2354, %v2496
      %v2541 = vadd.f32 %v2355, %v2499
      %v2542 = vadd.f32 %v2356, %v2504
      %v2543 = vadd.f32 %v2357, %v2507
      %v2544 = vadd.f32 %v2358, %v2512
      %v2545 = vadd.f32 %v2359, %v2515
      %v2546 = vadd.f32 %v2360, %v2520
      %v2547 = vadd.f32 %v2361, %v2523
      %v2548 = vadd.f32 %v2362, %v2528
      %v2549 = vadd.f32 %v2363, %v2531
      %v2550 = vld [vmem:[%s1076 + $0x10] sm:$0xff]
      %v2551 = vld [vmem:[%s1076 + $0x18] sm:$0xff]
      %v2552 = vld [vmem:[%s1076 + $0x20] sm:$0xff]
      %v2553 = vld [vmem:[%s1076 + $0x28] sm:$0xff]
      %v2554 = vld [vmem:[%s1076 + $0x30] sm:$0xff]
      %v2555 = vld [vmem:[%s1076 + $0x38] sm:$0xff]
      %v2556 = vld [vmem:[%s1076 + $0x40] sm:$0xff]
      %v2557 = vld [vmem:[%s1076 + $0x48] sm:$0xff]
      %s2558 = scalar_lea.vmem %s1, 512
      %v2559 = vld [vmem:[%s2558] sm:$0xf]
      %v2560 = vld [vmem:[%s2558 + $0x4] sm:$0xf]
      %v2561 = vld [vmem:[%s2558 + $0x8] sm:$0xf]
      %v2562 = vld [vmem:[%s2558 + $0xc] sm:$0xf]
      %v2563 = vld [vmem:[%s2558 + $0x10] sm:$0xf]
      %v2564 = vld [vmem:[%s2558 + $0x14] sm:$0xf]
      %v2565 = vld [vmem:[%s2558 + $0x18] sm:$0xf]
      %v2566 = vld [vmem:[%s2558 + $0x1c] sm:$0xf]
      %v2567 = vld [vmem:[%s2558 + $0x20] sm:$0xf]
      %v2568 = vld [vmem:[%s2558 + $0x24] sm:$0xf]
      %v2569 = vld [vmem:[%s2558 + $0x28] sm:$0xf]
      %v2570 = vld [vmem:[%s2558 + $0x2c] sm:$0xf]
      %v2571 = vld [vmem:[%s2558 + $0x30] sm:$0xf]
      %v2572 = vld [vmem:[%s2558 + $0x34] sm:$0xf]
      %v2573 = vld [vmem:[%s2558 + $0x38] sm:$0xf]
      %v2574 = vld [vmem:[%s2558 + $0x3c] sm:$0xf]
      %v2591 = vunpack.c.l.b16 %v2559
      %v2592 = vunpack.c.l.b16 %v2560
      %v2593 = vunpack.c.l.b16 %v2561
      %v2594 = vunpack.c.l.b16 %v2562
      %v2595 = vunpack.c.l.b16 %v2563
      %v2596 = vunpack.c.l.b16 %v2564
      %v2597 = vunpack.c.l.b16 %v2565
      %v2598 = vunpack.c.l.b16 %v2566
      %v2599 = vunpack.c.l.b16 %v2567
      %v2600 = vunpack.c.l.b16 %v2568
      %v2601 = vunpack.c.l.b16 %v2569
      %v2602 = vunpack.c.l.b16 %v2570
      %v2603 = vunpack.c.l.b16 %v2571
      %v2604 = vunpack.c.l.b16 %v2572
      %v2605 = vunpack.c.l.b16 %v2573
      %v2606 = vunpack.c.l.b16 %v2574
      %v2607 = vpack.c.b16 %v2592, %v2591
      %v2608 = vpack.c.b16 %v2594, %v2593
      %v2609 = vpack.c.b16 %v2596, %v2595
      %v2610 = vpack.c.b16 %v2598, %v2597
      %v2611 = vpack.c.b16 %v2600, %v2599
      %v2612 = vpack.c.b16 %v2602, %v2601
      %v2613 = vpack.c.b16 %v2604, %v2603
      %v2614 = vpack.c.b16 %v2606, %v2605
      %2623 = vmatprep.subr.bf16.mxu0 0
      %2624 = vmatpush1.bf16.msra.mxu0 %v2607
      %2625 = vmatprep.subr.bf16.mxu0 0
      %2626 = vmatpush1.bf16.msra.mxu0 %v2608
      %2627 = vmatprep.subr.bf16.mxu0 0
      %2628 = vmatpush1.bf16.msra.mxu0 %v2609
      %2629 = vmatprep.subr.bf16.mxu0 0
      %2630 = vmatpush1.bf16.msra.mxu0 %v2610
      %2631 = vmatprep.subr.bf16.mxu0 0
      %2632 = vmatpush1.bf16.msra.mxu0 %v2611
      %2633 = vmatprep.subr.bf16.mxu0 0
      %2634 = vmatpush1.bf16.msra.mxu0 %v2612
      %2635 = vmatprep.subr.bf16.mxu0 0
      %2636 = vmatpush1.bf16.msra.mxu0 %v2613
      %2637 = vmatprep.subr.bf16.mxu0 0
      %2638 = vmatpush1.bf16.msra.mxu0 %v2614
      %2639 = vmatprep.subr.bf16.mxu0 0
      %2640 = vmatpush1.bf16.msra.mxu0 0
      %2641 = vmatprep.subr.bf16.mxu0 0
      %2642 = vmatpush1.bf16.msra.mxu0 0
      %2643 = vmatprep.subr.bf16.mxu0 0
      %2644 = vmatpush1.bf16.msra.mxu0 0
      %2645 = vmatprep.subr.bf16.mxu0 0
      %2646 = vmatpush1.bf16.msra.mxu0 0
      %2647 = vmatprep.subr.bf16.mxu0 0
      %2648 = vmatpush1.bf16.msra.mxu0 0
      %2649 = vmatprep.subr.bf16.mxu0 0
      %2650 = vmatpush1.bf16.msra.mxu0 0
      %2651 = vmatprep.subr.bf16.mxu0 0
      %2652 = vmatpush1.bf16.msra.mxu0 0
      %2653 = vmatprep.subr.bf16.mxu0 0
      %2654 = vmatpush1.bf16.msra.mxu0 0
      %2655 = vmatprep.mubr.bf16.mxu0 0
      %2656 = vmatmul.mubr.bf16.gmra.mrb[0].mxu0 %v2550
      %v2657 = vpop.f32.mrb[0].mxu0
      %v2658 = vadd.f32 0.0, %v2657
      %v2659 = vpop.f32.mrb[0].mxu0
      %v2660 = vpop.f32.mrb[0].mxu0
      %v2661 = vadd.f32 0.0, %v2660
      %v2662 = vpop.f32.mrb[0].mxu0
      %2663 = vmatprep.mubr.bf16.mxu0 0
      %2664 = vmatmul.mubr.bf16.gmra.mrb[0].mxu0 %v2551
      %v2665 = vpop.f32.mrb[0].mxu0
      %v2666 = vadd.f32 0.0, %v2665
      %v2667 = vpop.f32.mrb[0].mxu0
      %v2668 = vpop.f32.mrb[0].mxu0
      %v2669 = vadd.f32 0.0, %v2668
      %v2670 = vpop.f32.mrb[0].mxu0
      %2671 = vmatprep.mubr.bf16.mxu0 0
      %2672 = vmatmul.mubr.bf16.gmra.mrb[0].mxu0 %v2552
      %v2673 = vpop.f32.mrb[0].mxu0
      %v2674 = vadd.f32 0.0, %v2673
      %v2675 = vpop.f32.mrb[0].mxu0
      %v2676 = vpop.f32.mrb[0].mxu0
      %v2677 = vadd.f32 0.0, %v2676
      %v2678 = vpop.f32.mrb[0].mxu0
      %2679 = vmatprep.mubr.bf16.mxu0 0
      %2680 = vmatmul.mubr.bf16.gmra.mrb[0].mxu0 %v2553
      %v2681 = vpop.f32.mrb[0].mxu0
      %v2682 = vadd.f32 0.0, %v2681
      %v2683 = vpop.f32.mrb[0].mxu0
      %v2684 = vpop.f32.mrb[0].mxu0
      %v2685 = vadd.f32 0.0, %v2684
      %v2686 = vpop.f32.mrb[0].mxu0
      %2687 = vmatprep.mubr.bf16.mxu0 0
      %2688 = vmatmul.mubr.bf16.gmra.mrb[0].mxu0 %v2554
      %v2689 = vpop.f32.mrb[0].mxu0
      %v2690 = vadd.f32 0.0, %v2689
      %v2691 = vpop.f32.mrb[0].mxu0
      %v2692 = vpop.f32.mrb[0].mxu0
      %v2693 = vadd.f32 0.0, %v2692
      %v2694 = vpop.f32.mrb[0].mxu0
      %2695 = vmatprep.mubr.bf16.mxu0 0
      %2696 = vmatmul.mubr.bf16.gmra.mrb[0].mxu0 %v2555
      %v2697 = vpop.f32.mrb[0].mxu0
      %v2698 = vadd.f32 0.0, %v2697
      %v2699 = vpop.f32.mrb[0].mxu0
      %v2700 = vpop.f32.mrb[0].mxu0
      %v2701 = vadd.f32 0.0, %v2700
      %v2702 = vpop.f32.mrb[0].mxu0
      %2703 = vmatprep.mubr.bf16.mxu0 0
      %2704 = vmatmul.mubr.bf16.gmra.mrb[0].mxu0 %v2556
      %v2705 = vpop.f32.mrb[0].mxu0
      %v2706 = vadd.f32 0.0, %v2705
      %v2707 = vpop.f32.mrb[0].mxu0
      %v2708 = vpop.f32.mrb[0].mxu0
      %v2709 = vadd.f32 0.0, %v2708
      %v2710 = vpop.f32.mrb[0].mxu0
      %2711 = vmatprep.mubr.bf16.mxu0 0
      %2712 = vmatmul.mubr.bf16.gmra.mrb[0].mxu0 %v2557
      %v2713 = vpop.f32.mrb[0].mxu0
      %v2714 = vadd.f32 0.0, %v2713
      %v2715 = vpop.f32.mrb[0].mxu0
      %v2716 = vpop.f32.mrb[0].mxu0
      %v2717 = vadd.f32 0.0, %v2716
      %v2718 = vpop.f32.mrb[0].mxu0
      %2719 = vdwg.mxu0
      %v2720 = vadd.f32 %v2534, %v2658
      %v2721 = vadd.f32 %v2535, %v2661
      %v2722 = vadd.f32 %v2536, %v2666
      %v2723 = vadd.f32 %v2537, %v2669
      %v2724 = vadd.f32 %v2538, %v2674
      %v2725 = vadd.f32 %v2539, %v2677
      %v2726 = vadd.f32 %v2540, %v2682
      %v2727 = vadd.f32 %v2541, %v2685
      %v2728 = vadd.f32 %v2542, %v2690
      %v2729 = vadd.f32 %v2543, %v2693
      %v2730 = vadd.f32 %v2544, %v2698
      %v2731 = vadd.f32 %v2545, %v2701
      %v2732 = vadd.f32 %v2546, %v2706
      %v2733 = vadd.f32 %v2547, %v2709
      %v2734 = vadd.f32 %v2548, %v2714
      %v2735 = vadd.f32 %v2549, %v2717
      %v2736 = vld [vmem:[%s3] sm:$0x1]
      %v2738 = vlaneseq
      %v2739 = vshrl.u32 %v2738, 7
      %v2740 = vsub.s32 0, %v2739
      %v2741 = vrot.slane %v2736, %v2740
      %v2743 = vadd.f32 %v2720, %v2741
      %v2744 = vadd.f32 %v2721, %v2741
      %v2745 = vadd.f32 %v2722, %v2741
      %v2746 = vadd.f32 %v2723, %v2741
      %v2747 = vadd.f32 %v2724, %v2741
      %v2748 = vadd.f32 %v2725, %v2741
      %v2749 = vadd.f32 %v2726, %v2741
      %v2750 = vadd.f32 %v2727, %v2741
      %v2751 = vadd.f32 %v2728, %v2741
      %v2752 = vadd.f32 %v2729, %v2741
      %v2753 = vadd.f32 %v2730, %v2741
      %v2754 = vadd.f32 %v2731, %v2741
      %v2755 = vadd.f32 %v2732, %v2741
      %v2756 = vadd.f32 %v2733, %v2741
      %v2757 = vadd.f32 %v2734, %v2741
      %v2758 = vadd.f32 %v2735, %v2741
      %v2759 = vmax.f32 %v2743, 0.0
      %v2760 = vmax.f32 %v2744, 0.0
      %v2761 = vmax.f32 %v2745, 0.0
      %v2762 = vmax.f32 %v2746, 0.0
      %v2763 = vmax.f32 %v2747, 0.0
      %v2764 = vmax.f32 %v2748, 0.0
      %v2765 = vmax.f32 %v2749, 0.0
      %v2766 = vmax.f32 %v2750, 0.0
      %v2767 = vmax.f32 %v2751, 0.0
      %v2768 = vmax.f32 %v2752, 0.0
      %v2769 = vmax.f32 %v2753, 0.0
      %v2770 = vmax.f32 %v2754, 0.0
      %v2771 = vmax.f32 %v2755, 0.0
      %v2772 = vmax.f32 %v2756, 0.0
      %v2773 = vmax.f32 %v2757, 0.0
      %v2774 = vmax.f32 %v2758, 0.0
      %v2775 = vpack.c.bf16 %v2760, %v2759
      %v2776 = vpack.c.bf16 %v2762, %v2761
      %v2777 = vpack.c.bf16 %v2764, %v2763
      %v2778 = vpack.c.bf16 %v2766, %v2765
      %v2779 = vpack.c.bf16 %v2768, %v2767
      %v2780 = vpack.c.bf16 %v2770, %v2769
      %v2781 = vpack.c.bf16 %v2772, %v2771
      %v2782 = vpack.c.bf16 %v2774, %v2773
      %2783 = vst [vmem:[%s233 + $0x8] sm:$0xff] %v2775
      %2784 = vst [vmem:[%s233 + $0x20] sm:$0xff] %v2776
      %2785 = vst [vmem:[%s233 + $0x38] sm:$0xff] %v2777
      %2786 = vst [vmem:[%s233 + $0x50] sm:$0xff] %v2778
      %2787 = vst [vmem:[%s233 + $0x68] sm:$0xff] %v2779
      %2788 = vst [vmem:[%s233 + $0x80] sm:$0xff] %v2780
      %2789 = vst [vmem:[%s233 + $0x98] sm:$0xff] %v2781
      %2790 = vst [vmem:[%s233 + $0xb0] sm:$0xff] %v2782
      %v2791 = vld [vmem:[#allocation3 + $0x40] sm:$0xff]
      %v2792 = vld [vmem:[#allocation3 + $0x48] sm:$0xff]
      %v2793 = vld [vmem:[#allocation3 + $0x50] sm:$0xff]
      %v2794 = vld [vmem:[#allocation3 + $0x58] sm:$0xff]
      %v2795 = vld [vmem:[#allocation3 + $0x60] sm:$0xff]
      %v2796 = vld [vmem:[#allocation3 + $0x68] sm:$0xff]
      %v2797 = vld [vmem:[#allocation3 + $0x70] sm:$0xff]
      %v2798 = vld [vmem:[#allocation3 + $0x78] sm:$0xff]
      %v2799 = vld [vmem:[%s1] sm:$0xf]
      %v2800 = vld [vmem:[%s1 + $0x4] sm:$0xf]
      %v2801 = vld [vmem:[%s1 + $0x8] sm:$0xf]
      %v2802 = vld [vmem:[%s1 + $0xc] sm:$0xf]
      %v2803 = vld [vmem:[%s1 + $0x10] sm:$0xf]
      %v2804 = vld [vmem:[%s1 + $0x14] sm:$0xf]
      %v2805 = vld [vmem:[%s1 + $0x18] sm:$0xf]
      %v2806 = vld [vmem:[%s1 + $0x1c] sm:$0xf]
      %v2807 = vld [vmem:[%s1 + $0x20] sm:$0xf]
      %v2808 = vld [vmem:[%s1 + $0x24] sm:$0xf]
      %v2809 = vld [vmem:[%s1 + $0x28] sm:$0xf]
      %v2810 = vld [vmem:[%s1 + $0x2c] sm:$0xf]
      %v2811 = vld [vmem:[%s1 + $0x30] sm:$0xf]
      %v2812 = vld [vmem:[%s1 + $0x34] sm:$0xf]
      %v2813 = vld [vmem:[%s1 + $0x38] sm:$0xf]
      %v2814 = vld [vmem:[%s1 + $0x3c] sm:$0xf]
      %v2815 = vld [vmem:[%s786 + $0x40] sm:$0xff]
      %v2816 = vld [vmem:[%s786 + $0x48] sm:$0xff]
      %v2817 = vld [vmem:[%s786 + $0x50] sm:$0xff]
      %v2818 = vld [vmem:[%s786 + $0x58] sm:$0xff]
      %v2819 = vld [vmem:[%s786 + $0x60] sm:$0xff]
      %v2820 = vld [vmem:[%s786 + $0x68] sm:$0xff]
      %v2821 = vld [vmem:[%s786 + $0x70] sm:$0xff]
      %v2822 = vld [vmem:[%s786 + $0x78] sm:$0xff]
      %v2823 = vld [vmem:[%s1127] sm:$0xf]
      %v2824 = vld [vmem:[%s1127 + $0x4] sm:$0xf]
      %v2825 = vld [vmem:[%s1127 + $0x8] sm:$0xf]
      %v2826 = vld [vmem:[%s1127 + $0xc] sm:$0xf]
      %v2827 = vld [vmem:[%s1127 + $0x10] sm:$0xf]
      %v2828 = vld [vmem:[%s1127 + $0x14] sm:$0xf]
      %v2829 = vld [vmem:[%s1127 + $0x18] sm:$0xf]
      %v2830 = vld [vmem:[%s1127 + $0x1c] sm:$0xf]
      %v2831 = vld [vmem:[%s1127 + $0x20] sm:$0xf]
      %v2832 = vld [vmem:[%s1127 + $0x24] sm:$0xf]
      %v2833 = vld [vmem:[%s1127 + $0x28] sm:$0xf]
      %v2834 = vld [vmem:[%s1127 + $0x2c] sm:$0xf]
      %v2835 = vld [vmem:[%s1127 + $0x30] sm:$0xf]
      %v2836 = vld [vmem:[%s1127 + $0x34] sm:$0xf]
      %v2837 = vld [vmem:[%s1127 + $0x38] sm:$0xf]
      %v2838 = vld [vmem:[%s1127 + $0x3c] sm:$0xf]
      %v2855 = vunpack.c.l.b16 %v2823
      %v2856 = vunpack.c.l.b16 %v2824
      %v2857 = vunpack.c.l.b16 %v2825
      %v2858 = vunpack.c.l.b16 %v2826
      %v2859 = vunpack.c.l.b16 %v2827
      %v2860 = vunpack.c.l.b16 %v2828
      %v2861 = vunpack.c.l.b16 %v2829
      %v2862 = vunpack.c.l.b16 %v2830
      %v2863 = vunpack.c.l.b16 %v2831
      %v2864 = vunpack.c.l.b16 %v2832
      %v2865 = vunpack.c.l.b16 %v2833
      %v2866 = vunpack.c.l.b16 %v2834
      %v2867 = vunpack.c.l.b16 %v2835
      %v2868 = vunpack.c.l.b16 %v2836
      %v2869 = vunpack.c.l.b16 %v2837
      %v2870 = vunpack.c.l.b16 %v2838
      %v2871 = vpack.c.b16 %v2856, %v2855
      %v2872 = vpack.c.b16 %v2858, %v2857
      %v2873 = vpack.c.b16 %v2860, %v2859
      %v2874 = vpack.c.b16 %v2862, %v2861
      %v2875 = vpack.c.b16 %v2864, %v2863
      %v2876 = vpack.c.b16 %v2866, %v2865
      %v2877 = vpack.c.b16 %v2868, %v2867
      %v2878 = vpack.c.b16 %v2870, %v2869
      %2887 = vmatprep.subr.bf16.mxu0 0
      %2888 = vmatpush1.bf16.msra.mxu0 %v2871
      %2889 = vmatprep.subr.bf16.mxu0 0
      %2890 = vmatpush1.bf16.msra.mxu0 %v2872
      %2891 = vmatprep.subr.bf16.mxu0 0
      %2892 = vmatpush1.bf16.msra.mxu0 %v2873
      %2893 = vmatprep.subr.bf16.mxu0 0
      %2894 = vmatpush1.bf16.msra.mxu0 %v2874
      %2895 = vmatprep.subr.bf16.mxu0 0
      %2896 = vmatpush1.bf16.msra.mxu0 %v2875
      %2897 = vmatprep.subr.bf16.mxu0 0
      %2898 = vmatpush1.bf16.msra.mxu0 %v2876
      %2899 = vmatprep.subr.bf16.mxu0 0
      %2900 = vmatpush1.bf16.msra.mxu0 %v2877
      %2901 = vmatprep.subr.bf16.mxu0 0
      %2902 = vmatpush1.bf16.msra.mxu0 %v2878
      %2903 = vmatprep.subr.bf16.mxu0 0
      %2904 = vmatpush1.bf16.msra.mxu0 0
      %2905 = vmatprep.subr.bf16.mxu0 0
      %2906 = vmatpush1.bf16.msra.mxu0 0
      %2907 = vmatprep.subr.bf16.mxu0 0
      %2908 = vmatpush1.bf16.msra.mxu0 0
      %2909 = vmatprep.subr.bf16.mxu0 0
      %2910 = vmatpush1.bf16.msra.mxu0 0
      %2911 = vmatprep.subr.bf16.mxu0 0
      %2912 = vmatpush1.bf16.msra.mxu0 0
      %2913 = vmatprep.subr.bf16.mxu0 0
      %2914 = vmatpush1.bf16.msra.mxu0 0
      %2915 = vmatprep.subr.bf16.mxu0 0
      %2916 = vmatpush1.bf16.msra.mxu0 0
      %2917 = vmatprep.subr.bf16.mxu0 0
      %2918 = vmatpush1.bf16.msra.mxu0 0
      %2919 = vmatprep.mubr.bf16.mxu0 0
      %2920 = vmatmul.mubr.bf16.gmra.mrb[0].mxu0 %v2815
      %v2921 = vpop.f32.mrb[0].mxu0
      %v2922 = vadd.f32 0.0, %v2921
      %v2923 = vpop.f32.mrb[0].mxu0
      %v2924 = vpop.f32.mrb[0].mxu0
      %v2925 = vadd.f32 0.0, %v2924
      %v2926 = vpop.f32.mrb[0].mxu0
      %2927 = vmatprep.mubr.bf16.mxu0 0
      %2928 = vmatmul.mubr.bf16.gmra.mrb[0].mxu0 %v2816
      %v2929 = vpop.f32.mrb[0].mxu0
      %v2930 = vadd.f32 0.0, %v2929
      %v2931 = vpop.f32.mrb[0].mxu0
      %v2932 = vpop.f32.mrb[0].mxu0
      %v2933 = vadd.f32 0.0, %v2932
      %v2934 = vpop.f32.mrb[0].mxu0
      %2935 = vmatprep.mubr.bf16.mxu0 0
      %2936 = vmatmul.mubr.bf16.gmra.mrb[0].mxu0 %v2817
      %v2937 = vpop.f32.mrb[0].mxu0
      %v2938 = vadd.f32 0.0, %v2937
      %v2939 = vpop.f32.mrb[0].mxu0
      %v2940 = vpop.f32.mrb[0].mxu0
      %v2941 = vadd.f32 0.0, %v2940
      %v2942 = vpop.f32.mrb[0].mxu0
      %2943 = vmatprep.mubr.bf16.mxu0 0
      %2944 = vmatmul.mubr.bf16.gmra.mrb[0].mxu0 %v2818
      %v2945 = vpop.f32.mrb[0].mxu0
      %v2946 = vadd.f32 0.0, %v2945
      %v2947 = vpop.f32.mrb[0].mxu0
      %v2948 = vpop.f32.mrb[0].mxu0
      %v2949 = vadd.f32 0.0, %v2948
      %v2950 = vpop.f32.mrb[0].mxu0
      %2951 = vmatprep.mubr.bf16.mxu0 0
      %2952 = vmatmul.mubr.bf16.gmra.mrb[0].mxu0 %v2819
      %v2953 = vpop.f32.mrb[0].mxu0
      %v2954 = vadd.f32 0.0, %v2953
      %v2955 = vpop.f32.mrb[0].mxu0
      %v2956 = vpop.f32.mrb[0].mxu0
      %v2957 = vadd.f32 0.0, %v2956
      %v2958 = vpop.f32.mrb[0].mxu0
      %2959 = vmatprep.mubr.bf16.mxu0 0
      %2960 = vmatmul.mubr.bf16.gmra.mrb[0].mxu0 %v2820
      %v2961 = vpop.f32.mrb[0].mxu0
      %v2962 = vadd.f32 0.0, %v2961
      %v2963 = vpop.f32.mrb[0].mxu0
      %v2964 = vpop.f32.mrb[0].mxu0
      %v2965 = vadd.f32 0.0, %v2964
      %v2966 = vpop.f32.mrb[0].mxu0
      %2967 = vmatprep.mubr.bf16.mxu0 0
      %2968 = vmatmul.mubr.bf16.gmra.mrb[0].mxu0 %v2821
      %v2969 = vpop.f32.mrb[0].mxu0
      %v2970 = vadd.f32 0.0, %v2969
      %v2971 = vpop.f32.mrb[0].mxu0
      %v2972 = vpop.f32.mrb[0].mxu0
      %v2973 = vadd.f32 0.0, %v2972
      %v2974 = vpop.f32.mrb[0].mxu0
      %2975 = vmatprep.mubr.bf16.mxu0 0
      %2976 = vmatmul.mubr.bf16.gmra.mrb[0].mxu0 %v2822
      %v2977 = vpop.f32.mrb[0].mxu0
      %v2978 = vadd.f32 0.0, %v2977
      %v2979 = vpop.f32.mrb[0].mxu0
      %v2980 = vpop.f32.mrb[0].mxu0
      %v2981 = vadd.f32 0.0, %v2980
      %v2982 = vpop.f32.mrb[0].mxu0
      %2983 = vdwg.mxu0
      %v3000 = vunpack.c.l.b16 %v2799
      %v3001 = vunpack.c.l.b16 %v2800
      %v3002 = vunpack.c.l.b16 %v2801
      %v3003 = vunpack.c.l.b16 %v2802
      %v3004 = vunpack.c.l.b16 %v2803
      %v3005 = vunpack.c.l.b16 %v2804
      %v3006 = vunpack.c.l.b16 %v2805
      %v3007 = vunpack.c.l.b16 %v2806
      %v3008 = vunpack.c.l.b16 %v2807
      %v3009 = vunpack.c.l.b16 %v2808
      %v3010 = vunpack.c.l.b16 %v2809
      %v3011 = vunpack.c.l.b16 %v2810
      %v3012 = vunpack.c.l.b16 %v2811
      %v3013 = vunpack.c.l.b16 %v2812
      %v3014 = vunpack.c.l.b16 %v2813
      %v3015 = vunpack.c.l.b16 %v2814
      %v3016 = vpack.c.b16 %v3001, %v3000
      %v3017 = vpack.c.b16 %v3003, %v3002
      %v3018 = vpack.c.b16 %v3005, %v3004
      %v3019 = vpack.c.b16 %v3007, %v3006
      %v3020 = vpack.c.b16 %v3009, %v3008
      %v3021 = vpack.c.b16 %v3011, %v3010
      %v3022 = vpack.c.b16 %v3013, %v3012
      %v3023 = vpack.c.b16 %v3015, %v3014
      %3032 = vmatprep.subr.bf16.mxu0 0
      %3033 = vmatpush1.bf16.msra.mxu0 %v3016
      %3034 = vmatprep.subr.bf16.mxu0 0
      %3035 = vmatpush1.bf16.msra.mxu0 %v3017
      %3036 = vmatprep.subr.bf16.mxu0 0
      %3037 = vmatpush1.bf16.msra.mxu0 %v3018
      %3038 = vmatprep.subr.bf16.mxu0 0
      %3039 = vmatpush1.bf16.msra.mxu0 %v3019
      %3040 = vmatprep.subr.bf16.mxu0 0
      %3041 = vmatpush1.bf16.msra.mxu0 %v3020
      %3042 = vmatprep.subr.bf16.mxu0 0
      %3043 = vmatpush1.bf16.msra.mxu0 %v3021
      %3044 = vmatprep.subr.bf16.mxu0 0
      %3045 = vmatpush1.bf16.msra.mxu0 %v3022
      %3046 = vmatprep.subr.bf16.mxu0 0
      %3047 = vmatpush1.bf16.msra.mxu0 %v3023
      %3048 = vmatprep.subr.bf16.mxu0 0
      %3049 = vmatpush1.bf16.msra.mxu0 0
      %3050 = vmatprep.subr.bf16.mxu0 0
      %3051 = vmatpush1.bf16.msra.mxu0 0
      %3052 = vmatprep.subr.bf16.mxu0 0
      %3053 = vmatpush1.bf16.msra.mxu0 0
      %3054 = vmatprep.subr.bf16.mxu0 0
      %3055 = vmatpush1.bf16.msra.mxu0 0
      %3056 = vmatprep.subr.bf16.mxu0 0
      %3057 = vmatpush1.bf16.msra.mxu0 0
      %3058 = vmatprep.subr.bf16.mxu0 0
      %3059 = vmatpush1.bf16.msra.mxu0 0
      %3060 = vmatprep.subr.bf16.mxu0 0
      %3061 = vmatpush1.bf16.msra.mxu0 0
      %3062 = vmatprep.subr.bf16.mxu0 0
      %3063 = vmatpush1.bf16.msra.mxu0 0
      %3064 = vmatprep.mubr.bf16.mxu0 0
      %3065 = vmatmul.mubr.bf16.gmra.mrb[0].mxu0 %v2791
      %v3066 = vpop.f32.mrb[0].mxu0
      %v3067 = vadd.f32 %v2922, %v3066
      %v3068 = vpop.f32.mrb[0].mxu0
      %v3069 = vpop.f32.mrb[0].mxu0
      %v3070 = vadd.f32 %v2925, %v3069
      %v3071 = vpop.f32.mrb[0].mxu0
      %3072 = vmatprep.mubr.bf16.mxu0 0
      %3073 = vmatmul.mubr.bf16.gmra.mrb[0].mxu0 %v2792
      %v3074 = vpop.f32.mrb[0].mxu0
      %v3075 = vadd.f32 %v2930, %v3074
      %v3076 = vpop.f32.mrb[0].mxu0
      %v3077 = vpop.f32.mrb[0].mxu0
      %v3078 = vadd.f32 %v2933, %v3077
      %v3079 = vpop.f32.mrb[0].mxu0
      %3080 = vmatprep.mubr.bf16.mxu0 0
      %3081 = vmatmul.mubr.bf16.gmra.mrb[0].mxu0 %v2793
      %v3082 = vpop.f32.mrb[0].mxu0
      %v3083 = vadd.f32 %v2938, %v3082
      %v3084 = vpop.f32.mrb[0].mxu0
      %v3085 = vpop.f32.mrb[0].mxu0
      %v3086 = vadd.f32 %v2941, %v3085
      %v3087 = vpop.f32.mrb[0].mxu0
      %3088 = vmatprep.mubr.bf16.mxu0 0
      %3089 = vmatmul.mubr.bf16.gmra.mrb[0].mxu0 %v2794
      %v3090 = vpop.f32.mrb[0].mxu0
      %v3091 = vadd.f32 %v2946, %v3090
      %v3092 = vpop.f32.mrb[0].mxu0
      %v3093 = vpop.f32.mrb[0].mxu0
      %v3094 = vadd.f32 %v2949, %v3093
      %v3095 = vpop.f32.mrb[0].mxu0
      %3096 = vmatprep.mubr.bf16.mxu0 0
      %3097 = vmatmul.mubr.bf16.gmra.mrb[0].mxu0 %v2795
      %v3098 = vpop.f32.mrb[0].mxu0
      %v3099 = vadd.f32 %v2954, %v3098
      %v3100 = vpop.f32.mrb[0].mxu0
      %v3101 = vpop.f32.mrb[0].mxu0
      %v3102 = vadd.f32 %v2957, %v3101
      %v3103 = vpop.f32.mrb[0].mxu0
      %3104 = vmatprep.mubr.bf16.mxu0 0
      %3105 = vmatmul.mubr.bf16.gmra.mrb[0].mxu0 %v2796
      %v3106 = vpop.f32.mrb[0].mxu0
      %v3107 = vadd.f32 %v2962, %v3106
      %v3108 = vpop.f32.mrb[0].mxu0
      %v3109 = vpop.f32.mrb[0].mxu0
      %v3110 = vadd.f32 %v2965, %v3109
      %v3111 = vpop.f32.mrb[0].mxu0
      %3112 = vmatprep.mubr.bf16.mxu0 0
      %3113 = vmatmul.mubr.bf16.gmra.mrb[0].mxu0 %v2797
      %v3114 = vpop.f32.mrb[0].mxu0
      %v3115 = vadd.f32 %v2970, %v3114
      %v3116 = vpop.f32.mrb[0].mxu0
      %v3117 = vpop.f32.mrb[0].mxu0
      %v3118 = vadd.f32 %v2973, %v3117
      %v3119 = vpop.f32.mrb[0].mxu0
      %3120 = vmatprep.mubr.bf16.mxu0 0
      %3121 = vmatmul.mubr.bf16.gmra.mrb[0].mxu0 %v2798
      %v3122 = vpop.f32.mrb[0].mxu0
      %v3123 = vadd.f32 %v2978, %v3122
      %v3124 = vpop.f32.mrb[0].mxu0
      %v3125 = vpop.f32.mrb[0].mxu0
      %v3126 = vadd.f32 %v2981, %v3125
      %v3127 = vpop.f32.mrb[0].mxu0
      %3128 = vdwg.mxu0
      %v3129 = vld [vmem:[%s1076 + $0x40] sm:$0xff]
      %v3130 = vld [vmem:[%s1076 + $0x48] sm:$0xff]
      %v3131 = vld [vmem:[%s1076 + $0x50] sm:$0xff]
      %v3132 = vld [vmem:[%s1076 + $0x58] sm:$0xff]
      %v3133 = vld [vmem:[%s1076 + $0x60] sm:$0xff]
      %v3134 = vld [vmem:[%s1076 + $0x68] sm:$0xff]
      %v3135 = vld [vmem:[%s1076 + $0x70] sm:$0xff]
      %v3136 = vld [vmem:[%s1076 + $0x78] sm:$0xff]
      %v3137 = vld [vmem:[%s1442] sm:$0xf]
      %v3138 = vld [vmem:[%s1442 + $0x4] sm:$0xf]
      %v3139 = vld [vmem:[%s1442 + $0x8] sm:$0xf]
      %v3140 = vld [vmem:[%s1442 + $0xc] sm:$0xf]
      %v3141 = vld [vmem:[%s1442 + $0x10] sm:$0xf]
      %v3142 = vld [vmem:[%s1442 + $0x14] sm:$0xf]
      %v3143 = vld [vmem:[%s1442 + $0x18] sm:$0xf]
      %v3144 = vld [vmem:[%s1442 + $0x1c] sm:$0xf]
      %v3145 = vld [vmem:[%s1442 + $0x20] sm:$0xf]
      %v3146 = vld [vmem:[%s1442 + $0x24] sm:$0xf]
      %v3147 = vld [vmem:[%s1442 + $0x28] sm:$0xf]
      %v3148 = vld [vmem:[%s1442 + $0x2c] sm:$0xf]
      %v3149 = vld [vmem:[%s1442 + $0x30] sm:$0xf]
      %v3150 = vld [vmem:[%s1442 + $0x34] sm:$0xf]
      %v3151 = vld [vmem:[%s1442 + $0x38] sm:$0xf]
      %v3152 = vld [vmem:[%s1442 + $0x3c] sm:$0xf]
      %v3169 = vunpack.c.l.b16 %v3137
      %v3170 = vunpack.c.l.b16 %v3138
      %v3171 = vunpack.c.l.b16 %v3139
      %v3172 = vunpack.c.l.b16 %v3140
      %v3173 = vunpack.c.l.b16 %v3141
      %v3174 = vunpack.c.l.b16 %v3142
      %v3175 = vunpack.c.l.b16 %v3143
      %v3176 = vunpack.c.l.b16 %v3144
      %v3177 = vunpack.c.l.b16 %v3145
      %v3178 = vunpack.c.l.b16 %v3146
      %v3179 = vunpack.c.l.b16 %v3147
      %v3180 = vunpack.c.l.b16 %v3148
      %v3181 = vunpack.c.l.b16 %v3149
      %v3182 = vunpack.c.l.b16 %v3150
      %v3183 = vunpack.c.l.b16 %v3151
      %v3184 = vunpack.c.l.b16 %v3152
      %v3185 = vpack.c.b16 %v3170, %v3169
      %v3186 = vpack.c.b16 %v3172, %v3171
      %v3187 = vpack.c.b16 %v3174, %v3173
      %v3188 = vpack.c.b16 %v3176, %v3175
      %v3189 = vpack.c.b16 %v3178, %v3177
      %v3190 = vpack.c.b16 %v3180, %v3179
      %v3191 = vpack.c.b16 %v3182, %v3181
      %v3192 = vpack.c.b16 %v3184, %v3183
      %3201 = vmatprep.subr.bf16.mxu0 0
      %3202 = vmatpush1.bf16.msra.mxu0 %v3185
      %3203 = vmatprep.subr.bf16.mxu0 0
      %3204 = vmatpush1.bf16.msra.mxu0 %v3186
      %3205 = vmatprep.subr.bf16.mxu0 0
      %3206 = vmatpush1.bf16.msra.mxu0 %v3187
      %3207 = vmatprep.subr.bf16.mxu0 0
      %3208 = vmatpush1.bf16.msra.mxu0 %v3188
      %3209 = vmatprep.subr.bf16.mxu0 0
      %3210 = vmatpush1.bf16.msra.mxu0 %v3189
      %3211 = vmatprep.subr.bf16.mxu0 0
      %3212 = vmatpush1.bf16.msra.mxu0 %v3190
      %3213 = vmatprep.subr.bf16.mxu0 0
      %3214 = vmatpush1.bf16.msra.mxu0 %v3191
      %3215 = vmatprep.subr.bf16.mxu0 0
      %3216 = vmatpush1.bf16.msra.mxu0 %v3192
      %3217 = vmatprep.subr.bf16.mxu0 0
      %3218 = vmatpush1.bf16.msra.mxu0 0
      %3219 = vmatprep.subr.bf16.mxu0 0
      %3220 = vmatpush1.bf16.msra.mxu0 0
      %3221 = vmatprep.subr.bf16.mxu0 0
      %3222 = vmatpush1.bf16.msra.mxu0 0
      %3223 = vmatprep.subr.bf16.mxu0 0
      %3224 = vmatpush1.bf16.msra.mxu0 0
      %3225 = vmatprep.subr.bf16.mxu0 0
      %3226 = vmatpush1.bf16.msra.mxu0 0
      %3227 = vmatprep.subr.bf16.mxu0 0
      %3228 = vmatpush1.bf16.msra.mxu0 0
      %3229 = vmatprep.subr.bf16.mxu0 0
      %3230 = vmatpush1.bf16.msra.mxu0 0
      %3231 = vmatprep.subr.bf16.mxu0 0
      %3232 = vmatpush1.bf16.msra.mxu0 0
      %3233 = vmatprep.mubr.bf16.mxu0 0
      %3234 = vmatmul.mubr.bf16.gmra.mrb[0].mxu0 %v3129
      %v3235 = vpop.f32.mrb[0].mxu0
      %v3236 = vadd.f32 0.0, %v3235
      %v3237 = vpop.f32.mrb[0].mxu0
      %v3238 = vpop.f32.mrb[0].mxu0
      %v3239 = vadd.f32 0.0, %v3238
      %v3240 = vpop.f32.mrb[0].mxu0
      %3241 = vmatprep.mubr.bf16.mxu0 0
      %3242 = vmatmul.mubr.bf16.gmra.mrb[0].mxu0 %v3130
      %v3243 = vpop.f32.mrb[0].mxu0
      %v3244 = vadd.f32 0.0, %v3243
      %v3245 = vpop.f32.mrb[0].mxu0
      %v3246 = vpop.f32.mrb[0].mxu0
      %v3247 = vadd.f32 0.0, %v3246
      %v3248 = vpop.f32.mrb[0].mxu0
      %3249 = vmatprep.mubr.bf16.mxu0 0
      %3250 = vmatmul.mubr.bf16.gmra.mrb[0].mxu0 %v3131
      %v3251 = vpop.f32.mrb[0].mxu0
      %v3252 = vadd.f32 0.0, %v3251
      %v3253 = vpop.f32.mrb[0].mxu0
      %v3254 = vpop.f32.mrb[0].mxu0
      %v3255 = vadd.f32 0.0, %v3254
      %v3256 = vpop.f32.mrb[0].mxu0
      %3257 = vmatprep.mubr.bf16.mxu0 0
      %3258 = vmatmul.mubr.bf16.gmra.mrb[0].mxu0 %v3132
      %v3259 = vpop.f32.mrb[0].mxu0
      %v3260 = vadd.f32 0.0, %v3259
      %v3261 = vpop.f32.mrb[0].mxu0
      %v3262 = vpop.f32.mrb[0].mxu0
      %v3263 = vadd.f32 0.0, %v3262
      %v3264 = vpop.f32.mrb[0].mxu0
      %3265 = vmatprep.mubr.bf16.mxu0 0
      %3266 = vmatmul.mubr.bf16.gmra.mrb[0].mxu0 %v3133
      %v3267 = vpop.f32.mrb[0].mxu0
      %v3268 = vadd.f32 0.0, %v3267
      %v3269 = vpop.f32.mrb[0].mxu0
      %v3270 = vpop.f32.mrb[0].mxu0
      %v3271 = vadd.f32 0.0, %v3270
      %v3272 = vpop.f32.mrb[0].mxu0
      %3273 = vmatprep.mubr.bf16.mxu0 0
      %3274 = vmatmul.mubr.bf16.gmra.mrb[0].mxu0 %v3134
      %v3275 = vpop.f32.mrb[0].mxu0
      %v3276 = vadd.f32 0.0, %v3275
      %v3277 = vpop.f32.mrb[0].mxu0
      %v3278 = vpop.f32.mrb[0].mxu0
      %v3279 = vadd.f32 0.0, %v3278
      %v3280 = vpop.f32.mrb[0].mxu0
      %3281 = vmatprep.mubr.bf16.mxu0 0
      %3282 = vmatmul.mubr.bf16.gmra.mrb[0].mxu0 %v3135
      %v3283 = vpop.f32.mrb[0].mxu0
      %v3284 = vadd.f32 0.0, %v3283
      %v3285 = vpop.f32.mrb[0].mxu0
      %v3286 = vpop.f32.mrb[0].mxu0
      %v3287 = vadd.f32 0.0, %v3286
      %v3288 = vpop.f32.mrb[0].mxu0
      %3289 = vmatprep.mubr.bf16.mxu0 0
      %3290 = vmatmul.mubr.bf16.gmra.mrb[0].mxu0 %v3136
      %v3291 = vpop.f32.mrb[0].mxu0
      %v3292 = vadd.f32 0.0, %v3291
      %v3293 = vpop.f32.mrb[0].mxu0
      %v3294 = vpop.f32.mrb[0].mxu0
      %v3295 = vadd.f32 0.0, %v3294
      %v3296 = vpop.f32.mrb[0].mxu0
      %3297 = vdwg.mxu0
      %v3298 = vadd.f32 %v3067, %v3236
      %v3299 = vadd.f32 %v3070, %v3239
      %v3300 = vadd.f32 %v3075, %v3244
      %v3301 = vadd.f32 %v3078, %v3247
      %v3302 = vadd.f32 %v3083, %v3252
      %v3303 = vadd.f32 %v3086, %v3255
      %v3304 = vadd.f32 %v3091, %v3260
      %v3305 = vadd.f32 %v3094, %v3263
      %v3306 = vadd.f32 %v3099, %v3268
      %v3307 = vadd.f32 %v3102, %v3271
      %v3308 = vadd.f32 %v3107, %v3276
      %v3309 = vadd.f32 %v3110, %v3279
      %v3310 = vadd.f32 %v3115, %v3284
      %v3311 = vadd.f32 %v3118, %v3287
      %v3312 = vadd.f32 %v3123, %v3292
      %v3313 = vadd.f32 %v3126, %v3295
      %v3314 = vld [vmem:[#allocation3 + $0x48] sm:$0xff]
      %v3315 = vld [vmem:[#allocation3 + $0x50] sm:$0xff]
      %v3316 = vld [vmem:[#allocation3 + $0x58] sm:$0xff]
      %v3317 = vld [vmem:[#allocation3 + $0x60] sm:$0xff]
      %v3318 = vld [vmem:[#allocation3 + $0x68] sm:$0xff]
      %v3319 = vld [vmem:[#allocation3 + $0x70] sm:$0xff]
      %v3320 = vld [vmem:[#allocation3 + $0x78] sm:$0xff]
      %v3321 = vld [vmem:[#allocation3 + $0x80] sm:$0xff]
      %v3322 = vld [vmem:[%s1628] sm:$0xf]
      %v3323 = vld [vmem:[%s1628 + $0x4] sm:$0xf]
      %v3324 = vld [vmem:[%s1628 + $0x8] sm:$0xf]
      %v3325 = vld [vmem:[%s1628 + $0xc] sm:$0xf]
      %v3326 = vld [vmem:[%s1628 + $0x10] sm:$0xf]
      %v3327 = vld [vmem:[%s1628 + $0x14] sm:$0xf]
      %v3328 = vld [vmem:[%s1628 + $0x18] sm:$0xf]
      %v3329 = vld [vmem:[%s1628 + $0x1c] sm:$0xf]
      %v3330 = vld [vmem:[%s1628 + $0x20] sm:$0xf]
      %v3331 = vld [vmem:[%s1628 + $0x24] sm:$0xf]
      %v3332 = vld [vmem:[%s1628 + $0x28] sm:$0xf]
      %v3333 = vld [vmem:[%s1628 + $0x2c] sm:$0xf]
      %v3334 = vld [vmem:[%s1628 + $0x30] sm:$0xf]
      %v3335 = vld [vmem:[%s1628 + $0x34] sm:$0xf]
      %v3336 = vld [vmem:[%s1628 + $0x38] sm:$0xf]
      %v3337 = vld [vmem:[%s1628 + $0x3c] sm:$0xf]
      %v3354 = vunpack.c.l.b16 %v3322
      %v3355 = vunpack.c.l.b16 %v3323
      %v3356 = vunpack.c.l.b16 %v3324
      %v3357 = vunpack.c.l.b16 %v3325
      %v3358 = vunpack.c.l.b16 %v3326
      %v3359 = vunpack.c.l.b16 %v3327
      %v3360 = vunpack.c.l.b16 %v3328
      %v3361 = vunpack.c.l.b16 %v3329
      %v3362 = vunpack.c.l.b16 %v3330
      %v3363 = vunpack.c.l.b16 %v3331
      %v3364 = vunpack.c.l.b16 %v3332
      %v3365 = vunpack.c.l.b16 %v3333
      %v3366 = vunpack.c.l.b16 %v3334
      %v3367 = vunpack.c.l.b16 %v3335
      %v3368 = vunpack.c.l.b16 %v3336
      %v3369 = vunpack.c.l.b16 %v3337
      %v3370 = vpack.c.b16 %v3355, %v3354
      %v3371 = vpack.c.b16 %v3357, %v3356
      %v3372 = vpack.c.b16 %v3359, %v3358
      %v3373 = vpack.c.b16 %v3361, %v3360
      %v3374 = vpack.c.b16 %v3363, %v3362
      %v3375 = vpack.c.b16 %v3365, %v3364
      %v3376 = vpack.c.b16 %v3367, %v3366
      %v3377 = vpack.c.b16 %v3369, %v3368
      %3386 = vmatprep.subr.bf16.mxu0 0
      %3387 = vmatpush1.bf16.msra.mxu0 %v3370
      %3388 = vmatprep.subr.bf16.mxu0 0
      %3389 = vmatpush1.bf16.msra.mxu0 %v3371
      %3390 = vmatprep.subr.bf16.mxu0 0
      %3391 = vmatpush1.bf16.msra.mxu0 %v3372
      %3392 = vmatprep.subr.bf16.mxu0 0
      %3393 = vmatpush1.bf16.msra.mxu0 %v3373
      %3394 = vmatprep.subr.bf16.mxu0 0
      %3395 = vmatpush1.bf16.msra.mxu0 %v3374
      %3396 = vmatprep.subr.bf16.mxu0 0
      %3397 = vmatpush1.bf16.msra.mxu0 %v3375
      %3398 = vmatprep.subr.bf16.mxu0 0
      %3399 = vmatpush1.bf16.msra.mxu0 %v3376
      %3400 = vmatprep.subr.bf16.mxu0 0
      %3401 = vmatpush1.bf16.msra.mxu0 %v3377
      %3402 = vmatprep.subr.bf16.mxu0 0
      %3403 = vmatpush1.bf16.msra.mxu0 0
      %3404 = vmatprep.subr.bf16.mxu0 0
      %3405 = vmatpush1.bf16.msra.mxu0 0
      %3406 = vmatprep.subr.bf16.mxu0 0
      %3407 = vmatpush1.bf16.msra.mxu0 0
      %3408 = vmatprep.subr.bf16.mxu0 0
      %3409 = vmatpush1.bf16.msra.mxu0 0
      %3410 = vmatprep.subr.bf16.mxu0 0
      %3411 = vmatpush1.bf16.msra.mxu0 0
      %3412 = vmatprep.subr.bf16.mxu0 0
      %3413 = vmatpush1.bf16.msra.mxu0 0
      %3414 = vmatprep.subr.bf16.mxu0 0
      %3415 = vmatpush1.bf16.msra.mxu0 0
      %3416 = vmatprep.subr.bf16.mxu0 0
      %3417 = vmatpush1.bf16.msra.mxu0 0
      %3418 = vmatprep.mubr.bf16.mxu0 0
      %3419 = vmatmul.mubr.bf16.gmra.mrb[0].mxu0 %v3314
      %v3420 = vpop.f32.mrb[0].mxu0
      %v3421 = vadd.f32 0.0, %v3420
      %v3422 = vpop.f32.mrb[0].mxu0
      %v3423 = vpop.f32.mrb[0].mxu0
      %v3424 = vadd.f32 0.0, %v3423
      %v3425 = vpop.f32.mrb[0].mxu0
      %3426 = vmatprep.mubr.bf16.mxu0 0
      %3427 = vmatmul.mubr.bf16.gmra.mrb[0].mxu0 %v3315
      %v3428 = vpop.f32.mrb[0].mxu0
      %v3429 = vadd.f32 0.0, %v3428
      %v3430 = vpop.f32.mrb[0].mxu0
      %v3431 = vpop.f32.mrb[0].mxu0
      %v3432 = vadd.f32 0.0, %v3431
      %v3433 = vpop.f32.mrb[0].mxu0
      %3434 = vmatprep.mubr.bf16.mxu0 0
      %3435 = vmatmul.mubr.bf16.gmra.mrb[0].mxu0 %v3316
      %v3436 = vpop.f32.mrb[0].mxu0
      %v3437 = vadd.f32 0.0, %v3436
      %v3438 = vpop.f32.mrb[0].mxu0
      %v3439 = vpop.f32.mrb[0].mxu0
      %v3440 = vadd.f32 0.0, %v3439
      %v3441 = vpop.f32.mrb[0].mxu0
      %3442 = vmatprep.mubr.bf16.mxu0 0
      %3443 = vmatmul.mubr.bf16.gmra.mrb[0].mxu0 %v3317
      %v3444 = vpop.f32.mrb[0].mxu0
      %v3445 = vadd.f32 0.0, %v3444
      %v3446 = vpop.f32.mrb[0].mxu0
      %v3447 = vpop.f32.mrb[0].mxu0
      %v3448 = vadd.f32 0.0, %v3447
      %v3449 = vpop.f32.mrb[0].mxu0
      %3450 = vmatprep.mubr.bf16.mxu0 0
      %3451 = vmatmul.mubr.bf16.gmra.mrb[0].mxu0 %v3318
      %v3452 = vpop.f32.mrb[0].mxu0
      %v3453 = vadd.f32 0.0, %v3452
      %v3454 = vpop.f32.mrb[0].mxu0
      %v3455 = vpop.f32.mrb[0].mxu0
      %v3456 = vadd.f32 0.0, %v3455
      %v3457 = vpop.f32.mrb[0].mxu0
      %3458 = vmatprep.mubr.bf16.mxu0 0
      %3459 = vmatmul.mubr.bf16.gmra.mrb[0].mxu0 %v3319
      %v3460 = vpop.f32.mrb[0].mxu0
      %v3461 = vadd.f32 0.0, %v3460
      %v3462 = vpop.f32.mrb[0].mxu0
      %v3463 = vpop.f32.mrb[0].mxu0
      %v3464 = vadd.f32 0.0, %v3463
      %v3465 = vpop.f32.mrb[0].mxu0
      %3466 = vmatprep.mubr.bf16.mxu0 0
      %3467 = vmatmul.mubr.bf16.gmra.mrb[0].mxu0 %v3320
      %v3468 = vpop.f32.mrb[0].mxu0
      %v3469 = vadd.f32 0.0, %v3468
      %v3470 = vpop.f32.mrb[0].mxu0
      %v3471 = vpop.f32.mrb[0].mxu0
      %v3472 = vadd.f32 0.0, %v3471
      %v3473 = vpop.f32.mrb[0].mxu0
      %3474 = vmatprep.mubr.bf16.mxu0 0
      %3475 = vmatmul.mubr.bf16.gmra.mrb[0].mxu0 %v3321
      %v3476 = vpop.f32.mrb[0].mxu0
      %v3477 = vadd.f32 0.0, %v3476
      %v3478 = vpop.f32.mrb[0].mxu0
      %v3479 = vpop.f32.mrb[0].mxu0
      %v3480 = vadd.f32 0.0, %v3479
      %v3481 = vpop.f32.mrb[0].mxu0
      %3482 = vdwg.mxu0
      %v3483 = vadd.f32 %v3298, %v3421
      %v3484 = vadd.f32 %v3299, %v3424
      %v3485 = vadd.f32 %v3300, %v3429
      %v3486 = vadd.f32 %v3301, %v3432
      %v3487 = vadd.f32 %v3302, %v3437
      %v3488 = vadd.f32 %v3303, %v3440
      %v3489 = vadd.f32 %v3304, %v3445
      %v3490 = vadd.f32 %v3305, %v3448
      %v3491 = vadd.f32 %v3306, %v3453
      %v3492 = vadd.f32 %v3307, %v3456
      %v3493 = vadd.f32 %v3308, %v3461
      %v3494 = vadd.f32 %v3309, %v3464
      %v3495 = vadd.f32 %v3310, %v3469
      %v3496 = vadd.f32 %v3311, %v3472
      %v3497 = vadd.f32 %v3312, %v3477
      %v3498 = vadd.f32 %v3313, %v3480
      %v3499 = vld [vmem:[%s786 + $0x48] sm:$0xff]
      %v3500 = vld [vmem:[%s786 + $0x50] sm:$0xff]
      %v3501 = vld [vmem:[%s786 + $0x58] sm:$0xff]
      %v3502 = vld [vmem:[%s786 + $0x60] sm:$0xff]
      %v3503 = vld [vmem:[%s786 + $0x68] sm:$0xff]
      %v3504 = vld [vmem:[%s786 + $0x70] sm:$0xff]
      %v3505 = vld [vmem:[%s786 + $0x78] sm:$0xff]
      %v3506 = vld [vmem:[%s786 + $0x80] sm:$0xff]
      %v3507 = vld [vmem:[%s1814] sm:$0xf]
      %v3508 = vld [vmem:[%s1814 + $0x4] sm:$0xf]
      %v3509 = vld [vmem:[%s1814 + $0x8] sm:$0xf]
      %v3510 = vld [vmem:[%s1814 + $0xc] sm:$0xf]
      %v3511 = vld [vmem:[%s1814 + $0x10] sm:$0xf]
      %v3512 = vld [vmem:[%s1814 + $0x14] sm:$0xf]
      %v3513 = vld [vmem:[%s1814 + $0x18] sm:$0xf]
      %v3514 = vld [vmem:[%s1814 + $0x1c] sm:$0xf]
      %v3515 = vld [vmem:[%s1814 + $0x20] sm:$0xf]
      %v3516 = vld [vmem:[%s1814 + $0x24] sm:$0xf]
      %v3517 = vld [vmem:[%s1814 + $0x28] sm:$0xf]
      %v3518 = vld [vmem:[%s1814 + $0x2c] sm:$0xf]
      %v3519 = vld [vmem:[%s1814 + $0x30] sm:$0xf]
      %v3520 = vld [vmem:[%s1814 + $0x34] sm:$0xf]
      %v3521 = vld [vmem:[%s1814 + $0x38] sm:$0xf]
      %v3522 = vld [vmem:[%s1814 + $0x3c] sm:$0xf]
      %v3539 = vunpack.c.l.b16 %v3507
      %v3540 = vunpack.c.l.b16 %v3508
      %v3541 = vunpack.c.l.b16 %v3509
      %v3542 = vunpack.c.l.b16 %v3510
      %v3543 = vunpack.c.l.b16 %v3511
      %v3544 = vunpack.c.l.b16 %v3512
      %v3545 = vunpack.c.l.b16 %v3513
      %v3546 = vunpack.c.l.b16 %v3514
      %v3547 = vunpack.c.l.b16 %v3515
      %v3548 = vunpack.c.l.b16 %v3516
      %v3549 = vunpack.c.l.b16 %v3517
      %v3550 = vunpack.c.l.b16 %v3518
      %v3551 = vunpack.c.l.b16 %v3519
      %v3552 = vunpack.c.l.b16 %v3520
      %v3553 = vunpack.c.l.b16 %v3521
      %v3554 = vunpack.c.l.b16 %v3522
      %v3555 = vpack.c.b16 %v3540, %v3539
      %v3556 = vpack.c.b16 %v3542, %v3541
      %v3557 = vpack.c.b16 %v3544, %v3543
      %v3558 = vpack.c.b16 %v3546, %v3545
      %v3559 = vpack.c.b16 %v3548, %v3547
      %v3560 = vpack.c.b16 %v3550, %v3549
      %v3561 = vpack.c.b16 %v3552, %v3551
      %v3562 = vpack.c.b16 %v3554, %v3553
      %3571 = vmatprep.subr.bf16.mxu0 0
      %3572 = vmatpush1.bf16.msra.mxu0 %v3555
      %3573 = vmatprep.subr.bf16.mxu0 0
      %3574 = vmatpush1.bf16.msra.mxu0 %v3556
      %3575 = vmatprep.subr.bf16.mxu0 0
      %3576 = vmatpush1.bf16.msra.mxu0 %v3557
      %3577 = vmatprep.subr.bf16.mxu0 0
      %3578 = vmatpush1.bf16.msra.mxu0 %v3558
      %3579 = vmatprep.subr.bf16.mxu0 0
      %3580 = vmatpush1.bf16.msra.mxu0 %v3559
      %3581 = vmatprep.subr.bf16.mxu0 0
      %3582 = vmatpush1.bf16.msra.mxu0 %v3560
      %3583 = vmatprep.subr.bf16.mxu0 0
      %3584 = vmatpush1.bf16.msra.mxu0 %v3561
      %3585 = vmatprep.subr.bf16.mxu0 0
      %3586 = vmatpush1.bf16.msra.mxu0 %v3562
      %3587 = vmatprep.subr.bf16.mxu0 0
      %3588 = vmatpush1.bf16.msra.mxu0 0
      %3589 = vmatprep.subr.bf16.mxu0 0
      %3590 = vmatpush1.bf16.msra.mxu0 0
      %3591 = vmatprep.subr.bf16.mxu0 0
      %3592 = vmatpush1.bf16.msra.mxu0 0
      %3593 = vmatprep.subr.bf16.mxu0 0
      %3594 = vmatpush1.bf16.msra.mxu0 0
      %3595 = vmatprep.subr.bf16.mxu0 0
      %3596 = vmatpush1.bf16.msra.mxu0 0
      %3597 = vmatprep.subr.bf16.mxu0 0
      %3598 = vmatpush1.bf16.msra.mxu0 0
      %3599 = vmatprep.subr.bf16.mxu0 0
      %3600 = vmatpush1.bf16.msra.mxu0 0
      %3601 = vmatprep.subr.bf16.mxu0 0
      %3602 = vmatpush1.bf16.msra.mxu0 0
      %3603 = vmatprep.mubr.bf16.mxu0 0
      %3604 = vmatmul.mubr.bf16.gmra.mrb[0].mxu0 %v3499
      %v3605 = vpop.f32.mrb[0].mxu0
      %v3606 = vadd.f32 0.0, %v3605
      %v3607 = vpop.f32.mrb[0].mxu0
      %v3608 = vpop.f32.mrb[0].mxu0
      %v3609 = vadd.f32 0.0, %v3608
      %v3610 = vpop.f32.mrb[0].mxu0
      %3611 = vmatprep.mubr.bf16.mxu0 0
      %3612 = vmatmul.mubr.bf16.gmra.mrb[0].mxu0 %v3500
      %v3613 = vpop.f32.mrb[0].mxu0
      %v3614 = vadd.f32 0.0, %v3613
      %v3615 = vpop.f32.mrb[0].mxu0
      %v3616 = vpop.f32.mrb[0].mxu0
      %v3617 = vadd.f32 0.0, %v3616
      %v3618 = vpop.f32.mrb[0].mxu0
      %3619 = vmatprep.mubr.bf16.mxu0 0
      %3620 = vmatmul.mubr.bf16.gmra.mrb[0].mxu0 %v3501
      %v3621 = vpop.f32.mrb[0].mxu0
      %v3622 = vadd.f32 0.0, %v3621
      %v3623 = vpop.f32.mrb[0].mxu0
      %v3624 = vpop.f32.mrb[0].mxu0
      %v3625 = vadd.f32 0.0, %v3624
      %v3626 = vpop.f32.mrb[0].mxu0
      %3627 = vmatprep.mubr.bf16.mxu0 0
      %3628 = vmatmul.mubr.bf16.gmra.mrb[0].mxu0 %v3502
      %v3629 = vpop.f32.mrb[0].mxu0
      %v3630 = vadd.f32 0.0, %v3629
      %v3631 = vpop.f32.mrb[0].mxu0
      %v3632 = vpop.f32.mrb[0].mxu0
      %v3633 = vadd.f32 0.0, %v3632
      %v3634 = vpop.f32.mrb[0].mxu0
      %3635 = vmatprep.mubr.bf16.mxu0 0
      %3636 = vmatmul.mubr.bf16.gmra.mrb[0].mxu0 %v3503
      %v3637 = vpop.f32.mrb[0].mxu0
      %v3638 = vadd.f32 0.0, %v3637
      %v3639 = vpop.f32.mrb[0].mxu0
      %v3640 = vpop.f32.mrb[0].mxu0
      %v3641 = vadd.f32 0.0, %v3640
      %v3642 = vpop.f32.mrb[0].mxu0
      %3643 = vmatprep.mubr.bf16.mxu0 0
      %3644 = vmatmul.mubr.bf16.gmra.mrb[0].mxu0 %v3504
      %v3645 = vpop.f32.mrb[0].mxu0
      %v3646 = vadd.f32 0.0, %v3645
      %v3647 = vpop.f32.mrb[0].mxu0
      %v3648 = vpop.f32.mrb[0].mxu0
      %v3649 = vadd.f32 0.0, %v3648
      %v3650 = vpop.f32.mrb[0].mxu0
      %3651 = vmatprep.mubr.bf16.mxu0 0
      %3652 = vmatmul.mubr.bf16.gmra.mrb[0].mxu0 %v3505
      %v3653 = vpop.f32.mrb[0].mxu0
      %v3654 = vadd.f32 0.0, %v3653
      %v3655 = vpop.f32.mrb[0].mxu0
      %v3656 = vpop.f32.mrb[0].mxu0
      %v3657 = vadd.f32 0.0, %v3656
      %v3658 = vpop.f32.mrb[0].mxu0
      %3659 = vmatprep.mubr.bf16.mxu0 0
      %3660 = vmatmul.mubr.bf16.gmra.mrb[0].mxu0 %v3506
      %v3661 = vpop.f32.mrb[0].mxu0
      %v3662 = vadd.f32 0.0, %v3661
      %v3663 = vpop.f32.mrb[0].mxu0
      %v3664 = vpop.f32.mrb[0].mxu0
      %v3665 = vadd.f32 0.0, %v3664
      %v3666 = vpop.f32.mrb[0].mxu0
      %3667 = vdwg.mxu0
      %v3668 = vadd.f32 %v3483, %v3606
      %v3669 = vadd.f32 %v3484, %v3609
      %v3670 = vadd.f32 %v3485, %v3614
      %v3671 = vadd.f32 %v3486, %v3617
      %v3672 = vadd.f32 %v3487, %v3622
      %v3673 = vadd.f32 %v3488, %v3625
      %v3674 = vadd.f32 %v3489, %v3630
      %v3675 = vadd.f32 %v3490, %v3633
      %v3676 = vadd.f32 %v3491, %v3638
      %v3677 = vadd.f32 %v3492, %v3641
      %v3678 = vadd.f32 %v3493, %v3646
      %v3679 = vadd.f32 %v3494, %v3649
      %v3680 = vadd.f32 %v3495, %v3654
      %v3681 = vadd.f32 %v3496, %v3657
      %v3682 = vadd.f32 %v3497, %v3662
      %v3683 = vadd.f32 %v3498, %v3665
      %v3684 = vld [vmem:[%s1076 + $0x48] sm:$0xff]
      %v3685 = vld [vmem:[%s1076 + $0x50] sm:$0xff]
      %v3686 = vld [vmem:[%s1076 + $0x58] sm:$0xff]
      %v3687 = vld [vmem:[%s1076 + $0x60] sm:$0xff]
      %v3688 = vld [vmem:[%s1076 + $0x68] sm:$0xff]
      %v3689 = vld [vmem:[%s1076 + $0x70] sm:$0xff]
      %v3690 = vld [vmem:[%s1076 + $0x78] sm:$0xff]
      %v3691 = vld [vmem:[%s1076 + $0x80] sm:$0xff]
      %v3692 = vld [vmem:[%s2000] sm:$0xf]
      %v3693 = vld [vmem:[%s2000 + $0x4] sm:$0xf]
      %v3694 = vld [vmem:[%s2000 + $0x8] sm:$0xf]
      %v3695 = vld [vmem:[%s2000 + $0xc] sm:$0xf]
      %v3696 = vld [vmem:[%s2000 + $0x10] sm:$0xf]
      %v3697 = vld [vmem:[%s2000 + $0x14] sm:$0xf]
      %v3698 = vld [vmem:[%s2000 + $0x18] sm:$0xf]
      %v3699 = vld [vmem:[%s2000 + $0x1c] sm:$0xf]
      %v3700 = vld [vmem:[%s2000 + $0x20] sm:$0xf]
      %v3701 = vld [vmem:[%s2000 + $0x24] sm:$0xf]
      %v3702 = vld [vmem:[%s2000 + $0x28] sm:$0xf]
      %v3703 = vld [vmem:[%s2000 + $0x2c] sm:$0xf]
      %v3704 = vld [vmem:[%s2000 + $0x30] sm:$0xf]
      %v3705 = vld [vmem:[%s2000 + $0x34] sm:$0xf]
      %v3706 = vld [vmem:[%s2000 + $0x38] sm:$0xf]
      %v3707 = vld [vmem:[%s2000 + $0x3c] sm:$0xf]
      %v3724 = vunpack.c.l.b16 %v3692
      %v3725 = vunpack.c.l.b16 %v3693
      %v3726 = vunpack.c.l.b16 %v3694
      %v3727 = vunpack.c.l.b16 %v3695
      %v3728 = vunpack.c.l.b16 %v3696
      %v3729 = vunpack.c.l.b16 %v3697
      %v3730 = vunpack.c.l.b16 %v3698
      %v3731 = vunpack.c.l.b16 %v3699
      %v3732 = vunpack.c.l.b16 %v3700
      %v3733 = vunpack.c.l.b16 %v3701
      %v3734 = vunpack.c.l.b16 %v3702
      %v3735 = vunpack.c.l.b16 %v3703
      %v3736 = vunpack.c.l.b16 %v3704
      %v3737 = vunpack.c.l.b16 %v3705
      %v3738 = vunpack.c.l.b16 %v3706
      %v3739 = vunpack.c.l.b16 %v3707
      %v3740 = vpack.c.b16 %v3725, %v3724
      %v3741 = vpack.c.b16 %v3727, %v3726
      %v3742 = vpack.c.b16 %v3729, %v3728
      %v3743 = vpack.c.b16 %v3731, %v3730
      %v3744 = vpack.c.b16 %v3733, %v3732
      %v3745 = vpack.c.b16 %v3735, %v3734
      %v3746 = vpack.c.b16 %v3737, %v3736
      %v3747 = vpack.c.b16 %v3739, %v3738
      %3756 = vmatprep.subr.bf16.mxu0 0
      %3757 = vmatpush1.bf16.msra.mxu0 %v3740
      %3758 = vmatprep.subr.bf16.mxu0 0
      %3759 = vmatpush1.bf16.msra.mxu0 %v3741
      %3760 = vmatprep.subr.bf16.mxu0 0
      %3761 = vmatpush1.bf16.msra.mxu0 %v3742
      %3762 = vmatprep.subr.bf16.mxu0 0
      %3763 = vmatpush1.bf16.msra.mxu0 %v3743
      %3764 = vmatprep.subr.bf16.mxu0 0
      %3765 = vmatpush1.bf16.msra.mxu0 %v3744
      %3766 = vmatprep.subr.bf16.mxu0 0
      %3767 = vmatpush1.bf16.msra.mxu0 %v3745
      %3768 = vmatprep.subr.bf16.mxu0 0
      %3769 = vmatpush1.bf16.msra.mxu0 %v3746
      %3770 = vmatprep.subr.bf16.mxu0 0
      %3771 = vmatpush1.bf16.msra.mxu0 %v3747
      %3772 = vmatprep.subr.bf16.mxu0 0
      %3773 = vmatpush1.bf16.msra.mxu0 0
      %3774 = vmatprep.subr.bf16.mxu0 0
      %3775 = vmatpush1.bf16.msra.mxu0 0
      %3776 = vmatprep.subr.bf16.mxu0 0
      %3777 = vmatpush1.bf16.msra.mxu0 0
      %3778 = vmatprep.subr.bf16.mxu0 0
      %3779 = vmatpush1.bf16.msra.mxu0 0
      %3780 = vmatprep.subr.bf16.mxu0 0
      %3781 = vmatpush1.bf16.msra.mxu0 0
      %3782 = vmatprep.subr.bf16.mxu0 0
      %3783 = vmatpush1.bf16.msra.mxu0 0
      %3784 = vmatprep.subr.bf16.mxu0 0
      %3785 = vmatpush1.bf16.msra.mxu0 0
      %3786 = vmatprep.subr.bf16.mxu0 0
      %3787 = vmatpush1.bf16.msra.mxu0 0
      %3788 = vmatprep.mubr.bf16.mxu0 0
      %3789 = vmatmul.mubr.bf16.gmra.mrb[0].mxu0 %v3684
      %v3790 = vpop.f32.mrb[0].mxu0
      %v3791 = vadd.f32 0.0, %v3790
      %v3792 = vpop.f32.mrb[0].mxu0
      %v3793 = vpop.f32.mrb[0].mxu0
      %v3794 = vadd.f32 0.0, %v3793
      %v3795 = vpop.f32.mrb[0].mxu0
      %3796 = vmatprep.mubr.bf16.mxu0 0
      %3797 = vmatmul.mubr.bf16.gmra.mrb[0].mxu0 %v3685
      %v3798 = vpop.f32.mrb[0].mxu0
      %v3799 = vadd.f32 0.0, %v3798
      %v3800 = vpop.f32.mrb[0].mxu0
      %v3801 = vpop.f32.mrb[0].mxu0
      %v3802 = vadd.f32 0.0, %v3801
      %v3803 = vpop.f32.mrb[0].mxu0
      %3804 = vmatprep.mubr.bf16.mxu0 0
      %3805 = vmatmul.mubr.bf16.gmra.mrb[0].mxu0 %v3686
      %v3806 = vpop.f32.mrb[0].mxu0
      %v3807 = vadd.f32 0.0, %v3806
      %v3808 = vpop.f32.mrb[0].mxu0
      %v3809 = vpop.f32.mrb[0].mxu0
      %v3810 = vadd.f32 0.0, %v3809
      %v3811 = vpop.f32.mrb[0].mxu0
      %3812 = vmatprep.mubr.bf16.mxu0 0
      %3813 = vmatmul.mubr.bf16.gmra.mrb[0].mxu0 %v3687
      %v3814 = vpop.f32.mrb[0].mxu0
      %v3815 = vadd.f32 0.0, %v3814
      %v3816 = vpop.f32.mrb[0].mxu0
      %v3817 = vpop.f32.mrb[0].mxu0
      %v3818 = vadd.f32 0.0, %v3817
      %v3819 = vpop.f32.mrb[0].mxu0
      %3820 = vmatprep.mubr.bf16.mxu0 0
      %3821 = vmatmul.mubr.bf16.gmra.mrb[0].mxu0 %v3688
      %v3822 = vpop.f32.mrb[0].mxu0
      %v3823 = vadd.f32 0.0, %v3822
      %v3824 = vpop.f32.mrb[0].mxu0
      %v3825 = vpop.f32.mrb[0].mxu0
      %v3826 = vadd.f32 0.0, %v3825
      %v3827 = vpop.f32.mrb[0].mxu0
      %3828 = vmatprep.mubr.bf16.mxu0 0
      %3829 = vmatmul.mubr.bf16.gmra.mrb[0].mxu0 %v3689
      %v3830 = vpop.f32.mrb[0].mxu0
      %v3831 = vadd.f32 0.0, %v3830
      %v3832 = vpop.f32.mrb[0].mxu0
      %v3833 = vpop.f32.mrb[0].mxu0
      %v3834 = vadd.f32 0.0, %v3833
      %v3835 = vpop.f32.mrb[0].mxu0
      %3836 = vmatprep.mubr.bf16.mxu0 0
      %3837 = vmatmul.mubr.bf16.gmra.mrb[0].mxu0 %v3690
      %v3838 = vpop.f32.mrb[0].mxu0
      %v3839 = vadd.f32 0.0, %v3838
      %v3840 = vpop.f32.mrb[0].mxu0
      %v3841 = vpop.f32.mrb[0].mxu0
      %v3842 = vadd.f32 0.0, %v3841
      %v3843 = vpop.f32.mrb[0].mxu0
      %3844 = vmatprep.mubr.bf16.mxu0 0
      %3845 = vmatmul.mubr.bf16.gmra.mrb[0].mxu0 %v3691
      %v3846 = vpop.f32.mrb[0].mxu0
      %v3847 = vadd.f32 0.0, %v3846
      %v3848 = vpop.f32.mrb[0].mxu0
      %v3849 = vpop.f32.mrb[0].mxu0
      %v3850 = vadd.f32 0.0, %v3849
      %v3851 = vpop.f32.mrb[0].mxu0
      %3852 = vdwg.mxu0
      %v3853 = vadd.f32 %v3668, %v3791
      %v3854 = vadd.f32 %v3669, %v3794
      %v3855 = vadd.f32 %v3670, %v3799
      %v3856 = vadd.f32 %v3671, %v3802
      %v3857 = vadd.f32 %v3672, %v3807
      %v3858 = vadd.f32 %v3673, %v3810
      %v3859 = vadd.f32 %v3674, %v3815
      %v3860 = vadd.f32 %v3675, %v3818
      %v3861 = vadd.f32 %v3676, %v3823
      %v3862 = vadd.f32 %v3677, %v3826
      %v3863 = vadd.f32 %v3678, %v3831
      %v3864 = vadd.f32 %v3679, %v3834
      %v3865 = vadd.f32 %v3680, %v3839
      %v3866 = vadd.f32 %v3681, %v3842
      %v3867 = vadd.f32 %v3682, %v3847
      %v3868 = vadd.f32 %v3683, %v3850
      %v3869 = vld [vmem:[#allocation3 + $0x50] sm:$0xff]
      %v3870 = vld [vmem:[#allocation3 + $0x58] sm:$0xff]
      %v3871 = vld [vmem:[#allocation3 + $0x60] sm:$0xff]
      %v3872 = vld [vmem:[#allocation3 + $0x68] sm:$0xff]
      %v3873 = vld [vmem:[#allocation3 + $0x70] sm:$0xff]
      %v3874 = vld [vmem:[#allocation3 + $0x78] sm:$0xff]
      %v3875 = vld [vmem:[#allocation3 + $0x80] sm:$0xff]
      %v3876 = vld [vmem:[#allocation3 + $0x88] sm:$0xff]
      %v3877 = vld [vmem:[%s2186] sm:$0xf]
      %v3878 = vld [vmem:[%s2186 + $0x4] sm:$0xf]
      %v3879 = vld [vmem:[%s2186 + $0x8] sm:$0xf]
      %v3880 = vld [vmem:[%s2186 + $0xc] sm:$0xf]
      %v3881 = vld [vmem:[%s2186 + $0x10] sm:$0xf]
      %v3882 = vld [vmem:[%s2186 + $0x14] sm:$0xf]
      %v3883 = vld [vmem:[%s2186 + $0x18] sm:$0xf]
      %v3884 = vld [vmem:[%s2186 + $0x1c] sm:$0xf]
      %v3885 = vld [vmem:[%s2186 + $0x20] sm:$0xf]
      %v3886 = vld [vmem:[%s2186 + $0x24] sm:$0xf]
      %v3887 = vld [vmem:[%s2186 + $0x28] sm:$0xf]
      %v3888 = vld [vmem:[%s2186 + $0x2c] sm:$0xf]
      %v3889 = vld [vmem:[%s2186 + $0x30] sm:$0xf]
      %v3890 = vld [vmem:[%s2186 + $0x34] sm:$0xf]
      %v3891 = vld [vmem:[%s2186 + $0x38] sm:$0xf]
      %v3892 = vld [vmem:[%s2186 + $0x3c] sm:$0xf]
      %v3909 = vunpack.c.l.b16 %v3877
      %v3910 = vunpack.c.l.b16 %v3878
      %v3911 = vunpack.c.l.b16 %v3879
      %v3912 = vunpack.c.l.b16 %v3880
      %v3913 = vunpack.c.l.b16 %v3881
      %v3914 = vunpack.c.l.b16 %v3882
      %v3915 = vunpack.c.l.b16 %v3883
      %v3916 = vunpack.c.l.b16 %v3884
      %v3917 = vunpack.c.l.b16 %v3885
      %v3918 = vunpack.c.l.b16 %v3886
      %v3919 = vunpack.c.l.b16 %v3887
      %v3920 = vunpack.c.l.b16 %v3888
      %v3921 = vunpack.c.l.b16 %v3889
      %v3922 = vunpack.c.l.b16 %v3890
      %v3923 = vunpack.c.l.b16 %v3891
      %v3924 = vunpack.c.l.b16 %v3892
      %v3925 = vpack.c.b16 %v3910, %v3909
      %v3926 = vpack.c.b16 %v3912, %v3911
      %v3927 = vpack.c.b16 %v3914, %v3913
      %v3928 = vpack.c.b16 %v3916, %v3915
      %v3929 = vpack.c.b16 %v3918, %v3917
      %v3930 = vpack.c.b16 %v3920, %v3919
      %v3931 = vpack.c.b16 %v3922, %v3921
      %v3932 = vpack.c.b16 %v3924, %v3923
      %3941 = vmatprep.subr.bf16.mxu0 0
      %3942 = vmatpush1.bf16.msra.mxu0 %v3925
      %3943 = vmatprep.subr.bf16.mxu0 0
      %3944 = vmatpush1.bf16.msra.mxu0 %v3926
      %3945 = vmatprep.subr.bf16.mxu0 0
      %3946 = vmatpush1.bf16.msra.mxu0 %v3927
      %3947 = vmatprep.subr.bf16.mxu0 0
      %3948 = vmatpush1.bf16.msra.mxu0 %v3928
      %3949 = vmatprep.subr.bf16.mxu0 0
      %3950 = vmatpush1.bf16.msra.mxu0 %v3929
      %3951 = vmatprep.subr.bf16.mxu0 0
      %3952 = vmatpush1.bf16.msra.mxu0 %v3930
      %3953 = vmatprep.subr.bf16.mxu0 0
      %3954 = vmatpush1.bf16.msra.mxu0 %v3931
      %3955 = vmatprep.subr.bf16.mxu0 0
      %3956 = vmatpush1.bf16.msra.mxu0 %v3932
      %3957 = vmatprep.subr.bf16.mxu0 0
      %3958 = vmatpush1.bf16.msra.mxu0 0
      %3959 = vmatprep.subr.bf16.mxu0 0
      %3960 = vmatpush1.bf16.msra.mxu0 0
      %3961 = vmatprep.subr.bf16.mxu0 0
      %3962 = vmatpush1.bf16.msra.mxu0 0
      %3963 = vmatprep.subr.bf16.mxu0 0
      %3964 = vmatpush1.bf16.msra.mxu0 0
      %3965 = vmatprep.subr.bf16.mxu0 0
      %3966 = vmatpush1.bf16.msra.mxu0 0
      %3967 = vmatprep.subr.bf16.mxu0 0
      %3968 = vmatpush1.bf16.msra.mxu0 0
      %3969 = vmatprep.subr.bf16.mxu0 0
      %3970 = vmatpush1.bf16.msra.mxu0 0
      %3971 = vmatprep.subr.bf16.mxu0 0
      %3972 = vmatpush1.bf16.msra.mxu0 0
      %3973 = vmatprep.mubr.bf16.mxu0 0
      %3974 = vmatmul.mubr.bf16.gmra.mrb[0].mxu0 %v3869
      %v3975 = vpop.f32.mrb[0].mxu0
      %v3976 = vadd.f32 0.0, %v3975
      %v3977 = vpop.f32.mrb[0].mxu0
      %v3978 = vpop.f32.mrb[0].mxu0
      %v3979 = vadd.f32 0.0, %v3978
      %v3980 = vpop.f32.mrb[0].mxu0
      %3981 = vmatprep.mubr.bf16.mxu0 0
      %3982 = vmatmul.mubr.bf16.gmra.mrb[0].mxu0 %v3870
      %v3983 = vpop.f32.mrb[0].mxu0
      %v3984 = vadd.f32 0.0, %v3983
      %v3985 = vpop.f32.mrb[0].mxu0
      %v3986 = vpop.f32.mrb[0].mxu0
      %v3987 = vadd.f32 0.0, %v3986
      %v3988 = vpop.f32.mrb[0].mxu0
      %3989 = vmatprep.mubr.bf16.mxu0 0
      %3990 = vmatmul.mubr.bf16.gmra.mrb[0].mxu0 %v3871
      %v3991 = vpop.f32.mrb[0].mxu0
      %v3992 = vadd.f32 0.0, %v3991
      %v3993 = vpop.f32.mrb[0].mxu0
      %v3994 = vpop.f32.mrb[0].mxu0
      %v3995 = vadd.f32 0.0, %v3994
      %v3996 = vpop.f32.mrb[0].mxu0
      %3997 = vmatprep.mubr.bf16.mxu0 0
      %3998 = vmatmul.mubr.bf16.gmra.mrb[0].mxu0 %v3872
      %v3999 = vpop.f32.mrb[0].mxu0
      %v4000 = vadd.f32 0.0, %v3999
      %v4001 = vpop.f32.mrb[0].mxu0
      %v4002 = vpop.f32.mrb[0].mxu0
      %v4003 = vadd.f32 0.0, %v4002
      %v4004 = vpop.f32.mrb[0].mxu0
      %4005 = vmatprep.mubr.bf16.mxu0 0
      %4006 = vmatmul.mubr.bf16.gmra.mrb[0].mxu0 %v3873
      %v4007 = vpop.f32.mrb[0].mxu0
      %v4008 = vadd.f32 0.0, %v4007
      %v4009 = vpop.f32.mrb[0].mxu0
      %v4010 = vpop.f32.mrb[0].mxu0
      %v4011 = vadd.f32 0.0, %v4010
      %v4012 = vpop.f32.mrb[0].mxu0
      %4013 = vmatprep.mubr.bf16.mxu0 0
      %4014 = vmatmul.mubr.bf16.gmra.mrb[0].mxu0 %v3874
      %v4015 = vpop.f32.mrb[0].mxu0
      %v4016 = vadd.f32 0.0, %v4015
      %v4017 = vpop.f32.mrb[0].mxu0
      %v4018 = vpop.f32.mrb[0].mxu0
      %v4019 = vadd.f32 0.0, %v4018
      %v4020 = vpop.f32.mrb[0].mxu0
      %4021 = vmatprep.mubr.bf16.mxu0 0
      %4022 = vmatmul.mubr.bf16.gmra.mrb[0].mxu0 %v3875
      %v4023 = vpop.f32.mrb[0].mxu0
      %v4024 = vadd.f32 0.0, %v4023
      %v4025 = vpop.f32.mrb[0].mxu0
      %v4026 = vpop.f32.mrb[0].mxu0
      %v4027 = vadd.f32 0.0, %v4026
      %v4028 = vpop.f32.mrb[0].mxu0
      %4029 = vmatprep.mubr.bf16.mxu0 0
      %4030 = vmatmul.mubr.bf16.gmra.mrb[0].mxu0 %v3876
      %v4031 = vpop.f32.mrb[0].mxu0
      %v4032 = vadd.f32 0.0, %v4031
      %v4033 = vpop.f32.mrb[0].mxu0
      %v4034 = vpop.f32.mrb[0].mxu0
      %v4035 = vadd.f32 0.0, %v4034
      %v4036 = vpop.f32.mrb[0].mxu0
      %4037 = vdwg.mxu0
      %v4038 = vadd.f32 %v3853, %v3976
      %v4039 = vadd.f32 %v3854, %v3979
      %v4040 = vadd.f32 %v3855, %v3984
      %v4041 = vadd.f32 %v3856, %v3987
      %v4042 = vadd.f32 %v3857, %v3992
      %v4043 = vadd.f32 %v3858, %v3995
      %v4044 = vadd.f32 %v3859, %v4000
      %v4045 = vadd.f32 %v3860, %v4003
      %v4046 = vadd.f32 %v3861, %v4008
      %v4047 = vadd.f32 %v3862, %v4011
      %v4048 = vadd.f32 %v3863, %v4016
      %v4049 = vadd.f32 %v3864, %v4019
      %v4050 = vadd.f32 %v3865, %v4024
      %v4051 = vadd.f32 %v3866, %v4027
      %v4052 = vadd.f32 %v3867, %v4032
      %v4053 = vadd.f32 %v3868, %v4035
      %v4054 = vld [vmem:[%s786 + $0x50] sm:$0xff]
      %v4055 = vld [vmem:[%s786 + $0x58] sm:$0xff]
      %v4056 = vld [vmem:[%s786 + $0x60] sm:$0xff]
      %v4057 = vld [vmem:[%s786 + $0x68] sm:$0xff]
      %v4058 = vld [vmem:[%s786 + $0x70] sm:$0xff]
      %v4059 = vld [vmem:[%s786 + $0x78] sm:$0xff]
      %v4060 = vld [vmem:[%s786 + $0x80] sm:$0xff]
      %v4061 = vld [vmem:[%s786 + $0x88] sm:$0xff]
      %v4062 = vld [vmem:[%s2372] sm:$0xf]
      %v4063 = vld [vmem:[%s2372 + $0x4] sm:$0xf]
      %v4064 = vld [vmem:[%s2372 + $0x8] sm:$0xf]
      %v4065 = vld [vmem:[%s2372 + $0xc] sm:$0xf]
      %v4066 = vld [vmem:[%s2372 + $0x10] sm:$0xf]
      %v4067 = vld [vmem:[%s2372 + $0x14] sm:$0xf]
      %v4068 = vld [vmem:[%s2372 + $0x18] sm:$0xf]
      %v4069 = vld [vmem:[%s2372 + $0x1c] sm:$0xf]
      %v4070 = vld [vmem:[%s2372 + $0x20] sm:$0xf]
      %v4071 = vld [vmem:[%s2372 + $0x24] sm:$0xf]
      %v4072 = vld [vmem:[%s2372 + $0x28] sm:$0xf]
      %v4073 = vld [vmem:[%s2372 + $0x2c] sm:$0xf]
      %v4074 = vld [vmem:[%s2372 + $0x30] sm:$0xf]
      %v4075 = vld [vmem:[%s2372 + $0x34] sm:$0xf]
      %v4076 = vld [vmem:[%s2372 + $0x38] sm:$0xf]
      %v4077 = vld [vmem:[%s2372 + $0x3c] sm:$0xf]
      %v4094 = vunpack.c.l.b16 %v4062
      %v4095 = vunpack.c.l.b16 %v4063
      %v4096 = vunpack.c.l.b16 %v4064
      %v4097 = vunpack.c.l.b16 %v4065
      %v4098 = vunpack.c.l.b16 %v4066
      %v4099 = vunpack.c.l.b16 %v4067
      %v4100 = vunpack.c.l.b16 %v4068
      %v4101 = vunpack.c.l.b16 %v4069
      %v4102 = vunpack.c.l.b16 %v4070
      %v4103 = vunpack.c.l.b16 %v4071
      %v4104 = vunpack.c.l.b16 %v4072
      %v4105 = vunpack.c.l.b16 %v4073
      %v4106 = vunpack.c.l.b16 %v4074
      %v4107 = vunpack.c.l.b16 %v4075
      %v4108 = vunpack.c.l.b16 %v4076
      %v4109 = vunpack.c.l.b16 %v4077
      %v4110 = vpack.c.b16 %v4095, %v4094
      %v4111 = vpack.c.b16 %v4097, %v4096
      %v4112 = vpack.c.b16 %v4099, %v4098
      %v4113 = vpack.c.b16 %v4101, %v4100
      %v4114 = vpack.c.b16 %v4103, %v4102
      %v4115 = vpack.c.b16 %v4105, %v4104
      %v4116 = vpack.c.b16 %v4107, %v4106
      %v4117 = vpack.c.b16 %v4109, %v4108
      %4126 = vmatprep.subr.bf16.mxu0 0
      %4127 = vmatpush1.bf16.msra.mxu0 %v4110
      %4128 = vmatprep.subr.bf16.mxu0 0
      %4129 = vmatpush1.bf16.msra.mxu0 %v4111
      %4130 = vmatprep.subr.bf16.mxu0 0
      %4131 = vmatpush1.bf16.msra.mxu0 %v4112
      %4132 = vmatprep.subr.bf16.mxu0 0
      %4133 = vmatpush1.bf16.msra.mxu0 %v4113
      %4134 = vmatprep.subr.bf16.mxu0 0
      %4135 = vmatpush1.bf16.msra.mxu0 %v4114
      %4136 = vmatprep.subr.bf16.mxu0 0
      %4137 = vmatpush1.bf16.msra.mxu0 %v4115
      %4138 = vmatprep.subr.bf16.mxu0 0
      %4139 = vmatpush1.bf16.msra.mxu0 %v4116
      %4140 = vmatprep.subr.bf16.mxu0 0
      %4141 = vmatpush1.bf16.msra.mxu0 %v4117
      %4142 = vmatprep.subr.bf16.mxu0 0
      %4143 = vmatpush1.bf16.msra.mxu0 0
      %4144 = vmatprep.subr.bf16.mxu0 0
      %4145 = vmatpush1.bf16.msra.mxu0 0
      %4146 = vmatprep.subr.bf16.mxu0 0
      %4147 = vmatpush1.bf16.msra.mxu0 0
      %4148 = vmatprep.subr.bf16.mxu0 0
      %4149 = vmatpush1.bf16.msra.mxu0 0
      %4150 = vmatprep.subr.bf16.mxu0 0
      %4151 = vmatpush1.bf16.msra.mxu0 0
      %4152 = vmatprep.subr.bf16.mxu0 0
      %4153 = vmatpush1.bf16.msra.mxu0 0
      %4154 = vmatprep.subr.bf16.mxu0 0
      %4155 = vmatpush1.bf16.msra.mxu0 0
      %4156 = vmatprep.subr.bf16.mxu0 0
      %4157 = vmatpush1.bf16.msra.mxu0 0
      %4158 = vmatprep.mubr.bf16.mxu0 0
      %4159 = vmatmul.mubr.bf16.gmra.mrb[0].mxu0 %v4054
      %v4160 = vpop.f32.mrb[0].mxu0
      %v4161 = vadd.f32 0.0, %v4160
      %v4162 = vpop.f32.mrb[0].mxu0
      %v4163 = vpop.f32.mrb[0].mxu0
      %v4164 = vadd.f32 0.0, %v4163
      %v4165 = vpop.f32.mrb[0].mxu0
      %4166 = vmatprep.mubr.bf16.mxu0 0
      %4167 = vmatmul.mubr.bf16.gmra.mrb[0].mxu0 %v4055
      %v4168 = vpop.f32.mrb[0].mxu0
      %v4169 = vadd.f32 0.0, %v4168
      %v4170 = vpop.f32.mrb[0].mxu0
      %v4171 = vpop.f32.mrb[0].mxu0
      %v4172 = vadd.f32 0.0, %v4171
      %v4173 = vpop.f32.mrb[0].mxu0
      %4174 = vmatprep.mubr.bf16.mxu0 0
      %4175 = vmatmul.mubr.bf16.gmra.mrb[0].mxu0 %v4056
      %v4176 = vpop.f32.mrb[0].mxu0
      %v4177 = vadd.f32 0.0, %v4176
      %v4178 = vpop.f32.mrb[0].mxu0
      %v4179 = vpop.f32.mrb[0].mxu0
      %v4180 = vadd.f32 0.0, %v4179
      %v4181 = vpop.f32.mrb[0].mxu0
      %4182 = vmatprep.mubr.bf16.mxu0 0
      %4183 = vmatmul.mubr.bf16.gmra.mrb[0].mxu0 %v4057
      %v4184 = vpop.f32.mrb[0].mxu0
      %v4185 = vadd.f32 0.0, %v4184
      %v4186 = vpop.f32.mrb[0].mxu0
      %v4187 = vpop.f32.mrb[0].mxu0
      %v4188 = vadd.f32 0.0, %v4187
      %v4189 = vpop.f32.mrb[0].mxu0
      %4190 = vmatprep.mubr.bf16.mxu0 0
      %4191 = vmatmul.mubr.bf16.gmra.mrb[0].mxu0 %v4058
      %v4192 = vpop.f32.mrb[0].mxu0
      %v4193 = vadd.f32 0.0, %v4192
      %v4194 = vpop.f32.mrb[0].mxu0
      %v4195 = vpop.f32.mrb[0].mxu0
      %v4196 = vadd.f32 0.0, %v4195
      %v4197 = vpop.f32.mrb[0].mxu0
      %4198 = vmatprep.mubr.bf16.mxu0 0
      %4199 = vmatmul.mubr.bf16.gmra.mrb[0].mxu0 %v4059
      %v4200 = vpop.f32.mrb[0].mxu0
      %v4201 = vadd.f32 0.0, %v4200
      %v4202 = vpop.f32.mrb[0].mxu0
      %v4203 = vpop.f32.mrb[0].mxu0
      %v4204 = vadd.f32 0.0, %v4203
      %v4205 = vpop.f32.mrb[0].mxu0
      %4206 = vmatprep.mubr.bf16.mxu0 0
      %4207 = vmatmul.mubr.bf16.gmra.mrb[0].mxu0 %v4060
      %v4208 = vpop.f32.mrb[0].mxu0
      %v4209 = vadd.f32 0.0, %v4208
      %v4210 = vpop.f32.mrb[0].mxu0
      %v4211 = vpop.f32.mrb[0].mxu0
      %v4212 = vadd.f32 0.0, %v4211
      %v4213 = vpop.f32.mrb[0].mxu0
      %4214 = vmatprep.mubr.bf16.mxu0 0
      %4215 = vmatmul.mubr.bf16.gmra.mrb[0].mxu0 %v4061
      %v4216 = vpop.f32.mrb[0].mxu0
      %v4217 = vadd.f32 0.0, %v4216
      %v4218 = vpop.f32.mrb[0].mxu0
      %v4219 = vpop.f32.mrb[0].mxu0
      %v4220 = vadd.f32 0.0, %v4219
      %v4221 = vpop.f32.mrb[0].mxu0
      %4222 = vdwg.mxu0
      %v4223 = vadd.f32 %v4038, %v4161
      %v4224 = vadd.f32 %v4039, %v4164
      %v4225 = vadd.f32 %v4040, %v4169
      %v4226 = vadd.f32 %v4041, %v4172
      %v4227 = vadd.f32 %v4042, %v4177
      %v4228 = vadd.f32 %v4043, %v4180
      %v4229 = vadd.f32 %v4044, %v4185
      %v4230 = vadd.f32 %v4045, %v4188
      %v4231 = vadd.f32 %v4046, %v4193
      %v4232 = vadd.f32 %v4047, %v4196
      %v4233 = vadd.f32 %v4048, %v4201
      %v4234 = vadd.f32 %v4049, %v4204
      %v4235 = vadd.f32 %v4050, %v4209
      %v4236 = vadd.f32 %v4051, %v4212
      %v4237 = vadd.f32 %v4052, %v4217
      %v4238 = vadd.f32 %v4053, %v4220
      %v4239 = vld [vmem:[%s1076 + $0x50] sm:$0xff]
      %v4240 = vld [vmem:[%s1076 + $0x58] sm:$0xff]
      %v4241 = vld [vmem:[%s1076 + $0x60] sm:$0xff]
      %v4242 = vld [vmem:[%s1076 + $0x68] sm:$0xff]
      %v4243 = vld [vmem:[%s1076 + $0x70] sm:$0xff]
      %v4244 = vld [vmem:[%s1076 + $0x78] sm:$0xff]
      %v4245 = vld [vmem:[%s1076 + $0x80] sm:$0xff]
      %v4246 = vld [vmem:[%s1076 + $0x88] sm:$0xff]
      %v4247 = vld [vmem:[%s2558] sm:$0xf]
      %v4248 = vld [vmem:[%s2558 + $0x4] sm:$0xf]
      %v4249 = vld [vmem:[%s2558 + $0x8] sm:$0xf]
      %v4250 = vld [vmem:[%s2558 + $0xc] sm:$0xf]
      %v4251 = vld [vmem:[%s2558 + $0x10] sm:$0xf]
      %v4252 = vld [vmem:[%s2558 + $0x14] sm:$0xf]
      %v4253 = vld [vmem:[%s2558 + $0x18] sm:$0xf]
      %v4254 = vld [vmem:[%s2558 + $0x1c] sm:$0xf]
      %v4255 = vld [vmem:[%s2558 + $0x20] sm:$0xf]
      %v4256 = vld [vmem:[%s2558 + $0x24] sm:$0xf]
      %v4257 = vld [vmem:[%s2558 + $0x28] sm:$0xf]
      %v4258 = vld [vmem:[%s2558 + $0x2c] sm:$0xf]
      %v4259 = vld [vmem:[%s2558 + $0x30] sm:$0xf]
      %v4260 = vld [vmem:[%s2558 + $0x34] sm:$0xf]
      %v4261 = vld [vmem:[%s2558 + $0x38] sm:$0xf]
      %v4262 = vld [vmem:[%s2558 + $0x3c] sm:$0xf]
      %v4279 = vunpack.c.l.b16 %v4247
      %v4280 = vunpack.c.l.b16 %v4248
      %v4281 = vunpack.c.l.b16 %v4249
      %v4282 = vunpack.c.l.b16 %v4250
      %v4283 = vunpack.c.l.b16 %v4251
      %v4284 = vunpack.c.l.b16 %v4252
      %v4285 = vunpack.c.l.b16 %v4253
      %v4286 = vunpack.c.l.b16 %v4254
      %v4287 = vunpack.c.l.b16 %v4255
      %v4288 = vunpack.c.l.b16 %v4256
      %v4289 = vunpack.c.l.b16 %v4257
      %v4290 = vunpack.c.l.b16 %v4258
      %v4291 = vunpack.c.l.b16 %v4259
      %v4292 = vunpack.c.l.b16 %v4260
      %v4293 = vunpack.c.l.b16 %v4261
      %v4294 = vunpack.c.l.b16 %v4262
      %v4295 = vpack.c.b16 %v4280, %v4279
      %v4296 = vpack.c.b16 %v4282, %v4281
      %v4297 = vpack.c.b16 %v4284, %v4283
      %v4298 = vpack.c.b16 %v4286, %v4285
      %v4299 = vpack.c.b16 %v4288, %v4287
      %v4300 = vpack.c.b16 %v4290, %v4289
      %v4301 = vpack.c.b16 %v4292, %v4291
      %v4302 = vpack.c.b16 %v4294, %v4293
      %4311 = vmatprep.subr.bf16.mxu0 0
      %4312 = vmatpush1.bf16.msra.mxu0 %v4295
      %4313 = vmatprep.subr.bf16.mxu0 0
      %4314 = vmatpush1.bf16.msra.mxu0 %v4296
      %4315 = vmatprep.subr.bf16.mxu0 0
      %4316 = vmatpush1.bf16.msra.mxu0 %v4297
      %4317 = vmatprep.subr.bf16.mxu0 0
      %4318 = vmatpush1.bf16.msra.mxu0 %v4298
      %4319 = vmatprep.subr.bf16.mxu0 0
      %4320 = vmatpush1.bf16.msra.mxu0 %v4299
      %4321 = vmatprep.subr.bf16.mxu0 0
      %4322 = vmatpush1.bf16.msra.mxu0 %v4300
      %4323 = vmatprep.subr.bf16.mxu0 0
      %4324 = vmatpush1.bf16.msra.mxu0 %v4301
      %4325 = vmatprep.subr.bf16.mxu0 0
      %4326 = vmatpush1.bf16.msra.mxu0 %v4302
      %4327 = vmatprep.subr.bf16.mxu0 0
      %4328 = vmatpush1.bf16.msra.mxu0 0
      %4329 = vmatprep.subr.bf16.mxu0 0
      %4330 = vmatpush1.bf16.msra.mxu0 0
      %4331 = vmatprep.subr.bf16.mxu0 0
      %4332 = vmatpush1.bf16.msra.mxu0 0
      %4333 = vmatprep.subr.bf16.mxu0 0
      %4334 = vmatpush1.bf16.msra.mxu0 0
      %4335 = vmatprep.subr.bf16.mxu0 0
      %4336 = vmatpush1.bf16.msra.mxu0 0
      %4337 = vmatprep.subr.bf16.mxu0 0
      %4338 = vmatpush1.bf16.msra.mxu0 0
      %4339 = vmatprep.subr.bf16.mxu0 0
      %4340 = vmatpush1.bf16.msra.mxu0 0
      %4341 = vmatprep.subr.bf16.mxu0 0
      %4342 = vmatpush1.bf16.msra.mxu0 0
      %4343 = vmatprep.mubr.bf16.mxu0 0
      %4344 = vmatmul.mubr.bf16.gmra.mrb[0].mxu0 %v4239
      %v4345 = vpop.f32.mrb[0].mxu0
      %v4346 = vadd.f32 0.0, %v4345
      %v4347 = vpop.f32.mrb[0].mxu0
      %v4348 = vpop.f32.mrb[0].mxu0
      %v4349 = vadd.f32 0.0, %v4348
      %v4350 = vpop.f32.mrb[0].mxu0
      %4351 = vmatprep.mubr.bf16.mxu0 0
      %4352 = vmatmul.mubr.bf16.gmra.mrb[0].mxu0 %v4240
      %v4353 = vpop.f32.mrb[0].mxu0
      %v4354 = vadd.f32 0.0, %v4353
      %v4355 = vpop.f32.mrb[0].mxu0
      %v4356 = vpop.f32.mrb[0].mxu0
      %v4357 = vadd.f32 0.0, %v4356
      %v4358 = vpop.f32.mrb[0].mxu0
      %4359 = vmatprep.mubr.bf16.mxu0 0
      %4360 = vmatmul.mubr.bf16.gmra.mrb[0].mxu0 %v4241
      %v4361 = vpop.f32.mrb[0].mxu0
      %v4362 = vadd.f32 0.0, %v4361
      %v4363 = vpop.f32.mrb[0].mxu0
      %v4364 = vpop.f32.mrb[0].mxu0
      %v4365 = vadd.f32 0.0, %v4364
      %v4366 = vpop.f32.mrb[0].mxu0
      %4367 = vmatprep.mubr.bf16.mxu0 0
      %4368 = vmatmul.mubr.bf16.gmra.mrb[0].mxu0 %v4242
      %v4369 = vpop.f32.mrb[0].mxu0
      %v4370 = vadd.f32 0.0, %v4369
      %v4371 = vpop.f32.mrb[0].mxu0
      %v4372 = vpop.f32.mrb[0].mxu0
      %v4373 = vadd.f32 0.0, %v4372
      %v4374 = vpop.f32.mrb[0].mxu0
      %4375 = vmatprep.mubr.bf16.mxu0 0
      %4376 = vmatmul.mubr.bf16.gmra.mrb[0].mxu0 %v4243
      %v4377 = vpop.f32.mrb[0].mxu0
      %v4378 = vadd.f32 0.0, %v4377
      %v4379 = vpop.f32.mrb[0].mxu0
      %v4380 = vpop.f32.mrb[0].mxu0
      %v4381 = vadd.f32 0.0, %v4380
      %v4382 = vpop.f32.mrb[0].mxu0
      %4383 = vmatprep.mubr.bf16.mxu0 0
      %4384 = vmatmul.mubr.bf16.gmra.mrb[0].mxu0 %v4244
      %v4385 = vpop.f32.mrb[0].mxu0
      %v4386 = vadd.f32 0.0, %v4385
      %v4387 = vpop.f32.mrb[0].mxu0
      %v4388 = vpop.f32.mrb[0].mxu0
      %v4389 = vadd.f32 0.0, %v4388
      %v4390 = vpop.f32.mrb[0].mxu0
      %4391 = vmatprep.mubr.bf16.mxu0 0
      %4392 = vmatmul.mubr.bf16.gmra.mrb[0].mxu0 %v4245
      %v4393 = vpop.f32.mrb[0].mxu0
      %v4394 = vadd.f32 0.0, %v4393
      %v4395 = vpop.f32.mrb[0].mxu0
      %v4396 = vpop.f32.mrb[0].mxu0
      %v4397 = vadd.f32 0.0, %v4396
      %v4398 = vpop.f32.mrb[0].mxu0
      %4399 = vmatprep.mubr.bf16.mxu0 0
      %4400 = vmatmul.mubr.bf16.gmra.mrb[0].mxu0 %v4246
      %v4401 = vpop.f32.mrb[0].mxu0
      %v4402 = vadd.f32 0.0, %v4401
      %v4403 = vpop.f32.mrb[0].mxu0
      %v4404 = vpop.f32.mrb[0].mxu0
      %v4405 = vadd.f32 0.0, %v4404
      %v4406 = vpop.f32.mrb[0].mxu0
      %4407 = vdwg.mxu0
      %v4408 = vadd.f32 %v4223, %v4346
      %v4409 = vadd.f32 %v4224, %v4349
      %v4410 = vadd.f32 %v4225, %v4354
      %v4411 = vadd.f32 %v4226, %v4357
      %v4412 = vadd.f32 %v4227, %v4362
      %v4413 = vadd.f32 %v4228, %v4365
      %v4414 = vadd.f32 %v4229, %v4370
      %v4415 = vadd.f32 %v4230, %v4373
      %v4416 = vadd.f32 %v4231, %v4378
      %v4417 = vadd.f32 %v4232, %v4381
      %v4418 = vadd.f32 %v4233, %v4386
      %v4419 = vadd.f32 %v4234, %v4389
      %v4420 = vadd.f32 %v4235, %v4394
      %v4421 = vadd.f32 %v4236, %v4397
      %v4422 = vadd.f32 %v4237, %v4402
      %v4423 = vadd.f32 %v4238, %v4405
      %v4424 = vld [vmem:[%s3] sm:$0x1]
      %v4426 = vlaneseq
      %v4427 = vshrl.u32 %v4426, 7
      %v4428 = vsub.s32 0, %v4427
      %v4429 = vrot.slane %v4424, %v4428
      %v4431 = vadd.f32 %v4408, %v4429
      %v4432 = vadd.f32 %v4409, %v4429
      %v4433 = vadd.f32 %v4410, %v4429
      %v4434 = vadd.f32 %v4411, %v4429
      %v4435 = vadd.f32 %v4412, %v4429
      %v4436 = vadd.f32 %v4413, %v4429
      %v4437 = vadd.f32 %v4414, %v4429
      %v4438 = vadd.f32 %v4415, %v4429
      %v4439 = vadd.f32 %v4416, %v4429
      %v4440 = vadd.f32 %v4417, %v4429
      %v4441 = vadd.f32 %v4418, %v4429
      %v4442 = vadd.f32 %v4419, %v4429
      %v4443 = vadd.f32 %v4420, %v4429
      %v4444 = vadd.f32 %v4421, %v4429
      %v4445 = vadd.f32 %v4422, %v4429
      %v4446 = vadd.f32 %v4423, %v4429
      %v4447 = vmax.f32 %v4431, 0.0
      %v4448 = vmax.f32 %v4432, 0.0
      %v4449 = vmax.f32 %v4433, 0.0
      %v4450 = vmax.f32 %v4434, 0.0
      %v4451 = vmax.f32 %v4435, 0.0
      %v4452 = vmax.f32 %v4436, 0.0
      %v4453 = vmax.f32 %v4437, 0.0
      %v4454 = vmax.f32 %v4438, 0.0
      %v4455 = vmax.f32 %v4439, 0.0
      %v4456 = vmax.f32 %v4440, 0.0
      %v4457 = vmax.f32 %v4441, 0.0
      %v4458 = vmax.f32 %v4442, 0.0
      %v4459 = vmax.f32 %v4443, 0.0
      %v4460 = vmax.f32 %v4444, 0.0
      %v4461 = vmax.f32 %v4445, 0.0
      %v4462 = vmax.f32 %v4446, 0.0
      %v4463 = vpack.c.bf16 %v4448, %v4447
      %v4464 = vpack.c.bf16 %v4450, %v4449
      %v4465 = vpack.c.bf16 %v4452, %v4451
      %v4466 = vpack.c.bf16 %v4454, %v4453
      %v4467 = vpack.c.bf16 %v4456, %v4455
      %v4468 = vpack.c.bf16 %v4458, %v4457
      %v4469 = vpack.c.bf16 %v4460, %v4459
      %v4470 = vpack.c.bf16 %v4462, %v4461
      %s4471 = scalar_lea.vmem [#allocation2], 216
      %4472 = vst [vmem:[%s4471 + $0x8] sm:$0xff] %v4463
      %4473 = vst [vmem:[%s4471 + $0x20] sm:$0xff] %v4464
      %4474 = vst [vmem:[%s4471 + $0x38] sm:$0xff] %v4465
      %4475 = vst [vmem:[%s4471 + $0x50] sm:$0xff] %v4466
      %4476 = vst [vmem:[%s4471 + $0x68] sm:$0xff] %v4467
      %4477 = vst [vmem:[%s4471 + $0x80] sm:$0xff] %v4468
      %4478 = vst [vmem:[%s4471 + $0x98] sm:$0xff] %v4469
      %4479 = vst [vmem:[%s4471 + $0xb0] sm:$0xff] %v4470
      %v4480 = vld [vmem:[#allocation2] sm:$0x80]
      %v4481 = vld [vmem:[#allocation2 + $0x8] sm:$0xff]
      %v4482 = vld [vmem:[#allocation2 + $0x18] sm:$0x80]
      %v4483 = vld [vmem:[#allocation2 + $0x20] sm:$0xff]
      %v4484 = vld [vmem:[#allocation2 + $0x30] sm:$0x80]
      %v4485 = vld [vmem:[#allocation2 + $0x38] sm:$0xff]
      %v4486 = vld [vmem:[#allocation2 + $0x48] sm:$0x80]
      %v4487 = vld [vmem:[#allocation2 + $0x50] sm:$0xff]
      %v4488 = vld [vmem:[#allocation2 + $0x60] sm:$0x80]
      %v4489 = vld [vmem:[#allocation2 + $0x68] sm:$0xff]
      %v4490 = vld [vmem:[#allocation2 + $0x78] sm:$0x80]
      %v4491 = vld [vmem:[#allocation2 + $0x80] sm:$0xff]
      %v4492 = vld [vmem:[#allocation2 + $0x90] sm:$0x80]
      %v4493 = vld [vmem:[#allocation2 + $0x98] sm:$0xff]
      %v4494 = vld [vmem:[#allocation2 + $0xa8] sm:$0x80]
      %v4495 = vld [vmem:[#allocation2 + $0xb0] sm:$0xff]
      %v4496 = vld [vmem:[#allocation2 + $0xc0] sm:$0x80]
      %v4497 = vld [vmem:[#allocation2 + $0xc8] sm:$0xff]
      %v4498 = vld [vmem:[#allocation2 + $0xd8] sm:$0x80]
      %v4499 = vld [vmem:[#allocation2 + $0xe0] sm:$0xff]
      %v4500 = vld [vmem:[#allocation2 + $0xf0] sm:$0x80]
      %v4501 = vld [vmem:[#allocation2 + $0xf8] sm:$0xff]
      %v4502 = vld [vmem:[#allocation2 + $0x108] sm:$0x80]
      %v4503 = vld [vmem:[#allocation2 + $0x110] sm:$0xff]
      %v4504 = vld [vmem:[#allocation2 + $0x120] sm:$0x80]
      %v4505 = vld [vmem:[#allocation2 + $0x128] sm:$0xff]
      %v4506 = vld [vmem:[#allocation2 + $0x138] sm:$0x80]
      %v4507 = vld [vmem:[#allocation2 + $0x140] sm:$0xff]
      %v4508 = vld [vmem:[#allocation2 + $0x150] sm:$0x80]
      %v4509 = vld [vmem:[#allocation2 + $0x158] sm:$0xff]
      %v4510 = vld [vmem:[#allocation2 + $0x168] sm:$0x80]
      %v4511 = vld [vmem:[#allocation2 + $0x170] sm:$0xff]
      %v4512 = vld [vmem:[#allocation2 + $0x180] sm:$0x80]
      %v4513 = vld [vmem:[#allocation2 + $0x188] sm:$0xff]
      %v4514 = vld [vmem:[#allocation2 + $0x198] sm:$0x80]
      %v4515 = vld [vmem:[#allocation2 + $0x1a0] sm:$0xff]
      %v4517 = vshrl.u32 %v4480, 16
      %v4519 = vrot.slane %v4517, 7
      %v4521 = vshrl.u32 %v4481, 16
      %v4523 = vrot.slane %v4521, 7
      %v4524 = vshll.u32 %v4481, 16
      %v4526 = vor.u32 %v4523, %v4524
      %v4527 = vsel %vm286, %v4519, %v4526
      %v4529 = vshrl.u32 %v4482, 16
      %v4531 = vrot.slane %v4529, 7
      %v4533 = vshrl.u32 %v4483, 16
      %v4535 = vrot.slane %v4533, 7
      %v4536 = vshll.u32 %v4483, 16
      %v4538 = vor.u32 %v4535, %v4536
      %v4539 = vsel %vm286, %v4531, %v4538
      %v4541 = vshrl.u32 %v4484, 16
      %v4543 = vrot.slane %v4541, 7
      %v4545 = vshrl.u32 %v4485, 16
      %v4547 = vrot.slane %v4545, 7
      %v4548 = vshll.u32 %v4485, 16
      %v4550 = vor.u32 %v4547, %v4548
      %v4551 = vsel %vm286, %v4543, %v4550
      %v4553 = vshrl.u32 %v4486, 16
      %v4555 = vrot.slane %v4553, 7
      %v4557 = vshrl.u32 %v4487, 16
      %v4559 = vrot.slane %v4557, 7
      %v4560 = vshll.u32 %v4487, 16
      %v4562 = vor.u32 %v4559, %v4560
      %v4563 = vsel %vm286, %v4555, %v4562
      %v4565 = vshrl.u32 %v4488, 16
      %v4567 = vrot.slane %v4565, 7
      %v4569 = vshrl.u32 %v4489, 16
      %v4571 = vrot.slane %v4569, 7
      %v4572 = vshll.u32 %v4489, 16
      %v4574 = vor.u32 %v4571, %v4572
      %v4575 = vsel %vm286, %v4567, %v4574
      %v4577 = vshrl.u32 %v4490, 16
      %v4579 = vrot.slane %v4577, 7
      %v4581 = vshrl.u32 %v4491, 16
      %v4583 = vrot.slane %v4581, 7
      %v4584 = vshll.u32 %v4491, 16
      %v4586 = vor.u32 %v4583, %v4584
      %v4587 = vsel %vm286, %v4579, %v4586
      %v4589 = vshrl.u32 %v4492, 16
      %v4591 = vrot.slane %v4589, 7
      %v4593 = vshrl.u32 %v4493, 16
      %v4595 = vrot.slane %v4593, 7
      %v4596 = vshll.u32 %v4493, 16
      %v4598 = vor.u32 %v4595, %v4596
      %v4599 = vsel %vm286, %v4591, %v4598
      %v4601 = vshrl.u32 %v4494, 16
      %v4603 = vrot.slane %v4601, 7
      %v4605 = vshrl.u32 %v4495, 16
      %v4607 = vrot.slane %v4605, 7
      %v4608 = vshll.u32 %v4495, 16
      %v4610 = vor.u32 %v4607, %v4608
      %v4611 = vsel %vm286, %v4603, %v4610
      %v4613 = vshrl.u32 %v4496, 16
      %v4615 = vrot.slane %v4613, 7
      %v4617 = vshrl.u32 %v4497, 16
      %v4619 = vrot.slane %v4617, 7
      %v4620 = vshll.u32 %v4497, 16
      %v4622 = vor.u32 %v4619, %v4620
      %v4623 = vsel %vm286, %v4615, %v4622
      %v4625 = vshrl.u32 %v4498, 16
      %v4627 = vrot.slane %v4625, 7
      %v4629 = vshrl.u32 %v4499, 16
      %v4631 = vrot.slane %v4629, 7
      %v4632 = vshll.u32 %v4499, 16
      %v4634 = vor.u32 %v4631, %v4632
      %v4635 = vsel %vm286, %v4627, %v4634
      %v4637 = vshrl.u32 %v4500, 16
      %v4639 = vrot.slane %v4637, 7
      %v4641 = vshrl.u32 %v4501, 16
      %v4643 = vrot.slane %v4641, 7
      %v4644 = vshll.u32 %v4501, 16
      %v4646 = vor.u32 %v4643, %v4644
      %v4647 = vsel %vm286, %v4639, %v4646
      %v4649 = vshrl.u32 %v4502, 16
      %v4651 = vrot.slane %v4649, 7
      %v4653 = vshrl.u32 %v4503, 16
      %v4655 = vrot.slane %v4653, 7
      %v4656 = vshll.u32 %v4503, 16
      %v4658 = vor.u32 %v4655, %v4656
      %v4659 = vsel %vm286, %v4651, %v4658
      %v4661 = vshrl.u32 %v4504, 16
      %v4663 = vrot.slane %v4661, 7
      %v4665 = vshrl.u32 %v4505, 16
      %v4667 = vrot.slane %v4665, 7
      %v4668 = vshll.u32 %v4505, 16
      %v4670 = vor.u32 %v4667, %v4668
      %v4671 = vsel %vm286, %v4663, %v4670
      %v4673 = vshrl.u32 %v4506, 16
      %v4675 = vrot.slane %v4673, 7
      %v4677 = vshrl.u32 %v4507, 16
      %v4679 = vrot.slane %v4677, 7
      %v4680 = vshll.u32 %v4507, 16
      %v4682 = vor.u32 %v4679, %v4680
      %v4683 = vsel %vm286, %v4675, %v4682
      %v4685 = vshrl.u32 %v4508, 16
      %v4687 = vrot.slane %v4685, 7
      %v4689 = vshrl.u32 %v4509, 16
      %v4691 = vrot.slane %v4689, 7
      %v4692 = vshll.u32 %v4509, 16
      %v4694 = vor.u32 %v4691, %v4692
      %v4695 = vsel %vm286, %v4687, %v4694
      %v4697 = vshrl.u32 %v4510, 16
      %v4699 = vrot.slane %v4697, 7
      %v4701 = vshrl.u32 %v4511, 16
      %v4703 = vrot.slane %v4701, 7
      %v4704 = vshll.u32 %v4511, 16
      %v4706 = vor.u32 %v4703, %v4704
      %v4707 = vsel %vm286, %v4699, %v4706
      %v4709 = vshrl.u32 %v4512, 16
      %v4711 = vrot.slane %v4709, 7
      %v4713 = vshrl.u32 %v4513, 16
      %v4715 = vrot.slane %v4713, 7
      %v4716 = vshll.u32 %v4513, 16
      %v4718 = vor.u32 %v4715, %v4716
      %v4719 = vsel %vm286, %v4711, %v4718
      %v4721 = vshrl.u32 %v4514, 16
      %v4723 = vrot.slane %v4721, 7
      %v4725 = vshrl.u32 %v4515, 16
      %v4727 = vrot.slane %v4725, 7
      %v4728 = vshll.u32 %v4515, 16
      %v4730 = vor.u32 %v4727, %v4728
      %v4731 = vsel %vm286, %v4723, %v4730
      %4750 = vst [vmem:[#allocation3] sm:$0xff] %v4527
      %4751 = vst [vmem:[#allocation3 + $0x8] sm:$0xff] %v4539
      %4752 = vst [vmem:[#allocation3 + $0x10] sm:$0xff] %v4551
      %4753 = vst [vmem:[#allocation3 + $0x18] sm:$0xff] %v4563
      %4754 = vst [vmem:[#allocation3 + $0x20] sm:$0xff] %v4575
      %4755 = vst [vmem:[#allocation3 + $0x28] sm:$0xff] %v4587
      %4756 = vst [vmem:[#allocation3 + $0x30] sm:$0xff] %v4599
      %4757 = vst [vmem:[#allocation3 + $0x38] sm:$0xff] %v4611
      %4758 = vst [vmem:[#allocation3 + $0x40] sm:$0xff] %v4623
      %4759 = vst [vmem:[#allocation3 + $0x48] sm:$0xff] %v4635
      %4760 = vst [vmem:[#allocation3 + $0x50] sm:$0xff] %v4647
      %4761 = vst [vmem:[#allocation3 + $0x58] sm:$0xff] %v4659
      %4762 = vst [vmem:[#allocation3 + $0x60] sm:$0xff] %v4671
      %4763 = vst [vmem:[#allocation3 + $0x68] sm:$0xff] %v4683
      %4764 = vst [vmem:[#allocation3 + $0x70] sm:$0xff] %v4695
      %4765 = vst [vmem:[#allocation3 + $0x78] sm:$0xff] %v4707
      %4766 = vst [vmem:[#allocation3 + $0x80] sm:$0xff] %v4719
      %4767 = vst [vmem:[#allocation3 + $0x88] sm:$0xff] %v4731
      %v4768 = vld [vmem:[#allocation2 + $0x8] sm:$0xff]
      %v4769 = vld [vmem:[#allocation2 + $0x20] sm:$0xff]
      %v4770 = vld [vmem:[#allocation2 + $0x38] sm:$0xff]
      %v4771 = vld [vmem:[#allocation2 + $0x50] sm:$0xff]
      %v4772 = vld [vmem:[#allocation2 + $0x68] sm:$0xff]
      %v4773 = vld [vmem:[#allocation2 + $0x80] sm:$0xff]
      %v4774 = vld [vmem:[#allocation2 + $0x98] sm:$0xff]
      %v4775 = vld [vmem:[#allocation2 + $0xb0] sm:$0xff]
      %v4776 = vld [vmem:[#allocation2 + $0xc8] sm:$0xff]
      %v4777 = vld [vmem:[#allocation2 + $0xe0] sm:$0xff]
      %v4778 = vld [vmem:[#allocation2 + $0xf8] sm:$0xff]
      %v4779 = vld [vmem:[#allocation2 + $0x110] sm:$0xff]
      %v4780 = vld [vmem:[#allocation2 + $0x128] sm:$0xff]
      %v4781 = vld [vmem:[#allocation2 + $0x140] sm:$0xff]
      %v4782 = vld [vmem:[#allocation2 + $0x158] sm:$0xff]
      %v4783 = vld [vmem:[#allocation2 + $0x170] sm:$0xff]
      %v4784 = vld [vmem:[#allocation2 + $0x188] sm:$0xff]
      %v4785 = vld [vmem:[#allocation2 + $0x1a0] sm:$0xff]
      %4786 = vst [vmem:[%s786] sm:$0xff] %v4768
      %4787 = vst [vmem:[%s786 + $0x8] sm:$0xff] %v4769
      %4788 = vst [vmem:[%s786 + $0x10] sm:$0xff] %v4770
      %4789 = vst [vmem:[%s786 + $0x18] sm:$0xff] %v4771
      %4790 = vst [vmem:[%s786 + $0x20] sm:$0xff] %v4772
      %4791 = vst [vmem:[%s786 + $0x28] sm:$0xff] %v4773
      %4792 = vst [vmem:[%s786 + $0x30] sm:$0xff] %v4774
      %4793 = vst [vmem:[%s786 + $0x38] sm:$0xff] %v4775
      %4794 = vst [vmem:[%s786 + $0x40] sm:$0xff] %v4776
      %4795 = vst [vmem:[%s786 + $0x48] sm:$0xff] %v4777
      %4796 = vst [vmem:[%s786 + $0x50] sm:$0xff] %v4778
      %4797 = vst [vmem:[%s786 + $0x58] sm:$0xff] %v4779
      %4798 = vst [vmem:[%s786 + $0x60] sm:$0xff] %v4780
      %4799 = vst [vmem:[%s786 + $0x68] sm:$0xff] %v4781
      %4800 = vst [vmem:[%s786 + $0x70] sm:$0xff] %v4782
      %4801 = vst [vmem:[%s786 + $0x78] sm:$0xff] %v4783
      %4802 = vst [vmem:[%s786 + $0x80] sm:$0xff] %v4784
      %4803 = vst [vmem:[%s786 + $0x88] sm:$0xff] %v4785
      %v4804 = vld [vmem:[#allocation2 + $0x8] sm:$0xff]
      %v4805 = vld [vmem:[#allocation2 + $0x10] sm:$0x1]
      %v4806 = vld [vmem:[#allocation2 + $0x20] sm:$0xff]
      %v4807 = vld [vmem:[#allocation2 + $0x28] sm:$0x1]
      %v4808 = vld [vmem:[#allocation2 + $0x38] sm:$0xff]
      %v4809 = vld [vmem:[#allocation2 + $0x40] sm:$0x1]
      %v4810 = vld [vmem:[#allocation2 + $0x50] sm:$0xff]
      %v4811 = vld [vmem:[#allocation2 + $0x58] sm:$0x1]
      %v4812 = vld [vmem:[#allocation2 + $0x68] sm:$0xff]
      %v4813 = vld [vmem:[#allocation2 + $0x70] sm:$0x1]
      %v4814 = vld [vmem:[#allocation2 + $0x80] sm:$0xff]
      %v4815 = vld [vmem:[#allocation2 + $0x88] sm:$0x1]
      %v4816 = vld [vmem:[#allocation2 + $0x98] sm:$0xff]
      %v4817 = vld [vmem:[#allocation2 + $0xa0] sm:$0x1]
      %v4818 = vld [vmem:[#allocation2 + $0xb0] sm:$0xff]
      %v4819 = vld [vmem:[#allocation2 + $0xb8] sm:$0x1]
      %v4820 = vld [vmem:[#allocation2 + $0xc8] sm:$0xff]
      %v4821 = vld [vmem:[#allocation2 + $0xd0] sm:$0x1]
      %v4822 = vld [vmem:[#allocation2 + $0xe0] sm:$0xff]
      %v4823 = vld [vmem:[#allocation2 + $0xe8] sm:$0x1]
      %v4824 = vld [vmem:[#allocation2 + $0xf8] sm:$0xff]
      %v4825 = vld [vmem:[#allocation2 + $0x100] sm:$0x1]
      %v4826 = vld [vmem:[#allocation2 + $0x110] sm:$0xff]
      %v4827 = vld [vmem:[#allocation2 + $0x118] sm:$0x1]
      %v4828 = vld [vmem:[#allocation2 + $0x128] sm:$0xff]
      %v4829 = vld [vmem:[#allocation2 + $0x130] sm:$0x1]
      %v4830 = vld [vmem:[#allocation2 + $0x140] sm:$0xff]
      %v4831 = vld [vmem:[#allocation2 + $0x148] sm:$0x1]
      %v4832 = vld [vmem:[#allocation2 + $0x158] sm:$0xff]
      %v4833 = vld [vmem:[#allocation2 + $0x160] sm:$0x1]
      %v4834 = vld [vmem:[#allocation2 + $0x170] sm:$0xff]
      %v4835 = vld [vmem:[#allocation2 + $0x178] sm:$0x1]
      %v4836 = vld [vmem:[#allocation2 + $0x188] sm:$0xff]
      %v4837 = vld [vmem:[#allocation2 + $0x190] sm:$0x1]
      %v4838 = vld [vmem:[#allocation2 + $0x1a0] sm:$0xff]
      %v4839 = vld [vmem:[#allocation2 + $0x1a8] sm:$0x1]
      %v4841 = vshrl.u32 %v4804, 16
      %v4843 = vshll.u32 %v4804, 16
      %v4845 = vrot.slane %v4843, 1
      %v4846 = vor.u32 %v4841, %v4845
      %v4848 = vshll.u32 %v4805, 16
      %v4850 = vrot.slane %v4848, 1
      %v4851 = vsel %vm841, %v4846, %v4850
      %v4853 = vshrl.u32 %v4806, 16
      %v4855 = vshll.u32 %v4806, 16
      %v4857 = vrot.slane %v4855, 1
      %v4858 = vor.u32 %v4853, %v4857
      %v4860 = vshll.u32 %v4807, 16
      %v4862 = vrot.slane %v4860, 1
      %v4863 = vsel %vm841, %v4858, %v4862
      %v4865 = vshrl.u32 %v4808, 16
      %v4867 = vshll.u32 %v4808, 16
      %v4869 = vrot.slane %v4867, 1
      %v4870 = vor.u32 %v4865, %v4869
      %v4872 = vshll.u32 %v4809, 16
      %v4874 = vrot.slane %v4872, 1
      %v4875 = vsel %vm841, %v4870, %v4874
      %v4877 = vshrl.u32 %v4810, 16
      %v4879 = vshll.u32 %v4810, 16
      %v4881 = vrot.slane %v4879, 1
      %v4882 = vor.u32 %v4877, %v4881
      %v4884 = vshll.u32 %v4811, 16
      %v4886 = vrot.slane %v4884, 1
      %v4887 = vsel %vm841, %v4882, %v4886
      %v4889 = vshrl.u32 %v4812, 16
      %v4891 = vshll.u32 %v4812, 16
      %v4893 = vrot.slane %v4891, 1
      %v4894 = vor.u32 %v4889, %v4893
      %v4896 = vshll.u32 %v4813, 16
      %v4898 = vrot.slane %v4896, 1
      %v4899 = vsel %vm841, %v4894, %v4898
      %v4901 = vshrl.u32 %v4814, 16
      %v4903 = vshll.u32 %v4814, 16
      %v4905 = vrot.slane %v4903, 1
      %v4906 = vor.u32 %v4901, %v4905
      %v4908 = vshll.u32 %v4815, 16
      %v4910 = vrot.slane %v4908, 1
      %v4911 = vsel %vm841, %v4906, %v4910
      %v4913 = vshrl.u32 %v4816, 16
      %v4915 = vshll.u32 %v4816, 16
      %v4917 = vrot.slane %v4915, 1
      %v4918 = vor.u32 %v4913, %v4917
      %v4920 = vshll.u32 %v4817, 16
      %v4922 = vrot.slane %v4920, 1
      %v4923 = vsel %vm841, %v4918, %v4922
      %v4925 = vshrl.u32 %v4818, 16
      %v4927 = vshll.u32 %v4818, 16
      %v4929 = vrot.slane %v4927, 1
      %v4930 = vor.u32 %v4925, %v4929
      %v4932 = vshll.u32 %v4819, 16
      %v4934 = vrot.slane %v4932, 1
      %v4935 = vsel %vm841, %v4930, %v4934
      %v4937 = vshrl.u32 %v4820, 16
      %v4939 = vshll.u32 %v4820, 16
      %v4941 = vrot.slane %v4939, 1
      %v4942 = vor.u32 %v4937, %v4941
      %v4944 = vshll.u32 %v4821, 16
      %v4946 = vrot.slane %v4944, 1
      %v4947 = vsel %vm841, %v4942, %v4946
      %v4949 = vshrl.u32 %v4822, 16
      %v4951 = vshll.u32 %v4822, 16
      %v4953 = vrot.slane %v4951, 1
      %v4954 = vor.u32 %v4949, %v4953
      %v4956 = vshll.u32 %v4823, 16
      %v4958 = vrot.slane %v4956, 1
      %v4959 = vsel %vm841, %v4954, %v4958
      %v4961 = vshrl.u32 %v4824, 16
      %v4963 = vshll.u32 %v4824, 16
      %v4965 = vrot.slane %v4963, 1
      %v4966 = vor.u32 %v4961, %v4965
      %v4968 = vshll.u32 %v4825, 16
      %v4970 = vrot.slane %v4968, 1
      %v4971 = vsel %vm841, %v4966, %v4970
      %v4973 = vshrl.u32 %v4826, 16
      %v4975 = vshll.u32 %v4826, 16
      %v4977 = vrot.slane %v4975, 1
      %v4978 = vor.u32 %v4973, %v4977
      %v4980 = vshll.u32 %v4827, 16
      %v4982 = vrot.slane %v4980, 1
      %v4983 = vsel %vm841, %v4978, %v4982
      %v4985 = vshrl.u32 %v4828, 16
      %v4987 = vshll.u32 %v4828, 16
      %v4989 = vrot.slane %v4987, 1
      %v4990 = vor.u32 %v4985, %v4989
      %v4992 = vshll.u32 %v4829, 16
      %v4994 = vrot.slane %v4992, 1
      %v4995 = vsel %vm841, %v4990, %v4994
      %v4997 = vshrl.u32 %v4830, 16
      %v4999 = vshll.u32 %v4830, 16
      %v5001 = vrot.slane %v4999, 1
      %v5002 = vor.u32 %v4997, %v5001
      %v5004 = vshll.u32 %v4831, 16
      %v5006 = vrot.slane %v5004, 1
      %v5007 = vsel %vm841, %v5002, %v5006
      %v5009 = vshrl.u32 %v4832, 16
      %v5011 = vshll.u32 %v4832, 16
      %v5013 = vrot.slane %v5011, 1
      %v5014 = vor.u32 %v5009, %v5013
      %v5016 = vshll.u32 %v4833, 16
      %v5018 = vrot.slane %v5016, 1
      %v5019 = vsel %vm841, %v5014, %v5018
      %v5021 = vshrl.u32 %v4834, 16
      %v5023 = vshll.u32 %v4834, 16
      %v5025 = vrot.slane %v5023, 1
      %v5026 = vor.u32 %v5021, %v5025
      %v5028 = vshll.u32 %v4835, 16
      %v5030 = vrot.slane %v5028, 1
      %v5031 = vsel %vm841, %v5026, %v5030
      %v5033 = vshrl.u32 %v4836, 16
      %v5035 = vshll.u32 %v4836, 16
      %v5037 = vrot.slane %v5035, 1
      %v5038 = vor.u32 %v5033, %v5037
      %v5040 = vshll.u32 %v4837, 16
      %v5042 = vrot.slane %v5040, 1
      %v5043 = vsel %vm841, %v5038, %v5042
      %v5045 = vshrl.u32 %v4838, 16
      %v5047 = vshll.u32 %v4838, 16
      %v5049 = vrot.slane %v5047, 1
      %v5050 = vor.u32 %v5045, %v5049
      %v5052 = vshll.u32 %v4839, 16
      %v5054 = vrot.slane %v5052, 1
      %v5055 = vsel %vm841, %v5050, %v5054
      %5074 = vst [vmem:[%s1076] sm:$0xff] %v4851
      %5075 = vst [vmem:[%s1076 + $0x8] sm:$0xff] %v4863
      %5076 = vst [vmem:[%s1076 + $0x10] sm:$0xff] %v4875
      %5077 = vst [vmem:[%s1076 + $0x18] sm:$0xff] %v4887
      %5078 = vst [vmem:[%s1076 + $0x20] sm:$0xff] %v4899
      %5079 = vst [vmem:[%s1076 + $0x28] sm:$0xff] %v4911
      %5080 = vst [vmem:[%s1076 + $0x30] sm:$0xff] %v4923
      %5081 = vst [vmem:[%s1076 + $0x38] sm:$0xff] %v4935
      %5082 = vst [vmem:[%s1076 + $0x40] sm:$0xff] %v4947
      %5083 = vst [vmem:[%s1076 + $0x48] sm:$0xff] %v4959
      %5084 = vst [vmem:[%s1076 + $0x50] sm:$0xff] %v4971
      %5085 = vst [vmem:[%s1076 + $0x58] sm:$0xff] %v4983
      %5086 = vst [vmem:[%s1076 + $0x60] sm:$0xff] %v4995
      %5087 = vst [vmem:[%s1076 + $0x68] sm:$0xff] %v5007
      %5088 = vst [vmem:[%s1076 + $0x70] sm:$0xff] %v5019
      %5089 = vst [vmem:[%s1076 + $0x78] sm:$0xff] %v5031
      %5090 = vst [vmem:[%s1076 + $0x80] sm:$0xff] %v5043
      %5091 = vst [vmem:[%s1076 + $0x88] sm:$0xff] %v5055
      %v5092 = vld [vmem:[#allocation3] sm:$0xff]
      %v5093 = vld [vmem:[#allocation3 + $0x8] sm:$0xff]
      %v5094 = vld [vmem:[#allocation3 + $0x10] sm:$0xff]
      %v5095 = vld [vmem:[#allocation3 + $0x18] sm:$0xff]
      %v5096 = vld [vmem:[#allocation3 + $0x20] sm:$0xff]
      %v5097 = vld [vmem:[#allocation3 + $0x28] sm:$0xff]
      %v5098 = vld [vmem:[#allocation3 + $0x30] sm:$0xff]
      %v5099 = vld [vmem:[#allocation3 + $0x38] sm:$0xff]
      %v5100 = vld [vmem:[%s2] sm:$0xf]
      %v5101 = vld [vmem:[%s2 + $0x4] sm:$0xf]
      %v5102 = vld [vmem:[%s2 + $0x8] sm:$0xf]
      %v5103 = vld [vmem:[%s2 + $0xc] sm:$0xf]
      %v5104 = vld [vmem:[%s2 + $0x10] sm:$0xf]
      %v5105 = vld [vmem:[%s2 + $0x14] sm:$0xf]
      %v5106 = vld [vmem:[%s2 + $0x18] sm:$0xf]
      %v5107 = vld [vmem:[%s2 + $0x1c] sm:$0xf]
      %v5108 = vld [vmem:[%s2 + $0x20] sm:$0xf]
      %v5109 = vld [vmem:[%s2 + $0x24] sm:$0xf]
      %v5110 = vld [vmem:[%s2 + $0x28] sm:$0xf]
      %v5111 = vld [vmem:[%s2 + $0x2c] sm:$0xf]
      %v5112 = vld [vmem:[%s2 + $0x30] sm:$0xf]
      %v5113 = vld [vmem:[%s2 + $0x34] sm:$0xf]
      %v5114 = vld [vmem:[%s2 + $0x38] sm:$0xf]
      %v5115 = vld [vmem:[%s2 + $0x3c] sm:$0xf]
      %v5116 = vld [vmem:[%s786] sm:$0xff]
      %v5117 = vld [vmem:[%s786 + $0x8] sm:$0xff]
      %v5118 = vld [vmem:[%s786 + $0x10] sm:$0xff]
      %v5119 = vld [vmem:[%s786 + $0x18] sm:$0xff]
      %v5120 = vld [vmem:[%s786 + $0x20] sm:$0xff]
      %v5121 = vld [vmem:[%s786 + $0x28] sm:$0xff]
      %v5122 = vld [vmem:[%s786 + $0x30] sm:$0xff]
      %v5123 = vld [vmem:[%s786 + $0x38] sm:$0xff]
      %s5124 = scalar_lea.vmem %s2, 64
      %v5125 = vld [vmem:[%s5124] sm:$0xf]
      %v5126 = vld [vmem:[%s5124 + $0x4] sm:$0xf]
      %v5127 = vld [vmem:[%s5124 + $0x8] sm:$0xf]
      %v5128 = vld [vmem:[%s5124 + $0xc] sm:$0xf]
      %v5129 = vld [vmem:[%s5124 + $0x10] sm:$0xf]
      %v5130 = vld [vmem:[%s5124 + $0x14] sm:$0xf]
      %v5131 = vld [vmem:[%s5124 + $0x18] sm:$0xf]
      %v5132 = vld [vmem:[%s5124 + $0x1c] sm:$0xf]
      %v5133 = vld [vmem:[%s5124 + $0x20] sm:$0xf]
      %v5134 = vld [vmem:[%s5124 + $0x24] sm:$0xf]
      %v5135 = vld [vmem:[%s5124 + $0x28] sm:$0xf]
      %v5136 = vld [vmem:[%s5124 + $0x2c] sm:$0xf]
      %v5137 = vld [vmem:[%s5124 + $0x30] sm:$0xf]
      %v5138 = vld [vmem:[%s5124 + $0x34] sm:$0xf]
      %v5139 = vld [vmem:[%s5124 + $0x38] sm:$0xf]
      %v5140 = vld [vmem:[%s5124 + $0x3c] sm:$0xf]
      %v5157 = vunpack.c.l.b16 %v5125
      %v5158 = vunpack.c.l.b16 %v5126
      %v5159 = vunpack.c.l.b16 %v5127
      %v5160 = vunpack.c.l.b16 %v5128
      %v5161 = vunpack.c.l.b16 %v5129
      %v5162 = vunpack.c.l.b16 %v5130
      %v5163 = vunpack.c.l.b16 %v5131
      %v5164 = vunpack.c.l.b16 %v5132
      %v5165 = vunpack.c.l.b16 %v5133
      %v5166 = vunpack.c.l.b16 %v5134
      %v5167 = vunpack.c.l.b16 %v5135
      %v5168 = vunpack.c.l.b16 %v5136
      %v5169 = vunpack.c.l.b16 %v5137
      %v5170 = vunpack.c.l.b16 %v5138
      %v5171 = vunpack.c.l.b16 %v5139
      %v5172 = vunpack.c.l.b16 %v5140
      %v5173 = vpack.c.b16 %v5158, %v5157
      %v5174 = vpack.c.b16 %v5160, %v5159
      %v5175 = vpack.c.b16 %v5162, %v5161
      %v5176 = vpack.c.b16 %v5164, %v5163
      %v5177 = vpack.c.b16 %v5166, %v5165
      %v5178 = vpack.c.b16 %v5168, %v5167
      %v5179 = vpack.c.b16 %v5170, %v5169
      %v5180 = vpack.c.b16 %v5172, %v5171
      %5189 = vmatprep.subr.bf16.mxu0 0
      %5190 = vmatpush1.bf16.msra.mxu0 %v5173
      %5191 = vmatprep.subr.bf16.mxu0 0
      %5192 = vmatpush1.bf16.msra.mxu0 %v5174
      %5193 = vmatprep.subr.bf16.mxu0 0
      %5194 = vmatpush1.bf16.msra.mxu0 %v5175
      %5195 = vmatprep.subr.bf16.mxu0 0
      %5196 = vmatpush1.bf16.msra.mxu0 %v5176
      %5197 = vmatprep.subr.bf16.mxu0 0
      %5198 = vmatpush1.bf16.msra.mxu0 %v5177
      %5199 = vmatprep.subr.bf16.mxu0 0
      %5200 = vmatpush1.bf16.msra.mxu0 %v5178
      %5201 = vmatprep.subr.bf16.mxu0 0
      %5202 = vmatpush1.bf16.msra.mxu0 %v5179
      %5203 = vmatprep.subr.bf16.mxu0 0
      %5204 = vmatpush1.bf16.msra.mxu0 %v5180
      %5205 = vmatprep.subr.bf16.mxu0 0
      %5206 = vmatpush1.bf16.msra.mxu0 0
      %5207 = vmatprep.subr.bf16.mxu0 0
      %5208 = vmatpush1.bf16.msra.mxu0 0
      %5209 = vmatprep.subr.bf16.mxu0 0
      %5210 = vmatpush1.bf16.msra.mxu0 0
      %5211 = vmatprep.subr.bf16.mxu0 0
      %5212 = vmatpush1.bf16.msra.mxu0 0
      %5213 = vmatprep.subr.bf16.mxu0 0
      %5214 = vmatpush1.bf16.msra.mxu0 0
      %5215 = vmatprep.subr.bf16.mxu0 0
      %5216 = vmatpush1.bf16.msra.mxu0 0
      %5217 = vmatprep.subr.bf16.mxu0 0
      %5218 = vmatpush1.bf16.msra.mxu0 0
      %5219 = vmatprep.subr.bf16.mxu0 0
      %5220 = vmatpush1.bf16.msra.mxu0 0
      %5221 = vmatprep.mubr.bf16.mxu0 0
      %5222 = vmatmul.mubr.bf16.gmra.mrb[0].mxu0 %v5116
      %v5223 = vpop.f32.mrb[0].mxu0
      %v5224 = vadd.f32 0.0, %v5223
      %v5225 = vpop.f32.mrb[0].mxu0
      %v5226 = vpop.f32.mrb[0].mxu0
      %v5227 = vadd.f32 0.0, %v5226
      %v5228 = vpop.f32.mrb[0].mxu0
      %5229 = vmatprep.mubr.bf16.mxu0 0
      %5230 = vmatmul.mubr.bf16.gmra.mrb[0].mxu0 %v5117
      %v5231 = vpop.f32.mrb[0].mxu0
      %v5232 = vadd.f32 0.0, %v5231
      %v5233 = vpop.f32.mrb[0].mxu0
      %v5234 = vpop.f32.mrb[0].mxu0
      %v5235 = vadd.f32 0.0, %v5234
      %v5236 = vpop.f32.mrb[0].mxu0
      %5237 = vmatprep.mubr.bf16.mxu0 0
      %5238 = vmatmul.mubr.bf16.gmra.mrb[0].mxu0 %v5118
      %v5239 = vpop.f32.mrb[0].mxu0
      %v5240 = vadd.f32 0.0, %v5239
      %v5241 = vpop.f32.mrb[0].mxu0
      %v5242 = vpop.f32.mrb[0].mxu0
      %v5243 = vadd.f32 0.0, %v5242
      %v5244 = vpop.f32.mrb[0].mxu0
      %5245 = vmatprep.mubr.bf16.mxu0 0
      %5246 = vmatmul.mubr.bf16.gmra.mrb[0].mxu0 %v5119
      %v5247 = vpop.f32.mrb[0].mxu0
      %v5248 = vadd.f32 0.0, %v5247
      %v5249 = vpop.f32.mrb[0].mxu0
      %v5250 = vpop.f32.mrb[0].mxu0
      %v5251 = vadd.f32 0.0, %v5250
      %v5252 = vpop.f32.mrb[0].mxu0
      %5253 = vmatprep.mubr.bf16.mxu0 0
      %5254 = vmatmul.mubr.bf16.gmra.mrb[0].mxu0 %v5120
      %v5255 = vpop.f32.mrb[0].mxu0
      %v5256 = vadd.f32 0.0, %v5255
      %v5257 = vpop.f32.mrb[0].mxu0
      %v5258 = vpop.f32.mrb[0].mxu0
      %v5259 = vadd.f32 0.0, %v5258
      %v5260 = vpop.f32.mrb[0].mxu0
      %5261 = vmatprep.mubr.bf16.mxu0 0
      %5262 = vmatmul.mubr.bf16.gmra.mrb[0].mxu0 %v5121
      %v5263 = vpop.f32.mrb[0].mxu0
      %v5264 = vadd.f32 0.0, %v5263
      %v5265 = vpop.f32.mrb[0].mxu0
      %v5266 = vpop.f32.mrb[0].mxu0
      %v5267 = vadd.f32 0.0, %v5266
      %v5268 = vpop.f32.mrb[0].mxu0
      %5269 = vmatprep.mubr.bf16.mxu0 0
      %5270 = vmatmul.mubr.bf16.gmra.mrb[0].mxu0 %v5122
      %v5271 = vpop.f32.mrb[0].mxu0
      %v5272 = vadd.f32 0.0, %v5271
      %v5273 = vpop.f32.mrb[0].mxu0
      %v5274 = vpop.f32.mrb[0].mxu0
      %v5275 = vadd.f32 0.0, %v5274
      %v5276 = vpop.f32.mrb[0].mxu0
      %5277 = vmatprep.mubr.bf16.mxu0 0
      %5278 = vmatmul.mubr.bf16.gmra.mrb[0].mxu0 %v5123
      %v5279 = vpop.f32.mrb[0].mxu0
      %v5280 = vadd.f32 0.0, %v5279
      %v5281 = vpop.f32.mrb[0].mxu0
      %v5282 = vpop.f32.mrb[0].mxu0
      %v5283 = vadd.f32 0.0, %v5282
      %v5284 = vpop.f32.mrb[0].mxu0
      %5285 = vdwg.mxu0
      %v5302 = vunpack.c.l.b16 %v5100
      %v5303 = vunpack.c.l.b16 %v5101
      %v5304 = vunpack.c.l.b16 %v5102
      %v5305 = vunpack.c.l.b16 %v5103
      %v5306 = vunpack.c.l.b16 %v5104
      %v5307 = vunpack.c.l.b16 %v5105
      %v5308 = vunpack.c.l.b16 %v5106
      %v5309 = vunpack.c.l.b16 %v5107
      %v5310 = vunpack.c.l.b16 %v5108
      %v5311 = vunpack.c.l.b16 %v5109
      %v5312 = vunpack.c.l.b16 %v5110
      %v5313 = vunpack.c.l.b16 %v5111
      %v5314 = vunpack.c.l.b16 %v5112
      %v5315 = vunpack.c.l.b16 %v5113
      %v5316 = vunpack.c.l.b16 %v5114
      %v5317 = vunpack.c.l.b16 %v5115
      %v5318 = vpack.c.b16 %v5303, %v5302
      %v5319 = vpack.c.b16 %v5305, %v5304
      %v5320 = vpack.c.b16 %v5307, %v5306
      %v5321 = vpack.c.b16 %v5309, %v5308
      %v5322 = vpack.c.b16 %v5311, %v5310
      %v5323 = vpack.c.b16 %v5313, %v5312
      %v5324 = vpack.c.b16 %v5315, %v5314
      %v5325 = vpack.c.b16 %v5317, %v5316
      %5334 = vmatprep.subr.bf16.mxu0 0
      %5335 = vmatpush1.bf16.msra.mxu0 %v5318
      %5336 = vmatprep.subr.bf16.mxu0 0
      %5337 = vmatpush1.bf16.msra.mxu0 %v5319
      %5338 = vmatprep.subr.bf16.mxu0 0
      %5339 = vmatpush1.bf16.msra.mxu0 %v5320
      %5340 = vmatprep.subr.bf16.mxu0 0
      %5341 = vmatpush1.bf16.msra.mxu0 %v5321
      %5342 = vmatprep.subr.bf16.mxu0 0
      %5343 = vmatpush1.bf16.msra.mxu0 %v5322
      %5344 = vmatprep.subr.bf16.mxu0 0
      %5345 = vmatpush1.bf16.msra.mxu0 %v5323
      %5346 = vmatprep.subr.bf16.mxu0 0
      %5347 = vmatpush1.bf16.msra.mxu0 %v5324
      %5348 = vmatprep.subr.bf16.mxu0 0
      %5349 = vmatpush1.bf16.msra.mxu0 %v5325
      %5350 = vmatprep.subr.bf16.mxu0 0
      %5351 = vmatpush1.bf16.msra.mxu0 0
      %5352 = vmatprep.subr.bf16.mxu0 0
      %5353 = vmatpush1.bf16.msra.mxu0 0
      %5354 = vmatprep.subr.bf16.mxu0 0
      %5355 = vmatpush1.bf16.msra.mxu0 0
      %5356 = vmatprep.subr.bf16.mxu0 0
      %5357 = vmatpush1.bf16.msra.mxu0 0
      %5358 = vmatprep.subr.bf16.mxu0 0
      %5359 = vmatpush1.bf16.msra.mxu0 0
      %5360 = vmatprep.subr.bf16.mxu0 0
      %5361 = vmatpush1.bf16.msra.mxu0 0
      %5362 = vmatprep.subr.bf16.mxu0 0
      %5363 = vmatpush1.bf16.msra.mxu0 0
      %5364 = vmatprep.subr.bf16.mxu0 0
      %5365 = vmatpush1.bf16.msra.mxu0 0
      %5366 = vmatprep.mubr.bf16.mxu0 0
      %5367 = vmatmul.mubr.bf16.gmra.mrb[0].mxu0 %v5092
      %v5368 = vpop.f32.mrb[0].mxu0
      %v5369 = vadd.f32 %v5224, %v5368
      %v5370 = vpop.f32.mrb[0].mxu0
      %v5371 = vpop.f32.mrb[0].mxu0
      %v5372 = vadd.f32 %v5227, %v5371
      %v5373 = vpop.f32.mrb[0].mxu0
      %5374 = vmatprep.mubr.bf16.mxu0 0
      %5375 = vmatmul.mubr.bf16.gmra.mrb[0].mxu0 %v5093
      %v5376 = vpop.f32.mrb[0].mxu0
      %v5377 = vadd.f32 %v5232, %v5376
      %v5378 = vpop.f32.mrb[0].mxu0
      %v5379 = vpop.f32.mrb[0].mxu0
      %v5380 = vadd.f32 %v5235, %v5379
      %v5381 = vpop.f32.mrb[0].mxu0
      %5382 = vmatprep.mubr.bf16.mxu0 0
      %5383 = vmatmul.mubr.bf16.gmra.mrb[0].mxu0 %v5094
      %v5384 = vpop.f32.mrb[0].mxu0
      %v5385 = vadd.f32 %v5240, %v5384
      %v5386 = vpop.f32.mrb[0].mxu0
      %v5387 = vpop.f32.mrb[0].mxu0
      %v5388 = vadd.f32 %v5243, %v5387
      %v5389 = vpop.f32.mrb[0].mxu0
      %5390 = vmatprep.mubr.bf16.mxu0 0
      %5391 = vmatmul.mubr.bf16.gmra.mrb[0].mxu0 %v5095
      %v5392 = vpop.f32.mrb[0].mxu0
      %v5393 = vadd.f32 %v5248, %v5392
      %v5394 = vpop.f32.mrb[0].mxu0
      %v5395 = vpop.f32.mrb[0].mxu0
      %v5396 = vadd.f32 %v5251, %v5395
      %v5397 = vpop.f32.mrb[0].mxu0
      %5398 = vmatprep.mubr.bf16.mxu0 0
      %5399 = vmatmul.mubr.bf16.gmra.mrb[0].mxu0 %v5096
      %v5400 = vpop.f32.mrb[0].mxu0
      %v5401 = vadd.f32 %v5256, %v5400
      %v5402 = vpop.f32.mrb[0].mxu0
      %v5403 = vpop.f32.mrb[0].mxu0
      %v5404 = vadd.f32 %v5259, %v5403
      %v5405 = vpop.f32.mrb[0].mxu0
      %5406 = vmatprep.mubr.bf16.mxu0 0
      %5407 = vmatmul.mubr.bf16.gmra.mrb[0].mxu0 %v5097
      %v5408 = vpop.f32.mrb[0].mxu0
      %v5409 = vadd.f32 %v5264, %v5408
      %v5410 = vpop.f32.mrb[0].mxu0
      %v5411 = vpop.f32.mrb[0].mxu0
      %v5412 = vadd.f32 %v5267, %v5411
      %v5413 = vpop.f32.mrb[0].mxu0
      %5414 = vmatprep.mubr.bf16.mxu0 0
      %5415 = vmatmul.mubr.bf16.gmra.mrb[0].mxu0 %v5098
      %v5416 = vpop.f32.mrb[0].mxu0
      %v5417 = vadd.f32 %v5272, %v5416
      %v5418 = vpop.f32.mrb[0].mxu0
      %v5419 = vpop.f32.mrb[0].mxu0
      %v5420 = vadd.f32 %v5275, %v5419
      %v5421 = vpop.f32.mrb[0].mxu0
      %5422 = vmatprep.mubr.bf16.mxu0 0
      %5423 = vmatmul.mubr.bf16.gmra.mrb[0].mxu0 %v5099
      %v5424 = vpop.f32.mrb[0].mxu0
      %v5425 = vadd.f32 %v5280, %v5424
      %v5426 = vpop.f32.mrb[0].mxu0
      %v5427 = vpop.f32.mrb[0].mxu0
      %v5428 = vadd.f32 %v5283, %v5427
      %v5429 = vpop.f32.mrb[0].mxu0
      %5430 = vdwg.mxu0
      %v5431 = vld [vmem:[%s1076] sm:$0xff]
      %v5432 = vld [vmem:[%s1076 + $0x8] sm:$0xff]
      %v5433 = vld [vmem:[%s1076 + $0x10] sm:$0xff]
      %v5434 = vld [vmem:[%s1076 + $0x18] sm:$0xff]
      %v5435 = vld [vmem:[%s1076 + $0x20] sm:$0xff]
      %v5436 = vld [vmem:[%s1076 + $0x28] sm:$0xff]
      %v5437 = vld [vmem:[%s1076 + $0x30] sm:$0xff]
      %v5438 = vld [vmem:[%s1076 + $0x38] sm:$0xff]
      %s5439 = scalar_lea.vmem %s2, 128
      %v5440 = vld [vmem:[%s5439] sm:$0xf]
      %v5441 = vld [vmem:[%s5439 + $0x4] sm:$0xf]
      %v5442 = vld [vmem:[%s5439 + $0x8] sm:$0xf]
      %v5443 = vld [vmem:[%s5439 + $0xc] sm:$0xf]
      %v5444 = vld [vmem:[%s5439 + $0x10] sm:$0xf]
      %v5445 = vld [vmem:[%s5439 + $0x14] sm:$0xf]
      %v5446 = vld [vmem:[%s5439 + $0x18] sm:$0xf]
      %v5447 = vld [vmem:[%s5439 + $0x1c] sm:$0xf]
      %v5448 = vld [vmem:[%s5439 + $0x20] sm:$0xf]
      %v5449 = vld [vmem:[%s5439 + $0x24] sm:$0xf]
      %v5450 = vld [vmem:[%s5439 + $0x28] sm:$0xf]
      %v5451 = vld [vmem:[%s5439 + $0x2c] sm:$0xf]
      %v5452 = vld [vmem:[%s5439 + $0x30] sm:$0xf]
      %v5453 = vld [vmem:[%s5439 + $0x34] sm:$0xf]
      %v5454 = vld [vmem:[%s5439 + $0x38] sm:$0xf]
      %v5455 = vld [vmem:[%s5439 + $0x3c] sm:$0xf]
      %v5472 = vunpack.c.l.b16 %v5440
      %v5473 = vunpack.c.l.b16 %v5441
      %v5474 = vunpack.c.l.b16 %v5442
      %v5475 = vunpack.c.l.b16 %v5443
      %v5476 = vunpack.c.l.b16 %v5444
      %v5477 = vunpack.c.l.b16 %v5445
      %v5478 = vunpack.c.l.b16 %v5446
      %v5479 = vunpack.c.l.b16 %v5447
      %v5480 = vunpack.c.l.b16 %v5448
      %v5481 = vunpack.c.l.b16 %v5449
      %v5482 = vunpack.c.l.b16 %v5450
      %v5483 = vunpack.c.l.b16 %v5451
      %v5484 = vunpack.c.l.b16 %v5452
      %v5485 = vunpack.c.l.b16 %v5453
      %v5486 = vunpack.c.l.b16 %v5454
      %v5487 = vunpack.c.l.b16 %v5455
      %v5488 = vpack.c.b16 %v5473, %v5472
      %v5489 = vpack.c.b16 %v5475, %v5474
      %v5490 = vpack.c.b16 %v5477, %v5476
      %v5491 = vpack.c.b16 %v5479, %v5478
      %v5492 = vpack.c.b16 %v5481, %v5480
      %v5493 = vpack.c.b16 %v5483, %v5482
      %v5494 = vpack.c.b16 %v5485, %v5484
      %v5495 = vpack.c.b16 %v5487, %v5486
      %5504 = vmatprep.subr.bf16.mxu0 0
      %5505 = vmatpush1.bf16.msra.mxu0 %v5488
      %5506 = vmatprep.subr.bf16.mxu0 0
      %5507 = vmatpush1.bf16.msra.mxu0 %v5489
      %5508 = vmatprep.subr.bf16.mxu0 0
      %5509 = vmatpush1.bf16.msra.mxu0 %v5490
      %5510 = vmatprep.subr.bf16.mxu0 0
      %5511 = vmatpush1.bf16.msra.mxu0 %v5491
      %5512 = vmatprep.subr.bf16.mxu0 0
      %5513 = vmatpush1.bf16.msra.mxu0 %v5492
      %5514 = vmatprep.subr.bf16.mxu0 0
      %5515 = vmatpush1.bf16.msra.mxu0 %v5493
      %5516 = vmatprep.subr.bf16.mxu0 0
      %5517 = vmatpush1.bf16.msra.mxu0 %v5494
      %5518 = vmatprep.subr.bf16.mxu0 0
      %5519 = vmatpush1.bf16.msra.mxu0 %v5495
      %5520 = vmatprep.subr.bf16.mxu0 0
      %5521 = vmatpush1.bf16.msra.mxu0 0
      %5522 = vmatprep.subr.bf16.mxu0 0
      %5523 = vmatpush1.bf16.msra.mxu0 0
      %5524 = vmatprep.subr.bf16.mxu0 0
      %5525 = vmatpush1.bf16.msra.mxu0 0
      %5526 = vmatprep.subr.bf16.mxu0 0
      %5527 = vmatpush1.bf16.msra.mxu0 0
      %5528 = vmatprep.subr.bf16.mxu0 0
      %5529 = vmatpush1.bf16.msra.mxu0 0
      %5530 = vmatprep.subr.bf16.mxu0 0
      %5531 = vmatpush1.bf16.msra.mxu0 0
      %5532 = vmatprep.subr.bf16.mxu0 0
      %5533 = vmatpush1.bf16.msra.mxu0 0
      %5534 = vmatprep.subr.bf16.mxu0 0
      %5535 = vmatpush1.bf16.msra.mxu0 0
      %5536 = vmatprep.mubr.bf16.mxu0 0
      %5537 = vmatmul.mubr.bf16.gmra.mrb[0].mxu0 %v5431
      %v5538 = vpop.f32.mrb[0].mxu0
      %v5539 = vadd.f32 0.0, %v5538
      %v5540 = vpop.f32.mrb[0].mxu0
      %v5541 = vpop.f32.mrb[0].mxu0
      %v5542 = vadd.f32 0.0, %v5541
      %v5543 = vpop.f32.mrb[0].mxu0
      %5544 = vmatprep.mubr.bf16.mxu0 0
      %5545 = vmatmul.mubr.bf16.gmra.mrb[0].mxu0 %v5432
      %v5546 = vpop.f32.mrb[0].mxu0
      %v5547 = vadd.f32 0.0, %v5546
      %v5548 = vpop.f32.mrb[0].mxu0
      %v5549 = vpop.f32.mrb[0].mxu0
      %v5550 = vadd.f32 0.0, %v5549
      %v5551 = vpop.f32.mrb[0].mxu0
      %5552 = vmatprep.mubr.bf16.mxu0 0
      %5553 = vmatmul.mubr.bf16.gmra.mrb[0].mxu0 %v5433
      %v5554 = vpop.f32.mrb[0].mxu0
      %v5555 = vadd.f32 0.0, %v5554
      %v5556 = vpop.f32.mrb[0].mxu0
      %v5557 = vpop.f32.mrb[0].mxu0
      %v5558 = vadd.f32 0.0, %v5557
      %v5559 = vpop.f32.mrb[0].mxu0
      %5560 = vmatprep.mubr.bf16.mxu0 0
      %5561 = vmatmul.mubr.bf16.gmra.mrb[0].mxu0 %v5434
      %v5562 = vpop.f32.mrb[0].mxu0
      %v5563 = vadd.f32 0.0, %v5562
      %v5564 = vpop.f32.mrb[0].mxu0
      %v5565 = vpop.f32.mrb[0].mxu0
      %v5566 = vadd.f32 0.0, %v5565
      %v5567 = vpop.f32.mrb[0].mxu0
      %5568 = vmatprep.mubr.bf16.mxu0 0
      %5569 = vmatmul.mubr.bf16.gmra.mrb[0].mxu0 %v5435
      %v5570 = vpop.f32.mrb[0].mxu0
      %v5571 = vadd.f32 0.0, %v5570
      %v5572 = vpop.f32.mrb[0].mxu0
      %v5573 = vpop.f32.mrb[0].mxu0
      %v5574 = vadd.f32 0.0, %v5573
      %v5575 = vpop.f32.mrb[0].mxu0
      %5576 = vmatprep.mubr.bf16.mxu0 0
      %5577 = vmatmul.mubr.bf16.gmra.mrb[0].mxu0 %v5436
      %v5578 = vpop.f32.mrb[0].mxu0
      %v5579 = vadd.f32 0.0, %v5578
      %v5580 = vpop.f32.mrb[0].mxu0
      %v5581 = vpop.f32.mrb[0].mxu0
      %v5582 = vadd.f32 0.0, %v5581
      %v5583 = vpop.f32.mrb[0].mxu0
      %5584 = vmatprep.mubr.bf16.mxu0 0
      %5585 = vmatmul.mubr.bf16.gmra.mrb[0].mxu0 %v5437
      %v5586 = vpop.f32.mrb[0].mxu0
      %v5587 = vadd.f32 0.0, %v5586
      %v5588 = vpop.f32.mrb[0].mxu0
      %v5589 = vpop.f32.mrb[0].mxu0
      %v5590 = vadd.f32 0.0, %v5589
      %v5591 = vpop.f32.mrb[0].mxu0
      %5592 = vmatprep.mubr.bf16.mxu0 0
      %5593 = vmatmul.mubr.bf16.gmra.mrb[0].mxu0 %v5438
      %v5594 = vpop.f32.mrb[0].mxu0
      %v5595 = vadd.f32 0.0, %v5594
      %v5596 = vpop.f32.mrb[0].mxu0
      %v5597 = vpop.f32.mrb[0].mxu0
      %v5598 = vadd.f32 0.0, %v5597
      %v5599 = vpop.f32.mrb[0].mxu0
      %5600 = vdwg.mxu0
      %v5601 = vadd.f32 %v5369, %v5539
      %v5602 = vadd.f32 %v5372, %v5542
      %v5603 = vadd.f32 %v5377, %v5547
      %v5604 = vadd.f32 %v5380, %v5550
      %v5605 = vadd.f32 %v5385, %v5555
      %v5606 = vadd.f32 %v5388, %v5558
      %v5607 = vadd.f32 %v5393, %v5563
      %v5608 = vadd.f32 %v5396, %v5566
      %v5609 = vadd.f32 %v5401, %v5571
      %v5610 = vadd.f32 %v5404, %v5574
      %v5611 = vadd.f32 %v5409, %v5579
      %v5612 = vadd.f32 %v5412, %v5582
      %v5613 = vadd.f32 %v5417, %v5587
      %v5614 = vadd.f32 %v5420, %v5590
      %v5615 = vadd.f32 %v5425, %v5595
      %v5616 = vadd.f32 %v5428, %v5598
      %v5617 = vld [vmem:[#allocation3 + $0x8] sm:$0xff]
      %v5618 = vld [vmem:[#allocation3 + $0x10] sm:$0xff]
      %v5619 = vld [vmem:[#allocation3 + $0x18] sm:$0xff]
      %v5620 = vld [vmem:[#allocation3 + $0x20] sm:$0xff]
      %v5621 = vld [vmem:[#allocation3 + $0x28] sm:$0xff]
      %v5622 = vld [vmem:[#allocation3 + $0x30] sm:$0xff]
      %v5623 = vld [vmem:[#allocation3 + $0x38] sm:$0xff]
      %v5624 = vld [vmem:[#allocation3 + $0x40] sm:$0xff]
      %s5625 = scalar_lea.vmem %s2, 192
      %v5626 = vld [vmem:[%s5625] sm:$0xf]
      %v5627 = vld [vmem:[%s5625 + $0x4] sm:$0xf]
      %v5628 = vld [vmem:[%s5625 + $0x8] sm:$0xf]
      %v5629 = vld [vmem:[%s5625 + $0xc] sm:$0xf]
      %v5630 = vld [vmem:[%s5625 + $0x10] sm:$0xf]
      %v5631 = vld [vmem:[%s5625 + $0x14] sm:$0xf]
      %v5632 = vld [vmem:[%s5625 + $0x18] sm:$0xf]
      %v5633 = vld [vmem:[%s5625 + $0x1c] sm:$0xf]
      %v5634 = vld [vmem:[%s5625 + $0x20] sm:$0xf]
      %v5635 = vld [vmem:[%s5625 + $0x24] sm:$0xf]
      %v5636 = vld [vmem:[%s5625 + $0x28] sm:$0xf]
      %v5637 = vld [vmem:[%s5625 + $0x2c] sm:$0xf]
      %v5638 = vld [vmem:[%s5625 + $0x30] sm:$0xf]
      %v5639 = vld [vmem:[%s5625 + $0x34] sm:$0xf]
      %v5640 = vld [vmem:[%s5625 + $0x38] sm:$0xf]
      %v5641 = vld [vmem:[%s5625 + $0x3c] sm:$0xf]
      %v5658 = vunpack.c.l.b16 %v5626
      %v5659 = vunpack.c.l.b16 %v5627
      %v5660 = vunpack.c.l.b16 %v5628
      %v5661 = vunpack.c.l.b16 %v5629
      %v5662 = vunpack.c.l.b16 %v5630
      %v5663 = vunpack.c.l.b16 %v5631
      %v5664 = vunpack.c.l.b16 %v5632
      %v5665 = vunpack.c.l.b16 %v5633
      %v5666 = vunpack.c.l.b16 %v5634
      %v5667 = vunpack.c.l.b16 %v5635
      %v5668 = vunpack.c.l.b16 %v5636
      %v5669 = vunpack.c.l.b16 %v5637
      %v5670 = vunpack.c.l.b16 %v5638
      %v5671 = vunpack.c.l.b16 %v5639
      %v5672 = vunpack.c.l.b16 %v5640
      %v5673 = vunpack.c.l.b16 %v5641
      %v5674 = vpack.c.b16 %v5659, %v5658
      %v5675 = vpack.c.b16 %v5661, %v5660
      %v5676 = vpack.c.b16 %v5663, %v5662
      %v5677 = vpack.c.b16 %v5665, %v5664
      %v5678 = vpack.c.b16 %v5667, %v5666
      %v5679 = vpack.c.b16 %v5669, %v5668
      %v5680 = vpack.c.b16 %v5671, %v5670
      %v5681 = vpack.c.b16 %v5673, %v5672
      %5690 = vmatprep.subr.bf16.mxu0 0
      %5691 = vmatpush1.bf16.msra.mxu0 %v5674
      %5692 = vmatprep.subr.bf16.mxu0 0
      %5693 = vmatpush1.bf16.msra.mxu0 %v5675
      %5694 = vmatprep.subr.bf16.mxu0 0
      %5695 = vmatpush1.bf16.msra.mxu0 %v5676
      %5696 = vmatprep.subr.bf16.mxu0 0
      %5697 = vmatpush1.bf16.msra.mxu0 %v5677
      %5698 = vmatprep.subr.bf16.mxu0 0
      %5699 = vmatpush1.bf16.msra.mxu0 %v5678
      %5700 = vmatprep.subr.bf16.mxu0 0
      %5701 = vmatpush1.bf16.msra.mxu0 %v5679
      %5702 = vmatprep.subr.bf16.mxu0 0
      %5703 = vmatpush1.bf16.msra.mxu0 %v5680
      %5704 = vmatprep.subr.bf16.mxu0 0
      %5705 = vmatpush1.bf16.msra.mxu0 %v5681
      %5706 = vmatprep.subr.bf16.mxu0 0
      %5707 = vmatpush1.bf16.msra.mxu0 0
      %5708 = vmatprep.subr.bf16.mxu0 0
      %5709 = vmatpush1.bf16.msra.mxu0 0
      %5710 = vmatprep.subr.bf16.mxu0 0
      %5711 = vmatpush1.bf16.msra.mxu0 0
      %5712 = vmatprep.subr.bf16.mxu0 0
      %5713 = vmatpush1.bf16.msra.mxu0 0
      %5714 = vmatprep.subr.bf16.mxu0 0
      %5715 = vmatpush1.bf16.msra.mxu0 0
      %5716 = vmatprep.subr.bf16.mxu0 0
      %5717 = vmatpush1.bf16.msra.mxu0 0
      %5718 = vmatprep.subr.bf16.mxu0 0
      %5719 = vmatpush1.bf16.msra.mxu0 0
      %5720 = vmatprep.subr.bf16.mxu0 0
      %5721 = vmatpush1.bf16.msra.mxu0 0
      %5722 = vmatprep.mubr.bf16.mxu0 0
      %5723 = vmatmul.mubr.bf16.gmra.mrb[0].mxu0 %v5617
      %v5724 = vpop.f32.mrb[0].mxu0
      %v5725 = vadd.f32 0.0, %v5724
      %v5726 = vpop.f32.mrb[0].mxu0
      %v5727 = vpop.f32.mrb[0].mxu0
      %v5728 = vadd.f32 0.0, %v5727
      %v5729 = vpop.f32.mrb[0].mxu0
      %5730 = vmatprep.mubr.bf16.mxu0 0
      %5731 = vmatmul.mubr.bf16.gmra.mrb[0].mxu0 %v5618
      %v5732 = vpop.f32.mrb[0].mxu0
      %v5733 = vadd.f32 0.0, %v5732
      %v5734 = vpop.f32.mrb[0].mxu0
      %v5735 = vpop.f32.mrb[0].mxu0
      %v5736 = vadd.f32 0.0, %v5735
      %v5737 = vpop.f32.mrb[0].mxu0
      %5738 = vmatprep.mubr.bf16.mxu0 0
      %5739 = vmatmul.mubr.bf16.gmra.mrb[0].mxu0 %v5619
      %v5740 = vpop.f32.mrb[0].mxu0
      %v5741 = vadd.f32 0.0, %v5740
      %v5742 = vpop.f32.mrb[0].mxu0
      %v5743 = vpop.f32.mrb[0].mxu0
      %v5744 = vadd.f32 0.0, %v5743
      %v5745 = vpop.f32.mrb[0].mxu0
      %5746 = vmatprep.mubr.bf16.mxu0 0
      %5747 = vmatmul.mubr.bf16.gmra.mrb[0].mxu0 %v5620
      %v5748 = vpop.f32.mrb[0].mxu0
      %v5749 = vadd.f32 0.0, %v5748
      %v5750 = vpop.f32.mrb[0].mxu0
      %v5751 = vpop.f32.mrb[0].mxu0
      %v5752 = vadd.f32 0.0, %v5751
      %v5753 = vpop.f32.mrb[0].mxu0
      %5754 = vmatprep.mubr.bf16.mxu0 0
      %5755 = vmatmul.mubr.bf16.gmra.mrb[0].mxu0 %v5621
      %v5756 = vpop.f32.mrb[0].mxu0
      %v5757 = vadd.f32 0.0, %v5756
      %v5758 = vpop.f32.mrb[0].mxu0
      %v5759 = vpop.f32.mrb[0].mxu0
      %v5760 = vadd.f32 0.0, %v5759
      %v5761 = vpop.f32.mrb[0].mxu0
      %5762 = vmatprep.mubr.bf16.mxu0 0
      %5763 = vmatmul.mubr.bf16.gmra.mrb[0].mxu0 %v5622
      %v5764 = vpop.f32.mrb[0].mxu0
      %v5765 = vadd.f32 0.0, %v5764
      %v5766 = vpop.f32.mrb[0].mxu0
      %v5767 = vpop.f32.mrb[0].mxu0
      %v5768 = vadd.f32 0.0, %v5767
      %v5769 = vpop.f32.mrb[0].mxu0
      %5770 = vmatprep.mubr.bf16.mxu0 0
      %5771 = vmatmul.mubr.bf16.gmra.mrb[0].mxu0 %v5623
      %v5772 = vpop.f32.mrb[0].mxu0
      %v5773 = vadd.f32 0.0, %v5772
      %v5774 = vpop.f32.mrb[0].mxu0
      %v5775 = vpop.f32.mrb[0].mxu0
      %v5776 = vadd.f32 0.0, %v5775
      %v5777 = vpop.f32.mrb[0].mxu0
      %5778 = vmatprep.mubr.bf16.mxu0 0
      %5779 = vmatmul.mubr.bf16.gmra.mrb[0].mxu0 %v5624
      %v5780 = vpop.f32.mrb[0].mxu0
      %v5781 = vadd.f32 0.0, %v5780
      %v5782 = vpop.f32.mrb[0].mxu0
      %v5783 = vpop.f32.mrb[0].mxu0
      %v5784 = vadd.f32 0.0, %v5783
      %v5785 = vpop.f32.mrb[0].mxu0
      %5786 = vdwg.mxu0
      %v5787 = vadd.f32 %v5601, %v5725
      %v5788 = vadd.f32 %v5602, %v5728
      %v5789 = vadd.f32 %v5603, %v5733
      %v5790 = vadd.f32 %v5604, %v5736
      %v5791 = vadd.f32 %v5605, %v5741
      %v5792 = vadd.f32 %v5606, %v5744
      %v5793 = vadd.f32 %v5607, %v5749
      %v5794 = vadd.f32 %v5608, %v5752
      %v5795 = vadd.f32 %v5609, %v5757
      %v5796 = vadd.f32 %v5610, %v5760
      %v5797 = vadd.f32 %v5611, %v5765
      %v5798 = vadd.f32 %v5612, %v5768
      %v5799 = vadd.f32 %v5613, %v5773
      %v5800 = vadd.f32 %v5614, %v5776
      %v5801 = vadd.f32 %v5615, %v5781
      %v5802 = vadd.f32 %v5616, %v5784
      %v5803 = vld [vmem:[%s786 + $0x8] sm:$0xff]
      %v5804 = vld [vmem:[%s786 + $0x10] sm:$0xff]
      %v5805 = vld [vmem:[%s786 + $0x18] sm:$0xff]
      %v5806 = vld [vmem:[%s786 + $0x20] sm:$0xff]
      %v5807 = vld [vmem:[%s786 + $0x28] sm:$0xff]
      %v5808 = vld [vmem:[%s786 + $0x30] sm:$0xff]
      %v5809 = vld [vmem:[%s786 + $0x38] sm:$0xff]
      %v5810 = vld [vmem:[%s786 + $0x40] sm:$0xff]
      %s5811 = scalar_lea.vmem %s2, 256
      %v5812 = vld [vmem:[%s5811] sm:$0xf]
      %v5813 = vld [vmem:[%s5811 + $0x4] sm:$0xf]
      %v5814 = vld [vmem:[%s5811 + $0x8] sm:$0xf]
      %v5815 = vld [vmem:[%s5811 + $0xc] sm:$0xf]
      %v5816 = vld [vmem:[%s5811 + $0x10] sm:$0xf]
      %v5817 = vld [vmem:[%s5811 + $0x14] sm:$0xf]
      %v5818 = vld [vmem:[%s5811 + $0x18] sm:$0xf]
      %v5819 = vld [vmem:[%s5811 + $0x1c] sm:$0xf]
      %v5820 = vld [vmem:[%s5811 + $0x20] sm:$0xf]
      %v5821 = vld [vmem:[%s5811 + $0x24] sm:$0xf]
      %v5822 = vld [vmem:[%s5811 + $0x28] sm:$0xf]
      %v5823 = vld [vmem:[%s5811 + $0x2c] sm:$0xf]
      %v5824 = vld [vmem:[%s5811 + $0x30] sm:$0xf]
      %v5825 = vld [vmem:[%s5811 + $0x34] sm:$0xf]
      %v5826 = vld [vmem:[%s5811 + $0x38] sm:$0xf]
      %v5827 = vld [vmem:[%s5811 + $0x3c] sm:$0xf]
      %v5844 = vunpack.c.l.b16 %v5812
      %v5845 = vunpack.c.l.b16 %v5813
      %v5846 = vunpack.c.l.b16 %v5814
      %v5847 = vunpack.c.l.b16 %v5815
      %v5848 = vunpack.c.l.b16 %v5816
      %v5849 = vunpack.c.l.b16 %v5817
      %v5850 = vunpack.c.l.b16 %v5818
      %v5851 = vunpack.c.l.b16 %v5819
      %v5852 = vunpack.c.l.b16 %v5820
      %v5853 = vunpack.c.l.b16 %v5821
      %v5854 = vunpack.c.l.b16 %v5822
      %v5855 = vunpack.c.l.b16 %v5823
      %v5856 = vunpack.c.l.b16 %v5824
      %v5857 = vunpack.c.l.b16 %v5825
      %v5858 = vunpack.c.l.b16 %v5826
      %v5859 = vunpack.c.l.b16 %v5827
      %v5860 = vpack.c.b16 %v5845, %v5844
      %v5861 = vpack.c.b16 %v5847, %v5846
      %v5862 = vpack.c.b16 %v5849, %v5848
      %v5863 = vpack.c.b16 %v5851, %v5850
      %v5864 = vpack.c.b16 %v5853, %v5852
      %v5865 = vpack.c.b16 %v5855, %v5854
      %v5866 = vpack.c.b16 %v5857, %v5856
      %v5867 = vpack.c.b16 %v5859, %v5858
      %5876 = vmatprep.subr.bf16.mxu0 0
      %5877 = vmatpush1.bf16.msra.mxu0 %v5860
      %5878 = vmatprep.subr.bf16.mxu0 0
      %5879 = vmatpush1.bf16.msra.mxu0 %v5861
      %5880 = vmatprep.subr.bf16.mxu0 0
      %5881 = vmatpush1.bf16.msra.mxu0 %v5862
      %5882 = vmatprep.subr.bf16.mxu0 0
      %5883 = vmatpush1.bf16.msra.mxu0 %v5863
      %5884 = vmatprep.subr.bf16.mxu0 0
      %5885 = vmatpush1.bf16.msra.mxu0 %v5864
      %5886 = vmatprep.subr.bf16.mxu0 0
      %5887 = vmatpush1.bf16.msra.mxu0 %v5865
      %5888 = vmatprep.subr.bf16.mxu0 0
      %5889 = vmatpush1.bf16.msra.mxu0 %v5866
      %5890 = vmatprep.subr.bf16.mxu0 0
      %5891 = vmatpush1.bf16.msra.mxu0 %v5867
      %5892 = vmatprep.subr.bf16.mxu0 0
      %5893 = vmatpush1.bf16.msra.mxu0 0
      %5894 = vmatprep.subr.bf16.mxu0 0
      %5895 = vmatpush1.bf16.msra.mxu0 0
      %5896 = vmatprep.subr.bf16.mxu0 0
      %5897 = vmatpush1.bf16.msra.mxu0 0
      %5898 = vmatprep.subr.bf16.mxu0 0
      %5899 = vmatpush1.bf16.msra.mxu0 0
      %5900 = vmatprep.subr.bf16.mxu0 0
      %5901 = vmatpush1.bf16.msra.mxu0 0
      %5902 = vmatprep.subr.bf16.mxu0 0
      %5903 = vmatpush1.bf16.msra.mxu0 0
      %5904 = vmatprep.subr.bf16.mxu0 0
      %5905 = vmatpush1.bf16.msra.mxu0 0
      %5906 = vmatprep.subr.bf16.mxu0 0
      %5907 = vmatpush1.bf16.msra.mxu0 0
      %5908 = vmatprep.mubr.bf16.mxu0 0
      %5909 = vmatmul.mubr.bf16.gmra.mrb[0].mxu0 %v5803
      %v5910 = vpop.f32.mrb[0].mxu0
      %v5911 = vadd.f32 0.0, %v5910
      %v5912 = vpop.f32.mrb[0].mxu0
      %v5913 = vpop.f32.mrb[0].mxu0
      %v5914 = vadd.f32 0.0, %v5913
      %v5915 = vpop.f32.mrb[0].mxu0
      %5916 = vmatprep.mubr.bf16.mxu0 0
      %5917 = vmatmul.mubr.bf16.gmra.mrb[0].mxu0 %v5804
      %v5918 = vpop.f32.mrb[0].mxu0
      %v5919 = vadd.f32 0.0, %v5918
      %v5920 = vpop.f32.mrb[0].mxu0
      %v5921 = vpop.f32.mrb[0].mxu0
      %v5922 = vadd.f32 0.0, %v5921
      %v5923 = vpop.f32.mrb[0].mxu0
      %5924 = vmatprep.mubr.bf16.mxu0 0
      %5925 = vmatmul.mubr.bf16.gmra.mrb[0].mxu0 %v5805
      %v5926 = vpop.f32.mrb[0].mxu0
      %v5927 = vadd.f32 0.0, %v5926
      %v5928 = vpop.f32.mrb[0].mxu0
      %v5929 = vpop.f32.mrb[0].mxu0
      %v5930 = vadd.f32 0.0, %v5929
      %v5931 = vpop.f32.mrb[0].mxu0
      %5932 = vmatprep.mubr.bf16.mxu0 0
      %5933 = vmatmul.mubr.bf16.gmra.mrb[0].mxu0 %v5806
      %v5934 = vpop.f32.mrb[0].mxu0
      %v5935 = vadd.f32 0.0, %v5934
      %v5936 = vpop.f32.mrb[0].mxu0
      %v5937 = vpop.f32.mrb[0].mxu0
      %v5938 = vadd.f32 0.0, %v5937
      %v5939 = vpop.f32.mrb[0].mxu0
      %5940 = vmatprep.mubr.bf16.mxu0 0
      %5941 = vmatmul.mubr.bf16.gmra.mrb[0].mxu0 %v5807
      %v5942 = vpop.f32.mrb[0].mxu0
      %v5943 = vadd.f32 0.0, %v5942
      %v5944 = vpop.f32.mrb[0].mxu0
      %v5945 = vpop.f32.mrb[0].mxu0
      %v5946 = vadd.f32 0.0, %v5945
      %v5947 = vpop.f32.mrb[0].mxu0
      %5948 = vmatprep.mubr.bf16.mxu0 0
      %5949 = vmatmul.mubr.bf16.gmra.mrb[0].mxu0 %v5808
      %v5950 = vpop.f32.mrb[0].mxu0
      %v5951 = vadd.f32 0.0, %v5950
      %v5952 = vpop.f32.mrb[0].mxu0
      %v5953 = vpop.f32.mrb[0].mxu0
      %v5954 = vadd.f32 0.0, %v5953
      %v5955 = vpop.f32.mrb[0].mxu0
      %5956 = vmatprep.mubr.bf16.mxu0 0
      %5957 = vmatmul.mubr.bf16.gmra.mrb[0].mxu0 %v5809
      %v5958 = vpop.f32.mrb[0].mxu0
      %v5959 = vadd.f32 0.0, %v5958
      %v5960 = vpop.f32.mrb[0].mxu0
      %v5961 = vpop.f32.mrb[0].mxu0
      %v5962 = vadd.f32 0.0, %v5961
      %v5963 = vpop.f32.mrb[0].mxu0
      %5964 = vmatprep.mubr.bf16.mxu0 0
      %5965 = vmatmul.mubr.bf16.gmra.mrb[0].mxu0 %v5810
      %v5966 = vpop.f32.mrb[0].mxu0
      %v5967 = vadd.f32 0.0, %v5966
      %v5968 = vpop.f32.mrb[0].mxu0
      %v5969 = vpop.f32.mrb[0].mxu0
      %v5970 = vadd.f32 0.0, %v5969
      %v5971 = vpop.f32.mrb[0].mxu0
      %5972 = vdwg.mxu0
      %v5973 = vadd.f32 %v5787, %v5911
      %v5974 = vadd.f32 %v5788, %v5914
      %v5975 = vadd.f32 %v5789, %v5919
      %v5976 = vadd.f32 %v5790, %v5922
      %v5977 = vadd.f32 %v5791, %v5927
      %v5978 = vadd.f32 %v5792, %v5930
      %v5979 = vadd.f32 %v5793, %v5935
      %v5980 = vadd.f32 %v5794, %v5938
      %v5981 = vadd.f32 %v5795, %v5943
      %v5982 = vadd.f32 %v5796, %v5946
      %v5983 = vadd.f32 %v5797, %v5951
      %v5984 = vadd.f32 %v5798, %v5954
      %v5985 = vadd.f32 %v5799, %v5959
      %v5986 = vadd.f32 %v5800, %v5962
      %v5987 = vadd.f32 %v5801, %v5967
      %v5988 = vadd.f32 %v5802, %v5970
      %v5989 = vld [vmem:[%s1076 + $0x8] sm:$0xff]
      %v5990 = vld [vmem:[%s1076 + $0x10] sm:$0xff]
      %v5991 = vld [vmem:[%s1076 + $0x18] sm:$0xff]
      %v5992 = vld [vmem:[%s1076 + $0x20] sm:$0xff]
      %v5993 = vld [vmem:[%s1076 + $0x28] sm:$0xff]
      %v5994 = vld [vmem:[%s1076 + $0x30] sm:$0xff]
      %v5995 = vld [vmem:[%s1076 + $0x38] sm:$0xff]
      %v5996 = vld [vmem:[%s1076 + $0x40] sm:$0xff]
      %s5997 = scalar_lea.vmem %s2, 320
      %v5998 = vld [vmem:[%s5997] sm:$0xf]
      %v5999 = vld [vmem:[%s5997 + $0x4] sm:$0xf]
      %v6000 = vld [vmem:[%s5997 + $0x8] sm:$0xf]
      %v6001 = vld [vmem:[%s5997 + $0xc] sm:$0xf]
      %v6002 = vld [vmem:[%s5997 + $0x10] sm:$0xf]
      %v6003 = vld [vmem:[%s5997 + $0x14] sm:$0xf]
      %v6004 = vld [vmem:[%s5997 + $0x18] sm:$0xf]
      %v6005 = vld [vmem:[%s5997 + $0x1c] sm:$0xf]
      %v6006 = vld [vmem:[%s5997 + $0x20] sm:$0xf]
      %v6007 = vld [vmem:[%s5997 + $0x24] sm:$0xf]
      %v6008 = vld [vmem:[%s5997 + $0x28] sm:$0xf]
      %v6009 = vld [vmem:[%s5997 + $0x2c] sm:$0xf]
      %v6010 = vld [vmem:[%s5997 + $0x30] sm:$0xf]
      %v6011 = vld [vmem:[%s5997 + $0x34] sm:$0xf]
      %v6012 = vld [vmem:[%s5997 + $0x38] sm:$0xf]
      %v6013 = vld [vmem:[%s5997 + $0x3c] sm:$0xf]
      %v6030 = vunpack.c.l.b16 %v5998
      %v6031 = vunpack.c.l.b16 %v5999
      %v6032 = vunpack.c.l.b16 %v6000
      %v6033 = vunpack.c.l.b16 %v6001
      %v6034 = vunpack.c.l.b16 %v6002
      %v6035 = vunpack.c.l.b16 %v6003
      %v6036 = vunpack.c.l.b16 %v6004
      %v6037 = vunpack.c.l.b16 %v6005
      %v6038 = vunpack.c.l.b16 %v6006
      %v6039 = vunpack.c.l.b16 %v6007
      %v6040 = vunpack.c.l.b16 %v6008
      %v6041 = vunpack.c.l.b16 %v6009
      %v6042 = vunpack.c.l.b16 %v6010
      %v6043 = vunpack.c.l.b16 %v6011
      %v6044 = vunpack.c.l.b16 %v6012
      %v6045 = vunpack.c.l.b16 %v6013
      %v6046 = vpack.c.b16 %v6031, %v6030
      %v6047 = vpack.c.b16 %v6033, %v6032
      %v6048 = vpack.c.b16 %v6035, %v6034
      %v6049 = vpack.c.b16 %v6037, %v6036
      %v6050 = vpack.c.b16 %v6039, %v6038
      %v6051 = vpack.c.b16 %v6041, %v6040
      %v6052 = vpack.c.b16 %v6043, %v6042
      %v6053 = vpack.c.b16 %v6045, %v6044
      %6062 = vmatprep.subr.bf16.mxu0 0
      %6063 = vmatpush1.bf16.msra.mxu0 %v6046
      %6064 = vmatprep.subr.bf16.mxu0 0
      %6065 = vmatpush1.bf16.msra.mxu0 %v6047
      %6066 = vmatprep.subr.bf16.mxu0 0
      %6067 = vmatpush1.bf16.msra.mxu0 %v6048
      %6068 = vmatprep.subr.bf16.mxu0 0
      %6069 = vmatpush1.bf16.msra.mxu0 %v6049
      %6070 = vmatprep.subr.bf16.mxu0 0
      %6071 = vmatpush1.bf16.msra.mxu0 %v6050
      %6072 = vmatprep.subr.bf16.mxu0 0
      %6073 = vmatpush1.bf16.msra.mxu0 %v6051
      %6074 = vmatprep.subr.bf16.mxu0 0
      %6075 = vmatpush1.bf16.msra.mxu0 %v6052
      %6076 = vmatprep.subr.bf16.mxu0 0
      %6077 = vmatpush1.bf16.msra.mxu0 %v6053
      %6078 = vmatprep.subr.bf16.mxu0 0
      %6079 = vmatpush1.bf16.msra.mxu0 0
      %6080 = vmatprep.subr.bf16.mxu0 0
      %6081 = vmatpush1.bf16.msra.mxu0 0
      %6082 = vmatprep.subr.bf16.mxu0 0
      %6083 = vmatpush1.bf16.msra.mxu0 0
      %6084 = vmatprep.subr.bf16.mxu0 0
      %6085 = vmatpush1.bf16.msra.mxu0 0
      %6086 = vmatprep.subr.bf16.mxu0 0
      %6087 = vmatpush1.bf16.msra.mxu0 0
      %6088 = vmatprep.subr.bf16.mxu0 0
      %6089 = vmatpush1.bf16.msra.mxu0 0
      %6090 = vmatprep.subr.bf16.mxu0 0
      %6091 = vmatpush1.bf16.msra.mxu0 0
      %6092 = vmatprep.subr.bf16.mxu0 0
      %6093 = vmatpush1.bf16.msra.mxu0 0
      %6094 = vmatprep.mubr.bf16.mxu0 0
      %6095 = vmatmul.mubr.bf16.gmra.mrb[0].mxu0 %v5989
      %v6096 = vpop.f32.mrb[0].mxu0
      %v6097 = vadd.f32 0.0, %v6096
      %v6098 = vpop.f32.mrb[0].mxu0
      %v6099 = vpop.f32.mrb[0].mxu0
      %v6100 = vadd.f32 0.0, %v6099
      %v6101 = vpop.f32.mrb[0].mxu0
      %6102 = vmatprep.mubr.bf16.mxu0 0
      %6103 = vmatmul.mubr.bf16.gmra.mrb[0].mxu0 %v5990
      %v6104 = vpop.f32.mrb[0].mxu0
      %v6105 = vadd.f32 0.0, %v6104
      %v6106 = vpop.f32.mrb[0].mxu0
      %v6107 = vpop.f32.mrb[0].mxu0
      %v6108 = vadd.f32 0.0, %v6107
      %v6109 = vpop.f32.mrb[0].mxu0
      %6110 = vmatprep.mubr.bf16.mxu0 0
      %6111 = vmatmul.mubr.bf16.gmra.mrb[0].mxu0 %v5991
      %v6112 = vpop.f32.mrb[0].mxu0
      %v6113 = vadd.f32 0.0, %v6112
      %v6114 = vpop.f32.mrb[0].mxu0
      %v6115 = vpop.f32.mrb[0].mxu0
      %v6116 = vadd.f32 0.0, %v6115
      %v6117 = vpop.f32.mrb[0].mxu0
      %6118 = vmatprep.mubr.bf16.mxu0 0
      %6119 = vmatmul.mubr.bf16.gmra.mrb[0].mxu0 %v5992
      %v6120 = vpop.f32.mrb[0].mxu0
      %v6121 = vadd.f32 0.0, %v6120
      %v6122 = vpop.f32.mrb[0].mxu0
      %v6123 = vpop.f32.mrb[0].mxu0
      %v6124 = vadd.f32 0.0, %v6123
      %v6125 = vpop.f32.mrb[0].mxu0
      %6126 = vmatprep.mubr.bf16.mxu0 0
      %6127 = vmatmul.mubr.bf16.gmra.mrb[0].mxu0 %v5993
      %v6128 = vpop.f32.mrb[0].mxu0
      %v6129 = vadd.f32 0.0, %v6128
      %v6130 = vpop.f32.mrb[0].mxu0
      %v6131 = vpop.f32.mrb[0].mxu0
      %v6132 = vadd.f32 0.0, %v6131
      %v6133 = vpop.f32.mrb[0].mxu0
      %6134 = vmatprep.mubr.bf16.mxu0 0
      %6135 = vmatmul.mubr.bf16.gmra.mrb[0].mxu0 %v5994
      %v6136 = vpop.f32.mrb[0].mxu0
      %v6137 = vadd.f32 0.0, %v6136
      %v6138 = vpop.f32.mrb[0].mxu0
      %v6139 = vpop.f32.mrb[0].mxu0
      %v6140 = vadd.f32 0.0, %v6139
      %v6141 = vpop.f32.mrb[0].mxu0
      %6142 = vmatprep.mubr.bf16.mxu0 0
      %6143 = vmatmul.mubr.bf16.gmra.mrb[0].mxu0 %v5995
      %v6144 = vpop.f32.mrb[0].mxu0
      %v6145 = vadd.f32 0.0, %v6144
      %v6146 = vpop.f32.mrb[0].mxu0
      %v6147 = vpop.f32.mrb[0].mxu0
      %v6148 = vadd.f32 0.0, %v6147
      %v6149 = vpop.f32.mrb[0].mxu0
      %6150 = vmatprep.mubr.bf16.mxu0 0
      %6151 = vmatmul.mubr.bf16.gmra.mrb[0].mxu0 %v5996
      %v6152 = vpop.f32.mrb[0].mxu0
      %v6153 = vadd.f32 0.0, %v6152
      %v6154 = vpop.f32.mrb[0].mxu0
      %v6155 = vpop.f32.mrb[0].mxu0
      %v6156 = vadd.f32 0.0, %v6155
      %v6157 = vpop.f32.mrb[0].mxu0
      %6158 = vdwg.mxu0
      %v6159 = vadd.f32 %v5973, %v6097
      %v6160 = vadd.f32 %v5974, %v6100
      %v6161 = vadd.f32 %v5975, %v6105
      %v6162 = vadd.f32 %v5976, %v6108
      %v6163 = vadd.f32 %v5977, %v6113
      %v6164 = vadd.f32 %v5978, %v6116
      %v6165 = vadd.f32 %v5979, %v6121
      %v6166 = vadd.f32 %v5980, %v6124
      %v6167 = vadd.f32 %v5981, %v6129
      %v6168 = vadd.f32 %v5982, %v6132
      %v6169 = vadd.f32 %v5983, %v6137
      %v6170 = vadd.f32 %v5984, %v6140
      %v6171 = vadd.f32 %v5985, %v6145
      %v6172 = vadd.f32 %v5986, %v6148
      %v6173 = vadd.f32 %v5987, %v6153
      %v6174 = vadd.f32 %v5988, %v6156
      %v6175 = vld [vmem:[#allocation3 + $0x10] sm:$0xff]
      %v6176 = vld [vmem:[#allocation3 + $0x18] sm:$0xff]
      %v6177 = vld [vmem:[#allocation3 + $0x20] sm:$0xff]
      %v6178 = vld [vmem:[#allocation3 + $0x28] sm:$0xff]
      %v6179 = vld [vmem:[#allocation3 + $0x30] sm:$0xff]
      %v6180 = vld [vmem:[#allocation3 + $0x38] sm:$0xff]
      %v6181 = vld [vmem:[#allocation3 + $0x40] sm:$0xff]
      %v6182 = vld [vmem:[#allocation3 + $0x48] sm:$0xff]
      %s6183 = scalar_lea.vmem %s2, 384
      %v6184 = vld [vmem:[%s6183] sm:$0xf]
      %v6185 = vld [vmem:[%s6183 + $0x4] sm:$0xf]
      %v6186 = vld [vmem:[%s6183 + $0x8] sm:$0xf]
      %v6187 = vld [vmem:[%s6183 + $0xc] sm:$0xf]
      %v6188 = vld [vmem:[%s6183 + $0x10] sm:$0xf]
      %v6189 = vld [vmem:[%s6183 + $0x14] sm:$0xf]
      %v6190 = vld [vmem:[%s6183 + $0x18] sm:$0xf]
      %v6191 = vld [vmem:[%s6183 + $0x1c] sm:$0xf]
      %v6192 = vld [vmem:[%s6183 + $0x20] sm:$0xf]
      %v6193 = vld [vmem:[%s6183 + $0x24] sm:$0xf]
      %v6194 = vld [vmem:[%s6183 + $0x28] sm:$0xf]
      %v6195 = vld [vmem:[%s6183 + $0x2c] sm:$0xf]
      %v6196 = vld [vmem:[%s6183 + $0x30] sm:$0xf]
      %v6197 = vld [vmem:[%s6183 + $0x34] sm:$0xf]
      %v6198 = vld [vmem:[%s6183 + $0x38] sm:$0xf]
      %v6199 = vld [vmem:[%s6183 + $0x3c] sm:$0xf]
      %v6216 = vunpack.c.l.b16 %v6184
      %v6217 = vunpack.c.l.b16 %v6185
      %v6218 = vunpack.c.l.b16 %v6186
      %v6219 = vunpack.c.l.b16 %v6187
      %v6220 = vunpack.c.l.b16 %v6188
      %v6221 = vunpack.c.l.b16 %v6189
      %v6222 = vunpack.c.l.b16 %v6190
      %v6223 = vunpack.c.l.b16 %v6191
      %v6224 = vunpack.c.l.b16 %v6192
      %v6225 = vunpack.c.l.b16 %v6193
      %v6226 = vunpack.c.l.b16 %v6194
      %v6227 = vunpack.c.l.b16 %v6195
      %v6228 = vunpack.c.l.b16 %v6196
      %v6229 = vunpack.c.l.b16 %v6197
      %v6230 = vunpack.c.l.b16 %v6198
      %v6231 = vunpack.c.l.b16 %v6199
      %v6232 = vpack.c.b16 %v6217, %v6216
      %v6233 = vpack.c.b16 %v6219, %v6218
      %v6234 = vpack.c.b16 %v6221, %v6220
      %v6235 = vpack.c.b16 %v6223, %v6222
      %v6236 = vpack.c.b16 %v6225, %v6224
      %v6237 = vpack.c.b16 %v6227, %v6226
      %v6238 = vpack.c.b16 %v6229, %v6228
      %v6239 = vpack.c.b16 %v6231, %v6230
      %6248 = vmatprep.subr.bf16.mxu0 0
      %6249 = vmatpush1.bf16.msra.mxu0 %v6232
      %6250 = vmatprep.subr.bf16.mxu0 0
      %6251 = vmatpush1.bf16.msra.mxu0 %v6233
      %6252 = vmatprep.subr.bf16.mxu0 0
      %6253 = vmatpush1.bf16.msra.mxu0 %v6234
      %6254 = vmatprep.subr.bf16.mxu0 0
      %6255 = vmatpush1.bf16.msra.mxu0 %v6235
      %6256 = vmatprep.subr.bf16.mxu0 0
      %6257 = vmatpush1.bf16.msra.mxu0 %v6236
      %6258 = vmatprep.subr.bf16.mxu0 0
      %6259 = vmatpush1.bf16.msra.mxu0 %v6237
      %6260 = vmatprep.subr.bf16.mxu0 0
      %6261 = vmatpush1.bf16.msra.mxu0 %v6238
      %6262 = vmatprep.subr.bf16.mxu0 0
      %6263 = vmatpush1.bf16.msra.mxu0 %v6239
      %6264 = vmatprep.subr.bf16.mxu0 0
      %6265 = vmatpush1.bf16.msra.mxu0 0
      %6266 = vmatprep.subr.bf16.mxu0 0
      %6267 = vmatpush1.bf16.msra.mxu0 0
      %6268 = vmatprep.subr.bf16.mxu0 0
      %6269 = vmatpush1.bf16.msra.mxu0 0
      %6270 = vmatprep.subr.bf16.mxu0 0
      %6271 = vmatpush1.bf16.msra.mxu0 0
      %6272 = vmatprep.subr.bf16.mxu0 0
      %6273 = vmatpush1.bf16.msra.mxu0 0
      %6274 = vmatprep.subr.bf16.mxu0 0
      %6275 = vmatpush1.bf16.msra.mxu0 0
      %6276 = vmatprep.subr.bf16.mxu0 0
      %6277 = vmatpush1.bf16.msra.mxu0 0
      %6278 = vmatprep.subr.bf16.mxu0 0
      %6279 = vmatpush1.bf16.msra.mxu0 0
      %6280 = vmatprep.mubr.bf16.mxu0 0
      %6281 = vmatmul.mubr.bf16.gmra.mrb[0].mxu0 %v6175
      %v6282 = vpop.f32.mrb[0].mxu0
      %v6283 = vadd.f32 0.0, %v6282
      %v6284 = vpop.f32.mrb[0].mxu0
      %v6285 = vpop.f32.mrb[0].mxu0
      %v6286 = vadd.f32 0.0, %v6285
      %v6287 = vpop.f32.mrb[0].mxu0
      %6288 = vmatprep.mubr.bf16.mxu0 0
      %6289 = vmatmul.mubr.bf16.gmra.mrb[0].mxu0 %v6176
      %v6290 = vpop.f32.mrb[0].mxu0
      %v6291 = vadd.f32 0.0, %v6290
      %v6292 = vpop.f32.mrb[0].mxu0
      %v6293 = vpop.f32.mrb[0].mxu0
      %v6294 = vadd.f32 0.0, %v6293
      %v6295 = vpop.f32.mrb[0].mxu0
      %6296 = vmatprep.mubr.bf16.mxu0 0
      %6297 = vmatmul.mubr.bf16.gmra.mrb[0].mxu0 %v6177
      %v6298 = vpop.f32.mrb[0].mxu0
      %v6299 = vadd.f32 0.0, %v6298
      %v6300 = vpop.f32.mrb[0].mxu0
      %v6301 = vpop.f32.mrb[0].mxu0
      %v6302 = vadd.f32 0.0, %v6301
      %v6303 = vpop.f32.mrb[0].mxu0
      %6304 = vmatprep.mubr.bf16.mxu0 0
      %6305 = vmatmul.mubr.bf16.gmra.mrb[0].mxu0 %v6178
      %v6306 = vpop.f32.mrb[0].mxu0
      %v6307 = vadd.f32 0.0, %v6306
      %v6308 = vpop.f32.mrb[0].mxu0
      %v6309 = vpop.f32.mrb[0].mxu0
      %v6310 = vadd.f32 0.0, %v6309
      %v6311 = vpop.f32.mrb[0].mxu0
      %6312 = vmatprep.mubr.bf16.mxu0 0
      %6313 = vmatmul.mubr.bf16.gmra.mrb[0].mxu0 %v6179
      %v6314 = vpop.f32.mrb[0].mxu0
      %v6315 = vadd.f32 0.0, %v6314
      %v6316 = vpop.f32.mrb[0].mxu0
      %v6317 = vpop.f32.mrb[0].mxu0
      %v6318 = vadd.f32 0.0, %v6317
      %v6319 = vpop.f32.mrb[0].mxu0
      %6320 = vmatprep.mubr.bf16.mxu0 0
      %6321 = vmatmul.mubr.bf16.gmra.mrb[0].mxu0 %v6180
      %v6322 = vpop.f32.mrb[0].mxu0
      %v6323 = vadd.f32 0.0, %v6322
      %v6324 = vpop.f32.mrb[0].mxu0
      %v6325 = vpop.f32.mrb[0].mxu0
      %v6326 = vadd.f32 0.0, %v6325
      %v6327 = vpop.f32.mrb[0].mxu0
      %6328 = vmatprep.mubr.bf16.mxu0 0
      %6329 = vmatmul.mubr.bf16.gmra.mrb[0].mxu0 %v6181
      %v6330 = vpop.f32.mrb[0].mxu0
      %v6331 = vadd.f32 0.0, %v6330
      %v6332 = vpop.f32.mrb[0].mxu0
      %v6333 = vpop.f32.mrb[0].mxu0
      %v6334 = vadd.f32 0.0, %v6333
      %v6335 = vpop.f32.mrb[0].mxu0
      %6336 = vmatprep.mubr.bf16.mxu0 0
      %6337 = vmatmul.mubr.bf16.gmra.mrb[0].mxu0 %v6182
      %v6338 = vpop.f32.mrb[0].mxu0
      %v6339 = vadd.f32 0.0, %v6338
      %v6340 = vpop.f32.mrb[0].mxu0
      %v6341 = vpop.f32.mrb[0].mxu0
      %v6342 = vadd.f32 0.0, %v6341
      %v6343 = vpop.f32.mrb[0].mxu0
      %6344 = vdwg.mxu0
      %v6345 = vadd.f32 %v6159, %v6283
      %v6346 = vadd.f32 %v6160, %v6286
      %v6347 = vadd.f32 %v6161, %v6291
      %v6348 = vadd.f32 %v6162, %v6294
      %v6349 = vadd.f32 %v6163, %v6299
      %v6350 = vadd.f32 %v6164, %v6302
      %v6351 = vadd.f32 %v6165, %v6307
      %v6352 = vadd.f32 %v6166, %v6310
      %v6353 = vadd.f32 %v6167, %v6315
      %v6354 = vadd.f32 %v6168, %v6318
      %v6355 = vadd.f32 %v6169, %v6323
      %v6356 = vadd.f32 %v6170, %v6326
      %v6357 = vadd.f32 %v6171, %v6331
      %v6358 = vadd.f32 %v6172, %v6334
      %v6359 = vadd.f32 %v6173, %v6339
      %v6360 = vadd.f32 %v6174, %v6342
      %v6361 = vld [vmem:[%s786 + $0x10] sm:$0xff]
      %v6362 = vld [vmem:[%s786 + $0x18] sm:$0xff]
      %v6363 = vld [vmem:[%s786 + $0x20] sm:$0xff]
      %v6364 = vld [vmem:[%s786 + $0x28] sm:$0xff]
      %v6365 = vld [vmem:[%s786 + $0x30] sm:$0xff]
      %v6366 = vld [vmem:[%s786 + $0x38] sm:$0xff]
      %v6367 = vld [vmem:[%s786 + $0x40] sm:$0xff]
      %v6368 = vld [vmem:[%s786 + $0x48] sm:$0xff]
      %s6369 = scalar_lea.vmem %s2, 448
      %v6370 = vld [vmem:[%s6369] sm:$0xf]
      %v6371 = vld [vmem:[%s6369 + $0x4] sm:$0xf]
      %v6372 = vld [vmem:[%s6369 + $0x8] sm:$0xf]
      %v6373 = vld [vmem:[%s6369 + $0xc] sm:$0xf]
      %v6374 = vld [vmem:[%s6369 + $0x10] sm:$0xf]
      %v6375 = vld [vmem:[%s6369 + $0x14] sm:$0xf]
      %v6376 = vld [vmem:[%s6369 + $0x18] sm:$0xf]
      %v6377 = vld [vmem:[%s6369 + $0x1c] sm:$0xf]
      %v6378 = vld [vmem:[%s6369 + $0x20] sm:$0xf]
      %v6379 = vld [vmem:[%s6369 + $0x24] sm:$0xf]
      %v6380 = vld [vmem:[%s6369 + $0x28] sm:$0xf]
      %v6381 = vld [vmem:[%s6369 + $0x2c] sm:$0xf]
      %v6382 = vld [vmem:[%s6369 + $0x30] sm:$0xf]
      %v6383 = vld [vmem:[%s6369 + $0x34] sm:$0xf]
      %v6384 = vld [vmem:[%s6369 + $0x38] sm:$0xf]
      %v6385 = vld [vmem:[%s6369 + $0x3c] sm:$0xf]
      %v6402 = vunpack.c.l.b16 %v6370
      %v6403 = vunpack.c.l.b16 %v6371
      %v6404 = vunpack.c.l.b16 %v6372
      %v6405 = vunpack.c.l.b16 %v6373
      %v6406 = vunpack.c.l.b16 %v6374
      %v6407 = vunpack.c.l.b16 %v6375
      %v6408 = vunpack.c.l.b16 %v6376
      %v6409 = vunpack.c.l.b16 %v6377
      %v6410 = vunpack.c.l.b16 %v6378
      %v6411 = vunpack.c.l.b16 %v6379
      %v6412 = vunpack.c.l.b16 %v6380
      %v6413 = vunpack.c.l.b16 %v6381
      %v6414 = vunpack.c.l.b16 %v6382
      %v6415 = vunpack.c.l.b16 %v6383
      %v6416 = vunpack.c.l.b16 %v6384
      %v6417 = vunpack.c.l.b16 %v6385
      %v6418 = vpack.c.b16 %v6403, %v6402
      %v6419 = vpack.c.b16 %v6405, %v6404
      %v6420 = vpack.c.b16 %v6407, %v6406
      %v6421 = vpack.c.b16 %v6409, %v6408
      %v6422 = vpack.c.b16 %v6411, %v6410
      %v6423 = vpack.c.b16 %v6413, %v6412
      %v6424 = vpack.c.b16 %v6415, %v6414
      %v6425 = vpack.c.b16 %v6417, %v6416
      %6434 = vmatprep.subr.bf16.mxu0 0
      %6435 = vmatpush1.bf16.msra.mxu0 %v6418
      %6436 = vmatprep.subr.bf16.mxu0 0
      %6437 = vmatpush1.bf16.msra.mxu0 %v6419
      %6438 = vmatprep.subr.bf16.mxu0 0
      %6439 = vmatpush1.bf16.msra.mxu0 %v6420
      %6440 = vmatprep.subr.bf16.mxu0 0
      %6441 = vmatpush1.bf16.msra.mxu0 %v6421
      %6442 = vmatprep.subr.bf16.mxu0 0
      %6443 = vmatpush1.bf16.msra.mxu0 %v6422
      %6444 = vmatprep.subr.bf16.mxu0 0
      %6445 = vmatpush1.bf16.msra.mxu0 %v6423
      %6446 = vmatprep.subr.bf16.mxu0 0
      %6447 = vmatpush1.bf16.msra.mxu0 %v6424
      %6448 = vmatprep.subr.bf16.mxu0 0
      %6449 = vmatpush1.bf16.msra.mxu0 %v6425
      %6450 = vmatprep.subr.bf16.mxu0 0
      %6451 = vmatpush1.bf16.msra.mxu0 0
      %6452 = vmatprep.subr.bf16.mxu0 0
      %6453 = vmatpush1.bf16.msra.mxu0 0
      %6454 = vmatprep.subr.bf16.mxu0 0
      %6455 = vmatpush1.bf16.msra.mxu0 0
      %6456 = vmatprep.subr.bf16.mxu0 0
      %6457 = vmatpush1.bf16.msra.mxu0 0
      %6458 = vmatprep.subr.bf16.mxu0 0
      %6459 = vmatpush1.bf16.msra.mxu0 0
      %6460 = vmatprep.subr.bf16.mxu0 0
      %6461 = vmatpush1.bf16.msra.mxu0 0
      %6462 = vmatprep.subr.bf16.mxu0 0
      %6463 = vmatpush1.bf16.msra.mxu0 0
      %6464 = vmatprep.subr.bf16.mxu0 0
      %6465 = vmatpush1.bf16.msra.mxu0 0
      %6466 = vmatprep.mubr.bf16.mxu0 0
      %6467 = vmatmul.mubr.bf16.gmra.mrb[0].mxu0 %v6361
      %v6468 = vpop.f32.mrb[0].mxu0
      %v6469 = vadd.f32 0.0, %v6468
      %v6470 = vpop.f32.mrb[0].mxu0
      %v6471 = vpop.f32.mrb[0].mxu0
      %v6472 = vadd.f32 0.0, %v6471
      %v6473 = vpop.f32.mrb[0].mxu0
      %6474 = vmatprep.mubr.bf16.mxu0 0
      %6475 = vmatmul.mubr.bf16.gmra.mrb[0].mxu0 %v6362
      %v6476 = vpop.f32.mrb[0].mxu0
      %v6477 = vadd.f32 0.0, %v6476
      %v6478 = vpop.f32.mrb[0].mxu0
      %v6479 = vpop.f32.mrb[0].mxu0
      %v6480 = vadd.f32 0.0, %v6479
      %v6481 = vpop.f32.mrb[0].mxu0
      %6482 = vmatprep.mubr.bf16.mxu0 0
      %6483 = vmatmul.mubr.bf16.gmra.mrb[0].mxu0 %v6363
      %v6484 = vpop.f32.mrb[0].mxu0
      %v6485 = vadd.f32 0.0, %v6484
      %v6486 = vpop.f32.mrb[0].mxu0
      %v6487 = vpop.f32.mrb[0].mxu0
      %v6488 = vadd.f32 0.0, %v6487
      %v6489 = vpop.f32.mrb[0].mxu0
      %6490 = vmatprep.mubr.bf16.mxu0 0
      %6491 = vmatmul.mubr.bf16.gmra.mrb[0].mxu0 %v6364
      %v6492 = vpop.f32.mrb[0].mxu0
      %v6493 = vadd.f32 0.0, %v6492
      %v6494 = vpop.f32.mrb[0].mxu0
      %v6495 = vpop.f32.mrb[0].mxu0
      %v6496 = vadd.f32 0.0, %v6495
      %v6497 = vpop.f32.mrb[0].mxu0
      %6498 = vmatprep.mubr.bf16.mxu0 0
      %6499 = vmatmul.mubr.bf16.gmra.mrb[0].mxu0 %v6365
      %v6500 = vpop.f32.mrb[0].mxu0
      %v6501 = vadd.f32 0.0, %v6500
      %v6502 = vpop.f32.mrb[0].mxu0
      %v6503 = vpop.f32.mrb[0].mxu0
      %v6504 = vadd.f32 0.0, %v6503
      %v6505 = vpop.f32.mrb[0].mxu0
      %6506 = vmatprep.mubr.bf16.mxu0 0
      %6507 = vmatmul.mubr.bf16.gmra.mrb[0].mxu0 %v6366
      %v6508 = vpop.f32.mrb[0].mxu0
      %v6509 = vadd.f32 0.0, %v6508
      %v6510 = vpop.f32.mrb[0].mxu0
      %v6511 = vpop.f32.mrb[0].mxu0
      %v6512 = vadd.f32 0.0, %v6511
      %v6513 = vpop.f32.mrb[0].mxu0
      %6514 = vmatprep.mubr.bf16.mxu0 0
      %6515 = vmatmul.mubr.bf16.gmra.mrb[0].mxu0 %v6367
      %v6516 = vpop.f32.mrb[0].mxu0
      %v6517 = vadd.f32 0.0, %v6516
      %v6518 = vpop.f32.mrb[0].mxu0
      %v6519 = vpop.f32.mrb[0].mxu0
      %v6520 = vadd.f32 0.0, %v6519
      %v6521 = vpop.f32.mrb[0].mxu0
      %6522 = vmatprep.mubr.bf16.mxu0 0
      %6523 = vmatmul.mubr.bf16.gmra.mrb[0].mxu0 %v6368
      %v6524 = vpop.f32.mrb[0].mxu0
      %v6525 = vadd.f32 0.0, %v6524
      %v6526 = vpop.f32.mrb[0].mxu0
      %v6527 = vpop.f32.mrb[0].mxu0
      %v6528 = vadd.f32 0.0, %v6527
      %v6529 = vpop.f32.mrb[0].mxu0
      %6530 = vdwg.mxu0
      %v6531 = vadd.f32 %v6345, %v6469
      %v6532 = vadd.f32 %v6346, %v6472
      %v6533 = vadd.f32 %v6347, %v6477
      %v6534 = vadd.f32 %v6348, %v6480
      %v6535 = vadd.f32 %v6349, %v6485
      %v6536 = vadd.f32 %v6350, %v6488
      %v6537 = vadd.f32 %v6351, %v6493
      %v6538 = vadd.f32 %v6352, %v6496
      %v6539 = vadd.f32 %v6353, %v6501
      %v6540 = vadd.f32 %v6354, %v6504
      %v6541 = vadd.f32 %v6355, %v6509
      %v6542 = vadd.f32 %v6356, %v6512
      %v6543 = vadd.f32 %v6357, %v6517
      %v6544 = vadd.f32 %v6358, %v6520
      %v6545 = vadd.f32 %v6359, %v6525
      %v6546 = vadd.f32 %v6360, %v6528
      %v6547 = vld [vmem:[%s1076 + $0x10] sm:$0xff]
      %v6548 = vld [vmem:[%s1076 + $0x18] sm:$0xff]
      %v6549 = vld [vmem:[%s1076 + $0x20] sm:$0xff]
      %v6550 = vld [vmem:[%s1076 + $0x28] sm:$0xff]
      %v6551 = vld [vmem:[%s1076 + $0x30] sm:$0xff]
      %v6552 = vld [vmem:[%s1076 + $0x38] sm:$0xff]
      %v6553 = vld [vmem:[%s1076 + $0x40] sm:$0xff]
      %v6554 = vld [vmem:[%s1076 + $0x48] sm:$0xff]
      %s6555 = scalar_lea.vmem %s2, 512
      %v6556 = vld [vmem:[%s6555] sm:$0xf]
      %v6557 = vld [vmem:[%s6555 + $0x4] sm:$0xf]
      %v6558 = vld [vmem:[%s6555 + $0x8] sm:$0xf]
      %v6559 = vld [vmem:[%s6555 + $0xc] sm:$0xf]
      %v6560 = vld [vmem:[%s6555 + $0x10] sm:$0xf]
      %v6561 = vld [vmem:[%s6555 + $0x14] sm:$0xf]
      %v6562 = vld [vmem:[%s6555 + $0x18] sm:$0xf]
      %v6563 = vld [vmem:[%s6555 + $0x1c] sm:$0xf]
      %v6564 = vld [vmem:[%s6555 + $0x20] sm:$0xf]
      %v6565 = vld [vmem:[%s6555 + $0x24] sm:$0xf]
      %v6566 = vld [vmem:[%s6555 + $0x28] sm:$0xf]
      %v6567 = vld [vmem:[%s6555 + $0x2c] sm:$0xf]
      %v6568 = vld [vmem:[%s6555 + $0x30] sm:$0xf]
      %v6569 = vld [vmem:[%s6555 + $0x34] sm:$0xf]
      %v6570 = vld [vmem:[%s6555 + $0x38] sm:$0xf]
      %v6571 = vld [vmem:[%s6555 + $0x3c] sm:$0xf]
      %v6588 = vunpack.c.l.b16 %v6556
      %v6589 = vunpack.c.l.b16 %v6557
      %v6590 = vunpack.c.l.b16 %v6558
      %v6591 = vunpack.c.l.b16 %v6559
      %v6592 = vunpack.c.l.b16 %v6560
      %v6593 = vunpack.c.l.b16 %v6561
      %v6594 = vunpack.c.l.b16 %v6562
      %v6595 = vunpack.c.l.b16 %v6563
      %v6596 = vunpack.c.l.b16 %v6564
      %v6597 = vunpack.c.l.b16 %v6565
      %v6598 = vunpack.c.l.b16 %v6566
      %v6599 = vunpack.c.l.b16 %v6567
      %v6600 = vunpack.c.l.b16 %v6568
      %v6601 = vunpack.c.l.b16 %v6569
      %v6602 = vunpack.c.l.b16 %v6570
      %v6603 = vunpack.c.l.b16 %v6571
      %v6604 = vpack.c.b16 %v6589, %v6588
      %v6605 = vpack.c.b16 %v6591, %v6590
      %v6606 = vpack.c.b16 %v6593, %v6592
      %v6607 = vpack.c.b16 %v6595, %v6594
      %v6608 = vpack.c.b16 %v6597, %v6596
      %v6609 = vpack.c.b16 %v6599, %v6598
      %v6610 = vpack.c.b16 %v6601, %v6600
      %v6611 = vpack.c.b16 %v6603, %v6602
      %6620 = vmatprep.subr.bf16.mxu0 0
      %6621 = vmatpush1.bf16.msra.mxu0 %v6604
      %6622 = vmatprep.subr.bf16.mxu0 0
      %6623 = vmatpush1.bf16.msra.mxu0 %v6605
      %6624 = vmatprep.subr.bf16.mxu0 0
      %6625 = vmatpush1.bf16.msra.mxu0 %v6606
      %6626 = vmatprep.subr.bf16.mxu0 0
      %6627 = vmatpush1.bf16.msra.mxu0 %v6607
      %6628 = vmatprep.subr.bf16.mxu0 0
      %6629 = vmatpush1.bf16.msra.mxu0 %v6608
      %6630 = vmatprep.subr.bf16.mxu0 0
      %6631 = vmatpush1.bf16.msra.mxu0 %v6609
      %6632 = vmatprep.subr.bf16.mxu0 0
      %6633 = vmatpush1.bf16.msra.mxu0 %v6610
      %6634 = vmatprep.subr.bf16.mxu0 0
      %6635 = vmatpush1.bf16.msra.mxu0 %v6611
      %6636 = vmatprep.subr.bf16.mxu0 0
      %6637 = vmatpush1.bf16.msra.mxu0 0
      %6638 = vmatprep.subr.bf16.mxu0 0
      %6639 = vmatpush1.bf16.msra.mxu0 0
      %6640 = vmatprep.subr.bf16.mxu0 0
      %6641 = vmatpush1.bf16.msra.mxu0 0
      %6642 = vmatprep.subr.bf16.mxu0 0
      %6643 = vmatpush1.bf16.msra.mxu0 0
      %6644 = vmatprep.subr.bf16.mxu0 0
      %6645 = vmatpush1.bf16.msra.mxu0 0
      %6646 = vmatprep.subr.bf16.mxu0 0
      %6647 = vmatpush1.bf16.msra.mxu0 0
      %6648 = vmatprep.subr.bf16.mxu0 0
      %6649 = vmatpush1.bf16.msra.mxu0 0
      %6650 = vmatprep.subr.bf16.mxu0 0
      %6651 = vmatpush1.bf16.msra.mxu0 0
      %6652 = vmatprep.mubr.bf16.mxu0 0
      %6653 = vmatmul.mubr.bf16.gmra.mrb[0].mxu0 %v6547
      %v6654 = vpop.f32.mrb[0].mxu0
      %v6655 = vadd.f32 0.0, %v6654
      %v6656 = vpop.f32.mrb[0].mxu0
      %v6657 = vpop.f32.mrb[0].mxu0
      %v6658 = vadd.f32 0.0, %v6657
      %v6659 = vpop.f32.mrb[0].mxu0
      %6660 = vmatprep.mubr.bf16.mxu0 0
      %6661 = vmatmul.mubr.bf16.gmra.mrb[0].mxu0 %v6548
      %v6662 = vpop.f32.mrb[0].mxu0
      %v6663 = vadd.f32 0.0, %v6662
      %v6664 = vpop.f32.mrb[0].mxu0
      %v6665 = vpop.f32.mrb[0].mxu0
      %v6666 = vadd.f32 0.0, %v6665
      %v6667 = vpop.f32.mrb[0].mxu0
      %6668 = vmatprep.mubr.bf16.mxu0 0
      %6669 = vmatmul.mubr.bf16.gmra.mrb[0].mxu0 %v6549
      %v6670 = vpop.f32.mrb[0].mxu0
      %v6671 = vadd.f32 0.0, %v6670
      %v6672 = vpop.f32.mrb[0].mxu0
      %v6673 = vpop.f32.mrb[0].mxu0
      %v6674 = vadd.f32 0.0, %v6673
      %v6675 = vpop.f32.mrb[0].mxu0
      %6676 = vmatprep.mubr.bf16.mxu0 0
      %6677 = vmatmul.mubr.bf16.gmra.mrb[0].mxu0 %v6550
      %v6678 = vpop.f32.mrb[0].mxu0
      %v6679 = vadd.f32 0.0, %v6678
      %v6680 = vpop.f32.mrb[0].mxu0
      %v6681 = vpop.f32.mrb[0].mxu0
      %v6682 = vadd.f32 0.0, %v6681
      %v6683 = vpop.f32.mrb[0].mxu0
      %6684 = vmatprep.mubr.bf16.mxu0 0
      %6685 = vmatmul.mubr.bf16.gmra.mrb[0].mxu0 %v6551
      %v6686 = vpop.f32.mrb[0].mxu0
      %v6687 = vadd.f32 0.0, %v6686
      %v6688 = vpop.f32.mrb[0].mxu0
      %v6689 = vpop.f32.mrb[0].mxu0
      %v6690 = vadd.f32 0.0, %v6689
      %v6691 = vpop.f32.mrb[0].mxu0
      %6692 = vmatprep.mubr.bf16.mxu0 0
      %6693 = vmatmul.mubr.bf16.gmra.mrb[0].mxu0 %v6552
      %v6694 = vpop.f32.mrb[0].mxu0
      %v6695 = vadd.f32 0.0, %v6694
      %v6696 = vpop.f32.mrb[0].mxu0
      %v6697 = vpop.f32.mrb[0].mxu0
      %v6698 = vadd.f32 0.0, %v6697
      %v6699 = vpop.f32.mrb[0].mxu0
      %6700 = vmatprep.mubr.bf16.mxu0 0
      %6701 = vmatmul.mubr.bf16.gmra.mrb[0].mxu0 %v6553
      %v6702 = vpop.f32.mrb[0].mxu0
      %v6703 = vadd.f32 0.0, %v6702
      %v6704 = vpop.f32.mrb[0].mxu0
      %v6705 = vpop.f32.mrb[0].mxu0
      %v6706 = vadd.f32 0.0, %v6705
      %v6707 = vpop.f32.mrb[0].mxu0
      %6708 = vmatprep.mubr.bf16.mxu0 0
      %6709 = vmatmul.mubr.bf16.gmra.mrb[0].mxu0 %v6554
      %v6710 = vpop.f32.mrb[0].mxu0
      %v6711 = vadd.f32 0.0, %v6710
      %v6712 = vpop.f32.mrb[0].mxu0
      %v6713 = vpop.f32.mrb[0].mxu0
      %v6714 = vadd.f32 0.0, %v6713
      %v6715 = vpop.f32.mrb[0].mxu0
      %6716 = vdwg.mxu0
      %v6717 = vadd.f32 %v6531, %v6655
      %v6718 = vadd.f32 %v6532, %v6658
      %v6719 = vadd.f32 %v6533, %v6663
      %v6720 = vadd.f32 %v6534, %v6666
      %v6721 = vadd.f32 %v6535, %v6671
      %v6722 = vadd.f32 %v6536, %v6674
      %v6723 = vadd.f32 %v6537, %v6679
      %v6724 = vadd.f32 %v6538, %v6682
      %v6725 = vadd.f32 %v6539, %v6687
      %v6726 = vadd.f32 %v6540, %v6690
      %v6727 = vadd.f32 %v6541, %v6695
      %v6728 = vadd.f32 %v6542, %v6698
      %v6729 = vadd.f32 %v6543, %v6703
      %v6730 = vadd.f32 %v6544, %v6706
      %v6731 = vadd.f32 %v6545, %v6711
      %v6732 = vadd.f32 %v6546, %v6714
      %v6733 = vld [vmem:[%s4] sm:$0x1]
      %v6735 = vlaneseq
      %v6736 = vshrl.u32 %v6735, 7
      %v6737 = vsub.s32 0, %v6736
      %v6738 = vrot.slane %v6733, %v6737
      %v6740 = vadd.f32 %v6717, %v6738
      %v6741 = vadd.f32 %v6718, %v6738
      %v6742 = vadd.f32 %v6719, %v6738
      %v6743 = vadd.f32 %v6720, %v6738
      %v6744 = vadd.f32 %v6721, %v6738
      %v6745 = vadd.f32 %v6722, %v6738
      %v6746 = vadd.f32 %v6723, %v6738
      %v6747 = vadd.f32 %v6724, %v6738
      %v6748 = vadd.f32 %v6725, %v6738
      %v6749 = vadd.f32 %v6726, %v6738
      %v6750 = vadd.f32 %v6727, %v6738
      %v6751 = vadd.f32 %v6728, %v6738
      %v6752 = vadd.f32 %v6729, %v6738
      %v6753 = vadd.f32 %v6730, %v6738
      %v6754 = vadd.f32 %v6731, %v6738
      %v6755 = vadd.f32 %v6732, %v6738
      %v6756 = vld [vmem:[%s219] sm:$0xf]
      %v6757 = vld [vmem:[%s219 + $0x4] sm:$0xf]
      %v6758 = vld [vmem:[%s219 + $0x8] sm:$0xf]
      %v6759 = vld [vmem:[%s219 + $0xc] sm:$0xf]
      %v6760 = vld [vmem:[%s219 + $0x10] sm:$0xf]
      %v6761 = vld [vmem:[%s219 + $0x14] sm:$0xf]
      %v6762 = vld [vmem:[%s219 + $0x18] sm:$0xf]
      %v6763 = vld [vmem:[%s219 + $0x1c] sm:$0xf]
      %v6764 = vld [vmem:[%s219 + $0x20] sm:$0xf]
      %v6765 = vld [vmem:[%s219 + $0x24] sm:$0xf]
      %v6766 = vld [vmem:[%s219 + $0x28] sm:$0xf]
      %v6767 = vld [vmem:[%s219 + $0x2c] sm:$0xf]
      %v6768 = vld [vmem:[%s219 + $0x30] sm:$0xf]
      %v6769 = vld [vmem:[%s219 + $0x34] sm:$0xf]
      %v6770 = vld [vmem:[%s219 + $0x38] sm:$0xf]
      %v6771 = vld [vmem:[%s219 + $0x3c] sm:$0xf]
      %v6772 = vunpack.c.l.bf16 %v6756
      %v6773 = vunpack.c.l.bf16 %v6757
      %v6774 = vunpack.c.l.bf16 %v6758
      %v6775 = vunpack.c.l.bf16 %v6759
      %v6776 = vunpack.c.l.bf16 %v6760
      %v6777 = vunpack.c.l.bf16 %v6761
      %v6778 = vunpack.c.l.bf16 %v6762
      %v6779 = vunpack.c.l.bf16 %v6763
      %v6780 = vunpack.c.l.bf16 %v6764
      %v6781 = vunpack.c.l.bf16 %v6765
      %v6782 = vunpack.c.l.bf16 %v6766
      %v6783 = vunpack.c.l.bf16 %v6767
      %v6784 = vunpack.c.l.bf16 %v6768
      %v6785 = vunpack.c.l.bf16 %v6769
      %v6786 = vunpack.c.l.bf16 %v6770
      %v6787 = vunpack.c.l.bf16 %v6771
      %v6788 = vadd.f32 %v6740, %v6772
      %v6789 = vadd.f32 %v6741, %v6773
      %v6790 = vadd.f32 %v6742, %v6774
      %v6791 = vadd.f32 %v6743, %v6775
      %v6792 = vadd.f32 %v6744, %v6776
      %v6793 = vadd.f32 %v6745, %v6777
      %v6794 = vadd.f32 %v6746, %v6778
      %v6795 = vadd.f32 %v6747, %v6779
      %v6796 = vadd.f32 %v6748, %v6780
      %v6797 = vadd.f32 %v6749, %v6781
      %v6798 = vadd.f32 %v6750, %v6782
      %v6799 = vadd.f32 %v6751, %v6783
      %v6800 = vadd.f32 %v6752, %v6784
      %v6801 = vadd.f32 %v6753, %v6785
      %v6802 = vadd.f32 %v6754, %v6786
      %v6803 = vadd.f32 %v6755, %v6787
      %v6804 = vmax.f32 %v6788, 0.0
      %v6805 = vmax.f32 %v6789, 0.0
      %v6806 = vmax.f32 %v6790, 0.0
      %v6807 = vmax.f32 %v6791, 0.0
      %v6808 = vmax.f32 %v6792, 0.0
      %v6809 = vmax.f32 %v6793, 0.0
      %v6810 = vmax.f32 %v6794, 0.0
      %v6811 = vmax.f32 %v6795, 0.0
      %v6812 = vmax.f32 %v6796, 0.0
      %v6813 = vmax.f32 %v6797, 0.0
      %v6814 = vmax.f32 %v6798, 0.0
      %v6815 = vmax.f32 %v6799, 0.0
      %v6816 = vmax.f32 %v6800, 0.0
      %v6817 = vmax.f32 %v6801, 0.0
      %v6818 = vmax.f32 %v6802, 0.0
      %v6819 = vmax.f32 %v6803, 0.0
      %v6820 = vpack.c.bf16 %v6805, %v6804
      %v6821 = vpack.c.bf16 %v6807, %v6806
      %v6822 = vpack.c.bf16 %v6809, %v6808
      %v6823 = vpack.c.bf16 %v6811, %v6810
      %v6824 = vpack.c.bf16 %v6813, %v6812
      %v6825 = vpack.c.bf16 %v6815, %v6814
      %v6826 = vpack.c.bf16 %v6817, %v6816
      %v6827 = vpack.c.bf16 %v6819, %v6818
      %v6836 = vunpack.c.l.b16 %v6820
      %v6837 = vunpack.c.h.b16 %v6820
      %v6838 = vunpack.c.l.b16 %v6821
      %v6839 = vunpack.c.h.b16 %v6821
      %v6840 = vunpack.c.l.b16 %v6822
      %v6841 = vunpack.c.h.b16 %v6822
      %v6842 = vunpack.c.l.b16 %v6823
      %v6843 = vunpack.c.h.b16 %v6823
      %v6844 = vunpack.c.l.b16 %v6824
      %v6845 = vunpack.c.h.b16 %v6824
      %v6846 = vunpack.c.l.b16 %v6825
      %v6847 = vunpack.c.h.b16 %v6825
      %v6848 = vunpack.c.l.b16 %v6826
      %v6849 = vunpack.c.h.b16 %v6826
      %v6850 = vunpack.c.l.b16 %v6827
      %v6851 = vunpack.c.h.b16 %v6827
      %v6852 = vpack.c.b16 %v6836, %v6836
      %v6853 = vpack.c.b16 %v6837, %v6837
      %v6854 = vpack.c.b16 %v6838, %v6838
      %v6855 = vpack.c.b16 %v6839, %v6839
      %v6856 = vpack.c.b16 %v6840, %v6840
      %v6857 = vpack.c.b16 %v6841, %v6841
      %v6858 = vpack.c.b16 %v6842, %v6842
      %v6859 = vpack.c.b16 %v6843, %v6843
      %v6860 = vpack.c.b16 %v6844, %v6844
      %v6861 = vpack.c.b16 %v6845, %v6845
      %v6862 = vpack.c.b16 %v6846, %v6846
      %v6863 = vpack.c.b16 %v6847, %v6847
      %v6864 = vpack.c.b16 %v6848, %v6848
      %v6865 = vpack.c.b16 %v6849, %v6849
      %v6866 = vpack.c.b16 %v6850, %v6850
      %v6867 = vpack.c.b16 %v6851, %v6851
      %6884 = vst [vmem:[%s224] sm:$0xf] %v6852
      %6885 = vst [vmem:[%s224 + $0x4] sm:$0xf] %v6853
      %6886 = vst [vmem:[%s224 + $0x8] sm:$0xf] %v6854
      %6887 = vst [vmem:[%s224 + $0xc] sm:$0xf] %v6855
      %6888 = vst [vmem:[%s224 + $0x10] sm:$0xf] %v6856
      %6889 = vst [vmem:[%s224 + $0x14] sm:$0xf] %v6857
      %6890 = vst [vmem:[%s224 + $0x18] sm:$0xf] %v6858
      %6891 = vst [vmem:[%s224 + $0x1c] sm:$0xf] %v6859
      %6892 = vst [vmem:[%s224 + $0x20] sm:$0xf] %v6860
      %6893 = vst [vmem:[%s224 + $0x24] sm:$0xf] %v6861
      %6894 = vst [vmem:[%s224 + $0x28] sm:$0xf] %v6862
      %6895 = vst [vmem:[%s224 + $0x2c] sm:$0xf] %v6863
      %6896 = vst [vmem:[%s224 + $0x30] sm:$0xf] %v6864
      %6897 = vst [vmem:[%s224 + $0x34] sm:$0xf] %v6865
      %6898 = vst [vmem:[%s224 + $0x38] sm:$0xf] %v6866
      %6899 = vst [vmem:[%s224 + $0x3c] sm:$0xf] %v6867
      %v6900 = vld [vmem:[#allocation3 + $0x40] sm:$0xff]
      %v6901 = vld [vmem:[#allocation3 + $0x48] sm:$0xff]
      %v6902 = vld [vmem:[#allocation3 + $0x50] sm:$0xff]
      %v6903 = vld [vmem:[#allocation3 + $0x58] sm:$0xff]
      %v6904 = vld [vmem:[#allocation3 + $0x60] sm:$0xff]
      %v6905 = vld [vmem:[#allocation3 + $0x68] sm:$0xff]
      %v6906 = vld [vmem:[#allocation3 + $0x70] sm:$0xff]
      %v6907 = vld [vmem:[#allocation3 + $0x78] sm:$0xff]
      %v6908 = vld [vmem:[%s2] sm:$0xf]
      %v6909 = vld [vmem:[%s2 + $0x4] sm:$0xf]
      %v6910 = vld [vmem:[%s2 + $0x8] sm:$0xf]
      %v6911 = vld [vmem:[%s2 + $0xc] sm:$0xf]
      %v6912 = vld [vmem:[%s2 + $0x10] sm:$0xf]
      %v6913 = vld [vmem:[%s2 + $0x14] sm:$0xf]
      %v6914 = vld [vmem:[%s2 + $0x18] sm:$0xf]
      %v6915 = vld [vmem:[%s2 + $0x1c] sm:$0xf]
      %v6916 = vld [vmem:[%s2 + $0x20] sm:$0xf]
      %v6917 = vld [vmem:[%s2 + $0x24] sm:$0xf]
      %v6918 = vld [vmem:[%s2 + $0x28] sm:$0xf]
      %v6919 = vld [vmem:[%s2 + $0x2c] sm:$0xf]
      %v6920 = vld [vmem:[%s2 + $0x30] sm:$0xf]
      %v6921 = vld [vmem:[%s2 + $0x34] sm:$0xf]
      %v6922 = vld [vmem:[%s2 + $0x38] sm:$0xf]
      %v6923 = vld [vmem:[%s2 + $0x3c] sm:$0xf]
      %v6924 = vld [vmem:[%s786 + $0x40] sm:$0xff]
      %v6925 = vld [vmem:[%s786 + $0x48] sm:$0xff]
      %v6926 = vld [vmem:[%s786 + $0x50] sm:$0xff]
      %v6927 = vld [vmem:[%s786 + $0x58] sm:$0xff]
      %v6928 = vld [vmem:[%s786 + $0x60] sm:$0xff]
      %v6929 = vld [vmem:[%s786 + $0x68] sm:$0xff]
      %v6930 = vld [vmem:[%s786 + $0x70] sm:$0xff]
      %v6931 = vld [vmem:[%s786 + $0x78] sm:$0xff]
      %v6932 = vld [vmem:[%s5124] sm:$0xf]
      %v6933 = vld [vmem:[%s5124 + $0x4] sm:$0xf]
      %v6934 = vld [vmem:[%s5124 + $0x8] sm:$0xf]
      %v6935 = vld [vmem:[%s5124 + $0xc] sm:$0xf]
      %v6936 = vld [vmem:[%s5124 + $0x10] sm:$0xf]
      %v6937 = vld [vmem:[%s5124 + $0x14] sm:$0xf]
      %v6938 = vld [vmem:[%s5124 + $0x18] sm:$0xf]
      %v6939 = vld [vmem:[%s5124 + $0x1c] sm:$0xf]
      %v6940 = vld [vmem:[%s5124 + $0x20] sm:$0xf]
      %v6941 = vld [vmem:[%s5124 + $0x24] sm:$0xf]
      %v6942 = vld [vmem:[%s5124 + $0x28] sm:$0xf]
      %v6943 = vld [vmem:[%s5124 + $0x2c] sm:$0xf]
      %v6944 = vld [vmem:[%s5124 + $0x30] sm:$0xf]
      %v6945 = vld [vmem:[%s5124 + $0x34] sm:$0xf]
      %v6946 = vld [vmem:[%s5124 + $0x38] sm:$0xf]
      %v6947 = vld [vmem:[%s5124 + $0x3c] sm:$0xf]
      %v6964 = vunpack.c.l.b16 %v6932
      %v6965 = vunpack.c.l.b16 %v6933
      %v6966 = vunpack.c.l.b16 %v6934
      %v6967 = vunpack.c.l.b16 %v6935
      %v6968 = vunpack.c.l.b16 %v6936
      %v6969 = vunpack.c.l.b16 %v6937
      %v6970 = vunpack.c.l.b16 %v6938
      %v6971 = vunpack.c.l.b16 %v6939
      %v6972 = vunpack.c.l.b16 %v6940
      %v6973 = vunpack.c.l.b16 %v6941
      %v6974 = vunpack.c.l.b16 %v6942
      %v6975 = vunpack.c.l.b16 %v6943
      %v6976 = vunpack.c.l.b16 %v6944
      %v6977 = vunpack.c.l.b16 %v6945
      %v6978 = vunpack.c.l.b16 %v6946
      %v6979 = vunpack.c.l.b16 %v6947
      %v6980 = vpack.c.b16 %v6965, %v6964
      %v6981 = vpack.c.b16 %v6967, %v6966
      %v6982 = vpack.c.b16 %v6969, %v6968
      %v6983 = vpack.c.b16 %v6971, %v6970
      %v6984 = vpack.c.b16 %v6973, %v6972
      %v6985 = vpack.c.b16 %v6975, %v6974
      %v6986 = vpack.c.b16 %v6977, %v6976
      %v6987 = vpack.c.b16 %v6979, %v6978
      %6996 = vmatprep.subr.bf16.mxu0 0
      %6997 = vmatpush1.bf16.msra.mxu0 %v6980
      %6998 = vmatprep.subr.bf16.mxu0 0
      %6999 = vmatpush1.bf16.msra.mxu0 %v6981
      %7000 = vmatprep.subr.bf16.mxu0 0
      %7001 = vmatpush1.bf16.msra.mxu0 %v6982
      %7002 = vmatprep.subr.bf16.mxu0 0
      %7003 = vmatpush1.bf16.msra.mxu0 %v6983
      %7004 = vmatprep.subr.bf16.mxu0 0
      %7005 = vmatpush1.bf16.msra.mxu0 %v6984
      %7006 = vmatprep.subr.bf16.mxu0 0
      %7007 = vmatpush1.bf16.msra.mxu0 %v6985
      %7008 = vmatprep.subr.bf16.mxu0 0
      %7009 = vmatpush1.bf16.msra.mxu0 %v6986
      %7010 = vmatprep.subr.bf16.mxu0 0
      %7011 = vmatpush1.bf16.msra.mxu0 %v6987
      %7012 = vmatprep.subr.bf16.mxu0 0
      %7013 = vmatpush1.bf16.msra.mxu0 0
      %7014 = vmatprep.subr.bf16.mxu0 0
      %7015 = vmatpush1.bf16.msra.mxu0 0
      %7016 = vmatprep.subr.bf16.mxu0 0
      %7017 = vmatpush1.bf16.msra.mxu0 0
      %7018 = vmatprep.subr.bf16.mxu0 0
      %7019 = vmatpush1.bf16.msra.mxu0 0
      %7020 = vmatprep.subr.bf16.mxu0 0
      %7021 = vmatpush1.bf16.msra.mxu0 0
      %7022 = vmatprep.subr.bf16.mxu0 0
      %7023 = vmatpush1.bf16.msra.mxu0 0
      %7024 = vmatprep.subr.bf16.mxu0 0
      %7025 = vmatpush1.bf16.msra.mxu0 0
      %7026 = vmatprep.subr.bf16.mxu0 0
      %7027 = vmatpush1.bf16.msra.mxu0 0
      %7028 = vmatprep.mubr.bf16.mxu0 0
      %7029 = vmatmul.mubr.bf16.gmra.mrb[0].mxu0 %v6924
      %v7030 = vpop.f32.mrb[0].mxu0
      %v7031 = vadd.f32 0.0, %v7030
      %v7032 = vpop.f32.mrb[0].mxu0
      %v7033 = vpop.f32.mrb[0].mxu0
      %v7034 = vadd.f32 0.0, %v7033
      %v7035 = vpop.f32.mrb[0].mxu0
      %7036 = vmatprep.mubr.bf16.mxu0 0
      %7037 = vmatmul.mubr.bf16.gmra.mrb[0].mxu0 %v6925
      %v7038 = vpop.f32.mrb[0].mxu0
      %v7039 = vadd.f32 0.0, %v7038
      %v7040 = vpop.f32.mrb[0].mxu0
      %v7041 = vpop.f32.mrb[0].mxu0
      %v7042 = vadd.f32 0.0, %v7041
      %v7043 = vpop.f32.mrb[0].mxu0
      %7044 = vmatprep.mubr.bf16.mxu0 0
      %7045 = vmatmul.mubr.bf16.gmra.mrb[0].mxu0 %v6926
      %v7046 = vpop.f32.mrb[0].mxu0
      %v7047 = vadd.f32 0.0, %v7046
      %v7048 = vpop.f32.mrb[0].mxu0
      %v7049 = vpop.f32.mrb[0].mxu0
      %v7050 = vadd.f32 0.0, %v7049
      %v7051 = vpop.f32.mrb[0].mxu0
      %7052 = vmatprep.mubr.bf16.mxu0 0
      %7053 = vmatmul.mubr.bf16.gmra.mrb[0].mxu0 %v6927
      %v7054 = vpop.f32.mrb[0].mxu0
      %v7055 = vadd.f32 0.0, %v7054
      %v7056 = vpop.f32.mrb[0].mxu0
      %v7057 = vpop.f32.mrb[0].mxu0
      %v7058 = vadd.f32 0.0, %v7057
      %v7059 = vpop.f32.mrb[0].mxu0
      %7060 = vmatprep.mubr.bf16.mxu0 0
      %7061 = vmatmul.mubr.bf16.gmra.mrb[0].mxu0 %v6928
      %v7062 = vpop.f32.mrb[0].mxu0
      %v7063 = vadd.f32 0.0, %v7062
      %v7064 = vpop.f32.mrb[0].mxu0
      %v7065 = vpop.f32.mrb[0].mxu0
      %v7066 = vadd.f32 0.0, %v7065
      %v7067 = vpop.f32.mrb[0].mxu0
      %7068 = vmatprep.mubr.bf16.mxu0 0
      %7069 = vmatmul.mubr.bf16.gmra.mrb[0].mxu0 %v6929
      %v7070 = vpop.f32.mrb[0].mxu0
      %v7071 = vadd.f32 0.0, %v7070
      %v7072 = vpop.f32.mrb[0].mxu0
      %v7073 = vpop.f32.mrb[0].mxu0
      %v7074 = vadd.f32 0.0, %v7073
      %v7075 = vpop.f32.mrb[0].mxu0
      %7076 = vmatprep.mubr.bf16.mxu0 0
      %7077 = vmatmul.mubr.bf16.gmra.mrb[0].mxu0 %v6930
      %v7078 = vpop.f32.mrb[0].mxu0
      %v7079 = vadd.f32 0.0, %v7078
      %v7080 = vpop.f32.mrb[0].mxu0
      %v7081 = vpop.f32.mrb[0].mxu0
      %v7082 = vadd.f32 0.0, %v7081
      %v7083 = vpop.f32.mrb[0].mxu0
      %7084 = vmatprep.mubr.bf16.mxu0 0
      %7085 = vmatmul.mubr.bf16.gmra.mrb[0].mxu0 %v6931
      %v7086 = vpop.f32.mrb[0].mxu0
      %v7087 = vadd.f32 0.0, %v7086
      %v7088 = vpop.f32.mrb[0].mxu0
      %v7089 = vpop.f32.mrb[0].mxu0
      %v7090 = vadd.f32 0.0, %v7089
      %v7091 = vpop.f32.mrb[0].mxu0
      %7092 = vdwg.mxu0
      %v7109 = vunpack.c.l.b16 %v6908
      %v7110 = vunpack.c.l.b16 %v6909
      %v7111 = vunpack.c.l.b16 %v6910
      %v7112 = vunpack.c.l.b16 %v6911
      %v7113 = vunpack.c.l.b16 %v6912
      %v7114 = vunpack.c.l.b16 %v6913
      %v7115 = vunpack.c.l.b16 %v6914
      %v7116 = vunpack.c.l.b16 %v6915
      %v7117 = vunpack.c.l.b16 %v6916
      %v7118 = vunpack.c.l.b16 %v6917
      %v7119 = vunpack.c.l.b16 %v6918
      %v7120 = vunpack.c.l.b16 %v6919
      %v7121 = vunpack.c.l.b16 %v6920
      %v7122 = vunpack.c.l.b16 %v6921
      %v7123 = vunpack.c.l.b16 %v6922
      %v7124 = vunpack.c.l.b16 %v6923
      %v7125 = vpack.c.b16 %v7110, %v7109
      %v7126 = vpack.c.b16 %v7112, %v7111
      %v7127 = vpack.c.b16 %v7114, %v7113
      %v7128 = vpack.c.b16 %v7116, %v7115
      %v7129 = vpack.c.b16 %v7118, %v7117
      %v7130 = vpack.c.b16 %v7120, %v7119
      %v7131 = vpack.c.b16 %v7122, %v7121
      %v7132 = vpack.c.b16 %v7124, %v7123
      %7141 = vmatprep.subr.bf16.mxu0 0
      %7142 = vmatpush1.bf16.msra.mxu0 %v7125
      %7143 = vmatprep.subr.bf16.mxu0 0
      %7144 = vmatpush1.bf16.msra.mxu0 %v7126
      %7145 = vmatprep.subr.bf16.mxu0 0
      %7146 = vmatpush1.bf16.msra.mxu0 %v7127
      %7147 = vmatprep.subr.bf16.mxu0 0
      %7148 = vmatpush1.bf16.msra.mxu0 %v7128
      %7149 = vmatprep.subr.bf16.mxu0 0
      %7150 = vmatpush1.bf16.msra.mxu0 %v7129
      %7151 = vmatprep.subr.bf16.mxu0 0
      %7152 = vmatpush1.bf16.msra.mxu0 %v7130
      %7153 = vmatprep.subr.bf16.mxu0 0
      %7154 = vmatpush1.bf16.msra.mxu0 %v7131
      %7155 = vmatprep.subr.bf16.mxu0 0
      %7156 = vmatpush1.bf16.msra.mxu0 %v7132
      %7157 = vmatprep.subr.bf16.mxu0 0
      %7158 = vmatpush1.bf16.msra.mxu0 0
      %7159 = vmatprep.subr.bf16.mxu0 0
      %7160 = vmatpush1.bf16.msra.mxu0 0
      %7161 = vmatprep.subr.bf16.mxu0 0
      %7162 = vmatpush1.bf16.msra.mxu0 0
      %7163 = vmatprep.subr.bf16.mxu0 0
      %7164 = vmatpush1.bf16.msra.mxu0 0
      %7165 = vmatprep.subr.bf16.mxu0 0
      %7166 = vmatpush1.bf16.msra.mxu0 0
      %7167 = vmatprep.subr.bf16.mxu0 0
      %7168 = vmatpush1.bf16.msra.mxu0 0
      %7169 = vmatprep.subr.bf16.mxu0 0
      %7170 = vmatpush1.bf16.msra.mxu0 0
      %7171 = vmatprep.subr.bf16.mxu0 0
      %7172 = vmatpush1.bf16.msra.mxu0 0
      %7173 = vmatprep.mubr.bf16.mxu0 0
      %7174 = vmatmul.mubr.bf16.gmra.mrb[0].mxu0 %v6900
      %v7175 = vpop.f32.mrb[0].mxu0
      %v7176 = vadd.f32 %v7031, %v7175
      %v7177 = vpop.f32.mrb[0].mxu0
      %v7178 = vpop.f32.mrb[0].mxu0
      %v7179 = vadd.f32 %v7034, %v7178
      %v7180 = vpop.f32.mrb[0].mxu0
      %7181 = vmatprep.mubr.bf16.mxu0 0
      %7182 = vmatmul.mubr.bf16.gmra.mrb[0].mxu0 %v6901
      %v7183 = vpop.f32.mrb[0].mxu0
      %v7184 = vadd.f32 %v7039, %v7183
      %v7185 = vpop.f32.mrb[0].mxu0
      %v7186 = vpop.f32.mrb[0].mxu0
      %v7187 = vadd.f32 %v7042, %v7186
      %v7188 = vpop.f32.mrb[0].mxu0
      %7189 = vmatprep.mubr.bf16.mxu0 0
      %7190 = vmatmul.mubr.bf16.gmra.mrb[0].mxu0 %v6902
      %v7191 = vpop.f32.mrb[0].mxu0
      %v7192 = vadd.f32 %v7047, %v7191
      %v7193 = vpop.f32.mrb[0].mxu0
      %v7194 = vpop.f32.mrb[0].mxu0
      %v7195 = vadd.f32 %v7050, %v7194
      %v7196 = vpop.f32.mrb[0].mxu0
      %7197 = vmatprep.mubr.bf16.mxu0 0
      %7198 = vmatmul.mubr.bf16.gmra.mrb[0].mxu0 %v6903
      %v7199 = vpop.f32.mrb[0].mxu0
      %v7200 = vadd.f32 %v7055, %v7199
      %v7201 = vpop.f32.mrb[0].mxu0
      %v7202 = vpop.f32.mrb[0].mxu0
      %v7203 = vadd.f32 %v7058, %v7202
      %v7204 = vpop.f32.mrb[0].mxu0
      %7205 = vmatprep.mubr.bf16.mxu0 0
      %7206 = vmatmul.mubr.bf16.gmra.mrb[0].mxu0 %v6904
      %v7207 = vpop.f32.mrb[0].mxu0
      %v7208 = vadd.f32 %v7063, %v7207
      %v7209 = vpop.f32.mrb[0].mxu0
      %v7210 = vpop.f32.mrb[0].mxu0
      %v7211 = vadd.f32 %v7066, %v7210
      %v7212 = vpop.f32.mrb[0].mxu0
      %7213 = vmatprep.mubr.bf16.mxu0 0
      %7214 = vmatmul.mubr.bf16.gmra.mrb[0].mxu0 %v6905
      %v7215 = vpop.f32.mrb[0].mxu0
      %v7216 = vadd.f32 %v7071, %v7215
      %v7217 = vpop.f32.mrb[0].mxu0
      %v7218 = vpop.f32.mrb[0].mxu0
      %v7219 = vadd.f32 %v7074, %v7218
      %v7220 = vpop.f32.mrb[0].mxu0
      %7221 = vmatprep.mubr.bf16.mxu0 0
      %7222 = vmatmul.mubr.bf16.gmra.mrb[0].mxu0 %v6906
      %v7223 = vpop.f32.mrb[0].mxu0
      %v7224 = vadd.f32 %v7079, %v7223
      %v7225 = vpop.f32.mrb[0].mxu0
      %v7226 = vpop.f32.mrb[0].mxu0
      %v7227 = vadd.f32 %v7082, %v7226
      %v7228 = vpop.f32.mrb[0].mxu0
      %7229 = vmatprep.mubr.bf16.mxu0 0
      %7230 = vmatmul.mubr.bf16.gmra.mrb[0].mxu0 %v6907
      %v7231 = vpop.f32.mrb[0].mxu0
      %v7232 = vadd.f32 %v7087, %v7231
      %v7233 = vpop.f32.mrb[0].mxu0
      %v7234 = vpop.f32.mrb[0].mxu0
      %v7235 = vadd.f32 %v7090, %v7234
      %v7236 = vpop.f32.mrb[0].mxu0
      %7237 = vdwg.mxu0
      %v7238 = vld [vmem:[%s1076 + $0x40] sm:$0xff]
      %v7239 = vld [vmem:[%s1076 + $0x48] sm:$0xff]
      %v7240 = vld [vmem:[%s1076 + $0x50] sm:$0xff]
      %v7241 = vld [vmem:[%s1076 + $0x58] sm:$0xff]
      %v7242 = vld [vmem:[%s1076 + $0x60] sm:$0xff]
      %v7243 = vld [vmem:[%s1076 + $0x68] sm:$0xff]
      %v7244 = vld [vmem:[%s1076 + $0x70] sm:$0xff]
      %v7245 = vld [vmem:[%s1076 + $0x78] sm:$0xff]
      %v7246 = vld [vmem:[%s5439] sm:$0xf]
      %v7247 = vld [vmem:[%s5439 + $0x4] sm:$0xf]
      %v7248 = vld [vmem:[%s5439 + $0x8] sm:$0xf]
      %v7249 = vld [vmem:[%s5439 + $0xc] sm:$0xf]
      %v7250 = vld [vmem:[%s5439 + $0x10] sm:$0xf]
      %v7251 = vld [vmem:[%s5439 + $0x14] sm:$0xf]
      %v7252 = vld [vmem:[%s5439 + $0x18] sm:$0xf]
      %v7253 = vld [vmem:[%s5439 + $0x1c] sm:$0xf]
      %v7254 = vld [vmem:[%s5439 + $0x20] sm:$0xf]
      %v7255 = vld [vmem:[%s5439 + $0x24] sm:$0xf]
      %v7256 = vld [vmem:[%s5439 + $0x28] sm:$0xf]
      %v7257 = vld [vmem:[%s5439 + $0x2c] sm:$0xf]
      %v7258 = vld [vmem:[%s5439 + $0x30] sm:$0xf]
      %v7259 = vld [vmem:[%s5439 + $0x34] sm:$0xf]
      %v7260 = vld [vmem:[%s5439 + $0x38] sm:$0xf]
      %v7261 = vld [vmem:[%s5439 + $0x3c] sm:$0xf]
      %v7278 = vunpack.c.l.b16 %v7246
      %v7279 = vunpack.c.l.b16 %v7247
      %v7280 = vunpack.c.l.b16 %v7248
      %v7281 = vunpack.c.l.b16 %v7249
      %v7282 = vunpack.c.l.b16 %v7250
      %v7283 = vunpack.c.l.b16 %v7251
      %v7284 = vunpack.c.l.b16 %v7252
      %v7285 = vunpack.c.l.b16 %v7253
      %v7286 = vunpack.c.l.b16 %v7254
      %v7287 = vunpack.c.l.b16 %v7255
      %v7288 = vunpack.c.l.b16 %v7256
      %v7289 = vunpack.c.l.b16 %v7257
      %v7290 = vunpack.c.l.b16 %v7258
      %v7291 = vunpack.c.l.b16 %v7259
      %v7292 = vunpack.c.l.b16 %v7260
      %v7293 = vunpack.c.l.b16 %v7261
      %v7294 = vpack.c.b16 %v7279, %v7278
      %v7295 = vpack.c.b16 %v7281, %v7280
      %v7296 = vpack.c.b16 %v7283, %v7282
      %v7297 = vpack.c.b16 %v7285, %v7284
      %v7298 = vpack.c.b16 %v7287, %v7286
      %v7299 = vpack.c.b16 %v7289, %v7288
      %v7300 = vpack.c.b16 %v7291, %v7290
      %v7301 = vpack.c.b16 %v7293, %v7292
      %7310 = vmatprep.subr.bf16.mxu0 0
      %7311 = vmatpush1.bf16.msra.mxu0 %v7294
      %7312 = vmatprep.subr.bf16.mxu0 0
      %7313 = vmatpush1.bf16.msra.mxu0 %v7295
      %7314 = vmatprep.subr.bf16.mxu0 0
      %7315 = vmatpush1.bf16.msra.mxu0 %v7296
      %7316 = vmatprep.subr.bf16.mxu0 0
      %7317 = vmatpush1.bf16.msra.mxu0 %v7297
      %7318 = vmatprep.subr.bf16.mxu0 0
      %7319 = vmatpush1.bf16.msra.mxu0 %v7298
      %7320 = vmatprep.subr.bf16.mxu0 0
      %7321 = vmatpush1.bf16.msra.mxu0 %v7299
      %7322 = vmatprep.subr.bf16.mxu0 0
      %7323 = vmatpush1.bf16.msra.mxu0 %v7300
      %7324 = vmatprep.subr.bf16.mxu0 0
      %7325 = vmatpush1.bf16.msra.mxu0 %v7301
      %7326 = vmatprep.subr.bf16.mxu0 0
      %7327 = vmatpush1.bf16.msra.mxu0 0
      %7328 = vmatprep.subr.bf16.mxu0 0
      %7329 = vmatpush1.bf16.msra.mxu0 0
      %7330 = vmatprep.subr.bf16.mxu0 0
      %7331 = vmatpush1.bf16.msra.mxu0 0
      %7332 = vmatprep.subr.bf16.mxu0 0
      %7333 = vmatpush1.bf16.msra.mxu0 0
      %7334 = vmatprep.subr.bf16.mxu0 0
      %7335 = vmatpush1.bf16.msra.mxu0 0
      %7336 = vmatprep.subr.bf16.mxu0 0
      %7337 = vmatpush1.bf16.msra.mxu0 0
      %7338 = vmatprep.subr.bf16.mxu0 0
      %7339 = vmatpush1.bf16.msra.mxu0 0
      %7340 = vmatprep.subr.bf16.mxu0 0
      %7341 = vmatpush1.bf16.msra.mxu0 0
      %7342 = vmatprep.mubr.bf16.mxu0 0
      %7343 = vmatmul.mubr.bf16.gmra.mrb[0].mxu0 %v7238
      %v7344 = vpop.f32.mrb[0].mxu0
      %v7345 = vadd.f32 0.0, %v7344
      %v7346 = vpop.f32.mrb[0].mxu0
      %v7347 = vpop.f32.mrb[0].mxu0
      %v7348 = vadd.f32 0.0, %v7347
      %v7349 = vpop.f32.mrb[0].mxu0
      %7350 = vmatprep.mubr.bf16.mxu0 0
      %7351 = vmatmul.mubr.bf16.gmra.mrb[0].mxu0 %v7239
      %v7352 = vpop.f32.mrb[0].mxu0
      %v7353 = vadd.f32 0.0, %v7352
      %v7354 = vpop.f32.mrb[0].mxu0
      %v7355 = vpop.f32.mrb[0].mxu0
      %v7356 = vadd.f32 0.0, %v7355
      %v7357 = vpop.f32.mrb[0].mxu0
      %7358 = vmatprep.mubr.bf16.mxu0 0
      %7359 = vmatmul.mubr.bf16.gmra.mrb[0].mxu0 %v7240
      %v7360 = vpop.f32.mrb[0].mxu0
      %v7361 = vadd.f32 0.0, %v7360
      %v7362 = vpop.f32.mrb[0].mxu0
      %v7363 = vpop.f32.mrb[0].mxu0
      %v7364 = vadd.f32 0.0, %v7363
      %v7365 = vpop.f32.mrb[0].mxu0
      %7366 = vmatprep.mubr.bf16.mxu0 0
      %7367 = vmatmul.mubr.bf16.gmra.mrb[0].mxu0 %v7241
      %v7368 = vpop.f32.mrb[0].mxu0
      %v7369 = vadd.f32 0.0, %v7368
      %v7370 = vpop.f32.mrb[0].mxu0
      %v7371 = vpop.f32.mrb[0].mxu0
      %v7372 = vadd.f32 0.0, %v7371
      %v7373 = vpop.f32.mrb[0].mxu0
      %7374 = vmatprep.mubr.bf16.mxu0 0
      %7375 = vmatmul.mubr.bf16.gmra.mrb[0].mxu0 %v7242
      %v7376 = vpop.f32.mrb[0].mxu0
      %v7377 = vadd.f32 0.0, %v7376
      %v7378 = vpop.f32.mrb[0].mxu0
      %v7379 = vpop.f32.mrb[0].mxu0
      %v7380 = vadd.f32 0.0, %v7379
      %v7381 = vpop.f32.mrb[0].mxu0
      %7382 = vmatprep.mubr.bf16.mxu0 0
      %7383 = vmatmul.mubr.bf16.gmra.mrb[0].mxu0 %v7243
      %v7384 = vpop.f32.mrb[0].mxu0
      %v7385 = vadd.f32 0.0, %v7384
      %v7386 = vpop.f32.mrb[0].mxu0
      %v7387 = vpop.f32.mrb[0].mxu0
      %v7388 = vadd.f32 0.0, %v7387
      %v7389 = vpop.f32.mrb[0].mxu0
      %7390 = vmatprep.mubr.bf16.mxu0 0
      %7391 = vmatmul.mubr.bf16.gmra.mrb[0].mxu0 %v7244
      %v7392 = vpop.f32.mrb[0].mxu0
      %v7393 = vadd.f32 0.0, %v7392
      %v7394 = vpop.f32.mrb[0].mxu0
      %v7395 = vpop.f32.mrb[0].mxu0
      %v7396 = vadd.f32 0.0, %v7395
      %v7397 = vpop.f32.mrb[0].mxu0
      %7398 = vmatprep.mubr.bf16.mxu0 0
      %7399 = vmatmul.mubr.bf16.gmra.mrb[0].mxu0 %v7245
      %v7400 = vpop.f32.mrb[0].mxu0
      %v7401 = vadd.f32 0.0, %v7400
      %v7402 = vpop.f32.mrb[0].mxu0
      %v7403 = vpop.f32.mrb[0].mxu0
      %v7404 = vadd.f32 0.0, %v7403
      %v7405 = vpop.f32.mrb[0].mxu0
      %7406 = vdwg.mxu0
      %v7407 = vadd.f32 %v7176, %v7345
      %v7408 = vadd.f32 %v7179, %v7348
      %v7409 = vadd.f32 %v7184, %v7353
      %v7410 = vadd.f32 %v7187, %v7356
      %v7411 = vadd.f32 %v7192, %v7361
      %v7412 = vadd.f32 %v7195, %v7364
      %v7413 = vadd.f32 %v7200, %v7369
      %v7414 = vadd.f32 %v7203, %v7372
      %v7415 = vadd.f32 %v7208, %v7377
      %v7416 = vadd.f32 %v7211, %v7380
      %v7417 = vadd.f32 %v7216, %v7385
      %v7418 = vadd.f32 %v7219, %v7388
      %v7419 = vadd.f32 %v7224, %v7393
      %v7420 = vadd.f32 %v7227, %v7396
      %v7421 = vadd.f32 %v7232, %v7401
      %v7422 = vadd.f32 %v7235, %v7404
      %v7423 = vld [vmem:[#allocation3 + $0x48] sm:$0xff]
      %v7424 = vld [vmem:[#allocation3 + $0x50] sm:$0xff]
      %v7425 = vld [vmem:[#allocation3 + $0x58] sm:$0xff]
      %v7426 = vld [vmem:[#allocation3 + $0x60] sm:$0xff]
      %v7427 = vld [vmem:[#allocation3 + $0x68] sm:$0xff]
      %v7428 = vld [vmem:[#allocation3 + $0x70] sm:$0xff]
      %v7429 = vld [vmem:[#allocation3 + $0x78] sm:$0xff]
      %v7430 = vld [vmem:[#allocation3 + $0x80] sm:$0xff]
      %v7431 = vld [vmem:[%s5625] sm:$0xf]
      %v7432 = vld [vmem:[%s5625 + $0x4] sm:$0xf]
      %v7433 = vld [vmem:[%s5625 + $0x8] sm:$0xf]
      %v7434 = vld [vmem:[%s5625 + $0xc] sm:$0xf]
      %v7435 = vld [vmem:[%s5625 + $0x10] sm:$0xf]
      %v7436 = vld [vmem:[%s5625 + $0x14] sm:$0xf]
      %v7437 = vld [vmem:[%s5625 + $0x18] sm:$0xf]
      %v7438 = vld [vmem:[%s5625 + $0x1c] sm:$0xf]
      %v7439 = vld [vmem:[%s5625 + $0x20] sm:$0xf]
      %v7440 = vld [vmem:[%s5625 + $0x24] sm:$0xf]
      %v7441 = vld [vmem:[%s5625 + $0x28] sm:$0xf]
      %v7442 = vld [vmem:[%s5625 + $0x2c] sm:$0xf]
      %v7443 = vld [vmem:[%s5625 + $0x30] sm:$0xf]
      %v7444 = vld [vmem:[%s5625 + $0x34] sm:$0xf]
      %v7445 = vld [vmem:[%s5625 + $0x38] sm:$0xf]
      %v7446 = vld [vmem:[%s5625 + $0x3c] sm:$0xf]
      %v7463 = vunpack.c.l.b16 %v7431
      %v7464 = vunpack.c.l.b16 %v7432
      %v7465 = vunpack.c.l.b16 %v7433
      %v7466 = vunpack.c.l.b16 %v7434
      %v7467 = vunpack.c.l.b16 %v7435
      %v7468 = vunpack.c.l.b16 %v7436
      %v7469 = vunpack.c.l.b16 %v7437
      %v7470 = vunpack.c.l.b16 %v7438
      %v7471 = vunpack.c.l.b16 %v7439
      %v7472 = vunpack.c.l.b16 %v7440
      %v7473 = vunpack.c.l.b16 %v7441
      %v7474 = vunpack.c.l.b16 %v7442
      %v7475 = vunpack.c.l.b16 %v7443
      %v7476 = vunpack.c.l.b16 %v7444
      %v7477 = vunpack.c.l.b16 %v7445
      %v7478 = vunpack.c.l.b16 %v7446
      %v7479 = vpack.c.b16 %v7464, %v7463
      %v7480 = vpack.c.b16 %v7466, %v7465
      %v7481 = vpack.c.b16 %v7468, %v7467
      %v7482 = vpack.c.b16 %v7470, %v7469
      %v7483 = vpack.c.b16 %v7472, %v7471
      %v7484 = vpack.c.b16 %v7474, %v7473
      %v7485 = vpack.c.b16 %v7476, %v7475
      %v7486 = vpack.c.b16 %v7478, %v7477
      %7495 = vmatprep.subr.bf16.mxu0 0
      %7496 = vmatpush1.bf16.msra.mxu0 %v7479
      %7497 = vmatprep.subr.bf16.mxu0 0
      %7498 = vmatpush1.bf16.msra.mxu0 %v7480
      %7499 = vmatprep.subr.bf16.mxu0 0
      %7500 = vmatpush1.bf16.msra.mxu0 %v7481
      %7501 = vmatprep.subr.bf16.mxu0 0
      %7502 = vmatpush1.bf16.msra.mxu0 %v7482
      %7503 = vmatprep.subr.bf16.mxu0 0
      %7504 = vmatpush1.bf16.msra.mxu0 %v7483
      %7505 = vmatprep.subr.bf16.mxu0 0
      %7506 = vmatpush1.bf16.msra.mxu0 %v7484
      %7507 = vmatprep.subr.bf16.mxu0 0
      %7508 = vmatpush1.bf16.msra.mxu0 %v7485
      %7509 = vmatprep.subr.bf16.mxu0 0
      %7510 = vmatpush1.bf16.msra.mxu0 %v7486
      %7511 = vmatprep.subr.bf16.mxu0 0
      %7512 = vmatpush1.bf16.msra.mxu0 0
      %7513 = vmatprep.subr.bf16.mxu0 0
      %7514 = vmatpush1.bf16.msra.mxu0 0
      %7515 = vmatprep.subr.bf16.mxu0 0
      %7516 = vmatpush1.bf16.msra.mxu0 0
      %7517 = vmatprep.subr.bf16.mxu0 0
      %7518 = vmatpush1.bf16.msra.mxu0 0
      %7519 = vmatprep.subr.bf16.mxu0 0
      %7520 = vmatpush1.bf16.msra.mxu0 0
      %7521 = vmatprep.subr.bf16.mxu0 0
      %7522 = vmatpush1.bf16.msra.mxu0 0
      %7523 = vmatprep.subr.bf16.mxu0 0
      %7524 = vmatpush1.bf16.msra.mxu0 0
      %7525 = vmatprep.subr.bf16.mxu0 0
      %7526 = vmatpush1.bf16.msra.mxu0 0
      %7527 = vmatprep.mubr.bf16.mxu0 0
      %7528 = vmatmul.mubr.bf16.gmra.mrb[0].mxu0 %v7423
      %v7529 = vpop.f32.mrb[0].mxu0
      %v7530 = vadd.f32 0.0, %v7529
      %v7531 = vpop.f32.mrb[0].mxu0
      %v7532 = vpop.f32.mrb[0].mxu0
      %v7533 = vadd.f32 0.0, %v7532
      %v7534 = vpop.f32.mrb[0].mxu0
      %7535 = vmatprep.mubr.bf16.mxu0 0
      %7536 = vmatmul.mubr.bf16.gmra.mrb[0].mxu0 %v7424
      %v7537 = vpop.f32.mrb[0].mxu0
      %v7538 = vadd.f32 0.0, %v7537
      %v7539 = vpop.f32.mrb[0].mxu0
      %v7540 = vpop.f32.mrb[0].mxu0
      %v7541 = vadd.f32 0.0, %v7540
      %v7542 = vpop.f32.mrb[0].mxu0
      %7543 = vmatprep.mubr.bf16.mxu0 0
      %7544 = vmatmul.mubr.bf16.gmra.mrb[0].mxu0 %v7425
      %v7545 = vpop.f32.mrb[0].mxu0
      %v7546 = vadd.f32 0.0, %v7545
      %v7547 = vpop.f32.mrb[0].mxu0
      %v7548 = vpop.f32.mrb[0].mxu0
      %v7549 = vadd.f32 0.0, %v7548
      %v7550 = vpop.f32.mrb[0].mxu0
      %7551 = vmatprep.mubr.bf16.mxu0 0
      %7552 = vmatmul.mubr.bf16.gmra.mrb[0].mxu0 %v7426
      %v7553 = vpop.f32.mrb[0].mxu0
      %v7554 = vadd.f32 0.0, %v7553
      %v7555 = vpop.f32.mrb[0].mxu0
      %v7556 = vpop.f32.mrb[0].mxu0
      %v7557 = vadd.f32 0.0, %v7556
      %v7558 = vpop.f32.mrb[0].mxu0
      %7559 = vmatprep.mubr.bf16.mxu0 0
      %7560 = vmatmul.mubr.bf16.gmra.mrb[0].mxu0 %v7427
      %v7561 = vpop.f32.mrb[0].mxu0
      %v7562 = vadd.f32 0.0, %v7561
      %v7563 = vpop.f32.mrb[0].mxu0
      %v7564 = vpop.f32.mrb[0].mxu0
      %v7565 = vadd.f32 0.0, %v7564
      %v7566 = vpop.f32.mrb[0].mxu0
      %7567 = vmatprep.mubr.bf16.mxu0 0
      %7568 = vmatmul.mubr.bf16.gmra.mrb[0].mxu0 %v7428
      %v7569 = vpop.f32.mrb[0].mxu0
      %v7570 = vadd.f32 0.0, %v7569
      %v7571 = vpop.f32.mrb[0].mxu0
      %v7572 = vpop.f32.mrb[0].mxu0
      %v7573 = vadd.f32 0.0, %v7572
      %v7574 = vpop.f32.mrb[0].mxu0
      %7575 = vmatprep.mubr.bf16.mxu0 0
      %7576 = vmatmul.mubr.bf16.gmra.mrb[0].mxu0 %v7429
      %v7577 = vpop.f32.mrb[0].mxu0
      %v7578 = vadd.f32 0.0, %v7577
      %v7579 = vpop.f32.mrb[0].mxu0
      %v7580 = vpop.f32.mrb[0].mxu0
      %v7581 = vadd.f32 0.0, %v7580
      %v7582 = vpop.f32.mrb[0].mxu0
      %7583 = vmatprep.mubr.bf16.mxu0 0
      %7584 = vmatmul.mubr.bf16.gmra.mrb[0].mxu0 %v7430
      %v7585 = vpop.f32.mrb[0].mxu0
      %v7586 = vadd.f32 0.0, %v7585
      %v7587 = vpop.f32.mrb[0].mxu0
      %v7588 = vpop.f32.mrb[0].mxu0
      %v7589 = vadd.f32 0.0, %v7588
      %v7590 = vpop.f32.mrb[0].mxu0
      %7591 = vdwg.mxu0
      %v7592 = vadd.f32 %v7407, %v7530
      %v7593 = vadd.f32 %v7408, %v7533
      %v7594 = vadd.f32 %v7409, %v7538
      %v7595 = vadd.f32 %v7410, %v7541
      %v7596 = vadd.f32 %v7411, %v7546
      %v7597 = vadd.f32 %v7412, %v7549
      %v7598 = vadd.f32 %v7413, %v7554
      %v7599 = vadd.f32 %v7414, %v7557
      %v7600 = vadd.f32 %v7415, %v7562
      %v7601 = vadd.f32 %v7416, %v7565
      %v7602 = vadd.f32 %v7417, %v7570
      %v7603 = vadd.f32 %v7418, %v7573
      %v7604 = vadd.f32 %v7419, %v7578
      %v7605 = vadd.f32 %v7420, %v7581
      %v7606 = vadd.f32 %v7421, %v7586
      %v7607 = vadd.f32 %v7422, %v7589
      %v7608 = vld [vmem:[%s786 + $0x48] sm:$0xff]
      %v7609 = vld [vmem:[%s786 + $0x50] sm:$0xff]
      %v7610 = vld [vmem:[%s786 + $0x58] sm:$0xff]
      %v7611 = vld [vmem:[%s786 + $0x60] sm:$0xff]
      %v7612 = vld [vmem:[%s786 + $0x68] sm:$0xff]
      %v7613 = vld [vmem:[%s786 + $0x70] sm:$0xff]
      %v7614 = vld [vmem:[%s786 + $0x78] sm:$0xff]
      %v7615 = vld [vmem:[%s786 + $0x80] sm:$0xff]
      %v7616 = vld [vmem:[%s5811] sm:$0xf]
      %v7617 = vld [vmem:[%s5811 + $0x4] sm:$0xf]
      %v7618 = vld [vmem:[%s5811 + $0x8] sm:$0xf]
      %v7619 = vld [vmem:[%s5811 + $0xc] sm:$0xf]
      %v7620 = vld [vmem:[%s5811 + $0x10] sm:$0xf]
      %v7621 = vld [vmem:[%s5811 + $0x14] sm:$0xf]
      %v7622 = vld [vmem:[%s5811 + $0x18] sm:$0xf]
      %v7623 = vld [vmem:[%s5811 + $0x1c] sm:$0xf]
      %v7624 = vld [vmem:[%s5811 + $0x20] sm:$0xf]
      %v7625 = vld [vmem:[%s5811 + $0x24] sm:$0xf]
      %v7626 = vld [vmem:[%s5811 + $0x28] sm:$0xf]
      %v7627 = vld [vmem:[%s5811 + $0x2c] sm:$0xf]
      %v7628 = vld [vmem:[%s5811 + $0x30] sm:$0xf]
      %v7629 = vld [vmem:[%s5811 + $0x34] sm:$0xf]
      %v7630 = vld [vmem:[%s5811 + $0x38] sm:$0xf]
      %v7631 = vld [vmem:[%s5811 + $0x3c] sm:$0xf]
      %v7648 = vunpack.c.l.b16 %v7616
      %v7649 = vunpack.c.l.b16 %v7617
      %v7650 = vunpack.c.l.b16 %v7618
      %v7651 = vunpack.c.l.b16 %v7619
      %v7652 = vunpack.c.l.b16 %v7620
      %v7653 = vunpack.c.l.b16 %v7621
      %v7654 = vunpack.c.l.b16 %v7622
      %v7655 = vunpack.c.l.b16 %v7623
      %v7656 = vunpack.c.l.b16 %v7624
      %v7657 = vunpack.c.l.b16 %v7625
      %v7658 = vunpack.c.l.b16 %v7626
      %v7659 = vunpack.c.l.b16 %v7627
      %v7660 = vunpack.c.l.b16 %v7628
      %v7661 = vunpack.c.l.b16 %v7629
      %v7662 = vunpack.c.l.b16 %v7630
      %v7663 = vunpack.c.l.b16 %v7631
      %v7664 = vpack.c.b16 %v7649, %v7648
      %v7665 = vpack.c.b16 %v7651, %v7650
      %v7666 = vpack.c.b16 %v7653, %v7652
      %v7667 = vpack.c.b16 %v7655, %v7654
      %v7668 = vpack.c.b16 %v7657, %v7656
      %v7669 = vpack.c.b16 %v7659, %v7658
      %v7670 = vpack.c.b16 %v7661, %v7660
      %v7671 = vpack.c.b16 %v7663, %v7662
      %7680 = vmatprep.subr.bf16.mxu0 0
      %7681 = vmatpush1.bf16.msra.mxu0 %v7664
      %7682 = vmatprep.subr.bf16.mxu0 0
      %7683 = vmatpush1.bf16.msra.mxu0 %v7665
      %7684 = vmatprep.subr.bf16.mxu0 0
      %7685 = vmatpush1.bf16.msra.mxu0 %v7666
      %7686 = vmatprep.subr.bf16.mxu0 0
      %7687 = vmatpush1.bf16.msra.mxu0 %v7667
      %7688 = vmatprep.subr.bf16.mxu0 0
      %7689 = vmatpush1.bf16.msra.mxu0 %v7668
      %7690 = vmatprep.subr.bf16.mxu0 0
      %7691 = vmatpush1.bf16.msra.mxu0 %v7669
      %7692 = vmatprep.subr.bf16.mxu0 0
      %7693 = vmatpush1.bf16.msra.mxu0 %v7670
      %7694 = vmatprep.subr.bf16.mxu0 0
      %7695 = vmatpush1.bf16.msra.mxu0 %v7671
      %7696 = vmatprep.subr.bf16.mxu0 0
      %7697 = vmatpush1.bf16.msra.mxu0 0
      %7698 = vmatprep.subr.bf16.mxu0 0
      %7699 = vmatpush1.bf16.msra.mxu0 0
      %7700 = vmatprep.subr.bf16.mxu0 0
      %7701 = vmatpush1.bf16.msra.mxu0 0
      %7702 = vmatprep.subr.bf16.mxu0 0
      %7703 = vmatpush1.bf16.msra.mxu0 0
      %7704 = vmatprep.subr.bf16.mxu0 0
      %7705 = vmatpush1.bf16.msra.mxu0 0
      %7706 = vmatprep.subr.bf16.mxu0 0
      %7707 = vmatpush1.bf16.msra.mxu0 0
      %7708 = vmatprep.subr.bf16.mxu0 0
      %7709 = vmatpush1.bf16.msra.mxu0 0
      %7710 = vmatprep.subr.bf16.mxu0 0
      %7711 = vmatpush1.bf16.msra.mxu0 0
      %7712 = vmatprep.mubr.bf16.mxu0 0
      %7713 = vmatmul.mubr.bf16.gmra.mrb[0].mxu0 %v7608
      %v7714 = vpop.f32.mrb[0].mxu0
      %v7715 = vadd.f32 0.0, %v7714
      %v7716 = vpop.f32.mrb[0].mxu0
      %v7717 = vpop.f32.mrb[0].mxu0
      %v7718 = vadd.f32 0.0, %v7717
      %v7719 = vpop.f32.mrb[0].mxu0
      %7720 = vmatprep.mubr.bf16.mxu0 0
      %7721 = vmatmul.mubr.bf16.gmra.mrb[0].mxu0 %v7609
      %v7722 = vpop.f32.mrb[0].mxu0
      %v7723 = vadd.f32 0.0, %v7722
      %v7724 = vpop.f32.mrb[0].mxu0
      %v7725 = vpop.f32.mrb[0].mxu0
      %v7726 = vadd.f32 0.0, %v7725
      %v7727 = vpop.f32.mrb[0].mxu0
      %7728 = vmatprep.mubr.bf16.mxu0 0
      %7729 = vmatmul.mubr.bf16.gmra.mrb[0].mxu0 %v7610
      %v7730 = vpop.f32.mrb[0].mxu0
      %v7731 = vadd.f32 0.0, %v7730
      %v7732 = vpop.f32.mrb[0].mxu0
      %v7733 = vpop.f32.mrb[0].mxu0
      %v7734 = vadd.f32 0.0, %v7733
      %v7735 = vpop.f32.mrb[0].mxu0
      %7736 = vmatprep.mubr.bf16.mxu0 0
      %7737 = vmatmul.mubr.bf16.gmra.mrb[0].mxu0 %v7611
      %v7738 = vpop.f32.mrb[0].mxu0
      %v7739 = vadd.f32 0.0, %v7738
      %v7740 = vpop.f32.mrb[0].mxu0
      %v7741 = vpop.f32.mrb[0].mxu0
      %v7742 = vadd.f32 0.0, %v7741
      %v7743 = vpop.f32.mrb[0].mxu0
      %7744 = vmatprep.mubr.bf16.mxu0 0
      %7745 = vmatmul.mubr.bf16.gmra.mrb[0].mxu0 %v7612
      %v7746 = vpop.f32.mrb[0].mxu0
      %v7747 = vadd.f32 0.0, %v7746
      %v7748 = vpop.f32.mrb[0].mxu0
      %v7749 = vpop.f32.mrb[0].mxu0
      %v7750 = vadd.f32 0.0, %v7749
      %v7751 = vpop.f32.mrb[0].mxu0
      %7752 = vmatprep.mubr.bf16.mxu0 0
      %7753 = vmatmul.mubr.bf16.gmra.mrb[0].mxu0 %v7613
      %v7754 = vpop.f32.mrb[0].mxu0
      %v7755 = vadd.f32 0.0, %v7754
      %v7756 = vpop.f32.mrb[0].mxu0
      %v7757 = vpop.f32.mrb[0].mxu0
      %v7758 = vadd.f32 0.0, %v7757
      %v7759 = vpop.f32.mrb[0].mxu0
      %7760 = vmatprep.mubr.bf16.mxu0 0
      %7761 = vmatmul.mubr.bf16.gmra.mrb[0].mxu0 %v7614
      %v7762 = vpop.f32.mrb[0].mxu0
      %v7763 = vadd.f32 0.0, %v7762
      %v7764 = vpop.f32.mrb[0].mxu0
      %v7765 = vpop.f32.mrb[0].mxu0
      %v7766 = vadd.f32 0.0, %v7765
      %v7767 = vpop.f32.mrb[0].mxu0
      %7768 = vmatprep.mubr.bf16.mxu0 0
      %7769 = vmatmul.mubr.bf16.gmra.mrb[0].mxu0 %v7615
      %v7770 = vpop.f32.mrb[0].mxu0
      %v7771 = vadd.f32 0.0, %v7770
      %v7772 = vpop.f32.mrb[0].mxu0
      %v7773 = vpop.f32.mrb[0].mxu0
      %v7774 = vadd.f32 0.0, %v7773
      %v7775 = vpop.f32.mrb[0].mxu0
      %7776 = vdwg.mxu0
      %v7777 = vadd.f32 %v7592, %v7715
      %v7778 = vadd.f32 %v7593, %v7718
      %v7779 = vadd.f32 %v7594, %v7723
      %v7780 = vadd.f32 %v7595, %v7726
      %v7781 = vadd.f32 %v7596, %v7731
      %v7782 = vadd.f32 %v7597, %v7734
      %v7783 = vadd.f32 %v7598, %v7739
      %v7784 = vadd.f32 %v7599, %v7742
      %v7785 = vadd.f32 %v7600, %v7747
      %v7786 = vadd.f32 %v7601, %v7750
      %v7787 = vadd.f32 %v7602, %v7755
      %v7788 = vadd.f32 %v7603, %v7758
      %v7789 = vadd.f32 %v7604, %v7763
      %v7790 = vadd.f32 %v7605, %v7766
      %v7791 = vadd.f32 %v7606, %v7771
      %v7792 = vadd.f32 %v7607, %v7774
      %v7793 = vld [vmem:[%s1076 + $0x48] sm:$0xff]
      %v7794 = vld [vmem:[%s1076 + $0x50] sm:$0xff]
      %v7795 = vld [vmem:[%s1076 + $0x58] sm:$0xff]
      %v7796 = vld [vmem:[%s1076 + $0x60] sm:$0xff]
      %v7797 = vld [vmem:[%s1076 + $0x68] sm:$0xff]
      %v7798 = vld [vmem:[%s1076 + $0x70] sm:$0xff]
      %v7799 = vld [vmem:[%s1076 + $0x78] sm:$0xff]
      %v7800 = vld [vmem:[%s1076 + $0x80] sm:$0xff]
      %v7801 = vld [vmem:[%s5997] sm:$0xf]
      %v7802 = vld [vmem:[%s5997 + $0x4] sm:$0xf]
      %v7803 = vld [vmem:[%s5997 + $0x8] sm:$0xf]
      %v7804 = vld [vmem:[%s5997 + $0xc] sm:$0xf]
      %v7805 = vld [vmem:[%s5997 + $0x10] sm:$0xf]
      %v7806 = vld [vmem:[%s5997 + $0x14] sm:$0xf]
      %v7807 = vld [vmem:[%s5997 + $0x18] sm:$0xf]
      %v7808 = vld [vmem:[%s5997 + $0x1c] sm:$0xf]
      %v7809 = vld [vmem:[%s5997 + $0x20] sm:$0xf]
      %v7810 = vld [vmem:[%s5997 + $0x24] sm:$0xf]
      %v7811 = vld [vmem:[%s5997 + $0x28] sm:$0xf]
      %v7812 = vld [vmem:[%s5997 + $0x2c] sm:$0xf]
      %v7813 = vld [vmem:[%s5997 + $0x30] sm:$0xf]
      %v7814 = vld [vmem:[%s5997 + $0x34] sm:$0xf]
      %v7815 = vld [vmem:[%s5997 + $0x38] sm:$0xf]
      %v7816 = vld [vmem:[%s5997 + $0x3c] sm:$0xf]
      %v7833 = vunpack.c.l.b16 %v7801
      %v7834 = vunpack.c.l.b16 %v7802
      %v7835 = vunpack.c.l.b16 %v7803
      %v7836 = vunpack.c.l.b16 %v7804
      %v7837 = vunpack.c.l.b16 %v7805
      %v7838 = vunpack.c.l.b16 %v7806
      %v7839 = vunpack.c.l.b16 %v7807
      %v7840 = vunpack.c.l.b16 %v7808
      %v7841 = vunpack.c.l.b16 %v7809
      %v7842 = vunpack.c.l.b16 %v7810
      %v7843 = vunpack.c.l.b16 %v7811
      %v7844 = vunpack.c.l.b16 %v7812
      %v7845 = vunpack.c.l.b16 %v7813
      %v7846 = vunpack.c.l.b16 %v7814
      %v7847 = vunpack.c.l.b16 %v7815
      %v7848 = vunpack.c.l.b16 %v7816
      %v7849 = vpack.c.b16 %v7834, %v7833
      %v7850 = vpack.c.b16 %v7836, %v7835
      %v7851 = vpack.c.b16 %v7838, %v7837
      %v7852 = vpack.c.b16 %v7840, %v7839
      %v7853 = vpack.c.b16 %v7842, %v7841
      %v7854 = vpack.c.b16 %v7844, %v7843
      %v7855 = vpack.c.b16 %v7846, %v7845
      %v7856 = vpack.c.b16 %v7848, %v7847
      %7865 = vmatprep.subr.bf16.mxu0 0
      %7866 = vmatpush1.bf16.msra.mxu0 %v7849
      %7867 = vmatprep.subr.bf16.mxu0 0
      %7868 = vmatpush1.bf16.msra.mxu0 %v7850
      %7869 = vmatprep.subr.bf16.mxu0 0
      %7870 = vmatpush1.bf16.msra.mxu0 %v7851
      %7871 = vmatprep.subr.bf16.mxu0 0
      %7872 = vmatpush1.bf16.msra.mxu0 %v7852
      %7873 = vmatprep.subr.bf16.mxu0 0
      %7874 = vmatpush1.bf16.msra.mxu0 %v7853
      %7875 = vmatprep.subr.bf16.mxu0 0
      %7876 = vmatpush1.bf16.msra.mxu0 %v7854
      %7877 = vmatprep.subr.bf16.mxu0 0
      %7878 = vmatpush1.bf16.msra.mxu0 %v7855
      %7879 = vmatprep.subr.bf16.mxu0 0
      %7880 = vmatpush1.bf16.msra.mxu0 %v7856
      %7881 = vmatprep.subr.bf16.mxu0 0
      %7882 = vmatpush1.bf16.msra.mxu0 0
      %7883 = vmatprep.subr.bf16.mxu0 0
      %7884 = vmatpush1.bf16.msra.mxu0 0
      %7885 = vmatprep.subr.bf16.mxu0 0
      %7886 = vmatpush1.bf16.msra.mxu0 0
      %7887 = vmatprep.subr.bf16.mxu0 0
      %7888 = vmatpush1.bf16.msra.mxu0 0
      %7889 = vmatprep.subr.bf16.mxu0 0
      %7890 = vmatpush1.bf16.msra.mxu0 0
      %7891 = vmatprep.subr.bf16.mxu0 0
      %7892 = vmatpush1.bf16.msra.mxu0 0
      %7893 = vmatprep.subr.bf16.mxu0 0
      %7894 = vmatpush1.bf16.msra.mxu0 0
      %7895 = vmatprep.subr.bf16.mxu0 0
      %7896 = vmatpush1.bf16.msra.mxu0 0
      %7897 = vmatprep.mubr.bf16.mxu0 0
      %7898 = vmatmul.mubr.bf16.gmra.mrb[0].mxu0 %v7793
      %v7899 = vpop.f32.mrb[0].mxu0
      %v7900 = vadd.f32 0.0, %v7899
      %v7901 = vpop.f32.mrb[0].mxu0
      %v7902 = vpop.f32.mrb[0].mxu0
      %v7903 = vadd.f32 0.0, %v7902
      %v7904 = vpop.f32.mrb[0].mxu0
      %7905 = vmatprep.mubr.bf16.mxu0 0
      %7906 = vmatmul.mubr.bf16.gmra.mrb[0].mxu0 %v7794
      %v7907 = vpop.f32.mrb[0].mxu0
      %v7908 = vadd.f32 0.0, %v7907
      %v7909 = vpop.f32.mrb[0].mxu0
      %v7910 = vpop.f32.mrb[0].mxu0
      %v7911 = vadd.f32 0.0, %v7910
      %v7912 = vpop.f32.mrb[0].mxu0
      %7913 = vmatprep.mubr.bf16.mxu0 0
      %7914 = vmatmul.mubr.bf16.gmra.mrb[0].mxu0 %v7795
      %v7915 = vpop.f32.mrb[0].mxu0
      %v7916 = vadd.f32 0.0, %v7915
      %v7917 = vpop.f32.mrb[0].mxu0
      %v7918 = vpop.f32.mrb[0].mxu0
      %v7919 = vadd.f32 0.0, %v7918
      %v7920 = vpop.f32.mrb[0].mxu0
      %7921 = vmatprep.mubr.bf16.mxu0 0
      %7922 = vmatmul.mubr.bf16.gmra.mrb[0].mxu0 %v7796
      %v7923 = vpop.f32.mrb[0].mxu0
      %v7924 = vadd.f32 0.0, %v7923
      %v7925 = vpop.f32.mrb[0].mxu0
      %v7926 = vpop.f32.mrb[0].mxu0
      %v7927 = vadd.f32 0.0, %v7926
      %v7928 = vpop.f32.mrb[0].mxu0
      %7929 = vmatprep.mubr.bf16.mxu0 0
      %7930 = vmatmul.mubr.bf16.gmra.mrb[0].mxu0 %v7797
      %v7931 = vpop.f32.mrb[0].mxu0
      %v7932 = vadd.f32 0.0, %v7931
      %v7933 = vpop.f32.mrb[0].mxu0
      %v7934 = vpop.f32.mrb[0].mxu0
      %v7935 = vadd.f32 0.0, %v7934
      %v7936 = vpop.f32.mrb[0].mxu0
      %7937 = vmatprep.mubr.bf16.mxu0 0
      %7938 = vmatmul.mubr.bf16.gmra.mrb[0].mxu0 %v7798
      %v7939 = vpop.f32.mrb[0].mxu0
      %v7940 = vadd.f32 0.0, %v7939
      %v7941 = vpop.f32.mrb[0].mxu0
      %v7942 = vpop.f32.mrb[0].mxu0
      %v7943 = vadd.f32 0.0, %v7942
      %v7944 = vpop.f32.mrb[0].mxu0
      %7945 = vmatprep.mubr.bf16.mxu0 0
      %7946 = vmatmul.mubr.bf16.gmra.mrb[0].mxu0 %v7799
      %v7947 = vpop.f32.mrb[0].mxu0
      %v7948 = vadd.f32 0.0, %v7947
      %v7949 = vpop.f32.mrb[0].mxu0
      %v7950 = vpop.f32.mrb[0].mxu0
      %v7951 = vadd.f32 0.0, %v7950
      %v7952 = vpop.f32.mrb[0].mxu0
      %7953 = vmatprep.mubr.bf16.mxu0 0
      %7954 = vmatmul.mubr.bf16.gmra.mrb[0].mxu0 %v7800
      %v7955 = vpop.f32.mrb[0].mxu0
      %v7956 = vadd.f32 0.0, %v7955
      %v7957 = vpop.f32.mrb[0].mxu0
      %v7958 = vpop.f32.mrb[0].mxu0
      %v7959 = vadd.f32 0.0, %v7958
      %v7960 = vpop.f32.mrb[0].mxu0
      %7961 = vdwg.mxu0
      %v7962 = vadd.f32 %v7777, %v7900
      %v7963 = vadd.f32 %v7778, %v7903
      %v7964 = vadd.f32 %v7779, %v7908
      %v7965 = vadd.f32 %v7780, %v7911
      %v7966 = vadd.f32 %v7781, %v7916
      %v7967 = vadd.f32 %v7782, %v7919
      %v7968 = vadd.f32 %v7783, %v7924
      %v7969 = vadd.f32 %v7784, %v7927
      %v7970 = vadd.f32 %v7785, %v7932
      %v7971 = vadd.f32 %v7786, %v7935
      %v7972 = vadd.f32 %v7787, %v7940
      %v7973 = vadd.f32 %v7788, %v7943
      %v7974 = vadd.f32 %v7789, %v7948
      %v7975 = vadd.f32 %v7790, %v7951
      %v7976 = vadd.f32 %v7791, %v7956
      %v7977 = vadd.f32 %v7792, %v7959
      %v7978 = vld [vmem:[#allocation3 + $0x50] sm:$0xff]
      %v7979 = vld [vmem:[#allocation3 + $0x58] sm:$0xff]
      %v7980 = vld [vmem:[#allocation3 + $0x60] sm:$0xff]
      %v7981 = vld [vmem:[#allocation3 + $0x68] sm:$0xff]
      %v7982 = vld [vmem:[#allocation3 + $0x70] sm:$0xff]
      %v7983 = vld [vmem:[#allocation3 + $0x78] sm:$0xff]
      %v7984 = vld [vmem:[#allocation3 + $0x80] sm:$0xff]
      %v7985 = vld [vmem:[#allocation3 + $0x88] sm:$0xff]
      %v7986 = vld [vmem:[%s6183] sm:$0xf]
      %v7987 = vld [vmem:[%s6183 + $0x4] sm:$0xf]
      %v7988 = vld [vmem:[%s6183 + $0x8] sm:$0xf]
      %v7989 = vld [vmem:[%s6183 + $0xc] sm:$0xf]
      %v7990 = vld [vmem:[%s6183 + $0x10] sm:$0xf]
      %v7991 = vld [vmem:[%s6183 + $0x14] sm:$0xf]
      %v7992 = vld [vmem:[%s6183 + $0x18] sm:$0xf]
      %v7993 = vld [vmem:[%s6183 + $0x1c] sm:$0xf]
      %v7994 = vld [vmem:[%s6183 + $0x20] sm:$0xf]
      %v7995 = vld [vmem:[%s6183 + $0x24] sm:$0xf]
      %v7996 = vld [vmem:[%s6183 + $0x28] sm:$0xf]
      %v7997 = vld [vmem:[%s6183 + $0x2c] sm:$0xf]
      %v7998 = vld [vmem:[%s6183 + $0x30] sm:$0xf]
      %v7999 = vld [vmem:[%s6183 + $0x34] sm:$0xf]
      %v8000 = vld [vmem:[%s6183 + $0x38] sm:$0xf]
      %v8001 = vld [vmem:[%s6183 + $0x3c] sm:$0xf]
      %v8018 = vunpack.c.l.b16 %v7986
      %v8019 = vunpack.c.l.b16 %v7987
      %v8020 = vunpack.c.l.b16 %v7988
      %v8021 = vunpack.c.l.b16 %v7989
      %v8022 = vunpack.c.l.b16 %v7990
      %v8023 = vunpack.c.l.b16 %v7991
      %v8024 = vunpack.c.l.b16 %v7992
      %v8025 = vunpack.c.l.b16 %v7993
      %v8026 = vunpack.c.l.b16 %v7994
      %v8027 = vunpack.c.l.b16 %v7995
      %v8028 = vunpack.c.l.b16 %v7996
      %v8029 = vunpack.c.l.b16 %v7997
      %v8030 = vunpack.c.l.b16 %v7998
      %v8031 = vunpack.c.l.b16 %v7999
      %v8032 = vunpack.c.l.b16 %v8000
      %v8033 = vunpack.c.l.b16 %v8001
      %v8034 = vpack.c.b16 %v8019, %v8018
      %v8035 = vpack.c.b16 %v8021, %v8020
      %v8036 = vpack.c.b16 %v8023, %v8022
      %v8037 = vpack.c.b16 %v8025, %v8024
      %v8038 = vpack.c.b16 %v8027, %v8026
      %v8039 = vpack.c.b16 %v8029, %v8028
      %v8040 = vpack.c.b16 %v8031, %v8030
      %v8041 = vpack.c.b16 %v8033, %v8032
      %8050 = vmatprep.subr.bf16.mxu0 0
      %8051 = vmatpush1.bf16.msra.mxu0 %v8034
      %8052 = vmatprep.subr.bf16.mxu0 0
      %8053 = vmatpush1.bf16.msra.mxu0 %v8035
      %8054 = vmatprep.subr.bf16.mxu0 0
      %8055 = vmatpush1.bf16.msra.mxu0 %v8036
      %8056 = vmatprep.subr.bf16.mxu0 0
      %8057 = vmatpush1.bf16.msra.mxu0 %v8037
      %8058 = vmatprep.subr.bf16.mxu0 0
      %8059 = vmatpush1.bf16.msra.mxu0 %v8038
      %8060 = vmatprep.subr.bf16.mxu0 0
      %8061 = vmatpush1.bf16.msra.mxu0 %v8039
      %8062 = vmatprep.subr.bf16.mxu0 0
      %8063 = vmatpush1.bf16.msra.mxu0 %v8040
      %8064 = vmatprep.subr.bf16.mxu0 0
      %8065 = vmatpush1.bf16.msra.mxu0 %v8041
      %8066 = vmatprep.subr.bf16.mxu0 0
      %8067 = vmatpush1.bf16.msra.mxu0 0
      %8068 = vmatprep.subr.bf16.mxu0 0
      %8069 = vmatpush1.bf16.msra.mxu0 0
      %8070 = vmatprep.subr.bf16.mxu0 0
      %8071 = vmatpush1.bf16.msra.mxu0 0
      %8072 = vmatprep.subr.bf16.mxu0 0
      %8073 = vmatpush1.bf16.msra.mxu0 0
      %8074 = vmatprep.subr.bf16.mxu0 0
      %8075 = vmatpush1.bf16.msra.mxu0 0
      %8076 = vmatprep.subr.bf16.mxu0 0
      %8077 = vmatpush1.bf16.msra.mxu0 0
      %8078 = vmatprep.subr.bf16.mxu0 0
      %8079 = vmatpush1.bf16.msra.mxu0 0
      %8080 = vmatprep.subr.bf16.mxu0 0
      %8081 = vmatpush1.bf16.msra.mxu0 0
      %8082 = vmatprep.mubr.bf16.mxu0 0
      %8083 = vmatmul.mubr.bf16.gmra.mrb[0].mxu0 %v7978
      %v8084 = vpop.f32.mrb[0].mxu0
      %v8085 = vadd.f32 0.0, %v8084
      %v8086 = vpop.f32.mrb[0].mxu0
      %v8087 = vpop.f32.mrb[0].mxu0
      %v8088 = vadd.f32 0.0, %v8087
      %v8089 = vpop.f32.mrb[0].mxu0
      %8090 = vmatprep.mubr.bf16.mxu0 0
      %8091 = vmatmul.mubr.bf16.gmra.mrb[0].mxu0 %v7979
      %v8092 = vpop.f32.mrb[0].mxu0
      %v8093 = vadd.f32 0.0, %v8092
      %v8094 = vpop.f32.mrb[0].mxu0
      %v8095 = vpop.f32.mrb[0].mxu0
      %v8096 = vadd.f32 0.0, %v8095
      %v8097 = vpop.f32.mrb[0].mxu0
      %8098 = vmatprep.mubr.bf16.mxu0 0
      %8099 = vmatmul.mubr.bf16.gmra.mrb[0].mxu0 %v7980
      %v8100 = vpop.f32.mrb[0].mxu0
      %v8101 = vadd.f32 0.0, %v8100
      %v8102 = vpop.f32.mrb[0].mxu0
      %v8103 = vpop.f32.mrb[0].mxu0
      %v8104 = vadd.f32 0.0, %v8103
      %v8105 = vpop.f32.mrb[0].mxu0
      %8106 = vmatprep.mubr.bf16.mxu0 0
      %8107 = vmatmul.mubr.bf16.gmra.mrb[0].mxu0 %v7981
      %v8108 = vpop.f32.mrb[0].mxu0
      %v8109 = vadd.f32 0.0, %v8108
      %v8110 = vpop.f32.mrb[0].mxu0
      %v8111 = vpop.f32.mrb[0].mxu0
      %v8112 = vadd.f32 0.0, %v8111
      %v8113 = vpop.f32.mrb[0].mxu0
      %8114 = vmatprep.mubr.bf16.mxu0 0
      %8115 = vmatmul.mubr.bf16.gmra.mrb[0].mxu0 %v7982
      %v8116 = vpop.f32.mrb[0].mxu0
      %v8117 = vadd.f32 0.0, %v8116
      %v8118 = vpop.f32.mrb[0].mxu0
      %v8119 = vpop.f32.mrb[0].mxu0
      %v8120 = vadd.f32 0.0, %v8119
      %v8121 = vpop.f32.mrb[0].mxu0
      %8122 = vmatprep.mubr.bf16.mxu0 0
      %8123 = vmatmul.mubr.bf16.gmra.mrb[0].mxu0 %v7983
      %v8124 = vpop.f32.mrb[0].mxu0
      %v8125 = vadd.f32 0.0, %v8124
      %v8126 = vpop.f32.mrb[0].mxu0
      %v8127 = vpop.f32.mrb[0].mxu0
      %v8128 = vadd.f32 0.0, %v8127
      %v8129 = vpop.f32.mrb[0].mxu0
      %8130 = vmatprep.mubr.bf16.mxu0 0
      %8131 = vmatmul.mubr.bf16.gmra.mrb[0].mxu0 %v7984
      %v8132 = vpop.f32.mrb[0].mxu0
      %v8133 = vadd.f32 0.0, %v8132
      %v8134 = vpop.f32.mrb[0].mxu0
      %v8135 = vpop.f32.mrb[0].mxu0
      %v8136 = vadd.f32 0.0, %v8135
      %v8137 = vpop.f32.mrb[0].mxu0
      %8138 = vmatprep.mubr.bf16.mxu0 0
      %8139 = vmatmul.mubr.bf16.gmra.mrb[0].mxu0 %v7985
      %v8140 = vpop.f32.mrb[0].mxu0
      %v8141 = vadd.f32 0.0, %v8140
      %v8142 = vpop.f32.mrb[0].mxu0
      %v8143 = vpop.f32.mrb[0].mxu0
      %v8144 = vadd.f32 0.0, %v8143
      %v8145 = vpop.f32.mrb[0].mxu0
      %8146 = vdwg.mxu0
      %v8147 = vadd.f32 %v7962, %v8085
      %v8148 = vadd.f32 %v7963, %v8088
      %v8149 = vadd.f32 %v7964, %v8093
      %v8150 = vadd.f32 %v7965, %v8096
      %v8151 = vadd.f32 %v7966, %v8101
      %v8152 = vadd.f32 %v7967, %v8104
      %v8153 = vadd.f32 %v7968, %v8109
      %v8154 = vadd.f32 %v7969, %v8112
      %v8155 = vadd.f32 %v7970, %v8117
      %v8156 = vadd.f32 %v7971, %v8120
      %v8157 = vadd.f32 %v7972, %v8125
      %v8158 = vadd.f32 %v7973, %v8128
      %v8159 = vadd.f32 %v7974, %v8133
      %v8160 = vadd.f32 %v7975, %v8136
      %v8161 = vadd.f32 %v7976, %v8141
      %v8162 = vadd.f32 %v7977, %v8144
      %v8163 = vld [vmem:[%s786 + $0x50] sm:$0xff]
      %v8164 = vld [vmem:[%s786 + $0x58] sm:$0xff]
      %v8165 = vld [vmem:[%s786 + $0x60] sm:$0xff]
      %v8166 = vld [vmem:[%s786 + $0x68] sm:$0xff]
      %v8167 = vld [vmem:[%s786 + $0x70] sm:$0xff]
      %v8168 = vld [vmem:[%s786 + $0x78] sm:$0xff]
      %v8169 = vld [vmem:[%s786 + $0x80] sm:$0xff]
      %v8170 = vld [vmem:[%s786 + $0x88] sm:$0xff]
      %v8171 = vld [vmem:[%s6369] sm:$0xf]
      %v8172 = vld [vmem:[%s6369 + $0x4] sm:$0xf]
      %v8173 = vld [vmem:[%s6369 + $0x8] sm:$0xf]
      %v8174 = vld [vmem:[%s6369 + $0xc] sm:$0xf]
      %v8175 = vld [vmem:[%s6369 + $0x10] sm:$0xf]
      %v8176 = vld [vmem:[%s6369 + $0x14] sm:$0xf]
      %v8177 = vld [vmem:[%s6369 + $0x18] sm:$0xf]
      %v8178 = vld [vmem:[%s6369 + $0x1c] sm:$0xf]
      %v8179 = vld [vmem:[%s6369 + $0x20] sm:$0xf]
      %v8180 = vld [vmem:[%s6369 + $0x24] sm:$0xf]
      %v8181 = vld [vmem:[%s6369 + $0x28] sm:$0xf]
      %v8182 = vld [vmem:[%s6369 + $0x2c] sm:$0xf]
      %v8183 = vld [vmem:[%s6369 + $0x30] sm:$0xf]
      %v8184 = vld [vmem:[%s6369 + $0x34] sm:$0xf]
      %v8185 = vld [vmem:[%s6369 + $0x38] sm:$0xf]
      %v8186 = vld [vmem:[%s6369 + $0x3c] sm:$0xf]
      %v8203 = vunpack.c.l.b16 %v8171
      %v8204 = vunpack.c.l.b16 %v8172
      %v8205 = vunpack.c.l.b16 %v8173
      %v8206 = vunpack.c.l.b16 %v8174
      %v8207 = vunpack.c.l.b16 %v8175
      %v8208 = vunpack.c.l.b16 %v8176
      %v8209 = vunpack.c.l.b16 %v8177
      %v8210 = vunpack.c.l.b16 %v8178
      %v8211 = vunpack.c.l.b16 %v8179
      %v8212 = vunpack.c.l.b16 %v8180
      %v8213 = vunpack.c.l.b16 %v8181
      %v8214 = vunpack.c.l.b16 %v8182
      %v8215 = vunpack.c.l.b16 %v8183
      %v8216 = vunpack.c.l.b16 %v8184
      %v8217 = vunpack.c.l.b16 %v8185
      %v8218 = vunpack.c.l.b16 %v8186
      %v8219 = vpack.c.b16 %v8204, %v8203
      %v8220 = vpack.c.b16 %v8206, %v8205
      %v8221 = vpack.c.b16 %v8208, %v8207
      %v8222 = vpack.c.b16 %v8210, %v8209
      %v8223 = vpack.c.b16 %v8212, %v8211
      %v8224 = vpack.c.b16 %v8214, %v8213
      %v8225 = vpack.c.b16 %v8216, %v8215
      %v8226 = vpack.c.b16 %v8218, %v8217
      %8235 = vmatprep.subr.bf16.mxu0 0
      %8236 = vmatpush1.bf16.msra.mxu0 %v8219
      %8237 = vmatprep.subr.bf16.mxu0 0
      %8238 = vmatpush1.bf16.msra.mxu0 %v8220
      %8239 = vmatprep.subr.bf16.mxu0 0
      %8240 = vmatpush1.bf16.msra.mxu0 %v8221
      %8241 = vmatprep.subr.bf16.mxu0 0
      %8242 = vmatpush1.bf16.msra.mxu0 %v8222
      %8243 = vmatprep.subr.bf16.mxu0 0
      %8244 = vmatpush1.bf16.msra.mxu0 %v8223
      %8245 = vmatprep.subr.bf16.mxu0 0
      %8246 = vmatpush1.bf16.msra.mxu0 %v8224
      %8247 = vmatprep.subr.bf16.mxu0 0
      %8248 = vmatpush1.bf16.msra.mxu0 %v8225
      %8249 = vmatprep.subr.bf16.mxu0 0
      %8250 = vmatpush1.bf16.msra.mxu0 %v8226
      %8251 = vmatprep.subr.bf16.mxu0 0
      %8252 = vmatpush1.bf16.msra.mxu0 0
      %8253 = vmatprep.subr.bf16.mxu0 0
      %8254 = vmatpush1.bf16.msra.mxu0 0
      %8255 = vmatprep.subr.bf16.mxu0 0
      %8256 = vmatpush1.bf16.msra.mxu0 0
      %8257 = vmatprep.subr.bf16.mxu0 0
      %8258 = vmatpush1.bf16.msra.mxu0 0
      %8259 = vmatprep.subr.bf16.mxu0 0
      %8260 = vmatpush1.bf16.msra.mxu0 0
      %8261 = vmatprep.subr.bf16.mxu0 0
      %8262 = vmatpush1.bf16.msra.mxu0 0
      %8263 = vmatprep.subr.bf16.mxu0 0
      %8264 = vmatpush1.bf16.msra.mxu0 0
      %8265 = vmatprep.subr.bf16.mxu0 0
      %8266 = vmatpush1.bf16.msra.mxu0 0
      %8267 = vmatprep.mubr.bf16.mxu0 0
      %8268 = vmatmul.mubr.bf16.gmra.mrb[0].mxu0 %v8163
      %v8269 = vpop.f32.mrb[0].mxu0
      %v8270 = vadd.f32 0.0, %v8269
      %v8271 = vpop.f32.mrb[0].mxu0
      %v8272 = vpop.f32.mrb[0].mxu0
      %v8273 = vadd.f32 0.0, %v8272
      %v8274 = vpop.f32.mrb[0].mxu0
      %8275 = vmatprep.mubr.bf16.mxu0 0
      %8276 = vmatmul.mubr.bf16.gmra.mrb[0].mxu0 %v8164
      %v8277 = vpop.f32.mrb[0].mxu0
      %v8278 = vadd.f32 0.0, %v8277
      %v8279 = vpop.f32.mrb[0].mxu0
      %v8280 = vpop.f32.mrb[0].mxu0
      %v8281 = vadd.f32 0.0, %v8280
      %v8282 = vpop.f32.mrb[0].mxu0
      %8283 = vmatprep.mubr.bf16.mxu0 0
      %8284 = vmatmul.mubr.bf16.gmra.mrb[0].mxu0 %v8165
      %v8285 = vpop.f32.mrb[0].mxu0
      %v8286 = vadd.f32 0.0, %v8285
      %v8287 = vpop.f32.mrb[0].mxu0
      %v8288 = vpop.f32.mrb[0].mxu0
      %v8289 = vadd.f32 0.0, %v8288
      %v8290 = vpop.f32.mrb[0].mxu0
      %8291 = vmatprep.mubr.bf16.mxu0 0
      %8292 = vmatmul.mubr.bf16.gmra.mrb[0].mxu0 %v8166
      %v8293 = vpop.f32.mrb[0].mxu0
      %v8294 = vadd.f32 0.0, %v8293
      %v8295 = vpop.f32.mrb[0].mxu0
      %v8296 = vpop.f32.mrb[0].mxu0
      %v8297 = vadd.f32 0.0, %v8296
      %v8298 = vpop.f32.mrb[0].mxu0
      %8299 = vmatprep.mubr.bf16.mxu0 0
      %8300 = vmatmul.mubr.bf16.gmra.mrb[0].mxu0 %v8167
      %v8301 = vpop.f32.mrb[0].mxu0
      %v8302 = vadd.f32 0.0, %v8301
      %v8303 = vpop.f32.mrb[0].mxu0
      %v8304 = vpop.f32.mrb[0].mxu0
      %v8305 = vadd.f32 0.0, %v8304
      %v8306 = vpop.f32.mrb[0].mxu0
      %8307 = vmatprep.mubr.bf16.mxu0 0
      %8308 = vmatmul.mubr.bf16.gmra.mrb[0].mxu0 %v8168
      %v8309 = vpop.f32.mrb[0].mxu0
      %v8310 = vadd.f32 0.0, %v8309
      %v8311 = vpop.f32.mrb[0].mxu0
      %v8312 = vpop.f32.mrb[0].mxu0
      %v8313 = vadd.f32 0.0, %v8312
      %v8314 = vpop.f32.mrb[0].mxu0
      %8315 = vmatprep.mubr.bf16.mxu0 0
      %8316 = vmatmul.mubr.bf16.gmra.mrb[0].mxu0 %v8169
      %v8317 = vpop.f32.mrb[0].mxu0
      %v8318 = vadd.f32 0.0, %v8317
      %v8319 = vpop.f32.mrb[0].mxu0
      %v8320 = vpop.f32.mrb[0].mxu0
      %v8321 = vadd.f32 0.0, %v8320
      %v8322 = vpop.f32.mrb[0].mxu0
      %8323 = vmatprep.mubr.bf16.mxu0 0
      %8324 = vmatmul.mubr.bf16.gmra.mrb[0].mxu0 %v8170
      %v8325 = vpop.f32.mrb[0].mxu0
      %v8326 = vadd.f32 0.0, %v8325
      %v8327 = vpop.f32.mrb[0].mxu0
      %v8328 = vpop.f32.mrb[0].mxu0
      %v8329 = vadd.f32 0.0, %v8328
      %v8330 = vpop.f32.mrb[0].mxu0
      %8331 = vdwg.mxu0
      %v8332 = vadd.f32 %v8147, %v8270
      %v8333 = vadd.f32 %v8148, %v8273
      %v8334 = vadd.f32 %v8149, %v8278
      %v8335 = vadd.f32 %v8150, %v8281
      %v8336 = vadd.f32 %v8151, %v8286
      %v8337 = vadd.f32 %v8152, %v8289
      %v8338 = vadd.f32 %v8153, %v8294
      %v8339 = vadd.f32 %v8154, %v8297
      %v8340 = vadd.f32 %v8155, %v8302
      %v8341 = vadd.f32 %v8156, %v8305
      %v8342 = vadd.f32 %v8157, %v8310
      %v8343 = vadd.f32 %v8158, %v8313
      %v8344 = vadd.f32 %v8159, %v8318
      %v8345 = vadd.f32 %v8160, %v8321
      %v8346 = vadd.f32 %v8161, %v8326
      %v8347 = vadd.f32 %v8162, %v8329
      %v8348 = vld [vmem:[%s1076 + $0x50] sm:$0xff]
      %v8349 = vld [vmem:[%s1076 + $0x58] sm:$0xff]
      %v8350 = vld [vmem:[%s1076 + $0x60] sm:$0xff]
      %v8351 = vld [vmem:[%s1076 + $0x68] sm:$0xff]
      %v8352 = vld [vmem:[%s1076 + $0x70] sm:$0xff]
      %v8353 = vld [vmem:[%s1076 + $0x78] sm:$0xff]
      %v8354 = vld [vmem:[%s1076 + $0x80] sm:$0xff]
      %v8355 = vld [vmem:[%s1076 + $0x88] sm:$0xff]
      %v8356 = vld [vmem:[%s6555] sm:$0xf]
      %v8357 = vld [vmem:[%s6555 + $0x4] sm:$0xf]
      %v8358 = vld [vmem:[%s6555 + $0x8] sm:$0xf]
      %v8359 = vld [vmem:[%s6555 + $0xc] sm:$0xf]
      %v8360 = vld [vmem:[%s6555 + $0x10] sm:$0xf]
      %v8361 = vld [vmem:[%s6555 + $0x14] sm:$0xf]
      %v8362 = vld [vmem:[%s6555 + $0x18] sm:$0xf]
      %v8363 = vld [vmem:[%s6555 + $0x1c] sm:$0xf]
      %v8364 = vld [vmem:[%s6555 + $0x20] sm:$0xf]
      %v8365 = vld [vmem:[%s6555 + $0x24] sm:$0xf]
      %v8366 = vld [vmem:[%s6555 + $0x28] sm:$0xf]
      %v8367 = vld [vmem:[%s6555 + $0x2c] sm:$0xf]
      %v8368 = vld [vmem:[%s6555 + $0x30] sm:$0xf]
      %v8369 = vld [vmem:[%s6555 + $0x34] sm:$0xf]
      %v8370 = vld [vmem:[%s6555 + $0x38] sm:$0xf]
      %v8371 = vld [vmem:[%s6555 + $0x3c] sm:$0xf]
      %v8388 = vunpack.c.l.b16 %v8356
      %v8389 = vunpack.c.l.b16 %v8357
      %v8390 = vunpack.c.l.b16 %v8358
      %v8391 = vunpack.c.l.b16 %v8359
      %v8392 = vunpack.c.l.b16 %v8360
      %v8393 = vunpack.c.l.b16 %v8361
      %v8394 = vunpack.c.l.b16 %v8362
      %v8395 = vunpack.c.l.b16 %v8363
      %v8396 = vunpack.c.l.b16 %v8364
      %v8397 = vunpack.c.l.b16 %v8365
      %v8398 = vunpack.c.l.b16 %v8366
      %v8399 = vunpack.c.l.b16 %v8367
      %v8400 = vunpack.c.l.b16 %v8368
      %v8401 = vunpack.c.l.b16 %v8369
      %v8402 = vunpack.c.l.b16 %v8370
      %v8403 = vunpack.c.l.b16 %v8371
      %v8404 = vpack.c.b16 %v8389, %v8388
      %v8405 = vpack.c.b16 %v8391, %v8390
      %v8406 = vpack.c.b16 %v8393, %v8392
      %v8407 = vpack.c.b16 %v8395, %v8394
      %v8408 = vpack.c.b16 %v8397, %v8396
      %v8409 = vpack.c.b16 %v8399, %v8398
      %v8410 = vpack.c.b16 %v8401, %v8400
      %v8411 = vpack.c.b16 %v8403, %v8402
      %8420 = vmatprep.subr.bf16.mxu0 0
      %8421 = vmatpush1.bf16.msra.mxu0 %v8404
      %8422 = vmatprep.subr.bf16.mxu0 0
      %8423 = vmatpush1.bf16.msra.mxu0 %v8405
      %8424 = vmatprep.subr.bf16.mxu0 0
      %8425 = vmatpush1.bf16.msra.mxu0 %v8406
      %8426 = vmatprep.subr.bf16.mxu0 0
      %8427 = vmatpush1.bf16.msra.mxu0 %v8407
      %8428 = vmatprep.subr.bf16.mxu0 0
      %8429 = vmatpush1.bf16.msra.mxu0 %v8408
      %8430 = vmatprep.subr.bf16.mxu0 0
      %8431 = vmatpush1.bf16.msra.mxu0 %v8409
      %8432 = vmatprep.subr.bf16.mxu0 0
      %8433 = vmatpush1.bf16.msra.mxu0 %v8410
      %8434 = vmatprep.subr.bf16.mxu0 0
      %8435 = vmatpush1.bf16.msra.mxu0 %v8411
      %8436 = vmatprep.subr.bf16.mxu0 0
      %8437 = vmatpush1.bf16.msra.mxu0 0
      %8438 = vmatprep.subr.bf16.mxu0 0
      %8439 = vmatpush1.bf16.msra.mxu0 0
      %8440 = vmatprep.subr.bf16.mxu0 0
      %8441 = vmatpush1.bf16.msra.mxu0 0
      %8442 = vmatprep.subr.bf16.mxu0 0
      %8443 = vmatpush1.bf16.msra.mxu0 0
      %8444 = vmatprep.subr.bf16.mxu0 0
      %8445 = vmatpush1.bf16.msra.mxu0 0
      %8446 = vmatprep.subr.bf16.mxu0 0
      %8447 = vmatpush1.bf16.msra.mxu0 0
      %8448 = vmatprep.subr.bf16.mxu0 0
      %8449 = vmatpush1.bf16.msra.mxu0 0
      %8450 = vmatprep.subr.bf16.mxu0 0
      %8451 = vmatpush1.bf16.msra.mxu0 0
      %8452 = vmatprep.mubr.bf16.mxu0 0
      %8453 = vmatmul.mubr.bf16.gmra.mrb[0].mxu0 %v8348
      %v8454 = vpop.f32.mrb[0].mxu0
      %v8455 = vadd.f32 0.0, %v8454
      %v8456 = vpop.f32.mrb[0].mxu0
      %v8457 = vpop.f32.mrb[0].mxu0
      %v8458 = vadd.f32 0.0, %v8457
      %v8459 = vpop.f32.mrb[0].mxu0
      %8460 = vmatprep.mubr.bf16.mxu0 0
      %8461 = vmatmul.mubr.bf16.gmra.mrb[0].mxu0 %v8349
      %v8462 = vpop.f32.mrb[0].mxu0
      %v8463 = vadd.f32 0.0, %v8462
      %v8464 = vpop.f32.mrb[0].mxu0
      %v8465 = vpop.f32.mrb[0].mxu0
      %v8466 = vadd.f32 0.0, %v8465
      %v8467 = vpop.f32.mrb[0].mxu0
      %8468 = vmatprep.mubr.bf16.mxu0 0
      %8469 = vmatmul.mubr.bf16.gmra.mrb[0].mxu0 %v8350
      %v8470 = vpop.f32.mrb[0].mxu0
      %v8471 = vadd.f32 0.0, %v8470
      %v8472 = vpop.f32.mrb[0].mxu0
      %v8473 = vpop.f32.mrb[0].mxu0
      %v8474 = vadd.f32 0.0, %v8473
      %v8475 = vpop.f32.mrb[0].mxu0
      %8476 = vmatprep.mubr.bf16.mxu0 0
      %8477 = vmatmul.mubr.bf16.gmra.mrb[0].mxu0 %v8351
      %v8478 = vpop.f32.mrb[0].mxu0
      %v8479 = vadd.f32 0.0, %v8478
      %v8480 = vpop.f32.mrb[0].mxu0
      %v8481 = vpop.f32.mrb[0].mxu0
      %v8482 = vadd.f32 0.0, %v8481
      %v8483 = vpop.f32.mrb[0].mxu0
      %8484 = vmatprep.mubr.bf16.mxu0 0
      %8485 = vmatmul.mubr.bf16.gmra.mrb[0].mxu0 %v8352
      %v8486 = vpop.f32.mrb[0].mxu0
      %v8487 = vadd.f32 0.0, %v8486
      %v8488 = vpop.f32.mrb[0].mxu0
      %v8489 = vpop.f32.mrb[0].mxu0
      %v8490 = vadd.f32 0.0, %v8489
      %v8491 = vpop.f32.mrb[0].mxu0
      %8492 = vmatprep.mubr.bf16.mxu0 0
      %8493 = vmatmul.mubr.bf16.gmra.mrb[0].mxu0 %v8353
      %v8494 = vpop.f32.mrb[0].mxu0
      %v8495 = vadd.f32 0.0, %v8494
      %v8496 = vpop.f32.mrb[0].mxu0
      %v8497 = vpop.f32.mrb[0].mxu0
      %v8498 = vadd.f32 0.0, %v8497
      %v8499 = vpop.f32.mrb[0].mxu0
      %8500 = vmatprep.mubr.bf16.mxu0 0
      %8501 = vmatmul.mubr.bf16.gmra.mrb[0].mxu0 %v8354
      %v8502 = vpop.f32.mrb[0].mxu0
      %v8503 = vadd.f32 0.0, %v8502
      %v8504 = vpop.f32.mrb[0].mxu0
      %v8505 = vpop.f32.mrb[0].mxu0
      %v8506 = vadd.f32 0.0, %v8505
      %v8507 = vpop.f32.mrb[0].mxu0
      %8508 = vmatprep.mubr.bf16.mxu0 0
      %8509 = vmatmul.mubr.bf16.gmra.mrb[0].mxu0 %v8355
      %v8510 = vpop.f32.mrb[0].mxu0
      %v8511 = vadd.f32 0.0, %v8510
      %v8512 = vpop.f32.mrb[0].mxu0
      %v8513 = vpop.f32.mrb[0].mxu0
      %v8514 = vadd.f32 0.0, %v8513
      %v8515 = vpop.f32.mrb[0].mxu0
      %8516 = vdwg.mxu0
      %v8517 = vadd.f32 %v8332, %v8455
      %v8518 = vadd.f32 %v8333, %v8458
      %v8519 = vadd.f32 %v8334, %v8463
      %v8520 = vadd.f32 %v8335, %v8466
      %v8521 = vadd.f32 %v8336, %v8471
      %v8522 = vadd.f32 %v8337, %v8474
      %v8523 = vadd.f32 %v8338, %v8479
      %v8524 = vadd.f32 %v8339, %v8482
      %v8525 = vadd.f32 %v8340, %v8487
      %v8526 = vadd.f32 %v8341, %v8490
      %v8527 = vadd.f32 %v8342, %v8495
      %v8528 = vadd.f32 %v8343, %v8498
      %v8529 = vadd.f32 %v8344, %v8503
      %v8530 = vadd.f32 %v8345, %v8506
      %v8531 = vadd.f32 %v8346, %v8511
      %v8532 = vadd.f32 %v8347, %v8514
      %v8533 = vld [vmem:[%s4] sm:$0x1]
      %v8535 = vlaneseq
      %v8536 = vshrl.u32 %v8535, 7
      %v8537 = vsub.s32 0, %v8536
      %v8538 = vrot.slane %v8533, %v8537
      %v8540 = vadd.f32 %v8517, %v8538
      %v8541 = vadd.f32 %v8518, %v8538
      %v8542 = vadd.f32 %v8519, %v8538
      %v8543 = vadd.f32 %v8520, %v8538
      %v8544 = vadd.f32 %v8521, %v8538
      %v8545 = vadd.f32 %v8522, %v8538
      %v8546 = vadd.f32 %v8523, %v8538
      %v8547 = vadd.f32 %v8524, %v8538
      %v8548 = vadd.f32 %v8525, %v8538
      %v8549 = vadd.f32 %v8526, %v8538
      %v8550 = vadd.f32 %v8527, %v8538
      %v8551 = vadd.f32 %v8528, %v8538
      %v8552 = vadd.f32 %v8529, %v8538
      %v8553 = vadd.f32 %v8530, %v8538
      %v8554 = vadd.f32 %v8531, %v8538
      %v8555 = vadd.f32 %v8532, %v8538
      %s8556 = scalar_lea.vmem %s219, 64
      %v8557 = vld [vmem:[%s8556] sm:$0xf]
      %v8558 = vld [vmem:[%s8556 + $0x4] sm:$0xf]
      %v8559 = vld [vmem:[%s8556 + $0x8] sm:$0xf]
      %v8560 = vld [vmem:[%s8556 + $0xc] sm:$0xf]
      %v8561 = vld [vmem:[%s8556 + $0x10] sm:$0xf]
      %v8562 = vld [vmem:[%s8556 + $0x14] sm:$0xf]
      %v8563 = vld [vmem:[%s8556 + $0x18] sm:$0xf]
      %v8564 = vld [vmem:[%s8556 + $0x1c] sm:$0xf]
      %v8565 = vld [vmem:[%s8556 + $0x20] sm:$0xf]
      %v8566 = vld [vmem:[%s8556 + $0x24] sm:$0xf]
      %v8567 = vld [vmem:[%s8556 + $0x28] sm:$0xf]
      %v8568 = vld [vmem:[%s8556 + $0x2c] sm:$0xf]
      %v8569 = vld [vmem:[%s8556 + $0x30] sm:$0xf]
      %v8570 = vld [vmem:[%s8556 + $0x34] sm:$0xf]
      %v8571 = vld [vmem:[%s8556 + $0x38] sm:$0xf]
      %v8572 = vld [vmem:[%s8556 + $0x3c] sm:$0xf]
      %v8573 = vunpack.c.l.bf16 %v8557
      %v8574 = vunpack.c.l.bf16 %v8558
      %v8575 = vunpack.c.l.bf16 %v8559
      %v8576 = vunpack.c.l.bf16 %v8560
      %v8577 = vunpack.c.l.bf16 %v8561
      %v8578 = vunpack.c.l.bf16 %v8562
      %v8579 = vunpack.c.l.bf16 %v8563
      %v8580 = vunpack.c.l.bf16 %v8564
      %v8581 = vunpack.c.l.bf16 %v8565
      %v8582 = vunpack.c.l.bf16 %v8566
      %v8583 = vunpack.c.l.bf16 %v8567
      %v8584 = vunpack.c.l.bf16 %v8568
      %v8585 = vunpack.c.l.bf16 %v8569
      %v8586 = vunpack.c.l.bf16 %v8570
      %v8587 = vunpack.c.l.bf16 %v8571
      %v8588 = vunpack.c.l.bf16 %v8572
      %v8589 = vadd.f32 %v8540, %v8573
      %v8590 = vadd.f32 %v8541, %v8574
      %v8591 = vadd.f32 %v8542, %v8575
      %v8592 = vadd.f32 %v8543, %v8576
      %v8593 = vadd.f32 %v8544, %v8577
      %v8594 = vadd.f32 %v8545, %v8578
      %v8595 = vadd.f32 %v8546, %v8579
      %v8596 = vadd.f32 %v8547, %v8580
      %v8597 = vadd.f32 %v8548, %v8581
      %v8598 = vadd.f32 %v8549, %v8582
      %v8599 = vadd.f32 %v8550, %v8583
      %v8600 = vadd.f32 %v8551, %v8584
      %v8601 = vadd.f32 %v8552, %v8585
      %v8602 = vadd.f32 %v8553, %v8586
      %v8603 = vadd.f32 %v8554, %v8587
      %v8604 = vadd.f32 %v8555, %v8588
      %v8605 = vmax.f32 %v8589, 0.0
      %v8606 = vmax.f32 %v8590, 0.0
      %v8607 = vmax.f32 %v8591, 0.0
      %v8608 = vmax.f32 %v8592, 0.0
      %v8609 = vmax.f32 %v8593, 0.0
      %v8610 = vmax.f32 %v8594, 0.0
      %v8611 = vmax.f32 %v8595, 0.0
      %v8612 = vmax.f32 %v8596, 0.0
      %v8613 = vmax.f32 %v8597, 0.0
      %v8614 = vmax.f32 %v8598, 0.0
      %v8615 = vmax.f32 %v8599, 0.0
      %v8616 = vmax.f32 %v8600, 0.0
      %v8617 = vmax.f32 %v8601, 0.0
      %v8618 = vmax.f32 %v8602, 0.0
      %v8619 = vmax.f32 %v8603, 0.0
      %v8620 = vmax.f32 %v8604, 0.0
      %v8621 = vpack.c.bf16 %v8606, %v8605
      %v8622 = vpack.c.bf16 %v8608, %v8607
      %v8623 = vpack.c.bf16 %v8610, %v8609
      %v8624 = vpack.c.bf16 %v8612, %v8611
      %v8625 = vpack.c.bf16 %v8614, %v8613
      %v8626 = vpack.c.bf16 %v8616, %v8615
      %v8627 = vpack.c.bf16 %v8618, %v8617
      %v8628 = vpack.c.bf16 %v8620, %v8619
      %v8637 = vunpack.c.l.b16 %v8621
      %v8638 = vunpack.c.h.b16 %v8621
      %v8639 = vunpack.c.l.b16 %v8622
      %v8640 = vunpack.c.h.b16 %v8622
      %v8641 = vunpack.c.l.b16 %v8623
      %v8642 = vunpack.c.h.b16 %v8623
      %v8643 = vunpack.c.l.b16 %v8624
      %v8644 = vunpack.c.h.b16 %v8624
      %v8645 = vunpack.c.l.b16 %v8625
      %v8646 = vunpack.c.h.b16 %v8625
      %v8647 = vunpack.c.l.b16 %v8626
      %v8648 = vunpack.c.h.b16 %v8626
      %v8649 = vunpack.c.l.b16 %v8627
      %v8650 = vunpack.c.h.b16 %v8627
      %v8651 = vunpack.c.l.b16 %v8628
      %v8652 = vunpack.c.h.b16 %v8628
      %v8653 = vpack.c.b16 %v8637, %v8637
      %v8654 = vpack.c.b16 %v8638, %v8638
      %v8655 = vpack.c.b16 %v8639, %v8639
      %v8656 = vpack.c.b16 %v8640, %v8640
      %v8657 = vpack.c.b16 %v8641, %v8641
      %v8658 = vpack.c.b16 %v8642, %v8642
      %v8659 = vpack.c.b16 %v8643, %v8643
      %v8660 = vpack.c.b16 %v8644, %v8644
      %v8661 = vpack.c.b16 %v8645, %v8645
      %v8662 = vpack.c.b16 %v8646, %v8646
      %v8663 = vpack.c.b16 %v8647, %v8647
      %v8664 = vpack.c.b16 %v8648, %v8648
      %v8665 = vpack.c.b16 %v8649, %v8649
      %v8666 = vpack.c.b16 %v8650, %v8650
      %v8667 = vpack.c.b16 %v8651, %v8651
      %v8668 = vpack.c.b16 %v8652, %v8652
      %s8685 = scalar_lea.vmem %s224, 64
      %8686 = vst [vmem:[%s8685] sm:$0xf] %v8653
      %8687 = vst [vmem:[%s8685 + $0x4] sm:$0xf] %v8654
      %8688 = vst [vmem:[%s8685 + $0x8] sm:$0xf] %v8655
      %8689 = vst [vmem:[%s8685 + $0xc] sm:$0xf] %v8656
      %8690 = vst [vmem:[%s8685 + $0x10] sm:$0xf] %v8657
      %8691 = vst [vmem:[%s8685 + $0x14] sm:$0xf] %v8658
      %8692 = vst [vmem:[%s8685 + $0x18] sm:$0xf] %v8659
      %8693 = vst [vmem:[%s8685 + $0x1c] sm:$0xf] %v8660
      %8694 = vst [vmem:[%s8685 + $0x20] sm:$0xf] %v8661
      %8695 = vst [vmem:[%s8685 + $0x24] sm:$0xf] %v8662
      %8696 = vst [vmem:[%s8685 + $0x28] sm:$0xf] %v8663
      %8697 = vst [vmem:[%s8685 + $0x2c] sm:$0xf] %v8664
      %8698 = vst [vmem:[%s8685 + $0x30] sm:$0xf] %v8665
      %8699 = vst [vmem:[%s8685 + $0x34] sm:$0xf] %v8666
      %8700 = vst [vmem:[%s8685 + $0x38] sm:$0xf] %v8667
      %8701 = vst [vmem:[%s8685 + $0x3c] sm:$0xf] %v8668
      %p8702 = scmp.lt.s32.totalorder %s16, 1
      %s8703 = scalar_select %p8702, %s16, 1
      %s8704 = smul.addr %s8703, 32
      %s8705 = smul.addr %s8704, 4
      %s8706 = scalar_lea.vmem %s5, %s8705
      // Predicated region
      $region41: #{basic_block_forward.1} parent=39 // pred_check
        %p8707 = pneg %p144
      $region42: #{basic_block_forward.1} parent=39 // pred_check_branch
        %8709 = sbr.rel (%p8707) target = $region44
      $region43: #{basic_block_forward.1} parent=39 // pred_region
        _
      $region44: #{basic_block_forward.1} parent=39 // pred_fallthru
        _
    $region40: #{basic_block_forward.1} parent=5 // pred_fallthru
      _
    %p8710 = scmp.le.s32.totalorder 2, %s11
    // Predicated region
    $region45: #{basic_block_forward.1} parent=5 // pred_check
      %p8711 = pneg %p8710
    $region46: #{basic_block_forward.1} parent=5 // pred_check_branch
      %8713 = sbr.rel (%p8711) target = $region48
    $region47: #{basic_block_forward.1} parent=5 // pred_region
      %s8714 = ssub.s32 %s11, 2
      // Predicated region
      $region49: #{basic_block_forward.1} parent=47 // pred_check
        %p8715 = pneg %p150
      $region50: #{basic_block_forward.1} parent=47 // pred_check_branch
        %8717 = sbr.rel (%p8715) target = $region52
      $region51: #{basic_block_forward.1} parent=47 // pred_region
        %p8718 = scmp.lt.s32.totalorder %s17, 1
        %s8719 = scalar_select %p8718, %s17, 1
        %s8720 = smul.addr %s8719, 32
        %s8721 = smul.addr %s8720, 4
        %s8722 = scalar_lea.vmem %s5, %s8721
      $region52: #{basic_block_forward.1} parent=47 // pred_fallthru
        _
    $region48: #{basic_block_forward.1} parent=5 // pred_fallthru
      _
  $region6: #{basic_block_forward.1} parent=0 // loop_footer
    %s15 = sadd.s32 1, %s11
  $region7: #{basic_block_forward.1} parent=0 // loop_footer_branch
    %10 = sbr.rel target = $region3
  $region8: #{basic_block_forward.1} parent=0 // loop_exit
    _

</llo_original>
